<compile_context>
chip_gen: v5e
topology: v5e:2x2
jax: 0.10.0
libtpu: 0.0.40
codegen_flags: <defaults>
</compile_context>

<pallas_src>
import functools

import jax
import jax.numpy as jnp
from jax.experimental import pallas as pl
from jax.experimental.pallas import tpu as pltpu

LN_EPS = 1e-5      # PyTorch nn.LayerNorm default eps
H1, H2 = 2000, 500 # hidden sizes of the module


# ---------------------------------------------------------------------------
# Kernel
# ---------------------------------------------------------------------------
def _layernorm_relu(h, gamma, beta):
    # Single-pass statistics: var = E[h^2] - mu^2 (one fewer VPU sweep than the
    # two-pass (h - mu)^2 form; clamp guards against tiny negative rounding).
    mu = jnp.mean(h, axis=-1, keepdims=True)
    ms = jnp.mean(h * h, axis=-1, keepdims=True)
    var = jnp.maximum(ms - mu * mu, 0.0)
    hn = (h - mu) * jax.lax.rsqrt(var + LN_EPS)
    return jnp.maximum(hn * gamma + beta, 0.0)


def network_kernel(x_ref, w1_ref, vec_ref, w2_hbm, w3_hbm, *rest, tau, out_dim):
    """Fused (Linear->LN->ReLU)x2 -> Linear [-> masked ST-softmax if tau]."""
    if tau is None:
        out_ref, w2_vmem, w3_vmem, sem = rest
        mask_ref = None
    else:
        mask_ref, out_ref, w2_vmem, w3_vmem, sem = rest

    # Kick off the w2 / w3 HBM->VMEM DMAs immediately so they overlap with the
    # layer-1 matmul + LayerNorm; each is waited on just before its dot.
    w2_cp = pltpu.make_async_copy(w2_hbm, w2_vmem, sem.at[0])
    w3_cp = pltpu.make_async_copy(w3_hbm, w3_vmem, sem.at[1])
    w2_cp.start()
    w3_cp.start()

    x = x_ref[...]

    # Packed per-feature vectors (one DMA): rows = [b1, g1, be1, b2, g2, be2, b3].
    b1 = vec_ref[0:1, :]
    g1 = vec_ref[1:2, :]
    be1 = vec_ref[2:3, :]
    b2 = vec_ref[3:4, :H2]
    g2 = vec_ref[4:5, :H2]
    be2 = vec_ref[5:6, :H2]
    b3 = vec_ref[6:7, :out_dim]

    # bf16 x bf16 matmuls on the MXU, f32 accumulation; LN math stays f32.
    h1 = jnp.dot(x.astype(jnp.bfloat16), w1_ref[...],
                 preferred_element_type=jnp.float32) + b1
    h1 = _layernorm_relu(h1, g1, be1)

    w2_cp.wait()
    h2 = jnp.dot(h1.astype(jnp.bfloat16), w2_vmem[...],
                 preferred_element_type=jnp.float32) + b2
    h2 = _layernorm_relu(h2, g2, be2)

    w3_cp.wait()
    logits = jnp.dot(h2.astype(jnp.bfloat16), w3_vmem[...],
                     preferred_element_type=jnp.float32) + b3

    if tau is None:
        out_ref[...] = logits
        return

    # --- tau branch ----------------------------------------------------------
    # Forward value of the PyTorch straight-through expression
    #   (softmax(ql/1e-9) - softmax(ql/tau)).detach() + softmax(ql/tau)
    # equals softmax(ql/1e-9), i.e. the hard argmax one-hot (ties split evenly),
    # so the soft-softmax is dead code in a forward-only kernel.
    # Near-ties (|delta logit| < ~1e-9) are winner-take-all here instead of a
    # near-even split — accepted semantic simplification.
    # TODO(synk): add a jax.custom_vjp restoring the soft-softmax path if this
    # kernel is ever differentiated (the .detach() trick is gradient-only).
    ql = logits - mask_ref[...] * 1000000000.0   # mask is {0,1}: FMA instead of where
    m = jnp.max(ql, axis=-1, keepdims=True)
    is_max = (ql == m).astype(jnp.float32)
    out_ref[...] = is_max / jnp.sum(is_max, axis=-1, keepdims=True)


# ---------------------------------------------------------------------------
# Wrapper
# ---------------------------------------------------------------------------
def _vmem_spec():
    return pl.BlockSpec(memory_space=pltpu.MemorySpace.VMEM)


def _hbm_spec():
    return pl.BlockSpec(memory_space=pl.ANY)


def network_forward(params, x, mask=None, tau=None):
    w1, w2, w3, vec = params
    batch = x.shape[0]
    out_dim = w3.shape[1]

    kernel = functools.partial(
        network_kernel,
        tau=None if tau is None else float(tau),
        out_dim=out_dim,
    )

    args = (x, w1, vec, w2, w3)
    in_specs = [_vmem_spec(), _vmem_spec(), _vmem_spec(), _hbm_spec(), _hbm_spec()]
    if tau is not None:
        args = args + (mask,)
        in_specs.append(_vmem_spec())

    return pl.pallas_call(
        kernel,
        out_shape=jax.ShapeDtypeStruct((batch, out_dim), jnp.float32),
        in_specs=in_specs,
        out_specs=_vmem_spec(),
        scratch_shapes=[
            pltpu.VMEM((H1, H2), jnp.bfloat16),       # w2 landing buffer
            pltpu.VMEM((H2, out_dim), jnp.bfloat16),  # w3 landing buffer
            pltpu.SemaphoreType.DMA((2,)),
        ],
        compiler_params=pltpu.CompilerParams(vmem_limit_bytes=16 * 1024 * 1024),
    )(*args)


# ---------------------------------------------------------------------------
# Deterministic parameter init (mirrors nn.Linear / nn.LayerNorm shapes)
#   weights -> bf16 (in, out) layout; per-feature vectors packed into (7, 2000)
# ---------------------------------------------------------------------------
def init_params(key, query_size=312, output_size=312):
    k1, k2, k3 = jax.random.split(key, 3)

    def linear(k, fan_in, fan_out):
        kw, kb = jax.random.split(k)
        bound = 1.0 / (fan_in ** 0.5)
        w = jax.random.uniform(kw, (fan_in, fan_out), jnp.float32, -bound, bound)
        b = jax.random.uniform(kb, (fan_out,), jnp.float32, -bound, bound)
        return w, b

    w1, b1 = linear(k1, query_size, H1)
    w2, b2 = linear(k2, H1, H2)
    w3, b3 = linear(k3, H2, output_size)

    width = H1

    def row(v):
        return jnp.pad(v, (0, width - v.shape[0]))[None, :]

    vec = jnp.concatenate(
        [
            row(b1),
            row(jnp.ones((H1,), jnp.float32)),   # gamma1
            row(jnp.zeros((H1,), jnp.float32)),  # beta1
            row(b2),
            row(jnp.ones((H2,), jnp.float32)),   # gamma2
            row(jnp.zeros((H2,), jnp.float32)),  # beta2
            row(b3),
        ],
        axis=0,
    ).astype(jnp.float32)

    return (w1.astype(jnp.bfloat16),
            w2.astype(jnp.bfloat16),
            w3.astype(jnp.bfloat16),
            vec)


# ---------------------------------------------------------------------------
# Pure-JAX reference (mirrors kernel numerics: bf16 matmul inputs, f32 acc/LN)
# ---------------------------------------------------------------------------
def reference_forward(params, x, mask=None, tau=None):
    w1, w2, w3, vec = params
    out_dim = w3.shape[1]
    b1, g1, be1 = vec[0, :H1], vec[1, :H1], vec[2, :H1]
    b2, g2, be2 = vec[3, :H2], vec[4, :H2], vec[5, :H2]
    b3 = vec[6, :out_dim]

    def ln_relu(h, g, be):
        mu = jnp.mean(h, axis=-1, keepdims=True)
        var = jnp.mean((h - mu) ** 2, axis=-1, keepdims=True)
        return jnp.maximum((h - mu) * jax.lax.rsqrt(var + LN_EPS) * g + be, 0.0)

    def bf16_dot(a, w):
        return jnp.dot(a.astype(jnp.bfloat16), w,
                       preferred_element_type=jnp.float32)

    h = ln_relu(bf16_dot(x, w1) + b1, g1, be1)
    h = ln_relu(bf16_dot(h, w2) + b2, g2, be2)
    logits = bf16_dot(h, w3) + b3
    if tau is None:
        return logits
    mask_add = jnp.where(mask == 1.0, -1000000000.0, 0.0)
    ql = logits + mask_add
    query = jax.nn.softmax(ql / tau, axis=-1)
    hard = jax.nn.softmax(ql / 1e-9, axis=-1)
    return (hard - query) + query   # forward value == hard


# ---------------------------------------------------------------------------
if __name__ == "__main__":
    key = jax.random.PRNGKey(0)
    k_param, k_x, k_mask = jax.random.split(key, 3)

    QUERY_SIZE = 312
    OUTPUT_SIZE = 312
    BATCH = 4

    params = init_params(k_param, QUERY_SIZE, OUTPUT_SIZE)
    x = jax.random.normal(k_x, (BATCH, QUERY_SIZE), jnp.float32)

    # --- tau is None path (plain classifier logits) ---
    logits = jax.block_until_ready(network_forward(params, x, tau=None))
    ref_logits = reference_forward(params, x, tau=None)
    assert logits.shape == (BATCH, OUTPUT_SIZE)
    assert jnp.allclose(logits, ref_logits, atol=1e-3, rtol=1e-3), "tau=None path mismatch"

    # --- tau path with mask (fused in the same kernel) ---
    mask = (jax.random.uniform(k_mask, (BATCH, OUTPUT_SIZE)) < 0.3).astype(jnp.float32)
    tau = 0.5
    out_tau = jax.block_until_ready(network_forward(params, x, mask=mask, tau=tau))
    assert out_tau.shape == (BATCH, OUTPUT_SIZE)

    # Check the straight-through stage against a pure-JAX computation on the
    # (already verified) kernel logits; avoids spurious argmax flips caused by
    # sub-tolerance logit noise near ties.
    mask_add = jnp.where(mask == 1.0, -1000000000.0, 0.0)
    ql = logits + mask_add
    query = jax.nn.softmax(ql / tau, axis=-1)
    hard = jax.nn.softmax(ql / 1e-9, axis=-1)
    ref_tau = (hard - query) + query
    assert jnp.allclose(out_tau, ref_tau, atol=1e-3, rtol=1e-3), "tau path mismatch"
    # Rows must be exact one-hots.
    assert jnp.allclose(jnp.sum(out_tau, axis=-1), 1.0), "tau path not one-hot"

    print("KERNEL_OK")
</pallas_src>

<mosaic_0001>
module attributes {stable_mosaic.version = 11 : i64} {
  func.func @network_kernel(%arg0: memref<4x312xf32, #tpu.memory_space<vmem>>, %arg1: memref<312x2000xbf16, #tpu.memory_space<vmem>>, %arg2: memref<7x2000xf32, #tpu.memory_space<vmem>>, %arg3: memref<2000x500xbf16, #tpu.memory_space<any>>, %arg4: memref<500x312xbf16, #tpu.memory_space<any>>, %arg5: memref<4x312xf32, #tpu.memory_space<vmem>>, %arg6: memref<2000x500xbf16, #tpu.memory_space<vmem>>, %arg7: memref<500x312xbf16, #tpu.memory_space<vmem>>, %arg8: memref<2x!tpu.dma_semaphore, #tpu.memory_space<semaphore_mem>>) attributes {dimension_semantics = [], scalar_prefetch = 0 : i64, scratch_operands = 3 : i64, tpu.core_type = #tpu.core_type<tc>} {
    %c0_i32 = arith.constant 0 : i32
    %0 = tpu.memref_slice %arg8[%c0_i32] : memref<2x!tpu.dma_semaphore, #tpu.memory_space<semaphore_mem>> -> memref<1x!tpu.dma_semaphore, #tpu.memory_space<semaphore_mem>>
    %1 = tpu.memref_squeeze %0 : memref<1x!tpu.dma_semaphore, #tpu.memory_space<semaphore_mem>> -> memref<!tpu.dma_semaphore, #tpu.memory_space<semaphore_mem>>
    tpu.enqueue_dma source(%arg3 : memref<2000x500xbf16, #tpu.memory_space<any>>) target(%arg6 : memref<2000x500xbf16, #tpu.memory_space<vmem>>) target_semaphore(%1 : memref<!tpu.dma_semaphore, #tpu.memory_space<semaphore_mem>>)
    %c1_i32 = arith.constant 1 : i32
    %2 = tpu.memref_slice %arg8[%c1_i32] : memref<2x!tpu.dma_semaphore, #tpu.memory_space<semaphore_mem>> -> memref<1x!tpu.dma_semaphore, #tpu.memory_space<semaphore_mem>>
    %3 = tpu.memref_squeeze %2 : memref<1x!tpu.dma_semaphore, #tpu.memory_space<semaphore_mem>> -> memref<!tpu.dma_semaphore, #tpu.memory_space<semaphore_mem>>
    tpu.enqueue_dma source(%arg4 : memref<500x312xbf16, #tpu.memory_space<any>>) target(%arg7 : memref<500x312xbf16, #tpu.memory_space<vmem>>) target_semaphore(%3 : memref<!tpu.dma_semaphore, #tpu.memory_space<semaphore_mem>>)
    %c0 = arith.constant 0 : index
    %c0_0 = arith.constant 0 : index
    %4 = vector.load %arg0[%c0, %c0_0] : memref<4x312xf32, #tpu.memory_space<vmem>>, vector<4x312xf32>
    %c0_1 = arith.constant 0 : index
    %c0_2 = arith.constant 0 : index
    %5 = vector.load %arg2[%c0_1, %c0_2] : memref<7x2000xf32, #tpu.memory_space<vmem>>, vector<1x2000xf32>
    %c1 = arith.constant 1 : index
    %c0_3 = arith.constant 0 : index
    %6 = vector.load %arg2[%c1, %c0_3] : memref<7x2000xf32, #tpu.memory_space<vmem>>, vector<1x2000xf32>
    %c2 = arith.constant 2 : index
    %c0_4 = arith.constant 0 : index
    %7 = vector.load %arg2[%c2, %c0_4] : memref<7x2000xf32, #tpu.memory_space<vmem>>, vector<1x2000xf32>
    %c3 = arith.constant 3 : index
    %c0_5 = arith.constant 0 : index
    %8 = vector.load %arg2[%c3, %c0_5] : memref<7x2000xf32, #tpu.memory_space<vmem>>, vector<1x500xf32>
    %c4 = arith.constant 4 : index
    %c0_6 = arith.constant 0 : index
    %9 = vector.load %arg2[%c4, %c0_6] : memref<7x2000xf32, #tpu.memory_space<vmem>>, vector<1x500xf32>
    %c5 = arith.constant 5 : index
    %c0_7 = arith.constant 0 : index
    %10 = vector.load %arg2[%c5, %c0_7] : memref<7x2000xf32, #tpu.memory_space<vmem>>, vector<1x500xf32>
    %c6 = arith.constant 6 : index
    %c0_8 = arith.constant 0 : index
    %11 = vector.load %arg2[%c6, %c0_8] : memref<7x2000xf32, #tpu.memory_space<vmem>>, vector<1x312xf32>
    %12 = arith.truncf %4 : vector<4x312xf32> to vector<4x312xbf16>
    %c0_9 = arith.constant 0 : index
    %c0_10 = arith.constant 0 : index
    %13 = vector.load %arg1[%c0_9, %c0_10] : memref<312x2000xbf16, #tpu.memory_space<vmem>>, vector<312x2000xbf16>
    %cst = arith.constant dense<0.000000e+00> : vector<4x2000xf32>
    %14 = tpu.matmul %12, %13, %cst {dimension_numbers = #tpu.dot_dimension_numbers<[1], [0], [0], [1], [0, 0, 1, 1], [], []>} : vector<4x312xbf16>, vector<312x2000xbf16>, vector<4x2000xf32> -> vector<4x2000xf32>
    %15 = vector.broadcast %5 : vector<1x2000xf32> to vector<4x2000xf32>
    %16 = arith.addf %14, %15 : vector<4x2000xf32>
    %cst_11 = arith.constant dense<0.000000e+00> : vector<4xf32>
    %17 = vector.multi_reduction <add>, %16, %cst_11 [1] : vector<4x2000xf32> to vector<4xf32>
    %18 = vector.shape_cast %17 : vector<4xf32> to vector<4x1xf32>
    %cst_12 = arith.constant 2.000000e+03 : f32
    %19 = vector.broadcast %cst_12 : f32 to vector<4x1xf32>
    %20 = arith.divf %18, %19 : vector<4x1xf32>
    %21 = arith.mulf %16, %16 : vector<4x2000xf32>
    %cst_13 = arith.constant dense<0.000000e+00> : vector<4xf32>
    %22 = vector.multi_reduction <add>, %21, %cst_13 [1] : vector<4x2000xf32> to vector<4xf32>
    %23 = vector.shape_cast %22 : vector<4xf32> to vector<4x1xf32>
    %cst_14 = arith.constant 2.000000e+03 : f32
    %24 = vector.broadcast %cst_14 : f32 to vector<4x1xf32>
    %25 = arith.divf %23, %24 : vector<4x1xf32>
    %26 = arith.mulf %20, %20 : vector<4x1xf32>
    %27 = arith.subf %25, %26 : vector<4x1xf32>
    %cst_15 = arith.constant 0.000000e+00 : f32
    %28 = vector.broadcast %cst_15 : f32 to vector<4x1xf32>
    %29 = arith.maximumf %27, %28 : vector<4x1xf32>
    %30 = vector.broadcast %20 : vector<4x1xf32> to vector<4x2000xf32>
    %31 = arith.subf %16, %30 : vector<4x2000xf32>
    %cst_16 = arith.constant 9.99999974E-6 : f32
    %32 = vector.broadcast %cst_16 : f32 to vector<4x1xf32>
    %33 = arith.addf %29, %32 : vector<4x1xf32>
    %34 = math.rsqrt %33 : vector<4x1xf32>
    %35 = vector.broadcast %34 : vector<4x1xf32> to vector<4x2000xf32>
    %36 = arith.mulf %31, %35 : vector<4x2000xf32>
    %37 = vector.broadcast %6 : vector<1x2000xf32> to vector<4x2000xf32>
    %38 = arith.mulf %36, %37 : vector<4x2000xf32>
    %39 = vector.broadcast %7 : vector<1x2000xf32> to vector<4x2000xf32>
    %40 = arith.addf %38, %39 : vector<4x2000xf32>
    %cst_17 = arith.constant 0.000000e+00 : f32
    %41 = vector.broadcast %cst_17 : f32 to vector<4x2000xf32>
    %42 = arith.maximumf %40, %41 : vector<4x2000xf32>
    %c0_i32_18 = arith.constant 0 : i32
    %43 = tpu.memref_slice %arg8[%c0_i32_18] : memref<2x!tpu.dma_semaphore, #tpu.memory_space<semaphore_mem>> -> memref<1x!tpu.dma_semaphore, #tpu.memory_space<semaphore_mem>>
    %44 = tpu.memref_squeeze %43 : memref<1x!tpu.dma_semaphore, #tpu.memory_space<semaphore_mem>> -> memref<!tpu.dma_semaphore, #tpu.memory_space<semaphore_mem>>
    tpu.wait_dma2 semaphore(%44 : memref<!tpu.dma_semaphore, #tpu.memory_space<semaphore_mem>>) src(%arg3 : memref<2000x500xbf16, #tpu.memory_space<any>>) dst(%arg6 : memref<2000x500xbf16, #tpu.memory_space<vmem>>)
    %45 = arith.truncf %42 : vector<4x2000xf32> to vector<4x2000xbf16>
    %c0_19 = arith.constant 0 : index
    %c0_20 = arith.constant 0 : index
    %46 = vector.load %arg6[%c0_19, %c0_20] : memref<2000x500xbf16, #tpu.memory_space<vmem>>, vector<2000x500xbf16>
    %cst_21 = arith.constant dense<0.000000e+00> : vector<4x500xf32>
    %47 = tpu.matmul %45, %46, %cst_21 {dimension_numbers = #tpu.dot_dimension_numbers<[1], [0], [0], [1], [0, 0, 1, 1], [], []>} : vector<4x2000xbf16>, vector<2000x500xbf16>, vector<4x500xf32> -> vector<4x500xf32>
    %48 = vector.broadcast %8 : vector<1x500xf32> to vector<4x500xf32>
    %49 = arith.addf %47, %48 : vector<4x500xf32>
    %cst_22 = arith.constant dense<0.000000e+00> : vector<4xf32>
    %50 = vector.multi_reduction <add>, %49, %cst_22 [1] : vector<4x500xf32> to vector<4xf32>
    %51 = vector.shape_cast %50 : vector<4xf32> to vector<4x1xf32>
    %cst_23 = arith.constant 5.000000e+02 : f32
    %52 = vector.broadcast %cst_23 : f32 to vector<4x1xf32>
    %53 = arith.divf %51, %52 : vector<4x1xf32>
    %54 = arith.mulf %49, %49 : vector<4x500xf32>
    %cst_24 = arith.constant dense<0.000000e+00> : vector<4xf32>
    %55 = vector.multi_reduction <add>, %54, %cst_24 [1] : vector<4x500xf32> to vector<4xf32>
    %56 = vector.shape_cast %55 : vector<4xf32> to vector<4x1xf32>
    %cst_25 = arith.constant 5.000000e+02 : f32
    %57 = vector.broadcast %cst_25 : f32 to vector<4x1xf32>
    %58 = arith.divf %56, %57 : vector<4x1xf32>
    %59 = arith.mulf %53, %53 : vector<4x1xf32>
    %60 = arith.subf %58, %59 : vector<4x1xf32>
    %cst_26 = arith.constant 0.000000e+00 : f32
    %61 = vector.broadcast %cst_26 : f32 to vector<4x1xf32>
    %62 = arith.maximumf %60, %61 : vector<4x1xf32>
    %63 = vector.broadcast %53 : vector<4x1xf32> to vector<4x500xf32>
    %64 = arith.subf %49, %63 : vector<4x500xf32>
    %cst_27 = arith.constant 9.99999974E-6 : f32
    %65 = vector.broadcast %cst_27 : f32 to vector<4x1xf32>
    %66 = arith.addf %62, %65 : vector<4x1xf32>
    %67 = math.rsqrt %66 : vector<4x1xf32>
    %68 = vector.broadcast %67 : vector<4x1xf32> to vector<4x500xf32>
    %69 = arith.mulf %64, %68 : vector<4x500xf32>
    %70 = vector.broadcast %9 : vector<1x500xf32> to vector<4x500xf32>
    %71 = arith.mulf %69, %70 : vector<4x500xf32>
    %72 = vector.broadcast %10 : vector<1x500xf32> to vector<4x500xf32>
    %73 = arith.addf %71, %72 : vector<4x500xf32>
    %cst_28 = arith.constant 0.000000e+00 : f32
    %74 = vector.broadcast %cst_28 : f32 to vector<4x500xf32>
    %75 = arith.maximumf %73, %74 : vector<4x500xf32>
    %c1_i32_29 = arith.constant 1 : i32
    %76 = tpu.memref_slice %arg8[%c1_i32_29] : memref<2x!tpu.dma_semaphore, #tpu.memory_space<semaphore_mem>> -> memref<1x!tpu.dma_semaphore, #tpu.memory_space<semaphore_mem>>
    %77 = tpu.memref_squeeze %76 : memref<1x!tpu.dma_semaphore, #tpu.memory_space<semaphore_mem>> -> memref<!tpu.dma_semaphore, #tpu.memory_space<semaphore_mem>>
    tpu.wait_dma2 semaphore(%77 : memref<!tpu.dma_semaphore, #tpu.memory_space<semaphore_mem>>) src(%arg4 : memref<500x312xbf16, #tpu.memory_space<any>>) dst(%arg7 : memref<500x312xbf16, #tpu.memory_space<vmem>>)
    %78 = arith.truncf %75 : vector<4x500xf32> to vector<4x500xbf16>
    %c0_30 = arith.constant 0 : index
    %c0_31 = arith.constant 0 : index
    %79 = vector.load %arg7[%c0_30, %c0_31] : memref<500x312xbf16, #tpu.memory_space<vmem>>, vector<500x312xbf16>
    %cst_32 = arith.constant dense<0.000000e+00> : vector<4x312xf32>
    %80 = tpu.matmul %78, %79, %cst_32 {dimension_numbers = #tpu.dot_dimension_numbers<[1], [0], [0], [1], [0, 0, 1, 1], [], []>} : vector<4x500xbf16>, vector<500x312xbf16>, vector<4x312xf32> -> vector<4x312xf32>
    %81 = vector.broadcast %11 : vector<1x312xf32> to vector<4x312xf32>
    %82 = arith.addf %80, %81 : vector<4x312xf32>
    %c0_33 = arith.constant 0 : index
    %c0_34 = arith.constant 0 : index
    %83 = vector.load %arg5[%c0_33, %c0_34] : memref<4x312xf32, #tpu.memory_space<vmem>>, vector<4x312xf32>
    tpu.vector_store %arg5[%c0_33, %c0_34], %82 {strides = array<i32>} : memref<4x312xf32, #tpu.memory_space<vmem>>, vector<4x312xf32>,
    return
  }
}

</mosaic_0001>

<llo_original>
// kernel: tpu_custom_call.1
$region0: #{tpu_custom_call.1}
  #allocation0 [shape = 'u32[]', space=smem, size = 0x4, offset = 0x4, fixed_abs, tag = 'smem constant byte address 0x4 - core index']
  #allocation1 [shape = 'u32[72,128]{1,0:T(1,128)}', space=vmem, size = 0x9000, scoped, tag = 'internal scratch']
  #allocation2 [shape = 'bf16[2000,500]{1,0:T(8,128)(2,1)}', space=vmem, size = 0x1f4000, scoped, tag = 'scratch operand']
  #allocation3 [shape = 'bf16[500,312]{1,0:T(8,128)(2,1)}', space=vmem, size = 0x5e800, scoped, tag = 'scratch operand']
  #allocation4 [shape = 's32[2]{0}', space=sflag, size = 0x8, scoped, tag = 'scratch operand']
  #allocation12 [shape = 's32[]', space=sflag, size = 0x4, offset = 0, fixed_abs, tag = 'sflag constant byte address 0x0 - dummy sync flag']
  #allocation13 [shape = 's32[]', space=sflag, size = 0x4, offset = 0, fixed_abs, tag = 'sflag constant byte address 0x0 - dummy sync flag']
  #allocation14 [shape = 'u32[]', space=smem, size = 0x4, offset = 0x44, fixed_abs, tag = 'smem constant byte address 0x44 - assertion arg 0']
  #allocation15 [shape = 'u32[]', space=smem, size = 0x4, offset = 0x48, fixed_abs, tag = 'smem constant byte address 0x48 - assertion arg 1']
  #allocation16 [shape = 's32[]', space=sflag, size = 0x4, offset = 0, fixed_abs, tag = 'sflag constant byte address 0x0 - dummy sync flag']
  %s0 = inlined_call_operand.hbm [shape: f32[4,312], index: 0, kind: input, shape index: {}]
  %s1 = inlined_call_operand.hbm [shape: bf16[312,2000], index: 1, kind: input, shape index: {}]
  %s2 = inlined_call_operand.hbm [shape: f32[7,2000], index: 2, kind: input, shape index: {}]
  %s3 = inlined_call_operand.hbm [shape: bf16[2000,500], index: 3, kind: input, shape index: {}]
  %s4 = inlined_call_operand.vmem [shape: bf16[500,312], index: 4, kind: input, shape index: {}]
  %s5 = inlined_call_operand.hbm [shape: f32[4,312], index: 5, kind: output, shape index: {}]
  %s6 = sld [smem:[#allocation0]]
  $region60: #{tpu_custom_call.1} parent=0
    _
  %s8 = ssub.s32 1, %s6
  %s9 = scalar_select 0, %s8, %s6
  $region1: #{tpu_custom_call.1} parent=0
    #allocation5 [shape = 'u8[6144]{0}', space=vmem, size = 0x1800, scoped, tag = 'input window, operand 0, single buffered']
    #allocation6 [shape = 's32[1]{0}', space=sflag, size = 0x4, scoped, tag = 'scoped memory for tpu_custom_call.1']
    #allocation7 [shape = 's32[1]{0}', space=sflag, size = 0x4, scoped, tag = 'scoped memory for tpu_custom_call.1']
    #allocation8 [shape = 'u8[1277952]{0}', space=vmem, size = 0x138000, scoped, tag = 'input window, operand 1, single buffered']
    #allocation9 [shape = 's32[1]{0}', space=sflag, size = 0x4, scoped, tag = 'scoped memory for tpu_custom_call.1']
    #allocation10 [shape = 'u8[65536]{0}', space=vmem, size = 0x10000, scoped, tag = 'input window, operand 2, single buffered']
    #allocation11 [shape = 'u8[6144]{0}', space=vmem, size = 0x1800, scoped, tag = 'output window, operand 0, single buffered']
    %10 = vsyncpa [#allocation6], 0
    %11 = vsyncpa [#allocation9], 0
    %12 = vsyncpa [#allocation7], 0
    // Predicated region
    $region2: #{tpu_custom_call.1} parent=1 // pred_check
      _
    $region3: #{tpu_custom_call.1} parent=1 // pred_check_branch
      %14 = sbr.rel (0) target = $region5
    $region4: #{tpu_custom_call.1} parent=1 // pred_region
      %16 = vsyncadd [#allocation6], 0
      %s18 = sshll.u32 %s0, 4
      %s19 = int_to_ptr.hbm [resolvable:$true] %s18
      %s20 = sshll.u32 [#allocation5], 4
      %s21 = int_to_ptr.vmem [resolvable:$true] %s20
      %23 = dma.hbm_to_vmem [thread:$0]  %s19, 192, %s21, [#allocation6]
    $region5: #{tpu_custom_call.1} parent=1 // pred_fallthru
      _
    // Predicated region
    $region6: #{tpu_custom_call.1} parent=1 // pred_check
      _
    $region7: #{tpu_custom_call.1} parent=1 // pred_check_branch
      %25 = sbr.rel (0) target = $region9
    $region8: #{tpu_custom_call.1} parent=1 // pred_region
      %27 = vsyncadd [#allocation9], 0
      %s28 = sshll.u32 %s1, 4
      %s29 = int_to_ptr.hbm [resolvable:$true] %s28
      %s30 = sshll.u32 [#allocation8], 4
      %s31 = int_to_ptr.vmem [resolvable:$true] %s30
      %36 = dma.hbm_to_vmem [thread:$0]  %s29, 39936, %s31, [#allocation9], 1024, 1024, 64
    $region9: #{tpu_custom_call.1} parent=1 // pred_fallthru
      _
    // Predicated region
    $region10: #{tpu_custom_call.1} parent=1 // pred_check
      _
    $region11: #{tpu_custom_call.1} parent=1 // pred_check_branch
      %38 = sbr.rel (0) target = $region13
    $region12: #{tpu_custom_call.1} parent=1 // pred_region
      %40 = vsyncadd [#allocation9], 0
      %s42 = sshll.u32 %s2, 4
      %s43 = int_to_ptr.hbm [resolvable:$true] %s42
      %s44 = sshll.u32 [#allocation10], 4
      %s45 = int_to_ptr.vmem [resolvable:$true] %s44
      %47 = dma.hbm_to_vmem [thread:$0]  %s43, 2048, %s45, [#allocation9]
    $region13: #{tpu_custom_call.1} parent=1 // pred_fallthru
      _
    // Predicated region
    $region14: #{tpu_custom_call.1} parent=1 // pred_check
      _
    $region15: #{tpu_custom_call.1} parent=1 // pred_check_branch
      %49 = sbr.rel (0) target = $region17
    $region16: #{tpu_custom_call.1} parent=1 // pred_region
      %51 = dma.done [#allocation6], 192
    $region17: #{tpu_custom_call.1} parent=1 // pred_fallthru
      _
    // Predicated region
    $region18: #{tpu_custom_call.1} parent=1 // pred_check
      _
    $region19: #{tpu_custom_call.1} parent=1 // pred_check_branch
      %53 = sbr.rel (0) target = $region21
    $region20: #{tpu_custom_call.1} parent=1 // pred_region
      %55 = dma.done [#allocation9], 39936
    $region21: #{tpu_custom_call.1} parent=1 // pred_fallthru
      _
    // Predicated region
    $region22: #{tpu_custom_call.1} parent=1 // pred_check
      _
    $region23: #{tpu_custom_call.1} parent=1 // pred_check_branch
      %57 = sbr.rel (0) target = $region25
    $region24: #{tpu_custom_call.1} parent=1 // pred_region
      %59 = dma.done [#allocation9], 2048
    $region25: #{tpu_custom_call.1} parent=1 // pred_fallthru
      _
    // Predicated region
    $region26: #{tpu_custom_call.1} parent=1 // pred_check
      _
    $region27: #{tpu_custom_call.1} parent=1 // pred_check_branch
      %62 = sbr.rel target = $region29
    $region28: #{tpu_custom_call.1} parent=1 // pred_region
      %63 = sst [smem:[#allocation14]] [#allocation13]
      %64 = sst [smem:[#allocation15]] [#allocation12]
    $region29: #{tpu_custom_call.1} parent=1 // pred_fallthru
      _
    %66 = shalt.err (0)
    %s68 = sshll.u32 %s3, 4
    %s69 = int_to_ptr.hbm [resolvable:$true] %s68
    %s70 = sshll.u32 [#allocation2], 4
    %s71 = int_to_ptr.vmem [resolvable:$true] %s70
    %73 = dma.hbm_to_vmem [thread:$0]  %s69, 64000, %s71, [#allocation4]
    %s74 = scalar_lea.sflag [#allocation4], 1
    // Predicated region
    $region30: #{tpu_custom_call.1} parent=1 // pred_check
      _
    $region31: #{tpu_custom_call.1} parent=1 // pred_check_branch
      %76 = sbr.rel (0) target = $region33
    $region32: #{tpu_custom_call.1} parent=1 // pred_region
      %s77 = scalar_lea.vmem %s4, 752
      %s78 = scalar_lea.vmem [#allocation3], 752
      loop: start=0, step=1, limit=1
      $region34: #{tpu_custom_call.1} parent=32 // loop_pre_header
        _
      $region35: #{tpu_custom_call.1} parent=32 // loop_header
        %s80 = sphi 0, %s84
        %p81 = scmp.ge.s32.totalorder %s80, 1
        %s85 = sphi %s4, %s4
        %s86 = sphi [#allocation3], [#allocation3]
      $region36: #{tpu_custom_call.1} parent=32 // loop_header_branch
        %83 = sbr.rel (%p81) target = $region40
      $region37: #{tpu_custom_call.1} parent=32 // loop_body
        %v87 = vld [vmem:[%s85] sm:$0xff]
        %88 = vst [vmem:[%s86] sm:$0xff] %v87
        %v89 = vld [vmem:[%s85 + $0x8] sm:$0xff]
        %90 = vst [vmem:[%s86 + $0x8] sm:$0xff] %v89
        %v91 = vld [vmem:[%s85 + $0x10] sm:$0xff]
        %92 = vst [vmem:[%s86 + $0x10] sm:$0xff] %v91
        %v93 = vld [vmem:[%s85 + $0x18] sm:$0xff]
        %94 = vst [vmem:[%s86 + $0x18] sm:$0xff] %v93
        %v95 = vld [vmem:[%s85 + $0x20] sm:$0xff]
        %96 = vst [vmem:[%s86 + $0x20] sm:$0xff] %v95
        %v97 = vld [vmem:[%s85 + $0x28] sm:$0xff]
        %98 = vst [vmem:[%s86 + $0x28] sm:$0xff] %v97
        %v99 = vld [vmem:[%s85 + $0x30] sm:$0xff]
        %100 = vst [vmem:[%s86 + $0x30] sm:$0xff] %v99
        %v101 = vld [vmem:[%s85 + $0x38] sm:$0xff]
        %102 = vst [vmem:[%s86 + $0x38] sm:$0xff] %v101
        %v103 = vld [vmem:[%s85 + $0x40] sm:$0xff]
        %104 = vst [vmem:[%s86 + $0x40] sm:$0xff] %v103
        %v105 = vld [vmem:[%s85 + $0x48] sm:$0xff]
        %106 = vst [vmem:[%s86 + $0x48] sm:$0xff] %v105
        %v107 = vld [vmem:[%s85 + $0x50] sm:$0xff]
        %108 = vst [vmem:[%s86 + $0x50] sm:$0xff] %v107
        %v109 = vld [vmem:[%s85 + $0x58] sm:$0xff]
        %110 = vst [vmem:[%s86 + $0x58] sm:$0xff] %v109
        %v111 = vld [vmem:[%s85 + $0x60] sm:$0xff]
        %112 = vst [vmem:[%s86 + $0x60] sm:$0xff] %v111
        %v113 = vld [vmem:[%s85 + $0x68] sm:$0xff]
        %114 = vst [vmem:[%s86 + $0x68] sm:$0xff] %v113
        %v115 = vld [vmem:[%s85 + $0x70] sm:$0xff]
        %116 = vst [vmem:[%s86 + $0x70] sm:$0xff] %v115
        %v117 = vld [vmem:[%s85 + $0x78] sm:$0xff]
        %118 = vst [vmem:[%s86 + $0x78] sm:$0xff] %v117
        %v119 = vld [vmem:[%s85 + $0x80] sm:$0xff]
        %120 = vst [vmem:[%s86 + $0x80] sm:$0xff] %v119
        %v121 = vld [vmem:[%s85 + $0x88] sm:$0xff]
        %122 = vst [vmem:[%s86 + $0x88] sm:$0xff] %v121
        %v123 = vld [vmem:[%s85 + $0x90] sm:$0xff]
        %124 = vst [vmem:[%s86 + $0x90] sm:$0xff] %v123
        %v125 = vld [vmem:[%s85 + $0x98] sm:$0xff]
        %126 = vst [vmem:[%s86 + $0x98] sm:$0xff] %v125
        %v127 = vld [vmem:[%s85 + $0xa0] sm:$0xff]
        %128 = vst [vmem:[%s86 + $0xa0] sm:$0xff] %v127
        %v129 = vld [vmem:[%s85 + $0xa8] sm:$0xff]
        %130 = vst [vmem:[%s86 + $0xa8] sm:$0xff] %v129
        %v131 = vld [vmem:[%s85 + $0xb0] sm:$0xff]
        %132 = vst [vmem:[%s86 + $0xb0] sm:$0xff] %v131
        %v133 = vld [vmem:[%s85 + $0xb8] sm:$0xff]
        %134 = vst [vmem:[%s86 + $0xb8] sm:$0xff] %v133
        %v135 = vld [vmem:[%s85 + $0xc0] sm:$0xff]
        %136 = vst [vmem:[%s86 + $0xc0] sm:$0xff] %v135
        %v137 = vld [vmem:[%s85 + $0xc8] sm:$0xff]
        %138 = vst [vmem:[%s86 + $0xc8] sm:$0xff] %v137
        %v139 = vld [vmem:[%s85 + $0xd0] sm:$0xff]
        %140 = vst [vmem:[%s86 + $0xd0] sm:$0xff] %v139
        %v141 = vld [vmem:[%s85 + $0xd8] sm:$0xff]
        %142 = vst [vmem:[%s86 + $0xd8] sm:$0xff] %v141
        %v143 = vld [vmem:[%s85 + $0xe0] sm:$0xff]
        %144 = vst [vmem:[%s86 + $0xe0] sm:$0xff] %v143
        %v145 = vld [vmem:[%s85 + $0xe8] sm:$0xff]
        %146 = vst [vmem:[%s86 + $0xe8] sm:$0xff] %v145
        %v147 = vld [vmem:[%s85 + $0xf0] sm:$0xff]
        %148 = vst [vmem:[%s86 + $0xf0] sm:$0xff] %v147
        %v149 = vld [vmem:[%s85 + $0xf8] sm:$0xff]
        %150 = vst [vmem:[%s86 + $0xf8] sm:$0xff] %v149
        %v151 = vld [vmem:[%s85 + $0x100] sm:$0xff]
        %152 = vst [vmem:[%s86 + $0x100] sm:$0xff] %v151
        %v153 = vld [vmem:[%s85 + $0x108] sm:$0xff]
        %154 = vst [vmem:[%s86 + $0x108] sm:$0xff] %v153
        %v155 = vld [vmem:[%s85 + $0x110] sm:$0xff]
        %156 = vst [vmem:[%s86 + $0x110] sm:$0xff] %v155
        %v157 = vld [vmem:[%s85 + $0x118] sm:$0xff]
        %158 = vst [vmem:[%s86 + $0x118] sm:$0xff] %v157
        %v159 = vld [vmem:[%s85 + $0x120] sm:$0xff]
        %160 = vst [vmem:[%s86 + $0x120] sm:$0xff] %v159
        %v161 = vld [vmem:[%s85 + $0x128] sm:$0xff]
        %162 = vst [vmem:[%s86 + $0x128] sm:$0xff] %v161
        %v163 = vld [vmem:[%s85 + $0x130] sm:$0xff]
        %164 = vst [vmem:[%s86 + $0x130] sm:$0xff] %v163
        %v165 = vld [vmem:[%s85 + $0x138] sm:$0xff]
        %166 = vst [vmem:[%s86 + $0x138] sm:$0xff] %v165
        %v167 = vld [vmem:[%s85 + $0x140] sm:$0xff]
        %168 = vst [vmem:[%s86 + $0x140] sm:$0xff] %v167
        %v169 = vld [vmem:[%s85 + $0x148] sm:$0xff]
        %170 = vst [vmem:[%s86 + $0x148] sm:$0xff] %v169
        %v171 = vld [vmem:[%s85 + $0x150] sm:$0xff]
        %172 = vst [vmem:[%s86 + $0x150] sm:$0xff] %v171
        %v173 = vld [vmem:[%s85 + $0x158] sm:$0xff]
        %174 = vst [vmem:[%s86 + $0x158] sm:$0xff] %v173
        %v175 = vld [vmem:[%s85 + $0x160] sm:$0xff]
        %176 = vst [vmem:[%s86 + $0x160] sm:$0xff] %v175
        %v177 = vld [vmem:[%s85 + $0x168] sm:$0xff]
        %178 = vst [vmem:[%s86 + $0x168] sm:$0xff] %v177
        %v179 = vld [vmem:[%s85 + $0x170] sm:$0xff]
        %180 = vst [vmem:[%s86 + $0x170] sm:$0xff] %v179
        %v181 = vld [vmem:[%s85 + $0x178] sm:$0xff]
        %182 = vst [vmem:[%s86 + $0x178] sm:$0xff] %v181
        %v183 = vld [vmem:[%s85 + $0x180] sm:$0xff]
        %184 = vst [vmem:[%s86 + $0x180] sm:$0xff] %v183
        %v185 = vld [vmem:[%s85 + $0x188] sm:$0xff]
        %186 = vst [vmem:[%s86 + $0x188] sm:$0xff] %v185
        %v187 = vld [vmem:[%s85 + $0x190] sm:$0xff]
        %188 = vst [vmem:[%s86 + $0x190] sm:$0xff] %v187
        %v189 = vld [vmem:[%s85 + $0x198] sm:$0xff]
        %190 = vst [vmem:[%s86 + $0x198] sm:$0xff] %v189
        %v191 = vld [vmem:[%s85 + $0x1a0] sm:$0xff]
        %192 = vst [vmem:[%s86 + $0x1a0] sm:$0xff] %v191
        %v193 = vld [vmem:[%s85 + $0x1a8] sm:$0xff]
        %194 = vst [vmem:[%s86 + $0x1a8] sm:$0xff] %v193
        %v195 = vld [vmem:[%s85 + $0x1b0] sm:$0xff]
        %196 = vst [vmem:[%s86 + $0x1b0] sm:$0xff] %v195
        %v197 = vld [vmem:[%s85 + $0x1b8] sm:$0xff]
        %198 = vst [vmem:[%s86 + $0x1b8] sm:$0xff] %v197
        %v199 = vld [vmem:[%s85 + $0x1c0] sm:$0xff]
        %200 = vst [vmem:[%s86 + $0x1c0] sm:$0xff] %v199
        %v201 = vld [vmem:[%s85 + $0x1c8] sm:$0xff]
        %202 = vst [vmem:[%s86 + $0x1c8] sm:$0xff] %v201
        %v203 = vld [vmem:[%s85 + $0x1d0] sm:$0xff]
        %204 = vst [vmem:[%s86 + $0x1d0] sm:$0xff] %v203
        %v205 = vld [vmem:[%s85 + $0x1d8] sm:$0xff]
        %206 = vst [vmem:[%s86 + $0x1d8] sm:$0xff] %v205
        %v207 = vld [vmem:[%s85 + $0x1e0] sm:$0xff]
        %208 = vst [vmem:[%s86 + $0x1e0] sm:$0xff] %v207
        %v209 = vld [vmem:[%s85 + $0x1e8] sm:$0xff]
        %210 = vst [vmem:[%s86 + $0x1e8] sm:$0xff] %v209
        %v211 = vld [vmem:[%s85 + $0x1f0] sm:$0xff]
        %212 = vst [vmem:[%s86 + $0x1f0] sm:$0xff] %v211
        %v213 = vld [vmem:[%s85 + $0x1f8] sm:$0xff]
        %214 = vst [vmem:[%s86 + $0x1f8] sm:$0xff] %v213
        %v215 = vld [vmem:[%s85 + $0x200] sm:$0xff]
        %216 = vst [vmem:[%s86 + $0x200] sm:$0xff] %v215
        %v217 = vld [vmem:[%s85 + $0x208] sm:$0xff]
        %218 = vst [vmem:[%s86 + $0x208] sm:$0xff] %v217
        %v219 = vld [vmem:[%s85 + $0x210] sm:$0xff]
        %220 = vst [vmem:[%s86 + $0x210] sm:$0xff] %v219
        %v221 = vld [vmem:[%s85 + $0x218] sm:$0xff]
        %222 = vst [vmem:[%s86 + $0x218] sm:$0xff] %v221
        %v223 = vld [vmem:[%s85 + $0x220] sm:$0xff]
        %224 = vst [vmem:[%s86 + $0x220] sm:$0xff] %v223
        %v225 = vld [vmem:[%s85 + $0x228] sm:$0xff]
        %226 = vst [vmem:[%s86 + $0x228] sm:$0xff] %v225
        %v227 = vld [vmem:[%s85 + $0x230] sm:$0xff]
        %228 = vst [vmem:[%s86 + $0x230] sm:$0xff] %v227
        %v229 = vld [vmem:[%s85 + $0x238] sm:$0xff]
        %230 = vst [vmem:[%s86 + $0x238] sm:$0xff] %v229
        %v231 = vld [vmem:[%s85 + $0x240] sm:$0xff]
        %232 = vst [vmem:[%s86 + $0x240] sm:$0xff] %v231
        %v233 = vld [vmem:[%s85 + $0x248] sm:$0xff]
        %234 = vst [vmem:[%s86 + $0x248] sm:$0xff] %v233
        %v235 = vld [vmem:[%s85 + $0x250] sm:$0xff]
        %236 = vst [vmem:[%s86 + $0x250] sm:$0xff] %v235
        %v237 = vld [vmem:[%s85 + $0x258] sm:$0xff]
        %238 = vst [vmem:[%s86 + $0x258] sm:$0xff] %v237
        %v239 = vld [vmem:[%s85 + $0x260] sm:$0xff]
        %240 = vst [vmem:[%s86 + $0x260] sm:$0xff] %v239
        %v241 = vld [vmem:[%s85 + $0x268] sm:$0xff]
        %242 = vst [vmem:[%s86 + $0x268] sm:$0xff] %v241
        %v243 = vld [vmem:[%s85 + $0x270] sm:$0xff]
        %244 = vst [vmem:[%s86 + $0x270] sm:$0xff] %v243
        %v245 = vld [vmem:[%s85 + $0x278] sm:$0xff]
        %246 = vst [vmem:[%s86 + $0x278] sm:$0xff] %v245
        %v247 = vld [vmem:[%s85 + $0x280] sm:$0xff]
        %248 = vst [vmem:[%s86 + $0x280] sm:$0xff] %v247
        %v249 = vld [vmem:[%s85 + $0x288] sm:$0xff]
        %250 = vst [vmem:[%s86 + $0x288] sm:$0xff] %v249
        %v251 = vld [vmem:[%s85 + $0x290] sm:$0xff]
        %252 = vst [vmem:[%s86 + $0x290] sm:$0xff] %v251
        %v253 = vld [vmem:[%s85 + $0x298] sm:$0xff]
        %254 = vst [vmem:[%s86 + $0x298] sm:$0xff] %v253
        %v255 = vld [vmem:[%s85 + $0x2a0] sm:$0xff]
        %256 = vst [vmem:[%s86 + $0x2a0] sm:$0xff] %v255
        %v257 = vld [vmem:[%s85 + $0x2a8] sm:$0xff]
        %258 = vst [vmem:[%s86 + $0x2a8] sm:$0xff] %v257
        %v259 = vld [vmem:[%s85 + $0x2b0] sm:$0xff]
        %260 = vst [vmem:[%s86 + $0x2b0] sm:$0xff] %v259
        %v261 = vld [vmem:[%s85 + $0x2b8] sm:$0xff]
        %262 = vst [vmem:[%s86 + $0x2b8] sm:$0xff] %v261
        %v263 = vld [vmem:[%s85 + $0x2c0] sm:$0xff]
        %264 = vst [vmem:[%s86 + $0x2c0] sm:$0xff] %v263
        %v265 = vld [vmem:[%s85 + $0x2c8] sm:$0xff]
        %266 = vst [vmem:[%s86 + $0x2c8] sm:$0xff] %v265
        %v267 = vld [vmem:[%s85 + $0x2d0] sm:$0xff]
        %268 = vst [vmem:[%s86 + $0x2d0] sm:$0xff] %v267
        %v269 = vld [vmem:[%s85 + $0x2d8] sm:$0xff]
        %270 = vst [vmem:[%s86 + $0x2d8] sm:$0xff] %v269
        %v271 = vld [vmem:[%s85 + $0x2e0] sm:$0xff]
        %272 = vst [vmem:[%s86 + $0x2e0] sm:$0xff] %v271
        %v273 = vld [vmem:[%s85 + $0x2e8] sm:$0xff]
        %274 = vst [vmem:[%s86 + $0x2e8] sm:$0xff] %v273
      $region38: #{tpu_custom_call.1} parent=32 // loop_footer
        %s84 = sadd.s32 1, %s80
      $region39: #{tpu_custom_call.1} parent=32 // loop_footer_branch
        %79 = sbr.rel target = $region35
      $region40: #{tpu_custom_call.1} parent=32 // loop_exit
        _
      %s276 = ssub.s32 16, 1
      loop: start=0, step=1, limit=1
      $region41: #{tpu_custom_call.1} parent=32 // loop_pre_header
        _
      $region42: #{tpu_custom_call.1} parent=32 // loop_header
        %s278 = sphi 0, %s282
        %p279 = scmp.ge.s32.totalorder %s278, 1
        %s283 = sphi %s77, %s77
        %s284 = sphi %s78, %s78
      $region43: #{tpu_custom_call.1} parent=32 // loop_header_branch
        %281 = sbr.rel (%p279) target = $region47
      $region44: #{tpu_custom_call.1} parent=32 // loop_body
        %v285 = vld [vmem:[%s283] sm:%s276]
        %286 = vst [vmem:[%s284] sm:%s276] %v285
      $region45: #{tpu_custom_call.1} parent=32 // loop_footer
        %s282 = sadd.s32 1, %s278
      $region46: #{tpu_custom_call.1} parent=32 // loop_footer_branch
        %277 = sbr.rel target = $region42
      $region47: #{tpu_custom_call.1} parent=32 // loop_exit
        _
    $region33: #{tpu_custom_call.1} parent=1 // pred_fallthru
      _
    // Predicated region
    $region48: #{tpu_custom_call.1} parent=1 // pred_check
      _
    $region49: #{tpu_custom_call.1} parent=1 // pred_check_branch
      %289 = sbr.rel (0) target = $region51
    $region50: #{tpu_custom_call.1} parent=1 // pred_region
      %290 = vsyncadd %s74, 12096
    $region51: #{tpu_custom_call.1} parent=1 // pred_fallthru
      _
    %v291 = vld [vmem:[#allocation5] sm:$0xff]
    %v292 = vld [vmem:[#allocation5 + $0x8] sm:$0xf]
    %v293 = vld [vmem:[#allocation10] ss:$8 sm:$0xf]
    %v294 = vld [vmem:[#allocation10] ss:$8 sm:$0xf0]
    %v295 = vor.u32 %v293, %v294
    %s296 = scalar_lea.vmem [#allocation10], 64
    %v297 = vld [vmem:[%s296] ss:$8 sm:$0xf]
    %v298 = vld [vmem:[%s296] ss:$8 sm:$0xf0]
    %v299 = vor.u32 %v297, %v298
    %s300 = scalar_lea.vmem [#allocation10], 1
    %v301 = vld [vmem:[%s300] ss:$8 sm:$0xf]
    %v302 = vld [vmem:[%s300] ss:$8 sm:$0xf0]
    %v303 = vor.u32 %v301, %v302
    %s304 = scalar_lea.vmem [#allocation10], 65
    %v305 = vld [vmem:[%s304] ss:$8 sm:$0xf]
    %v306 = vld [vmem:[%s304] ss:$8 sm:$0xf0]
    %v307 = vor.u32 %v305, %v306
    %s308 = scalar_lea.vmem [#allocation10], 2
    %v309 = vld [vmem:[%s308] ss:$8 sm:$0xf]
    %v310 = vld [vmem:[%s308] ss:$8 sm:$0xf0]
    %v311 = vor.u32 %v309, %v310
    %s312 = scalar_lea.vmem [#allocation10], 66
    %v313 = vld [vmem:[%s312] ss:$8 sm:$0xf]
    %v314 = vld [vmem:[%s312] ss:$8 sm:$0xf0]
    %v315 = vor.u32 %v313, %v314
    %s316 = scalar_lea.vmem [#allocation10], 3
    %v317 = vld [vmem:[%s316] ss:$8 sm:$0xf]
    %s318 = scalar_lea.vmem [#allocation10], 4
    %v319 = vld [vmem:[%s318] ss:$8 sm:$0xf]
    %s320 = scalar_lea.vmem [#allocation10], 5
    %v321 = vld [vmem:[%s320] ss:$8 sm:$0xf]
    %s322 = scalar_lea.vmem [#allocation10], 6
    %v323 = vld [vmem:[%s322] ss:$8 sm:$0x7]
    %326 = vst [vmem:[#allocation1] ss:$2 sm:$0xff] %v291
    %s327 = scalar_lea.vmem [#allocation1], 16
    %328 = vst [vmem:[%s327] ss:$2 sm:$0xff] %v292
    %v329 = vld.sshfl [vmem:[#allocation1] sm:$0xff pattern:$0x75316420]
    %v330 = vld.sshfl [vmem:[#allocation1 + $0x8] sm:$0xff pattern:$0x75316420]
    %v331 = vld.sshfl [vmem:[#allocation1 + $0x10] sm:$0xff pattern:$0x75316420]
    %v335 = vpack.c.bf16 %v329, %v329
    %v336 = vpack.c.bf16 %v330, %v330
    %v337 = vpack.c.bf16 %v331, %v331
    %v338 = vld [vmem:[#allocation8] sm:$0xff]
    %v339 = vld [vmem:[#allocation8 + $0x8] sm:$0xff]
    %v340 = vld [vmem:[#allocation8 + $0x10] sm:$0xff]
    %v341 = vld [vmem:[#allocation8 + $0x18] sm:$0xff]
    %v342 = vld [vmem:[#allocation8 + $0x20] sm:$0xff]
    %v343 = vld [vmem:[#allocation8 + $0x28] sm:$0xff]
    %v344 = vld [vmem:[#allocation8 + $0x30] sm:$0xff]
    %v345 = vld [vmem:[#allocation8 + $0x38] sm:$0xff]
    %v346 = vld [vmem:[#allocation8 + $0x40] sm:$0xff]
    %v347 = vld [vmem:[#allocation8 + $0x48] sm:$0xff]
    %v348 = vld [vmem:[#allocation8 + $0x50] sm:$0xff]
    %v349 = vld [vmem:[#allocation8 + $0x58] sm:$0xff]
    %v350 = vld [vmem:[#allocation8 + $0x60] sm:$0xff]
    %v351 = vld [vmem:[#allocation8 + $0x68] sm:$0xff]
    %v352 = vld [vmem:[#allocation8 + $0x70] sm:$0xff]
    %v353 = vld [vmem:[#allocation8 + $0x78] sm:$0xff]
    %v354 = vld [vmem:[#allocation8 + $0x80] sm:$0xff]
    %v355 = vld [vmem:[#allocation8 + $0x88] sm:$0xff]
    %v356 = vld [vmem:[#allocation8 + $0x90] sm:$0xff]
    %v357 = vld [vmem:[#allocation8 + $0x98] sm:$0xff]
    %v358 = vld [vmem:[#allocation8 + $0xa0] sm:$0xff]
    %v359 = vld [vmem:[#allocation8 + $0xa8] sm:$0xff]
    %v360 = vld [vmem:[#allocation8 + $0xb0] sm:$0xff]
    %v361 = vld [vmem:[#allocation8 + $0xb8] sm:$0xff]
    %v362 = vld [vmem:[#allocation8 + $0xc0] sm:$0xff]
    %v363 = vld [vmem:[#allocation8 + $0xc8] sm:$0xff]
    %v364 = vld [vmem:[#allocation8 + $0xd0] sm:$0xff]
    %v365 = vld [vmem:[#allocation8 + $0xd8] sm:$0xff]
    %v366 = vld [vmem:[#allocation8 + $0xe0] sm:$0xff]
    %v367 = vld [vmem:[#allocation8 + $0xe8] sm:$0xff]
    %v368 = vld [vmem:[#allocation8 + $0xf0] sm:$0xff]
    %v369 = vld [vmem:[#allocation8 + $0xf8] sm:$0xff]
    %v370 = vld [vmem:[#allocation8 + $0x100] sm:$0xff]
    %v371 = vld [vmem:[#allocation8 + $0x108] sm:$0xff]
    %v372 = vld [vmem:[#allocation8 + $0x110] sm:$0xff]
    %v373 = vld [vmem:[#allocation8 + $0x118] sm:$0xff]
    %v374 = vld [vmem:[#allocation8 + $0x120] sm:$0xff]
    %v375 = vld [vmem:[#allocation8 + $0x128] sm:$0xff]
    %v376 = vld [vmem:[#allocation8 + $0x130] sm:$0xff]
    %v377 = vld [vmem:[#allocation8 + $0x138] sm:$0xff]
    %v378 = vld [vmem:[#allocation8 + $0x140] sm:$0xff]
    %v379 = vld [vmem:[#allocation8 + $0x148] sm:$0xff]
    %v380 = vld [vmem:[#allocation8 + $0x150] sm:$0xff]
    %v381 = vld [vmem:[#allocation8 + $0x158] sm:$0xff]
    %v382 = vld [vmem:[#allocation8 + $0x160] sm:$0xff]
    %v383 = vld [vmem:[#allocation8 + $0x168] sm:$0xff]
    %v384 = vld [vmem:[#allocation8 + $0x170] sm:$0xff]
    %v385 = vld [vmem:[#allocation8 + $0x178] sm:$0xff]
    %v386 = vld [vmem:[#allocation8 + $0x180] sm:$0xff]
    %v387 = vld [vmem:[#allocation8 + $0x188] sm:$0xff]
    %v388 = vld [vmem:[#allocation8 + $0x190] sm:$0xff]
    %v389 = vld [vmem:[#allocation8 + $0x198] sm:$0xff]
    %v390 = vld [vmem:[#allocation8 + $0x1a0] sm:$0xff]
    %v391 = vld [vmem:[#allocation8 + $0x1a8] sm:$0xff]
    %v392 = vld [vmem:[#allocation8 + $0x1b0] sm:$0xff]
    %v393 = vld [vmem:[#allocation8 + $0x1b8] sm:$0xff]
    %v394 = vld [vmem:[#allocation8 + $0x1c0] sm:$0xff]
    %v395 = vld [vmem:[#allocation8 + $0x1c8] sm:$0xff]
    %v396 = vld [vmem:[#allocation8 + $0x1d0] sm:$0xff]
    %v397 = vld [vmem:[#allocation8 + $0x1d8] sm:$0xff]
    %v398 = vld [vmem:[#allocation8 + $0x1e0] sm:$0xff]
    %v399 = vld [vmem:[#allocation8 + $0x1e8] sm:$0xff]
    %v400 = vld [vmem:[#allocation8 + $0x1f0] sm:$0xff]
    %v401 = vld [vmem:[#allocation8 + $0x1f8] sm:$0xff]
    %v402 = vld [vmem:[#allocation8 + $0x200] sm:$0xff]
    %v403 = vld [vmem:[#allocation8 + $0x208] sm:$0xff]
    %v404 = vld [vmem:[#allocation8 + $0x210] sm:$0xff]
    %v405 = vld [vmem:[#allocation8 + $0x218] sm:$0xff]
    %v406 = vld [vmem:[#allocation8 + $0x220] sm:$0xff]
    %v407 = vld [vmem:[#allocation8 + $0x228] sm:$0xff]
    %v408 = vld [vmem:[#allocation8 + $0x230] sm:$0xff]
    %v409 = vld [vmem:[#allocation8 + $0x238] sm:$0xff]
    %v410 = vld [vmem:[#allocation8 + $0x240] sm:$0xff]
    %v411 = vld [vmem:[#allocation8 + $0x248] sm:$0xff]
    %v412 = vld [vmem:[#allocation8 + $0x250] sm:$0xff]
    %v413 = vld [vmem:[#allocation8 + $0x258] sm:$0xff]
    %v414 = vld [vmem:[#allocation8 + $0x260] sm:$0xff]
    %v415 = vld [vmem:[#allocation8 + $0x268] sm:$0xff]
    %v416 = vld [vmem:[#allocation8 + $0x270] sm:$0xff]
    %v417 = vld [vmem:[#allocation8 + $0x278] sm:$0xff]
    %v418 = vld [vmem:[#allocation8 + $0x280] sm:$0xff]
    %v419 = vld [vmem:[#allocation8 + $0x288] sm:$0xff]
    %v420 = vld [vmem:[#allocation8 + $0x290] sm:$0xff]
    %v421 = vld [vmem:[#allocation8 + $0x298] sm:$0xff]
    %v422 = vld [vmem:[#allocation8 + $0x2a0] sm:$0xff]
    %v423 = vld [vmem:[#allocation8 + $0x2a8] sm:$0xff]
    %v424 = vld [vmem:[#allocation8 + $0x2b0] sm:$0xff]
    %v425 = vld [vmem:[#allocation8 + $0x2b8] sm:$0xff]
    %v426 = vld [vmem:[#allocation8 + $0x2c0] sm:$0xff]
    %v427 = vld [vmem:[#allocation8 + $0x2c8] sm:$0xff]
    %v428 = vld [vmem:[#allocation8 + $0x2d0] sm:$0xff]
    %v429 = vld [vmem:[#allocation8 + $0x2d8] sm:$0xff]
    %v430 = vld [vmem:[#allocation8 + $0x2e0] sm:$0xff]
    %v431 = vld [vmem:[#allocation8 + $0x2e8] sm:$0xff]
    %v432 = vld [vmem:[#allocation8 + $0x2f0] sm:$0xff]
    %v433 = vld [vmem:[#allocation8 + $0x2f8] sm:$0xff]
    %v434 = vld [vmem:[#allocation8 + $0x300] sm:$0xff]
    %v435 = vld [vmem:[#allocation8 + $0x308] sm:$0xff]
    %v436 = vld [vmem:[#allocation8 + $0x310] sm:$0xff]
    %v437 = vld [vmem:[#allocation8 + $0x318] sm:$0xff]
    %v438 = vld [vmem:[#allocation8 + $0x320] sm:$0xff]
    %v439 = vld [vmem:[#allocation8 + $0x328] sm:$0xff]
    %v440 = vld [vmem:[#allocation8 + $0x330] sm:$0xff]
    %v441 = vld [vmem:[#allocation8 + $0x338] sm:$0xff]
    %v442 = vld [vmem:[#allocation8 + $0x340] sm:$0xff]
    %v443 = vld [vmem:[#allocation8 + $0x348] sm:$0xff]
    %v444 = vld [vmem:[#allocation8 + $0x350] sm:$0xff]
    %v445 = vld [vmem:[#allocation8 + $0x358] sm:$0xff]
    %v446 = vld [vmem:[#allocation8 + $0x360] sm:$0xff]
    %v447 = vld [vmem:[#allocation8 + $0x368] sm:$0xff]
    %v448 = vld [vmem:[#allocation8 + $0x370] sm:$0xff]
    %v449 = vld [vmem:[#allocation8 + $0x378] sm:$0xff]
    %v450 = vld [vmem:[#allocation8 + $0x380] sm:$0xff]
    %v451 = vld [vmem:[#allocation8 + $0x388] sm:$0xff]
    %v452 = vld [vmem:[#allocation8 + $0x390] sm:$0xff]
    %v453 = vld [vmem:[#allocation8 + $0x398] sm:$0xff]
    %v454 = vld [vmem:[#allocation8 + $0x3a0] sm:$0xff]
    %v455 = vld [vmem:[#allocation8 + $0x3a8] sm:$0xff]
    %v456 = vld [vmem:[#allocation8 + $0x3b0] sm:$0xff]
    %v457 = vld [vmem:[#allocation8 + $0x3b8] sm:$0xff]
    %v458 = vld [vmem:[#allocation8 + $0x3c0] sm:$0xff]
    %v459 = vld [vmem:[#allocation8 + $0x3c8] sm:$0xff]
    %v460 = vld [vmem:[#allocation8 + $0x3d0] sm:$0xff]
    %v461 = vld [vmem:[#allocation8 + $0x3d8] sm:$0xff]
    %v462 = vld [vmem:[#allocation8 + $0x3e0] sm:$0xff]
    %v463 = vld [vmem:[#allocation8 + $0x3e8] sm:$0xff]
    %v464 = vld [vmem:[#allocation8 + $0x3f0] sm:$0xff]
    %v465 = vld [vmem:[#allocation8 + $0x3f8] sm:$0xff]
    %v466 = vld [vmem:[#allocation8 + $0x400] sm:$0xff]
    %v467 = vld [vmem:[#allocation8 + $0x408] sm:$0xff]
    %v468 = vld [vmem:[#allocation8 + $0x410] sm:$0xff]
    %v469 = vld [vmem:[#allocation8 + $0x418] sm:$0xff]
    %v470 = vld [vmem:[#allocation8 + $0x420] sm:$0xff]
    %v471 = vld [vmem:[#allocation8 + $0x428] sm:$0xff]
    %v472 = vld [vmem:[#allocation8 + $0x430] sm:$0xff]
    %v473 = vld [vmem:[#allocation8 + $0x438] sm:$0xff]
    %v474 = vld [vmem:[#allocation8 + $0x440] sm:$0xff]
    %v475 = vld [vmem:[#allocation8 + $0x448] sm:$0xff]
    %v476 = vld [vmem:[#allocation8 + $0x450] sm:$0xff]
    %v477 = vld [vmem:[#allocation8 + $0x458] sm:$0xff]
    %v478 = vld [vmem:[#allocation8 + $0x460] sm:$0xff]
    %v479 = vld [vmem:[#allocation8 + $0x468] sm:$0xff]
    %v480 = vld [vmem:[#allocation8 + $0x470] sm:$0xff]
    %v481 = vld [vmem:[#allocation8 + $0x478] sm:$0xff]
    %v482 = vld [vmem:[#allocation8 + $0x480] sm:$0xff]
    %v483 = vld [vmem:[#allocation8 + $0x488] sm:$0xff]
    %v484 = vld [vmem:[#allocation8 + $0x490] sm:$0xff]
    %v485 = vld [vmem:[#allocation8 + $0x498] sm:$0xff]
    %v486 = vld [vmem:[#allocation8 + $0x4a0] sm:$0xff]
    %v487 = vld [vmem:[#allocation8 + $0x4a8] sm:$0xff]
    %v488 = vld [vmem:[#allocation8 + $0x4b0] sm:$0xff]
    %v489 = vld [vmem:[#allocation8 + $0x4b8] sm:$0xff]
    %v490 = vld [vmem:[#allocation8 + $0x4c0] sm:$0xff]
    %v491 = vld [vmem:[#allocation8 + $0x4c8] sm:$0xff]
    %v492 = vld [vmem:[#allocation8 + $0x4d0] sm:$0xff]
    %v493 = vld [vmem:[#allocation8 + $0x4d8] sm:$0xff]
    %v494 = vld [vmem:[#allocation8 + $0x4e0] sm:$0xff]
    %v495 = vld [vmem:[#allocation8 + $0x4e8] sm:$0xff]
    %v496 = vld [vmem:[#allocation8 + $0x4f0] sm:$0xff]
    %v497 = vld [vmem:[#allocation8 + $0x4f8] sm:$0xff]
    %v498 = vld [vmem:[#allocation8 + $0x500] sm:$0xff]
    %v499 = vld [vmem:[#allocation8 + $0x508] sm:$0xff]
    %v500 = vld [vmem:[#allocation8 + $0x510] sm:$0xff]
    %v501 = vld [vmem:[#allocation8 + $0x518] sm:$0xff]
    %v502 = vld [vmem:[#allocation8 + $0x520] sm:$0xff]
    %v503 = vld [vmem:[#allocation8 + $0x528] sm:$0xff]
    %v504 = vld [vmem:[#allocation8 + $0x530] sm:$0xff]
    %v505 = vld [vmem:[#allocation8 + $0x538] sm:$0xff]
    %v506 = vld [vmem:[#allocation8 + $0x540] sm:$0xff]
    %v507 = vld [vmem:[#allocation8 + $0x548] sm:$0xff]
    %v508 = vld [vmem:[#allocation8 + $0x550] sm:$0xff]
    %v509 = vld [vmem:[#allocation8 + $0x558] sm:$0xff]
    %v510 = vld [vmem:[#allocation8 + $0x560] sm:$0xff]
    %v511 = vld [vmem:[#allocation8 + $0x568] sm:$0xff]
    %v512 = vld [vmem:[#allocation8 + $0x570] sm:$0xff]
    %v513 = vld [vmem:[#allocation8 + $0x578] sm:$0xff]
    %v514 = vld [vmem:[#allocation8 + $0x580] sm:$0xff]
    %v515 = vld [vmem:[#allocation8 + $0x588] sm:$0xff]
    %v516 = vld [vmem:[#allocation8 + $0x590] sm:$0xff]
    %v517 = vld [vmem:[#allocation8 + $0x598] sm:$0xff]
    %v518 = vld [vmem:[#allocation8 + $0x5a0] sm:$0xff]
    %v519 = vld [vmem:[#allocation8 + $0x5a8] sm:$0xff]
    %v520 = vld [vmem:[#allocation8 + $0x5b0] sm:$0xff]
    %v521 = vld [vmem:[#allocation8 + $0x5b8] sm:$0xff]
    %v522 = vld [vmem:[#allocation8 + $0x5c0] sm:$0xff]
    %v523 = vld [vmem:[#allocation8 + $0x5c8] sm:$0xff]
    %v524 = vld [vmem:[#allocation8 + $0x5d0] sm:$0xff]
    %v525 = vld [vmem:[#allocation8 + $0x5d8] sm:$0xff]
    %v526 = vld [vmem:[#allocation8 + $0x5e0] sm:$0xff]
    %v527 = vld [vmem:[#allocation8 + $0x5e8] sm:$0xff]
    %v528 = vld [vmem:[#allocation8 + $0x5f0] sm:$0xff]
    %v529 = vld [vmem:[#allocation8 + $0x5f8] sm:$0xff]
    %v530 = vld [vmem:[#allocation8 + $0x600] sm:$0xff]
    %v531 = vld [vmem:[#allocation8 + $0x608] sm:$0xff]
    %v532 = vld [vmem:[#allocation8 + $0x610] sm:$0xff]
    %v533 = vld [vmem:[#allocation8 + $0x618] sm:$0xff]
    %v534 = vld [vmem:[#allocation8 + $0x620] sm:$0xff]
    %v535 = vld [vmem:[#allocation8 + $0x628] sm:$0xff]
    %v536 = vld [vmem:[#allocation8 + $0x630] sm:$0xff]
    %v537 = vld [vmem:[#allocation8 + $0x638] sm:$0xff]
    %v538 = vld [vmem:[#allocation8 + $0x640] sm:$0xff]
    %v539 = vld [vmem:[#allocation8 + $0x648] sm:$0xff]
    %v540 = vld [vmem:[#allocation8 + $0x650] sm:$0xff]
    %v541 = vld [vmem:[#allocation8 + $0x658] sm:$0xff]
    %v542 = vld [vmem:[#allocation8 + $0x660] sm:$0xff]
    %v543 = vld [vmem:[#allocation8 + $0x668] sm:$0xff]
    %v544 = vld [vmem:[#allocation8 + $0x670] sm:$0xff]
    %v545 = vld [vmem:[#allocation8 + $0x678] sm:$0xff]
    %v546 = vld [vmem:[#allocation8 + $0x680] sm:$0xff]
    %v547 = vld [vmem:[#allocation8 + $0x688] sm:$0xff]
    %v548 = vld [vmem:[#allocation8 + $0x690] sm:$0xff]
    %v549 = vld [vmem:[#allocation8 + $0x698] sm:$0xff]
    %v550 = vld [vmem:[#allocation8 + $0x6a0] sm:$0xff]
    %v551 = vld [vmem:[#allocation8 + $0x6a8] sm:$0xff]
    %v552 = vld [vmem:[#allocation8 + $0x6b0] sm:$0xff]
    %v553 = vld [vmem:[#allocation8 + $0x6b8] sm:$0xff]
    %v554 = vld [vmem:[#allocation8 + $0x6c0] sm:$0xff]
    %v555 = vld [vmem:[#allocation8 + $0x6c8] sm:$0xff]
    %v556 = vld [vmem:[#allocation8 + $0x6d0] sm:$0xff]
    %v557 = vld [vmem:[#allocation8 + $0x6d8] sm:$0xff]
    %v558 = vld [vmem:[#allocation8 + $0x6e0] sm:$0xff]
    %v559 = vld [vmem:[#allocation8 + $0x6e8] sm:$0xff]
    %v560 = vld [vmem:[#allocation8 + $0x6f0] sm:$0xff]
    %v561 = vld [vmem:[#allocation8 + $0x6f8] sm:$0xff]
    %v562 = vld [vmem:[#allocation8 + $0x700] sm:$0xff]
    %v563 = vld [vmem:[#allocation8 + $0x708] sm:$0xff]
    %v564 = vld [vmem:[#allocation8 + $0x710] sm:$0xff]
    %v565 = vld [vmem:[#allocation8 + $0x718] sm:$0xff]
    %v566 = vld [vmem:[#allocation8 + $0x720] sm:$0xff]
    %v567 = vld [vmem:[#allocation8 + $0x728] sm:$0xff]
    %v568 = vld [vmem:[#allocation8 + $0x730] sm:$0xff]
    %v569 = vld [vmem:[#allocation8 + $0x738] sm:$0xff]
    %v570 = vld [vmem:[#allocation8 + $0x740] sm:$0xff]
    %v571 = vld [vmem:[#allocation8 + $0x748] sm:$0xff]
    %v572 = vld [vmem:[#allocation8 + $0x750] sm:$0xff]
    %v573 = vld [vmem:[#allocation8 + $0x758] sm:$0xff]
    %v574 = vld [vmem:[#allocation8 + $0x760] sm:$0xff]
    %v575 = vld [vmem:[#allocation8 + $0x768] sm:$0xff]
    %v576 = vld [vmem:[#allocation8 + $0x770] sm:$0xff]
    %v577 = vld [vmem:[#allocation8 + $0x778] sm:$0xff]
    %v578 = vld [vmem:[#allocation8 + $0x780] sm:$0xff]
    %v579 = vld [vmem:[#allocation8 + $0x788] sm:$0xff]
    %v580 = vld [vmem:[#allocation8 + $0x790] sm:$0xff]
    %v581 = vld [vmem:[#allocation8 + $0x798] sm:$0xff]
    %v582 = vld [vmem:[#allocation8 + $0x7a0] sm:$0xff]
    %v583 = vld [vmem:[#allocation8 + $0x7a8] sm:$0xff]
    %v584 = vld [vmem:[#allocation8 + $0x7b0] sm:$0xff]
    %v585 = vld [vmem:[#allocation8 + $0x7b8] sm:$0xff]
    %v586 = vld [vmem:[#allocation8 + $0x7c0] sm:$0xff]
    %v587 = vld [vmem:[#allocation8 + $0x7c8] sm:$0xff]
    %v588 = vld [vmem:[#allocation8 + $0x7d0] sm:$0xff]
    %v589 = vld [vmem:[#allocation8 + $0x7d8] sm:$0xff]
    %v590 = vld [vmem:[#allocation8 + $0x7e0] sm:$0xff]
    %v591 = vld [vmem:[#allocation8 + $0x7e8] sm:$0xff]
    %v592 = vld [vmem:[#allocation8 + $0x7f0] sm:$0xff]
    %v593 = vld [vmem:[#allocation8 + $0x7f8] sm:$0xff]
    %v594 = vld [vmem:[#allocation8 + $0x800] sm:$0xff]
    %v595 = vld [vmem:[#allocation8 + $0x808] sm:$0xff]
    %v596 = vld [vmem:[#allocation8 + $0x810] sm:$0xff]
    %v597 = vld [vmem:[#allocation8 + $0x818] sm:$0xff]
    %v598 = vld [vmem:[#allocation8 + $0x820] sm:$0xff]
    %v599 = vld [vmem:[#allocation8 + $0x828] sm:$0xff]
    %v600 = vld [vmem:[#allocation8 + $0x830] sm:$0xff]
    %v601 = vld [vmem:[#allocation8 + $0x838] sm:$0xff]
    %v602 = vld [vmem:[#allocation8 + $0x840] sm:$0xff]
    %v603 = vld [vmem:[#allocation8 + $0x848] sm:$0xff]
    %v604 = vld [vmem:[#allocation8 + $0x850] sm:$0xff]
    %v605 = vld [vmem:[#allocation8 + $0x858] sm:$0xff]
    %v606 = vld [vmem:[#allocation8 + $0x860] sm:$0xff]
    %v607 = vld [vmem:[#allocation8 + $0x868] sm:$0xff]
    %v608 = vld [vmem:[#allocation8 + $0x870] sm:$0xff]
    %v609 = vld [vmem:[#allocation8 + $0x878] sm:$0xff]
    %v610 = vld [vmem:[#allocation8 + $0x880] sm:$0xff]
    %v611 = vld [vmem:[#allocation8 + $0x888] sm:$0xff]
    %v612 = vld [vmem:[#allocation8 + $0x890] sm:$0xff]
    %v613 = vld [vmem:[#allocation8 + $0x898] sm:$0xff]
    %v614 = vld [vmem:[#allocation8 + $0x8a0] sm:$0xff]
    %v615 = vld [vmem:[#allocation8 + $0x8a8] sm:$0xff]
    %v616 = vld [vmem:[#allocation8 + $0x8b0] sm:$0xff]
    %v617 = vld [vmem:[#allocation8 + $0x8b8] sm:$0xff]
    %v618 = vld [vmem:[#allocation8 + $0x8c0] sm:$0xff]
    %v619 = vld [vmem:[#allocation8 + $0x8c8] sm:$0xff]
    %v620 = vld [vmem:[#allocation8 + $0x8d0] sm:$0xff]
    %v621 = vld [vmem:[#allocation8 + $0x8d8] sm:$0xff]
    %v622 = vld [vmem:[#allocation8 + $0x8e0] sm:$0xff]
    %v623 = vld [vmem:[#allocation8 + $0x8e8] sm:$0xff]
    %v624 = vld [vmem:[#allocation8 + $0x8f0] sm:$0xff]
    %v625 = vld [vmem:[#allocation8 + $0x8f8] sm:$0xff]
    %v626 = vld [vmem:[#allocation8 + $0x900] sm:$0xff]
    %v627 = vld [vmem:[#allocation8 + $0x908] sm:$0xff]
    %v628 = vld [vmem:[#allocation8 + $0x910] sm:$0xff]
    %v629 = vld [vmem:[#allocation8 + $0x918] sm:$0xff]
    %v630 = vld [vmem:[#allocation8 + $0x920] sm:$0xff]
    %v631 = vld [vmem:[#allocation8 + $0x928] sm:$0xff]
    %v632 = vld [vmem:[#allocation8 + $0x930] sm:$0xff]
    %v633 = vld [vmem:[#allocation8 + $0x938] sm:$0xff]
    %v634 = vld [vmem:[#allocation8 + $0x940] sm:$0xff]
    %v635 = vld [vmem:[#allocation8 + $0x948] sm:$0xff]
    %v636 = vld [vmem:[#allocation8 + $0x950] sm:$0xff]
    %v637 = vld [vmem:[#allocation8 + $0x958] sm:$0xff]
    %v638 = vld [vmem:[#allocation8 + $0x960] sm:$0xff]
    %v639 = vld [vmem:[#allocation8 + $0x968] sm:$0xff]
    %v640 = vld [vmem:[#allocation8 + $0x970] sm:$0xff]
    %v641 = vld [vmem:[#allocation8 + $0x978] sm:$0xff]
    %v642 = vld [vmem:[#allocation8 + $0x980] sm:$0xff]
    %v643 = vld [vmem:[#allocation8 + $0x988] sm:$0xff]
    %v644 = vld [vmem:[#allocation8 + $0x990] sm:$0xff]
    %v645 = vld [vmem:[#allocation8 + $0x998] sm:$0xff]
    %v646 = vld [vmem:[#allocation8 + $0x9a0] sm:$0xff]
    %v647 = vld [vmem:[#allocation8 + $0x9a8] sm:$0xff]
    %v648 = vld [vmem:[#allocation8 + $0x9b0] sm:$0xff]
    %v649 = vld [vmem:[#allocation8 + $0x9b8] sm:$0xff]
    %v652 = vperm.slane %v295, 0
    %v653 = vperm.slane %v295, 1
    %v654 = vperm.slane %v295, 2
    %v655 = vperm.slane %v295, 3
    %v656 = vperm.slane %v295, 4
    %v657 = vperm.slane %v295, 5
    %v658 = vperm.slane %v295, 6
    %v659 = vperm.slane %v295, 7
    %v660 = vperm.slane %v299, 0
    %v661 = vperm.slane %v299, 1
    %v662 = vperm.slane %v299, 2
    %v663 = vperm.slane %v299, 3
    %v664 = vperm.slane %v299, 4
    %v665 = vperm.slane %v299, 5
    %v666 = vperm.slane %v299, 6
    %v667 = vperm.slane %v299, 7
    %v996 = vunpack.c.l.b16 %v338
    %v997 = vunpack.c.h.b16 %v338
    %v998 = vunpack.c.l.b16 %v339
    %v999 = vunpack.c.h.b16 %v339
    %v1000 = vunpack.c.l.b16 %v340
    %v1001 = vunpack.c.h.b16 %v340
    %v1002 = vunpack.c.l.b16 %v341
    %v1003 = vunpack.c.h.b16 %v341
    %v1004 = vunpack.c.l.b16 %v342
    %v1005 = vunpack.c.h.b16 %v342
    %v1006 = vunpack.c.l.b16 %v343
    %v1007 = vunpack.c.h.b16 %v343
    %v1008 = vunpack.c.l.b16 %v344
    %v1009 = vunpack.c.h.b16 %v344
    %v1010 = vunpack.c.l.b16 %v345
    %v1011 = vunpack.c.h.b16 %v345
    %v1012 = vunpack.c.l.b16 %v346
    %v1013 = vunpack.c.h.b16 %v346
    %v1014 = vunpack.c.l.b16 %v347
    %v1015 = vunpack.c.h.b16 %v347
    %v1016 = vunpack.c.l.b16 %v348
    %v1017 = vunpack.c.h.b16 %v348
    %v1018 = vunpack.c.l.b16 %v349
    %v1019 = vunpack.c.h.b16 %v349
    %v1020 = vunpack.c.l.b16 %v350
    %v1021 = vunpack.c.h.b16 %v350
    %v1022 = vunpack.c.l.b16 %v351
    %v1023 = vunpack.c.h.b16 %v351
    %v1024 = vunpack.c.l.b16 %v352
    %v1025 = vunpack.c.h.b16 %v352
    %v1026 = vunpack.c.l.b16 %v353
    %v1027 = vunpack.c.h.b16 %v353
    %v1028 = vunpack.c.l.b16 %v354
    %v1029 = vunpack.c.h.b16 %v354
    %v1030 = vunpack.c.l.b16 %v355
    %v1031 = vunpack.c.h.b16 %v355
    %v1032 = vunpack.c.l.b16 %v356
    %v1033 = vunpack.c.h.b16 %v356
    %v1034 = vunpack.c.l.b16 %v357
    %v1035 = vunpack.c.h.b16 %v357
    %v1036 = vunpack.c.l.b16 %v358
    %v1037 = vunpack.c.h.b16 %v358
    %v1038 = vunpack.c.l.b16 %v359
    %v1039 = vunpack.c.h.b16 %v359
    %v1040 = vunpack.c.l.b16 %v360
    %v1041 = vunpack.c.h.b16 %v360
    %v1042 = vunpack.c.l.b16 %v361
    %v1043 = vunpack.c.h.b16 %v361
    %v1044 = vunpack.c.l.b16 %v362
    %v1045 = vunpack.c.h.b16 %v362
    %v1046 = vunpack.c.l.b16 %v363
    %v1047 = vunpack.c.h.b16 %v363
    %v1048 = vunpack.c.l.b16 %v364
    %v1049 = vunpack.c.h.b16 %v364
    %v1050 = vunpack.c.l.b16 %v365
    %v1051 = vunpack.c.h.b16 %v365
    %v1052 = vunpack.c.l.b16 %v366
    %v1053 = vunpack.c.h.b16 %v366
    %v1054 = vunpack.c.l.b16 %v367
    %v1055 = vunpack.c.h.b16 %v367
    %v1056 = vunpack.c.l.b16 %v368
    %v1057 = vunpack.c.h.b16 %v368
    %v1058 = vunpack.c.l.b16 %v369
    %v1059 = vunpack.c.h.b16 %v369
    %v1060 = vunpack.c.l.b16 %v370
    %v1061 = vunpack.c.h.b16 %v370
    %v1062 = vunpack.c.l.b16 %v371
    %v1063 = vunpack.c.h.b16 %v371
    %v1064 = vunpack.c.l.b16 %v372
    %v1065 = vunpack.c.h.b16 %v372
    %v1066 = vunpack.c.l.b16 %v373
    %v1067 = vunpack.c.h.b16 %v373
    %v1068 = vunpack.c.l.b16 %v374
    %v1069 = vunpack.c.h.b16 %v374
    %v1070 = vunpack.c.l.b16 %v375
    %v1071 = vunpack.c.h.b16 %v375
    %v1072 = vunpack.c.l.b16 %v376
    %v1073 = vunpack.c.h.b16 %v376
    %v1074 = vunpack.c.l.b16 %v377
    %v1075 = vunpack.c.h.b16 %v377
    %v1076 = vunpack.c.l.b16 %v378
    %v1077 = vunpack.c.h.b16 %v378
    %v1078 = vunpack.c.l.b16 %v379
    %v1079 = vunpack.c.h.b16 %v379
    %v1080 = vunpack.c.l.b16 %v380
    %v1081 = vunpack.c.h.b16 %v380
    %v1082 = vunpack.c.l.b16 %v381
    %v1083 = vunpack.c.h.b16 %v381
    %v1084 = vunpack.c.l.b16 %v382
    %v1085 = vunpack.c.h.b16 %v382
    %v1086 = vunpack.c.l.b16 %v383
    %v1087 = vunpack.c.h.b16 %v383
    %v1088 = vunpack.c.l.b16 %v384
    %v1089 = vunpack.c.h.b16 %v384
    %v1090 = vunpack.c.l.b16 %v385
    %v1091 = vunpack.c.h.b16 %v385
    %v1092 = vunpack.c.l.b16 %v386
    %v1093 = vunpack.c.h.b16 %v386
    %v1094 = vunpack.c.l.b16 %v387
    %v1095 = vunpack.c.h.b16 %v387
    %v1096 = vunpack.c.l.b16 %v388
    %v1097 = vunpack.c.h.b16 %v388
    %v1098 = vunpack.c.l.b16 %v389
    %v1099 = vunpack.c.h.b16 %v389
    %v1100 = vunpack.c.l.b16 %v390
    %v1101 = vunpack.c.h.b16 %v390
    %v1102 = vunpack.c.l.b16 %v391
    %v1103 = vunpack.c.h.b16 %v391
    %v1104 = vunpack.c.l.b16 %v392
    %v1105 = vunpack.c.h.b16 %v392
    %v1106 = vunpack.c.l.b16 %v393
    %v1107 = vunpack.c.h.b16 %v393
    %v1108 = vunpack.c.l.b16 %v394
    %v1109 = vunpack.c.h.b16 %v394
    %v1110 = vunpack.c.l.b16 %v395
    %v1111 = vunpack.c.h.b16 %v395
    %v1112 = vunpack.c.l.b16 %v396
    %v1113 = vunpack.c.h.b16 %v396
    %v1114 = vunpack.c.l.b16 %v397
    %v1115 = vunpack.c.h.b16 %v397
    %v1116 = vunpack.c.l.b16 %v398
    %v1117 = vunpack.c.h.b16 %v398
    %v1118 = vunpack.c.l.b16 %v399
    %v1119 = vunpack.c.h.b16 %v399
    %v1120 = vunpack.c.l.b16 %v400
    %v1121 = vunpack.c.h.b16 %v400
    %v1122 = vunpack.c.l.b16 %v401
    %v1123 = vunpack.c.h.b16 %v401
    %v1124 = vunpack.c.l.b16 %v402
    %v1125 = vunpack.c.h.b16 %v402
    %v1126 = vunpack.c.l.b16 %v403
    %v1127 = vunpack.c.h.b16 %v403
    %v1128 = vunpack.c.l.b16 %v404
    %v1129 = vunpack.c.h.b16 %v404
    %v1130 = vunpack.c.l.b16 %v405
    %v1131 = vunpack.c.h.b16 %v405
    %v1132 = vunpack.c.l.b16 %v406
    %v1133 = vunpack.c.h.b16 %v406
    %v1134 = vunpack.c.l.b16 %v407
    %v1135 = vunpack.c.h.b16 %v407
    %v1136 = vunpack.c.l.b16 %v408
    %v1137 = vunpack.c.h.b16 %v408
    %v1138 = vunpack.c.l.b16 %v409
    %v1139 = vunpack.c.h.b16 %v409
    %v1140 = vunpack.c.l.b16 %v410
    %v1141 = vunpack.c.h.b16 %v410
    %v1142 = vunpack.c.l.b16 %v411
    %v1143 = vunpack.c.h.b16 %v411
    %v1144 = vunpack.c.l.b16 %v412
    %v1145 = vunpack.c.h.b16 %v412
    %v1146 = vunpack.c.l.b16 %v413
    %v1147 = vunpack.c.h.b16 %v413
    %v1148 = vunpack.c.l.b16 %v414
    %v1149 = vunpack.c.h.b16 %v414
    %v1150 = vunpack.c.l.b16 %v415
    %v1151 = vunpack.c.h.b16 %v415
    %v1152 = vunpack.c.l.b16 %v416
    %v1153 = vunpack.c.h.b16 %v416
    %v1154 = vunpack.c.l.b16 %v417
    %v1155 = vunpack.c.h.b16 %v417
    %v1156 = vunpack.c.l.b16 %v418
    %v1157 = vunpack.c.h.b16 %v418
    %v1158 = vunpack.c.l.b16 %v419
    %v1159 = vunpack.c.h.b16 %v419
    %v1160 = vunpack.c.l.b16 %v420
    %v1161 = vunpack.c.h.b16 %v420
    %v1162 = vunpack.c.l.b16 %v421
    %v1163 = vunpack.c.h.b16 %v421
    %v1164 = vunpack.c.l.b16 %v422
    %v1165 = vunpack.c.h.b16 %v422
    %v1166 = vunpack.c.l.b16 %v423
    %v1167 = vunpack.c.h.b16 %v423
    %v1168 = vunpack.c.l.b16 %v424
    %v1169 = vunpack.c.h.b16 %v424
    %v1170 = vunpack.c.l.b16 %v425
    %v1171 = vunpack.c.h.b16 %v425
    %v1172 = vunpack.c.l.b16 %v426
    %v1173 = vunpack.c.h.b16 %v426
    %v1174 = vunpack.c.l.b16 %v427
    %v1175 = vunpack.c.h.b16 %v427
    %v1176 = vunpack.c.l.b16 %v428
    %v1177 = vunpack.c.h.b16 %v428
    %v1178 = vunpack.c.l.b16 %v429
    %v1179 = vunpack.c.h.b16 %v429
    %v1180 = vunpack.c.l.b16 %v430
    %v1181 = vunpack.c.h.b16 %v430
    %v1182 = vunpack.c.l.b16 %v431
    %v1183 = vunpack.c.h.b16 %v431
    %v1184 = vunpack.c.l.b16 %v432
    %v1185 = vunpack.c.h.b16 %v432
    %v1186 = vunpack.c.l.b16 %v433
    %v1187 = vunpack.c.h.b16 %v433
    %v1188 = vunpack.c.l.b16 %v434
    %v1189 = vunpack.c.h.b16 %v434
    %v1190 = vunpack.c.l.b16 %v435
    %v1191 = vunpack.c.h.b16 %v435
    %v1192 = vunpack.c.l.b16 %v436
    %v1193 = vunpack.c.h.b16 %v436
    %v1194 = vunpack.c.l.b16 %v437
    %v1195 = vunpack.c.h.b16 %v437
    %v1196 = vunpack.c.l.b16 %v438
    %v1197 = vunpack.c.h.b16 %v438
    %v1198 = vunpack.c.l.b16 %v439
    %v1199 = vunpack.c.h.b16 %v439
    %v1200 = vunpack.c.l.b16 %v440
    %v1201 = vunpack.c.h.b16 %v440
    %v1202 = vunpack.c.l.b16 %v441
    %v1203 = vunpack.c.h.b16 %v441
    %v1204 = vunpack.c.l.b16 %v442
    %v1205 = vunpack.c.h.b16 %v442
    %v1206 = vunpack.c.l.b16 %v443
    %v1207 = vunpack.c.h.b16 %v443
    %v1208 = vunpack.c.l.b16 %v444
    %v1209 = vunpack.c.h.b16 %v444
    %v1210 = vunpack.c.l.b16 %v445
    %v1211 = vunpack.c.h.b16 %v445
    %v1212 = vunpack.c.l.b16 %v446
    %v1213 = vunpack.c.h.b16 %v446
    %v1214 = vunpack.c.l.b16 %v447
    %v1215 = vunpack.c.h.b16 %v447
    %v1216 = vunpack.c.l.b16 %v448
    %v1217 = vunpack.c.h.b16 %v448
    %v1218 = vunpack.c.l.b16 %v449
    %v1219 = vunpack.c.h.b16 %v449
    %v1220 = vunpack.c.l.b16 %v450
    %v1221 = vunpack.c.h.b16 %v450
    %v1222 = vunpack.c.l.b16 %v451
    %v1223 = vunpack.c.h.b16 %v451
    %v1224 = vunpack.c.l.b16 %v452
    %v1225 = vunpack.c.h.b16 %v452
    %v1226 = vunpack.c.l.b16 %v453
    %v1227 = vunpack.c.h.b16 %v453
    %v1228 = vunpack.c.l.b16 %v454
    %v1229 = vunpack.c.h.b16 %v454
    %v1230 = vunpack.c.l.b16 %v455
    %v1231 = vunpack.c.h.b16 %v455
    %v1232 = vunpack.c.l.b16 %v456
    %v1233 = vunpack.c.h.b16 %v456
    %v1234 = vunpack.c.l.b16 %v457
    %v1235 = vunpack.c.h.b16 %v457
    %v1236 = vunpack.c.l.b16 %v458
    %v1237 = vunpack.c.h.b16 %v458
    %v1238 = vunpack.c.l.b16 %v459
    %v1239 = vunpack.c.h.b16 %v459
    %v1240 = vunpack.c.l.b16 %v460
    %v1241 = vunpack.c.h.b16 %v460
    %v1242 = vunpack.c.l.b16 %v461
    %v1243 = vunpack.c.h.b16 %v461
    %v1244 = vunpack.c.l.b16 %v462
    %v1245 = vunpack.c.h.b16 %v462
    %v1246 = vunpack.c.l.b16 %v463
    %v1247 = vunpack.c.h.b16 %v463
    %v1248 = vunpack.c.l.b16 %v464
    %v1249 = vunpack.c.h.b16 %v464
    %v1250 = vunpack.c.l.b16 %v465
    %v1251 = vunpack.c.h.b16 %v465
    %v1252 = vunpack.c.l.b16 %v466
    %v1253 = vunpack.c.h.b16 %v466
    %v1254 = vunpack.c.l.b16 %v467
    %v1255 = vunpack.c.h.b16 %v467
    %v1256 = vunpack.c.l.b16 %v468
    %v1257 = vunpack.c.h.b16 %v468
    %v1258 = vunpack.c.l.b16 %v469
    %v1259 = vunpack.c.h.b16 %v469
    %v1260 = vunpack.c.l.b16 %v470
    %v1261 = vunpack.c.h.b16 %v470
    %v1262 = vunpack.c.l.b16 %v471
    %v1263 = vunpack.c.h.b16 %v471
    %v1264 = vunpack.c.l.b16 %v472
    %v1265 = vunpack.c.h.b16 %v472
    %v1266 = vunpack.c.l.b16 %v473
    %v1267 = vunpack.c.h.b16 %v473
    %v1268 = vunpack.c.l.b16 %v474
    %v1269 = vunpack.c.h.b16 %v474
    %v1270 = vunpack.c.l.b16 %v475
    %v1271 = vunpack.c.h.b16 %v475
    %v1272 = vunpack.c.l.b16 %v476
    %v1273 = vunpack.c.h.b16 %v476
    %v1274 = vunpack.c.l.b16 %v477
    %v1275 = vunpack.c.h.b16 %v477
    %v1276 = vunpack.c.l.b16 %v478
    %v1277 = vunpack.c.h.b16 %v478
    %v1278 = vunpack.c.l.b16 %v479
    %v1279 = vunpack.c.h.b16 %v479
    %v1280 = vunpack.c.l.b16 %v480
    %v1281 = vunpack.c.h.b16 %v480
    %v1282 = vunpack.c.l.b16 %v481
    %v1283 = vunpack.c.h.b16 %v481
    %v1284 = vunpack.c.l.b16 %v482
    %v1285 = vunpack.c.h.b16 %v482
    %v1286 = vunpack.c.l.b16 %v483
    %v1287 = vunpack.c.h.b16 %v483
    %v1288 = vunpack.c.l.b16 %v484
    %v1289 = vunpack.c.h.b16 %v484
    %v1290 = vunpack.c.l.b16 %v485
    %v1291 = vunpack.c.h.b16 %v485
    %v1292 = vunpack.c.l.b16 %v486
    %v1293 = vunpack.c.h.b16 %v486
    %v1294 = vunpack.c.l.b16 %v487
    %v1295 = vunpack.c.h.b16 %v487
    %v1296 = vunpack.c.l.b16 %v488
    %v1297 = vunpack.c.h.b16 %v488
    %v1298 = vunpack.c.l.b16 %v489
    %v1299 = vunpack.c.h.b16 %v489
    %v1300 = vunpack.c.l.b16 %v490
    %v1301 = vunpack.c.h.b16 %v490
    %v1302 = vunpack.c.l.b16 %v491
    %v1303 = vunpack.c.h.b16 %v491
    %v1304 = vunpack.c.l.b16 %v492
    %v1305 = vunpack.c.h.b16 %v492
    %v1306 = vunpack.c.l.b16 %v493
    %v1307 = vunpack.c.h.b16 %v493
    %v1308 = vunpack.c.l.b16 %v494
    %v1309 = vunpack.c.h.b16 %v494
    %v1310 = vunpack.c.l.b16 %v495
    %v1311 = vunpack.c.h.b16 %v495
    %v1312 = vunpack.c.l.b16 %v496
    %v1313 = vunpack.c.h.b16 %v496
    %v1314 = vunpack.c.l.b16 %v497
    %v1315 = vunpack.c.h.b16 %v497
    %v1316 = vunpack.c.l.b16 %v498
    %v1317 = vunpack.c.h.b16 %v498
    %v1318 = vunpack.c.l.b16 %v499
    %v1319 = vunpack.c.h.b16 %v499
    %v1320 = vunpack.c.l.b16 %v500
    %v1321 = vunpack.c.h.b16 %v500
    %v1322 = vunpack.c.l.b16 %v501
    %v1323 = vunpack.c.h.b16 %v501
    %v1324 = vunpack.c.l.b16 %v502
    %v1325 = vunpack.c.h.b16 %v502
    %v1326 = vunpack.c.l.b16 %v503
    %v1327 = vunpack.c.h.b16 %v503
    %v1328 = vunpack.c.l.b16 %v504
    %v1329 = vunpack.c.h.b16 %v504
    %v1330 = vunpack.c.l.b16 %v505
    %v1331 = vunpack.c.h.b16 %v505
    %v1332 = vunpack.c.l.b16 %v506
    %v1333 = vunpack.c.h.b16 %v506
    %v1334 = vunpack.c.l.b16 %v507
    %v1335 = vunpack.c.h.b16 %v507
    %v1336 = vunpack.c.l.b16 %v508
    %v1337 = vunpack.c.h.b16 %v508
    %v1338 = vunpack.c.l.b16 %v509
    %v1339 = vunpack.c.h.b16 %v509
    %v1340 = vunpack.c.l.b16 %v510
    %v1341 = vunpack.c.h.b16 %v510
    %v1342 = vunpack.c.l.b16 %v511
    %v1343 = vunpack.c.h.b16 %v511
    %v1344 = vunpack.c.l.b16 %v512
    %v1345 = vunpack.c.h.b16 %v512
    %v1346 = vunpack.c.l.b16 %v513
    %v1347 = vunpack.c.h.b16 %v513
    %v1348 = vunpack.c.l.b16 %v514
    %v1349 = vunpack.c.h.b16 %v514
    %v1350 = vunpack.c.l.b16 %v515
    %v1351 = vunpack.c.h.b16 %v515
    %v1352 = vunpack.c.l.b16 %v516
    %v1353 = vunpack.c.h.b16 %v516
    %v1354 = vunpack.c.l.b16 %v517
    %v1355 = vunpack.c.h.b16 %v517
    %v1356 = vunpack.c.l.b16 %v518
    %v1357 = vunpack.c.h.b16 %v518
    %v1358 = vunpack.c.l.b16 %v519
    %v1359 = vunpack.c.h.b16 %v519
    %v1360 = vunpack.c.l.b16 %v520
    %v1361 = vunpack.c.h.b16 %v520
    %v1362 = vunpack.c.l.b16 %v521
    %v1363 = vunpack.c.h.b16 %v521
    %v1364 = vunpack.c.l.b16 %v522
    %v1365 = vunpack.c.h.b16 %v522
    %v1366 = vunpack.c.l.b16 %v523
    %v1367 = vunpack.c.h.b16 %v523
    %v1368 = vunpack.c.l.b16 %v524
    %v1369 = vunpack.c.h.b16 %v524
    %v1370 = vunpack.c.l.b16 %v525
    %v1371 = vunpack.c.h.b16 %v525
    %v1372 = vunpack.c.l.b16 %v526
    %v1373 = vunpack.c.h.b16 %v526
    %v1374 = vunpack.c.l.b16 %v527
    %v1375 = vunpack.c.h.b16 %v527
    %v1376 = vunpack.c.l.b16 %v528
    %v1377 = vunpack.c.h.b16 %v528
    %v1378 = vunpack.c.l.b16 %v529
    %v1379 = vunpack.c.h.b16 %v529
    %v1380 = vunpack.c.l.b16 %v530
    %v1381 = vunpack.c.h.b16 %v530
    %v1382 = vunpack.c.l.b16 %v531
    %v1383 = vunpack.c.h.b16 %v531
    %v1384 = vunpack.c.l.b16 %v532
    %v1385 = vunpack.c.h.b16 %v532
    %v1386 = vunpack.c.l.b16 %v533
    %v1387 = vunpack.c.h.b16 %v533
    %v1388 = vunpack.c.l.b16 %v534
    %v1389 = vunpack.c.h.b16 %v534
    %v1390 = vunpack.c.l.b16 %v535
    %v1391 = vunpack.c.h.b16 %v535
    %v1392 = vunpack.c.l.b16 %v536
    %v1393 = vunpack.c.h.b16 %v536
    %v1394 = vunpack.c.l.b16 %v537
    %v1395 = vunpack.c.h.b16 %v537
    %v1396 = vunpack.c.l.b16 %v538
    %v1397 = vunpack.c.h.b16 %v538
    %v1398 = vunpack.c.l.b16 %v539
    %v1399 = vunpack.c.h.b16 %v539
    %v1400 = vunpack.c.l.b16 %v540
    %v1401 = vunpack.c.h.b16 %v540
    %v1402 = vunpack.c.l.b16 %v541
    %v1403 = vunpack.c.h.b16 %v541
    %v1404 = vunpack.c.l.b16 %v542
    %v1405 = vunpack.c.h.b16 %v542
    %v1406 = vunpack.c.l.b16 %v543
    %v1407 = vunpack.c.h.b16 %v543
    %v1408 = vunpack.c.l.b16 %v544
    %v1409 = vunpack.c.h.b16 %v544
    %v1410 = vunpack.c.l.b16 %v545
    %v1411 = vunpack.c.h.b16 %v545
    %v1412 = vunpack.c.l.b16 %v546
    %v1413 = vunpack.c.h.b16 %v546
    %v1414 = vunpack.c.l.b16 %v547
    %v1415 = vunpack.c.h.b16 %v547
    %v1416 = vunpack.c.l.b16 %v548
    %v1417 = vunpack.c.h.b16 %v548
    %v1418 = vunpack.c.l.b16 %v549
    %v1419 = vunpack.c.h.b16 %v549
    %v1420 = vunpack.c.l.b16 %v550
    %v1421 = vunpack.c.h.b16 %v550
    %v1422 = vunpack.c.l.b16 %v551
    %v1423 = vunpack.c.h.b16 %v551
    %v1424 = vunpack.c.l.b16 %v552
    %v1425 = vunpack.c.h.b16 %v552
    %v1426 = vunpack.c.l.b16 %v553
    %v1427 = vunpack.c.h.b16 %v553
    %v1428 = vunpack.c.l.b16 %v554
    %v1429 = vunpack.c.h.b16 %v554
    %v1430 = vunpack.c.l.b16 %v555
    %v1431 = vunpack.c.h.b16 %v555
    %v1432 = vunpack.c.l.b16 %v556
    %v1433 = vunpack.c.h.b16 %v556
    %v1434 = vunpack.c.l.b16 %v557
    %v1435 = vunpack.c.h.b16 %v557
    %v1436 = vunpack.c.l.b16 %v558
    %v1437 = vunpack.c.h.b16 %v558
    %v1438 = vunpack.c.l.b16 %v559
    %v1439 = vunpack.c.h.b16 %v559
    %v1440 = vunpack.c.l.b16 %v560
    %v1441 = vunpack.c.h.b16 %v560
    %v1442 = vunpack.c.l.b16 %v561
    %v1443 = vunpack.c.h.b16 %v561
    %v1444 = vunpack.c.l.b16 %v562
    %v1445 = vunpack.c.h.b16 %v562
    %v1446 = vunpack.c.l.b16 %v563
    %v1447 = vunpack.c.h.b16 %v563
    %v1448 = vunpack.c.l.b16 %v564
    %v1449 = vunpack.c.h.b16 %v564
    %v1450 = vunpack.c.l.b16 %v565
    %v1451 = vunpack.c.h.b16 %v565
    %v1452 = vunpack.c.l.b16 %v566
    %v1453 = vunpack.c.h.b16 %v566
    %v1454 = vunpack.c.l.b16 %v567
    %v1455 = vunpack.c.h.b16 %v567
    %v1456 = vunpack.c.l.b16 %v568
    %v1457 = vunpack.c.h.b16 %v568
    %v1458 = vunpack.c.l.b16 %v569
    %v1459 = vunpack.c.h.b16 %v569
    %v1460 = vunpack.c.l.b16 %v570
    %v1461 = vunpack.c.h.b16 %v570
    %v1462 = vunpack.c.l.b16 %v571
    %v1463 = vunpack.c.h.b16 %v571
    %v1464 = vunpack.c.l.b16 %v572
    %v1465 = vunpack.c.h.b16 %v572
    %v1466 = vunpack.c.l.b16 %v573
    %v1467 = vunpack.c.h.b16 %v573
    %v1468 = vunpack.c.l.b16 %v574
    %v1469 = vunpack.c.h.b16 %v574
    %v1470 = vunpack.c.l.b16 %v575
    %v1471 = vunpack.c.h.b16 %v575
    %v1472 = vunpack.c.l.b16 %v576
    %v1473 = vunpack.c.h.b16 %v576
    %v1474 = vunpack.c.l.b16 %v577
    %v1475 = vunpack.c.h.b16 %v577
    %v1476 = vunpack.c.l.b16 %v578
    %v1477 = vunpack.c.h.b16 %v578
    %v1478 = vunpack.c.l.b16 %v579
    %v1479 = vunpack.c.h.b16 %v579
    %v1480 = vunpack.c.l.b16 %v580
    %v1481 = vunpack.c.h.b16 %v580
    %v1482 = vunpack.c.l.b16 %v581
    %v1483 = vunpack.c.h.b16 %v581
    %v1484 = vunpack.c.l.b16 %v582
    %v1485 = vunpack.c.h.b16 %v582
    %v1486 = vunpack.c.l.b16 %v583
    %v1487 = vunpack.c.h.b16 %v583
    %v1488 = vunpack.c.l.b16 %v584
    %v1489 = vunpack.c.h.b16 %v584
    %v1490 = vunpack.c.l.b16 %v585
    %v1491 = vunpack.c.h.b16 %v585
    %v1492 = vunpack.c.l.b16 %v586
    %v1493 = vunpack.c.h.b16 %v586
    %v1494 = vunpack.c.l.b16 %v587
    %v1495 = vunpack.c.h.b16 %v587
    %v1496 = vunpack.c.l.b16 %v588
    %v1497 = vunpack.c.h.b16 %v588
    %v1498 = vunpack.c.l.b16 %v589
    %v1499 = vunpack.c.h.b16 %v589
    %v1500 = vunpack.c.l.b16 %v590
    %v1501 = vunpack.c.h.b16 %v590
    %v1502 = vunpack.c.l.b16 %v591
    %v1503 = vunpack.c.h.b16 %v591
    %v1504 = vunpack.c.l.b16 %v592
    %v1505 = vunpack.c.h.b16 %v592
    %v1506 = vunpack.c.l.b16 %v593
    %v1507 = vunpack.c.h.b16 %v593
    %v1508 = vunpack.c.l.b16 %v594
    %v1509 = vunpack.c.h.b16 %v594
    %v1510 = vunpack.c.l.b16 %v595
    %v1511 = vunpack.c.h.b16 %v595
    %v1512 = vunpack.c.l.b16 %v596
    %v1513 = vunpack.c.h.b16 %v596
    %v1514 = vunpack.c.l.b16 %v597
    %v1515 = vunpack.c.h.b16 %v597
    %v1516 = vunpack.c.l.b16 %v598
    %v1517 = vunpack.c.h.b16 %v598
    %v1518 = vunpack.c.l.b16 %v599
    %v1519 = vunpack.c.h.b16 %v599
    %v1520 = vunpack.c.l.b16 %v600
    %v1521 = vunpack.c.h.b16 %v600
    %v1522 = vunpack.c.l.b16 %v601
    %v1523 = vunpack.c.h.b16 %v601
    %v1524 = vunpack.c.l.b16 %v602
    %v1525 = vunpack.c.h.b16 %v602
    %v1526 = vunpack.c.l.b16 %v603
    %v1527 = vunpack.c.h.b16 %v603
    %v1528 = vunpack.c.l.b16 %v604
    %v1529 = vunpack.c.h.b16 %v604
    %v1530 = vunpack.c.l.b16 %v605
    %v1531 = vunpack.c.h.b16 %v605
    %v1532 = vunpack.c.l.b16 %v606
    %v1533 = vunpack.c.h.b16 %v606
    %v1534 = vunpack.c.l.b16 %v607
    %v1535 = vunpack.c.h.b16 %v607
    %v1536 = vunpack.c.l.b16 %v608
    %v1537 = vunpack.c.h.b16 %v608
    %v1538 = vunpack.c.l.b16 %v609
    %v1539 = vunpack.c.h.b16 %v609
    %v1540 = vunpack.c.l.b16 %v610
    %v1541 = vunpack.c.h.b16 %v610
    %v1542 = vunpack.c.l.b16 %v611
    %v1543 = vunpack.c.h.b16 %v611
    %v1544 = vunpack.c.l.b16 %v612
    %v1545 = vunpack.c.h.b16 %v612
    %v1546 = vunpack.c.l.b16 %v613
    %v1547 = vunpack.c.h.b16 %v613
    %v1548 = vunpack.c.l.b16 %v614
    %v1549 = vunpack.c.h.b16 %v614
    %v1550 = vunpack.c.l.b16 %v615
    %v1551 = vunpack.c.h.b16 %v615
    %v1552 = vunpack.c.l.b16 %v616
    %v1553 = vunpack.c.h.b16 %v616
    %v1554 = vunpack.c.l.b16 %v617
    %v1555 = vunpack.c.h.b16 %v617
    %v1556 = vunpack.c.l.b16 %v618
    %v1557 = vunpack.c.h.b16 %v618
    %v1558 = vunpack.c.l.b16 %v619
    %v1559 = vunpack.c.h.b16 %v619
    %v1560 = vunpack.c.l.b16 %v620
    %v1561 = vunpack.c.h.b16 %v620
    %v1562 = vunpack.c.l.b16 %v621
    %v1563 = vunpack.c.h.b16 %v621
    %v1564 = vunpack.c.l.b16 %v622
    %v1565 = vunpack.c.h.b16 %v622
    %v1566 = vunpack.c.l.b16 %v623
    %v1567 = vunpack.c.h.b16 %v623
    %v1568 = vunpack.c.l.b16 %v624
    %v1569 = vunpack.c.h.b16 %v624
    %v1570 = vunpack.c.l.b16 %v625
    %v1571 = vunpack.c.h.b16 %v625
    %v1572 = vunpack.c.l.b16 %v626
    %v1573 = vunpack.c.h.b16 %v626
    %v1574 = vunpack.c.l.b16 %v627
    %v1575 = vunpack.c.h.b16 %v627
    %v1576 = vunpack.c.l.b16 %v628
    %v1577 = vunpack.c.h.b16 %v628
    %v1578 = vunpack.c.l.b16 %v629
    %v1579 = vunpack.c.h.b16 %v629
    %v1580 = vunpack.c.l.b16 %v630
    %v1581 = vunpack.c.h.b16 %v630
    %v1582 = vunpack.c.l.b16 %v631
    %v1583 = vunpack.c.h.b16 %v631
    %v1584 = vunpack.c.l.b16 %v632
    %v1585 = vunpack.c.h.b16 %v632
    %v1586 = vunpack.c.l.b16 %v633
    %v1587 = vunpack.c.h.b16 %v633
    %v1588 = vunpack.c.l.b16 %v634
    %v1589 = vunpack.c.h.b16 %v634
    %v1590 = vunpack.c.l.b16 %v635
    %v1591 = vunpack.c.h.b16 %v635
    %v1592 = vunpack.c.l.b16 %v636
    %v1593 = vunpack.c.h.b16 %v636
    %v1594 = vunpack.c.l.b16 %v637
    %v1595 = vunpack.c.h.b16 %v637
    %v1596 = vunpack.c.l.b16 %v638
    %v1597 = vunpack.c.h.b16 %v638
    %v1598 = vunpack.c.l.b16 %v639
    %v1599 = vunpack.c.h.b16 %v639
    %v1600 = vunpack.c.l.b16 %v640
    %v1601 = vunpack.c.h.b16 %v640
    %v1602 = vunpack.c.l.b16 %v641
    %v1603 = vunpack.c.h.b16 %v641
    %v1604 = vunpack.c.l.b16 %v642
    %v1605 = vunpack.c.h.b16 %v642
    %v1606 = vunpack.c.l.b16 %v643
    %v1607 = vunpack.c.h.b16 %v643
    %v1608 = vunpack.c.l.b16 %v644
    %v1609 = vunpack.c.h.b16 %v644
    %v1610 = vunpack.c.l.b16 %v645
    %v1611 = vunpack.c.h.b16 %v645
    %v1612 = vunpack.c.l.b16 %v646
    %v1613 = vunpack.c.h.b16 %v646
    %v1614 = vunpack.c.l.b16 %v647
    %v1615 = vunpack.c.h.b16 %v647
    %v1616 = vunpack.c.l.b16 %v648
    %v1617 = vunpack.c.h.b16 %v648
    %v1618 = vunpack.c.l.b16 %v649
    %v1619 = vunpack.c.h.b16 %v649
    %v1620 = vpack.c.b16 %v1012, %v996
    %v1621 = vpack.c.b16 %v1013, %v997
    %v1622 = vpack.c.b16 %v1014, %v998
    %v1623 = vpack.c.b16 %v1015, %v999
    %v1624 = vpack.c.b16 %v1016, %v1000
    %v1625 = vpack.c.b16 %v1017, %v1001
    %v1626 = vpack.c.b16 %v1018, %v1002
    %v1627 = vpack.c.b16 %v1019, %v1003
    %v1628 = vpack.c.b16 %v1020, %v1004
    %v1629 = vpack.c.b16 %v1021, %v1005
    %v1630 = vpack.c.b16 %v1022, %v1006
    %v1631 = vpack.c.b16 %v1023, %v1007
    %v1632 = vpack.c.b16 %v1024, %v1008
    %v1633 = vpack.c.b16 %v1025, %v1009
    %v1634 = vpack.c.b16 %v1026, %v1010
    %v1635 = vpack.c.b16 %v1027, %v1011
    %v1636 = vpack.c.b16 %v1044, %v1028
    %v1637 = vpack.c.b16 %v1045, %v1029
    %v1638 = vpack.c.b16 %v1046, %v1030
    %v1639 = vpack.c.b16 %v1047, %v1031
    %v1640 = vpack.c.b16 %v1048, %v1032
    %v1641 = vpack.c.b16 %v1049, %v1033
    %v1642 = vpack.c.b16 %v1050, %v1034
    %v1643 = vpack.c.b16 %v1051, %v1035
    %v1644 = vpack.c.b16 %v1052, %v1036
    %v1645 = vpack.c.b16 %v1053, %v1037
    %v1646 = vpack.c.b16 %v1054, %v1038
    %v1647 = vpack.c.b16 %v1055, %v1039
    %v1648 = vpack.c.b16 %v1056, %v1040
    %v1649 = vpack.c.b16 %v1057, %v1041
    %v1650 = vpack.c.b16 %v1058, %v1042
    %v1651 = vpack.c.b16 %v1059, %v1043
    %v1652 = vpack.c.b16 %v1076, %v1060
    %v1653 = vpack.c.b16 %v1077, %v1061
    %v1654 = vpack.c.b16 %v1078, %v1062
    %v1655 = vpack.c.b16 %v1079, %v1063
    %v1656 = vpack.c.b16 %v1080, %v1064
    %v1657 = vpack.c.b16 %v1081, %v1065
    %v1658 = vpack.c.b16 %v1082, %v1066
    %v1659 = vpack.c.b16 %v1083, %v1067
    %v1660 = vpack.c.b16 %v1084, %v1068
    %v1661 = vpack.c.b16 %v1085, %v1069
    %v1662 = vpack.c.b16 %v1086, %v1070
    %v1663 = vpack.c.b16 %v1087, %v1071
    %v1664 = vpack.c.b16 %v1088, %v1072
    %v1665 = vpack.c.b16 %v1089, %v1073
    %v1666 = vpack.c.b16 %v1090, %v1074
    %v1667 = vpack.c.b16 %v1091, %v1075
    %v1668 = vpack.c.b16 %v1108, %v1092
    %v1669 = vpack.c.b16 %v1109, %v1093
    %v1670 = vpack.c.b16 %v1110, %v1094
    %v1671 = vpack.c.b16 %v1111, %v1095
    %v1672 = vpack.c.b16 %v1112, %v1096
    %v1673 = vpack.c.b16 %v1113, %v1097
    %v1674 = vpack.c.b16 %v1114, %v1098
    %v1675 = vpack.c.b16 %v1115, %v1099
    %v1676 = vpack.c.b16 %v1116, %v1100
    %v1677 = vpack.c.b16 %v1117, %v1101
    %v1678 = vpack.c.b16 %v1118, %v1102
    %v1679 = vpack.c.b16 %v1119, %v1103
    %v1680 = vpack.c.b16 %v1120, %v1104
    %v1681 = vpack.c.b16 %v1121, %v1105
    %v1682 = vpack.c.b16 %v1122, %v1106
    %v1683 = vpack.c.b16 %v1123, %v1107
    %v1684 = vpack.c.b16 %v1140, %v1124
    %v1685 = vpack.c.b16 %v1141, %v1125
    %v1686 = vpack.c.b16 %v1142, %v1126
    %v1687 = vpack.c.b16 %v1143, %v1127
    %v1688 = vpack.c.b16 %v1144, %v1128
    %v1689 = vpack.c.b16 %v1145, %v1129
    %v1690 = vpack.c.b16 %v1146, %v1130
    %v1691 = vpack.c.b16 %v1147, %v1131
    %v1692 = vpack.c.b16 %v1148, %v1132
    %v1693 = vpack.c.b16 %v1149, %v1133
    %v1694 = vpack.c.b16 %v1150, %v1134
    %v1695 = vpack.c.b16 %v1151, %v1135
    %v1696 = vpack.c.b16 %v1152, %v1136
    %v1697 = vpack.c.b16 %v1153, %v1137
    %v1698 = vpack.c.b16 %v1154, %v1138
    %v1699 = vpack.c.b16 %v1155, %v1139
    %v1700 = vpack.c.b16 %v1172, %v1156
    %v1701 = vpack.c.b16 %v1173, %v1157
    %v1702 = vpack.c.b16 %v1174, %v1158
    %v1703 = vpack.c.b16 %v1175, %v1159
    %v1704 = vpack.c.b16 %v1176, %v1160
    %v1705 = vpack.c.b16 %v1177, %v1161
    %v1706 = vpack.c.b16 %v1178, %v1162
    %v1707 = vpack.c.b16 %v1179, %v1163
    %v1708 = vpack.c.b16 %v1180, %v1164
    %v1709 = vpack.c.b16 %v1181, %v1165
    %v1710 = vpack.c.b16 %v1182, %v1166
    %v1711 = vpack.c.b16 %v1183, %v1167
    %v1712 = vpack.c.b16 %v1184, %v1168
    %v1713 = vpack.c.b16 %v1185, %v1169
    %v1714 = vpack.c.b16 %v1186, %v1170
    %v1715 = vpack.c.b16 %v1187, %v1171
    %v1716 = vpack.c.b16 %v1204, %v1188
    %v1717 = vpack.c.b16 %v1205, %v1189
    %v1718 = vpack.c.b16 %v1206, %v1190
    %v1719 = vpack.c.b16 %v1207, %v1191
    %v1720 = vpack.c.b16 %v1208, %v1192
    %v1721 = vpack.c.b16 %v1209, %v1193
    %v1722 = vpack.c.b16 %v1210, %v1194
    %v1723 = vpack.c.b16 %v1211, %v1195
    %v1724 = vpack.c.b16 %v1212, %v1196
    %v1725 = vpack.c.b16 %v1213, %v1197
    %v1726 = vpack.c.b16 %v1214, %v1198
    %v1727 = vpack.c.b16 %v1215, %v1199
    %v1728 = vpack.c.b16 %v1216, %v1200
    %v1729 = vpack.c.b16 %v1217, %v1201
    %v1730 = vpack.c.b16 %v1218, %v1202
    %v1731 = vpack.c.b16 %v1219, %v1203
    %v1732 = vpack.c.b16 %v1236, %v1220
    %v1733 = vpack.c.b16 %v1237, %v1221
    %v1734 = vpack.c.b16 %v1238, %v1222
    %v1735 = vpack.c.b16 %v1239, %v1223
    %v1736 = vpack.c.b16 %v1240, %v1224
    %v1737 = vpack.c.b16 %v1241, %v1225
    %v1738 = vpack.c.b16 %v1242, %v1226
    %v1739 = vpack.c.b16 %v1243, %v1227
    %v1740 = vpack.c.b16 %v1244, %v1228
    %v1741 = vpack.c.b16 %v1245, %v1229
    %v1742 = vpack.c.b16 %v1246, %v1230
    %v1743 = vpack.c.b16 %v1247, %v1231
    %v1744 = vpack.c.b16 %v1248, %v1232
    %v1745 = vpack.c.b16 %v1249, %v1233
    %v1746 = vpack.c.b16 %v1250, %v1234
    %v1747 = vpack.c.b16 %v1251, %v1235
    %v1748 = vpack.c.b16 %v1268, %v1252
    %v1749 = vpack.c.b16 %v1269, %v1253
    %v1750 = vpack.c.b16 %v1270, %v1254
    %v1751 = vpack.c.b16 %v1271, %v1255
    %v1752 = vpack.c.b16 %v1272, %v1256
    %v1753 = vpack.c.b16 %v1273, %v1257
    %v1754 = vpack.c.b16 %v1274, %v1258
    %v1755 = vpack.c.b16 %v1275, %v1259
    %v1756 = vpack.c.b16 %v1276, %v1260
    %v1757 = vpack.c.b16 %v1277, %v1261
    %v1758 = vpack.c.b16 %v1278, %v1262
    %v1759 = vpack.c.b16 %v1279, %v1263
    %v1760 = vpack.c.b16 %v1280, %v1264
    %v1761 = vpack.c.b16 %v1281, %v1265
    %v1762 = vpack.c.b16 %v1282, %v1266
    %v1763 = vpack.c.b16 %v1283, %v1267
    %v1764 = vpack.c.b16 %v1300, %v1284
    %v1765 = vpack.c.b16 %v1301, %v1285
    %v1766 = vpack.c.b16 %v1302, %v1286
    %v1767 = vpack.c.b16 %v1303, %v1287
    %v1768 = vpack.c.b16 %v1304, %v1288
    %v1769 = vpack.c.b16 %v1305, %v1289
    %v1770 = vpack.c.b16 %v1306, %v1290
    %v1771 = vpack.c.b16 %v1307, %v1291
    %v1772 = vpack.c.b16 %v1308, %v1292
    %v1773 = vpack.c.b16 %v1309, %v1293
    %v1774 = vpack.c.b16 %v1310, %v1294
    %v1775 = vpack.c.b16 %v1311, %v1295
    %v1776 = vpack.c.b16 %v1312, %v1296
    %v1777 = vpack.c.b16 %v1313, %v1297
    %v1778 = vpack.c.b16 %v1314, %v1298
    %v1779 = vpack.c.b16 %v1315, %v1299
    %v1780 = vpack.c.b16 %v1332, %v1316
    %v1781 = vpack.c.b16 %v1333, %v1317
    %v1782 = vpack.c.b16 %v1334, %v1318
    %v1783 = vpack.c.b16 %v1335, %v1319
    %v1784 = vpack.c.b16 %v1336, %v1320
    %v1785 = vpack.c.b16 %v1337, %v1321
    %v1786 = vpack.c.b16 %v1338, %v1322
    %v1787 = vpack.c.b16 %v1339, %v1323
    %v1788 = vpack.c.b16 %v1340, %v1324
    %v1789 = vpack.c.b16 %v1341, %v1325
    %v1790 = vpack.c.b16 %v1342, %v1326
    %v1791 = vpack.c.b16 %v1343, %v1327
    %v1792 = vpack.c.b16 %v1344, %v1328
    %v1793 = vpack.c.b16 %v1345, %v1329
    %v1794 = vpack.c.b16 %v1346, %v1330
    %v1795 = vpack.c.b16 %v1347, %v1331
    %v1796 = vpack.c.b16 %v1364, %v1348
    %v1797 = vpack.c.b16 %v1365, %v1349
    %v1798 = vpack.c.b16 %v1366, %v1350
    %v1799 = vpack.c.b16 %v1367, %v1351
    %v1800 = vpack.c.b16 %v1368, %v1352
    %v1801 = vpack.c.b16 %v1369, %v1353
    %v1802 = vpack.c.b16 %v1370, %v1354
    %v1803 = vpack.c.b16 %v1371, %v1355
    %v1804 = vpack.c.b16 %v1372, %v1356
    %v1805 = vpack.c.b16 %v1373, %v1357
    %v1806 = vpack.c.b16 %v1374, %v1358
    %v1807 = vpack.c.b16 %v1375, %v1359
    %v1808 = vpack.c.b16 %v1376, %v1360
    %v1809 = vpack.c.b16 %v1377, %v1361
    %v1810 = vpack.c.b16 %v1378, %v1362
    %v1811 = vpack.c.b16 %v1379, %v1363
    %v1812 = vpack.c.b16 %v1396, %v1380
    %v1813 = vpack.c.b16 %v1397, %v1381
    %v1814 = vpack.c.b16 %v1398, %v1382
    %v1815 = vpack.c.b16 %v1399, %v1383
    %v1816 = vpack.c.b16 %v1400, %v1384
    %v1817 = vpack.c.b16 %v1401, %v1385
    %v1818 = vpack.c.b16 %v1402, %v1386
    %v1819 = vpack.c.b16 %v1403, %v1387
    %v1820 = vpack.c.b16 %v1404, %v1388
    %v1821 = vpack.c.b16 %v1405, %v1389
    %v1822 = vpack.c.b16 %v1406, %v1390
    %v1823 = vpack.c.b16 %v1407, %v1391
    %v1824 = vpack.c.b16 %v1408, %v1392
    %v1825 = vpack.c.b16 %v1409, %v1393
    %v1826 = vpack.c.b16 %v1410, %v1394
    %v1827 = vpack.c.b16 %v1411, %v1395
    %v1828 = vpack.c.b16 %v1428, %v1412
    %v1829 = vpack.c.b16 %v1429, %v1413
    %v1830 = vpack.c.b16 %v1430, %v1414
    %v1831 = vpack.c.b16 %v1431, %v1415
    %v1832 = vpack.c.b16 %v1432, %v1416
    %v1833 = vpack.c.b16 %v1433, %v1417
    %v1834 = vpack.c.b16 %v1434, %v1418
    %v1835 = vpack.c.b16 %v1435, %v1419
    %v1836 = vpack.c.b16 %v1436, %v1420
    %v1837 = vpack.c.b16 %v1437, %v1421
    %v1838 = vpack.c.b16 %v1438, %v1422
    %v1839 = vpack.c.b16 %v1439, %v1423
    %v1840 = vpack.c.b16 %v1440, %v1424
    %v1841 = vpack.c.b16 %v1441, %v1425
    %v1842 = vpack.c.b16 %v1442, %v1426
    %v1843 = vpack.c.b16 %v1443, %v1427
    %v1844 = vpack.c.b16 %v1460, %v1444
    %v1845 = vpack.c.b16 %v1461, %v1445
    %v1846 = vpack.c.b16 %v1462, %v1446
    %v1847 = vpack.c.b16 %v1463, %v1447
    %v1848 = vpack.c.b16 %v1464, %v1448
    %v1849 = vpack.c.b16 %v1465, %v1449
    %v1850 = vpack.c.b16 %v1466, %v1450
    %v1851 = vpack.c.b16 %v1467, %v1451
    %v1852 = vpack.c.b16 %v1468, %v1452
    %v1853 = vpack.c.b16 %v1469, %v1453
    %v1854 = vpack.c.b16 %v1470, %v1454
    %v1855 = vpack.c.b16 %v1471, %v1455
    %v1856 = vpack.c.b16 %v1472, %v1456
    %v1857 = vpack.c.b16 %v1473, %v1457
    %v1858 = vpack.c.b16 %v1474, %v1458
    %v1859 = vpack.c.b16 %v1475, %v1459
    %v1860 = vpack.c.b16 %v1492, %v1476
    %v1861 = vpack.c.b16 %v1493, %v1477
    %v1862 = vpack.c.b16 %v1494, %v1478
    %v1863 = vpack.c.b16 %v1495, %v1479
    %v1864 = vpack.c.b16 %v1496, %v1480
    %v1865 = vpack.c.b16 %v1497, %v1481
    %v1866 = vpack.c.b16 %v1498, %v1482
    %v1867 = vpack.c.b16 %v1499, %v1483
    %v1868 = vpack.c.b16 %v1500, %v1484
    %v1869 = vpack.c.b16 %v1501, %v1485
    %v1870 = vpack.c.b16 %v1502, %v1486
    %v1871 = vpack.c.b16 %v1503, %v1487
    %v1872 = vpack.c.b16 %v1504, %v1488
    %v1873 = vpack.c.b16 %v1505, %v1489
    %v1874 = vpack.c.b16 %v1506, %v1490
    %v1875 = vpack.c.b16 %v1507, %v1491
    %v1876 = vpack.c.b16 %v1524, %v1508
    %v1877 = vpack.c.b16 %v1525, %v1509
    %v1878 = vpack.c.b16 %v1526, %v1510
    %v1879 = vpack.c.b16 %v1527, %v1511
    %v1880 = vpack.c.b16 %v1528, %v1512
    %v1881 = vpack.c.b16 %v1529, %v1513
    %v1882 = vpack.c.b16 %v1530, %v1514
    %v1883 = vpack.c.b16 %v1531, %v1515
    %v1884 = vpack.c.b16 %v1532, %v1516
    %v1885 = vpack.c.b16 %v1533, %v1517
    %v1886 = vpack.c.b16 %v1534, %v1518
    %v1887 = vpack.c.b16 %v1535, %v1519
    %v1888 = vpack.c.b16 %v1536, %v1520
    %v1889 = vpack.c.b16 %v1537, %v1521
    %v1890 = vpack.c.b16 %v1538, %v1522
    %v1891 = vpack.c.b16 %v1539, %v1523
    %v1892 = vpack.c.b16 %v1556, %v1540
    %v1893 = vpack.c.b16 %v1557, %v1541
    %v1894 = vpack.c.b16 %v1558, %v1542
    %v1895 = vpack.c.b16 %v1559, %v1543
    %v1896 = vpack.c.b16 %v1560, %v1544
    %v1897 = vpack.c.b16 %v1561, %v1545
    %v1898 = vpack.c.b16 %v1562, %v1546
    %v1899 = vpack.c.b16 %v1563, %v1547
    %v1900 = vpack.c.b16 %v1564, %v1548
    %v1901 = vpack.c.b16 %v1565, %v1549
    %v1902 = vpack.c.b16 %v1566, %v1550
    %v1903 = vpack.c.b16 %v1567, %v1551
    %v1904 = vpack.c.b16 %v1568, %v1552
    %v1905 = vpack.c.b16 %v1569, %v1553
    %v1906 = vpack.c.b16 %v1570, %v1554
    %v1907 = vpack.c.b16 %v1571, %v1555
    %v1908 = vpack.c.b16 %v1588, %v1572
    %v1909 = vpack.c.b16 %v1589, %v1573
    %v1910 = vpack.c.b16 %v1590, %v1574
    %v1911 = vpack.c.b16 %v1591, %v1575
    %v1912 = vpack.c.b16 %v1592, %v1576
    %v1913 = vpack.c.b16 %v1593, %v1577
    %v1914 = vpack.c.b16 %v1594, %v1578
    %v1915 = vpack.c.b16 %v1595, %v1579
    %v1916 = vpack.c.b16 %v1596, %v1580
    %v1917 = vpack.c.b16 %v1597, %v1581
    %v1918 = vpack.c.b16 %v1598, %v1582
    %v1919 = vpack.c.b16 %v1599, %v1583
    %v1920 = vpack.c.b16 %v1600, %v1584
    %v1921 = vpack.c.b16 %v1601, %v1585
    %v1922 = vpack.c.b16 %v1602, %v1586
    %v1923 = vpack.c.b16 %v1603, %v1587
    %v1924 = vpack.c.b16 %v1604, %v1604
    %v1925 = vpack.c.b16 %v1605, %v1605
    %v1926 = vpack.c.b16 %v1606, %v1606
    %v1927 = vpack.c.b16 %v1607, %v1607
    %v1928 = vpack.c.b16 %v1608, %v1608
    %v1929 = vpack.c.b16 %v1609, %v1609
    %v1930 = vpack.c.b16 %v1610, %v1610
    %v1931 = vpack.c.b16 %v1611, %v1611
    %v1932 = vpack.c.b16 %v1612, %v1612
    %v1933 = vpack.c.b16 %v1613, %v1613
    %v1934 = vpack.c.b16 %v1614, %v1614
    %v1935 = vpack.c.b16 %v1615, %v1615
    %v1936 = vpack.c.b16 %v1616, %v1616
    %v1937 = vpack.c.b16 %v1617, %v1617
    %v1938 = vpack.c.b16 %v1618, %v1618
    %v1939 = vpack.c.b16 %v1619, %v1619
    %vm2244 = vcmask 457728
    %v2246 = vsel %vm2244, %v337, 0
    %vm2248 = vcmask 1043456
    %v2250 = vsel %vm2248, %v1924, 0
    %v2253 = vsel %vm2248, %v1925, 0
    %v2256 = vsel %vm2248, %v1926, 0
    %v2259 = vsel %vm2248, %v1927, 0
    %v2262 = vsel %vm2248, %v1928, 0
    %v2265 = vsel %vm2248, %v1929, 0
    %v2268 = vsel %vm2248, %v1930, 0
    %v2271 = vsel %vm2248, %v1931, 0
    %v2274 = vsel %vm2248, %v1932, 0
    %v2277 = vsel %vm2248, %v1933, 0
    %v2280 = vsel %vm2248, %v1934, 0
    %v2283 = vsel %vm2248, %v1935, 0
    %v2286 = vsel %vm2248, %v1936, 0
    %v2289 = vsel %vm2248, %v1937, 0
    %v2292 = vsel %vm2248, %v1938, 0
    %v2295 = vsel %vm2248, %v1939, 0
    %2297 = vmatpush.bf16.msra.mxu0 %v1732
    %2298 = vmatpush.bf16.msra.mxu0 %v1716
    %2299 = vmatpush.bf16.msra.mxu0 %v1700
    %2300 = vmatpush.bf16.msra.mxu0 %v1684
    %2301 = vmatpush.bf16.msra.mxu0 %v1668
    %2302 = vmatpush.bf16.msra.mxu0 %v1652
    %2303 = vmatpush.bf16.msra.mxu0 %v1636
    %2304 = vmatpush.bf16.msra.mxu0 %v1620
    %2305 = vmatmul.bf16.gmra.mxu0 %v335
    %v2306 = vpop.f32.mrf.mxu0
    %v2307 = vadd.f32 %v652, %v2306
    %v2308 = vpop.f32.mrf.mxu0
    %2309 = vdwg.mxu0
    %2310 = vmatpush.bf16.msra.mxu0 %v1860
    %2311 = vmatpush.bf16.msra.mxu0 %v1844
    %2312 = vmatpush.bf16.msra.mxu0 %v1828
    %2313 = vmatpush.bf16.msra.mxu0 %v1812
    %2314 = vmatpush.bf16.msra.mxu0 %v1796
    %2315 = vmatpush.bf16.msra.mxu0 %v1780
    %2316 = vmatpush.bf16.msra.mxu0 %v1764
    %2317 = vmatpush.bf16.msra.mxu0 %v1748
    %2318 = vmatmul.bf16.gmra.mxu0 %v336
    %v2319 = vpop.f32.mrf.mxu0
    %v2320 = vadd.f32 %v2307, %v2319
    %v2321 = vpop.f32.mrf.mxu0
    %2322 = vdwg.mxu0
    %2323 = vmatpush.bf16.msra.mxu0 0
    %2324 = vmatpush.bf16.msra.mxu0 0
    %2325 = vmatpush.bf16.msra.mxu0 0
    %2326 = vmatpush.bf16.msra.mxu0 0
    %2327 = vmatpush.bf16.msra.mxu0 %v2250
    %2328 = vmatpush.bf16.msra.mxu0 %v1908
    %2329 = vmatpush.bf16.msra.mxu0 %v1892
    %2330 = vmatpush.bf16.msra.mxu0 %v1876
    %2331 = vmatmul.bf16.gmra.mxu0 %v2246
    %v2332 = vpop.f32.mrf.mxu0
    %v2333 = vadd.f32 %v2320, %v2332
    %v2334 = vpop.f32.mrf.mxu0
    %2335 = vdwg.mxu0
    %2336 = vmatpush.bf16.msra.mxu0 %v1733
    %2337 = vmatpush.bf16.msra.mxu0 %v1717
    %2338 = vmatpush.bf16.msra.mxu0 %v1701
    %2339 = vmatpush.bf16.msra.mxu0 %v1685
    %2340 = vmatpush.bf16.msra.mxu0 %v1669
    %2341 = vmatpush.bf16.msra.mxu0 %v1653
    %2342 = vmatpush.bf16.msra.mxu0 %v1637
    %2343 = vmatpush.bf16.msra.mxu0 %v1621
    %2344 = vmatmul.bf16.gmra.mxu0 %v335
    %v2345 = vpop.f32.mrf.mxu0
    %v2346 = vadd.f32 %v653, %v2345
    %v2347 = vpop.f32.mrf.mxu0
    %2348 = vdwg.mxu0
    %2349 = vmatpush.bf16.msra.mxu0 %v1861
    %2350 = vmatpush.bf16.msra.mxu0 %v1845
    %2351 = vmatpush.bf16.msra.mxu0 %v1829
    %2352 = vmatpush.bf16.msra.mxu0 %v1813
    %2353 = vmatpush.bf16.msra.mxu0 %v1797
    %2354 = vmatpush.bf16.msra.mxu0 %v1781
    %2355 = vmatpush.bf16.msra.mxu0 %v1765
    %2356 = vmatpush.bf16.msra.mxu0 %v1749
    %2357 = vmatmul.bf16.gmra.mxu0 %v336
    %v2358 = vpop.f32.mrf.mxu0
    %v2359 = vadd.f32 %v2346, %v2358
    %v2360 = vpop.f32.mrf.mxu0
    %2361 = vdwg.mxu0
    %2362 = vmatpush.bf16.msra.mxu0 0
    %2363 = vmatpush.bf16.msra.mxu0 0
    %2364 = vmatpush.bf16.msra.mxu0 0
    %2365 = vmatpush.bf16.msra.mxu0 0
    %2366 = vmatpush.bf16.msra.mxu0 %v2253
    %2367 = vmatpush.bf16.msra.mxu0 %v1909
    %2368 = vmatpush.bf16.msra.mxu0 %v1893
    %2369 = vmatpush.bf16.msra.mxu0 %v1877
    %2370 = vmatmul.bf16.gmra.mxu0 %v2246
    %v2371 = vpop.f32.mrf.mxu0
    %v2372 = vadd.f32 %v2359, %v2371
    %v2373 = vpop.f32.mrf.mxu0
    %2374 = vdwg.mxu0
    %2375 = vmatpush.bf16.msra.mxu0 %v1734
    %2376 = vmatpush.bf16.msra.mxu0 %v1718
    %2377 = vmatpush.bf16.msra.mxu0 %v1702
    %2378 = vmatpush.bf16.msra.mxu0 %v1686
    %2379 = vmatpush.bf16.msra.mxu0 %v1670
    %2380 = vmatpush.bf16.msra.mxu0 %v1654
    %2381 = vmatpush.bf16.msra.mxu0 %v1638
    %2382 = vmatpush.bf16.msra.mxu0 %v1622
    %2383 = vmatmul.bf16.gmra.mxu0 %v335
    %v2384 = vpop.f32.mrf.mxu0
    %v2385 = vadd.f32 %v654, %v2384
    %v2386 = vpop.f32.mrf.mxu0
    %2387 = vdwg.mxu0
    %2388 = vmatpush.bf16.msra.mxu0 %v1862
    %2389 = vmatpush.bf16.msra.mxu0 %v1846
    %2390 = vmatpush.bf16.msra.mxu0 %v1830
    %2391 = vmatpush.bf16.msra.mxu0 %v1814
    %2392 = vmatpush.bf16.msra.mxu0 %v1798
    %2393 = vmatpush.bf16.msra.mxu0 %v1782
    %2394 = vmatpush.bf16.msra.mxu0 %v1766
    %2395 = vmatpush.bf16.msra.mxu0 %v1750
    %2396 = vmatmul.bf16.gmra.mxu0 %v336
    %v2397 = vpop.f32.mrf.mxu0
    %v2398 = vadd.f32 %v2385, %v2397
    %v2399 = vpop.f32.mrf.mxu0
    %2400 = vdwg.mxu0
    %2401 = vmatpush.bf16.msra.mxu0 0
    %2402 = vmatpush.bf16.msra.mxu0 0
    %2403 = vmatpush.bf16.msra.mxu0 0
    %2404 = vmatpush.bf16.msra.mxu0 0
    %2405 = vmatpush.bf16.msra.mxu0 %v2256
    %2406 = vmatpush.bf16.msra.mxu0 %v1910
    %2407 = vmatpush.bf16.msra.mxu0 %v1894
    %2408 = vmatpush.bf16.msra.mxu0 %v1878
    %2409 = vmatmul.bf16.gmra.mxu0 %v2246
    %v2410 = vpop.f32.mrf.mxu0
    %v2411 = vadd.f32 %v2398, %v2410
    %v2412 = vpop.f32.mrf.mxu0
    %2413 = vdwg.mxu0
    %2414 = vmatpush.bf16.msra.mxu0 %v1735
    %2415 = vmatpush.bf16.msra.mxu0 %v1719
    %2416 = vmatpush.bf16.msra.mxu0 %v1703
    %2417 = vmatpush.bf16.msra.mxu0 %v1687
    %2418 = vmatpush.bf16.msra.mxu0 %v1671
    %2419 = vmatpush.bf16.msra.mxu0 %v1655
    %2420 = vmatpush.bf16.msra.mxu0 %v1639
    %2421 = vmatpush.bf16.msra.mxu0 %v1623
    %2422 = vmatmul.bf16.gmra.mxu0 %v335
    %v2423 = vpop.f32.mrf.mxu0
    %v2424 = vadd.f32 %v655, %v2423
    %v2425 = vpop.f32.mrf.mxu0
    %2426 = vdwg.mxu0
    %2427 = vmatpush.bf16.msra.mxu0 %v1863
    %2428 = vmatpush.bf16.msra.mxu0 %v1847
    %2429 = vmatpush.bf16.msra.mxu0 %v1831
    %2430 = vmatpush.bf16.msra.mxu0 %v1815
    %2431 = vmatpush.bf16.msra.mxu0 %v1799
    %2432 = vmatpush.bf16.msra.mxu0 %v1783
    %2433 = vmatpush.bf16.msra.mxu0 %v1767
    %2434 = vmatpush.bf16.msra.mxu0 %v1751
    %2435 = vmatmul.bf16.gmra.mxu0 %v336
    %v2436 = vpop.f32.mrf.mxu0
    %v2437 = vadd.f32 %v2424, %v2436
    %v2438 = vpop.f32.mrf.mxu0
    %2439 = vdwg.mxu0
    %2440 = vmatpush.bf16.msra.mxu0 0
    %2441 = vmatpush.bf16.msra.mxu0 0
    %2442 = vmatpush.bf16.msra.mxu0 0
    %2443 = vmatpush.bf16.msra.mxu0 0
    %2444 = vmatpush.bf16.msra.mxu0 %v2259
    %2445 = vmatpush.bf16.msra.mxu0 %v1911
    %2446 = vmatpush.bf16.msra.mxu0 %v1895
    %2447 = vmatpush.bf16.msra.mxu0 %v1879
    %2448 = vmatmul.bf16.gmra.mxu0 %v2246
    %v2449 = vpop.f32.mrf.mxu0
    %v2450 = vadd.f32 %v2437, %v2449
    %v2451 = vpop.f32.mrf.mxu0
    %2452 = vdwg.mxu0
    %2453 = vmatpush.bf16.msra.mxu0 %v1736
    %2454 = vmatpush.bf16.msra.mxu0 %v1720
    %2455 = vmatpush.bf16.msra.mxu0 %v1704
    %2456 = vmatpush.bf16.msra.mxu0 %v1688
    %2457 = vmatpush.bf16.msra.mxu0 %v1672
    %2458 = vmatpush.bf16.msra.mxu0 %v1656
    %2459 = vmatpush.bf16.msra.mxu0 %v1640
    %2460 = vmatpush.bf16.msra.mxu0 %v1624
    %2461 = vmatmul.bf16.gmra.mxu0 %v335
    %v2462 = vpop.f32.mrf.mxu0
    %v2463 = vadd.f32 %v656, %v2462
    %v2464 = vpop.f32.mrf.mxu0
    %2465 = vdwg.mxu0
    %2466 = vmatpush.bf16.msra.mxu0 %v1864
    %2467 = vmatpush.bf16.msra.mxu0 %v1848
    %2468 = vmatpush.bf16.msra.mxu0 %v1832
    %2469 = vmatpush.bf16.msra.mxu0 %v1816
    %2470 = vmatpush.bf16.msra.mxu0 %v1800
    %2471 = vmatpush.bf16.msra.mxu0 %v1784
    %2472 = vmatpush.bf16.msra.mxu0 %v1768
    %2473 = vmatpush.bf16.msra.mxu0 %v1752
    %2474 = vmatmul.bf16.gmra.mxu0 %v336
    %v2475 = vpop.f32.mrf.mxu0
    %v2476 = vadd.f32 %v2463, %v2475
    %v2477 = vpop.f32.mrf.mxu0
    %2478 = vdwg.mxu0
    %2479 = vmatpush.bf16.msra.mxu0 0
    %2480 = vmatpush.bf16.msra.mxu0 0
    %2481 = vmatpush.bf16.msra.mxu0 0
    %2482 = vmatpush.bf16.msra.mxu0 0
    %2483 = vmatpush.bf16.msra.mxu0 %v2262
    %2484 = vmatpush.bf16.msra.mxu0 %v1912
    %2485 = vmatpush.bf16.msra.mxu0 %v1896
    %2486 = vmatpush.bf16.msra.mxu0 %v1880
    %2487 = vmatmul.bf16.gmra.mxu0 %v2246
    %v2488 = vpop.f32.mrf.mxu0
    %v2489 = vadd.f32 %v2476, %v2488
    %v2490 = vpop.f32.mrf.mxu0
    %2491 = vdwg.mxu0
    %2492 = vmatpush.bf16.msra.mxu0 %v1737
    %2493 = vmatpush.bf16.msra.mxu0 %v1721
    %2494 = vmatpush.bf16.msra.mxu0 %v1705
    %2495 = vmatpush.bf16.msra.mxu0 %v1689
    %2496 = vmatpush.bf16.msra.mxu0 %v1673
    %2497 = vmatpush.bf16.msra.mxu0 %v1657
    %2498 = vmatpush.bf16.msra.mxu0 %v1641
    %2499 = vmatpush.bf16.msra.mxu0 %v1625
    %2500 = vmatmul.bf16.gmra.mxu0 %v335
    %v2501 = vpop.f32.mrf.mxu0
    %v2502 = vadd.f32 %v657, %v2501
    %v2503 = vpop.f32.mrf.mxu0
    %2504 = vdwg.mxu0
    %2505 = vmatpush.bf16.msra.mxu0 %v1865
    %2506 = vmatpush.bf16.msra.mxu0 %v1849
    %2507 = vmatpush.bf16.msra.mxu0 %v1833
    %2508 = vmatpush.bf16.msra.mxu0 %v1817
    %2509 = vmatpush.bf16.msra.mxu0 %v1801
    %2510 = vmatpush.bf16.msra.mxu0 %v1785
    %2511 = vmatpush.bf16.msra.mxu0 %v1769
    %2512 = vmatpush.bf16.msra.mxu0 %v1753
    %2513 = vmatmul.bf16.gmra.mxu0 %v336
    %v2514 = vpop.f32.mrf.mxu0
    %v2515 = vadd.f32 %v2502, %v2514
    %v2516 = vpop.f32.mrf.mxu0
    %2517 = vdwg.mxu0
    %2518 = vmatpush.bf16.msra.mxu0 0
    %2519 = vmatpush.bf16.msra.mxu0 0
    %2520 = vmatpush.bf16.msra.mxu0 0
    %2521 = vmatpush.bf16.msra.mxu0 0
    %2522 = vmatpush.bf16.msra.mxu0 %v2265
    %2523 = vmatpush.bf16.msra.mxu0 %v1913
    %2524 = vmatpush.bf16.msra.mxu0 %v1897
    %2525 = vmatpush.bf16.msra.mxu0 %v1881
    %2526 = vmatmul.bf16.gmra.mxu0 %v2246
    %v2527 = vpop.f32.mrf.mxu0
    %v2528 = vadd.f32 %v2515, %v2527
    %v2529 = vpop.f32.mrf.mxu0
    %2530 = vdwg.mxu0
    %2531 = vmatpush.bf16.msra.mxu0 %v1738
    %2532 = vmatpush.bf16.msra.mxu0 %v1722
    %2533 = vmatpush.bf16.msra.mxu0 %v1706
    %2534 = vmatpush.bf16.msra.mxu0 %v1690
    %2535 = vmatpush.bf16.msra.mxu0 %v1674
    %2536 = vmatpush.bf16.msra.mxu0 %v1658
    %2537 = vmatpush.bf16.msra.mxu0 %v1642
    %2538 = vmatpush.bf16.msra.mxu0 %v1626
    %2539 = vmatmul.bf16.gmra.mxu0 %v335
    %v2540 = vpop.f32.mrf.mxu0
    %v2541 = vadd.f32 %v658, %v2540
    %v2542 = vpop.f32.mrf.mxu0
    %2543 = vdwg.mxu0
    %2544 = vmatpush.bf16.msra.mxu0 %v1866
    %2545 = vmatpush.bf16.msra.mxu0 %v1850
    %2546 = vmatpush.bf16.msra.mxu0 %v1834
    %2547 = vmatpush.bf16.msra.mxu0 %v1818
    %2548 = vmatpush.bf16.msra.mxu0 %v1802
    %2549 = vmatpush.bf16.msra.mxu0 %v1786
    %2550 = vmatpush.bf16.msra.mxu0 %v1770
    %2551 = vmatpush.bf16.msra.mxu0 %v1754
    %2552 = vmatmul.bf16.gmra.mxu0 %v336
    %v2553 = vpop.f32.mrf.mxu0
    %v2554 = vadd.f32 %v2541, %v2553
    %v2555 = vpop.f32.mrf.mxu0
    %2556 = vdwg.mxu0
    %2557 = vmatpush.bf16.msra.mxu0 0
    %2558 = vmatpush.bf16.msra.mxu0 0
    %2559 = vmatpush.bf16.msra.mxu0 0
    %2560 = vmatpush.bf16.msra.mxu0 0
    %2561 = vmatpush.bf16.msra.mxu0 %v2268
    %2562 = vmatpush.bf16.msra.mxu0 %v1914
    %2563 = vmatpush.bf16.msra.mxu0 %v1898
    %2564 = vmatpush.bf16.msra.mxu0 %v1882
    %2565 = vmatmul.bf16.gmra.mxu0 %v2246
    %v2566 = vpop.f32.mrf.mxu0
    %v2567 = vadd.f32 %v2554, %v2566
    %v2568 = vpop.f32.mrf.mxu0
    %2569 = vdwg.mxu0
    %2570 = vmatpush.bf16.msra.mxu0 %v1739
    %2571 = vmatpush.bf16.msra.mxu0 %v1723
    %2572 = vmatpush.bf16.msra.mxu0 %v1707
    %2573 = vmatpush.bf16.msra.mxu0 %v1691
    %2574 = vmatpush.bf16.msra.mxu0 %v1675
    %2575 = vmatpush.bf16.msra.mxu0 %v1659
    %2576 = vmatpush.bf16.msra.mxu0 %v1643
    %2577 = vmatpush.bf16.msra.mxu0 %v1627
    %2578 = vmatmul.bf16.gmra.mxu0 %v335
    %v2579 = vpop.f32.mrf.mxu0
    %v2580 = vadd.f32 %v659, %v2579
    %v2581 = vpop.f32.mrf.mxu0
    %2582 = vdwg.mxu0
    %2583 = vmatpush.bf16.msra.mxu0 %v1867
    %2584 = vmatpush.bf16.msra.mxu0 %v1851
    %2585 = vmatpush.bf16.msra.mxu0 %v1835
    %2586 = vmatpush.bf16.msra.mxu0 %v1819
    %2587 = vmatpush.bf16.msra.mxu0 %v1803
    %2588 = vmatpush.bf16.msra.mxu0 %v1787
    %2589 = vmatpush.bf16.msra.mxu0 %v1771
    %2590 = vmatpush.bf16.msra.mxu0 %v1755
    %2591 = vmatmul.bf16.gmra.mxu0 %v336
    %v2592 = vpop.f32.mrf.mxu0
    %v2593 = vadd.f32 %v2580, %v2592
    %v2594 = vpop.f32.mrf.mxu0
    %2595 = vdwg.mxu0
    %2596 = vmatpush.bf16.msra.mxu0 0
    %2597 = vmatpush.bf16.msra.mxu0 0
    %2598 = vmatpush.bf16.msra.mxu0 0
    %2599 = vmatpush.bf16.msra.mxu0 0
    %2600 = vmatpush.bf16.msra.mxu0 %v2271
    %2601 = vmatpush.bf16.msra.mxu0 %v1915
    %2602 = vmatpush.bf16.msra.mxu0 %v1899
    %2603 = vmatpush.bf16.msra.mxu0 %v1883
    %2604 = vmatmul.bf16.gmra.mxu0 %v2246
    %v2605 = vpop.f32.mrf.mxu0
    %v2606 = vadd.f32 %v2593, %v2605
    %v2607 = vpop.f32.mrf.mxu0
    %2608 = vdwg.mxu0
    %2609 = vmatpush.bf16.msra.mxu0 %v1740
    %2610 = vmatpush.bf16.msra.mxu0 %v1724
    %2611 = vmatpush.bf16.msra.mxu0 %v1708
    %2612 = vmatpush.bf16.msra.mxu0 %v1692
    %2613 = vmatpush.bf16.msra.mxu0 %v1676
    %2614 = vmatpush.bf16.msra.mxu0 %v1660
    %2615 = vmatpush.bf16.msra.mxu0 %v1644
    %2616 = vmatpush.bf16.msra.mxu0 %v1628
    %2617 = vmatmul.bf16.gmra.mxu0 %v335
    %v2618 = vpop.f32.mrf.mxu0
    %v2619 = vadd.f32 %v660, %v2618
    %v2620 = vpop.f32.mrf.mxu0
    %2621 = vdwg.mxu0
    %2622 = vmatpush.bf16.msra.mxu0 %v1868
    %2623 = vmatpush.bf16.msra.mxu0 %v1852
    %2624 = vmatpush.bf16.msra.mxu0 %v1836
    %2625 = vmatpush.bf16.msra.mxu0 %v1820
    %2626 = vmatpush.bf16.msra.mxu0 %v1804
    %2627 = vmatpush.bf16.msra.mxu0 %v1788
    %2628 = vmatpush.bf16.msra.mxu0 %v1772
    %2629 = vmatpush.bf16.msra.mxu0 %v1756
    %2630 = vmatmul.bf16.gmra.mxu0 %v336
    %v2631 = vpop.f32.mrf.mxu0
    %v2632 = vadd.f32 %v2619, %v2631
    %v2633 = vpop.f32.mrf.mxu0
    %2634 = vdwg.mxu0
    %2635 = vmatpush.bf16.msra.mxu0 0
    %2636 = vmatpush.bf16.msra.mxu0 0
    %2637 = vmatpush.bf16.msra.mxu0 0
    %2638 = vmatpush.bf16.msra.mxu0 0
    %2639 = vmatpush.bf16.msra.mxu0 %v2274
    %2640 = vmatpush.bf16.msra.mxu0 %v1916
    %2641 = vmatpush.bf16.msra.mxu0 %v1900
    %2642 = vmatpush.bf16.msra.mxu0 %v1884
    %2643 = vmatmul.bf16.gmra.mxu0 %v2246
    %v2644 = vpop.f32.mrf.mxu0
    %v2645 = vadd.f32 %v2632, %v2644
    %v2646 = vpop.f32.mrf.mxu0
    %2647 = vdwg.mxu0
    %2648 = vmatpush.bf16.msra.mxu0 %v1741
    %2649 = vmatpush.bf16.msra.mxu0 %v1725
    %2650 = vmatpush.bf16.msra.mxu0 %v1709
    %2651 = vmatpush.bf16.msra.mxu0 %v1693
    %2652 = vmatpush.bf16.msra.mxu0 %v1677
    %2653 = vmatpush.bf16.msra.mxu0 %v1661
    %2654 = vmatpush.bf16.msra.mxu0 %v1645
    %2655 = vmatpush.bf16.msra.mxu0 %v1629
    %2656 = vmatmul.bf16.gmra.mxu0 %v335
    %v2657 = vpop.f32.mrf.mxu0
    %v2658 = vadd.f32 %v661, %v2657
    %v2659 = vpop.f32.mrf.mxu0
    %2660 = vdwg.mxu0
    %2661 = vmatpush.bf16.msra.mxu0 %v1869
    %2662 = vmatpush.bf16.msra.mxu0 %v1853
    %2663 = vmatpush.bf16.msra.mxu0 %v1837
    %2664 = vmatpush.bf16.msra.mxu0 %v1821
    %2665 = vmatpush.bf16.msra.mxu0 %v1805
    %2666 = vmatpush.bf16.msra.mxu0 %v1789
    %2667 = vmatpush.bf16.msra.mxu0 %v1773
    %2668 = vmatpush.bf16.msra.mxu0 %v1757
    %2669 = vmatmul.bf16.gmra.mxu0 %v336
    %v2670 = vpop.f32.mrf.mxu0
    %v2671 = vadd.f32 %v2658, %v2670
    %v2672 = vpop.f32.mrf.mxu0
    %2673 = vdwg.mxu0
    %2674 = vmatpush.bf16.msra.mxu0 0
    %2675 = vmatpush.bf16.msra.mxu0 0
    %2676 = vmatpush.bf16.msra.mxu0 0
    %2677 = vmatpush.bf16.msra.mxu0 0
    %2678 = vmatpush.bf16.msra.mxu0 %v2277
    %2679 = vmatpush.bf16.msra.mxu0 %v1917
    %2680 = vmatpush.bf16.msra.mxu0 %v1901
    %2681 = vmatpush.bf16.msra.mxu0 %v1885
    %2682 = vmatmul.bf16.gmra.mxu0 %v2246
    %v2683 = vpop.f32.mrf.mxu0
    %v2684 = vadd.f32 %v2671, %v2683
    %v2685 = vpop.f32.mrf.mxu0
    %2686 = vdwg.mxu0
    %2687 = vmatpush.bf16.msra.mxu0 %v1742
    %2688 = vmatpush.bf16.msra.mxu0 %v1726
    %2689 = vmatpush.bf16.msra.mxu0 %v1710
    %2690 = vmatpush.bf16.msra.mxu0 %v1694
    %2691 = vmatpush.bf16.msra.mxu0 %v1678
    %2692 = vmatpush.bf16.msra.mxu0 %v1662
    %2693 = vmatpush.bf16.msra.mxu0 %v1646
    %2694 = vmatpush.bf16.msra.mxu0 %v1630
    %2695 = vmatmul.bf16.gmra.mxu0 %v335
    %v2696 = vpop.f32.mrf.mxu0
    %v2697 = vadd.f32 %v662, %v2696
    %v2698 = vpop.f32.mrf.mxu0
    %2699 = vdwg.mxu0
    %2700 = vmatpush.bf16.msra.mxu0 %v1870
    %2701 = vmatpush.bf16.msra.mxu0 %v1854
    %2702 = vmatpush.bf16.msra.mxu0 %v1838
    %2703 = vmatpush.bf16.msra.mxu0 %v1822
    %2704 = vmatpush.bf16.msra.mxu0 %v1806
    %2705 = vmatpush.bf16.msra.mxu0 %v1790
    %2706 = vmatpush.bf16.msra.mxu0 %v1774
    %2707 = vmatpush.bf16.msra.mxu0 %v1758
    %2708 = vmatmul.bf16.gmra.mxu0 %v336
    %v2709 = vpop.f32.mrf.mxu0
    %v2710 = vadd.f32 %v2697, %v2709
    %v2711 = vpop.f32.mrf.mxu0
    %2712 = vdwg.mxu0
    %2713 = vmatpush.bf16.msra.mxu0 0
    %2714 = vmatpush.bf16.msra.mxu0 0
    %2715 = vmatpush.bf16.msra.mxu0 0
    %2716 = vmatpush.bf16.msra.mxu0 0
    %2717 = vmatpush.bf16.msra.mxu0 %v2280
    %2718 = vmatpush.bf16.msra.mxu0 %v1918
    %2719 = vmatpush.bf16.msra.mxu0 %v1902
    %2720 = vmatpush.bf16.msra.mxu0 %v1886
    %2721 = vmatmul.bf16.gmra.mxu0 %v2246
    %v2722 = vpop.f32.mrf.mxu0
    %v2723 = vadd.f32 %v2710, %v2722
    %v2724 = vpop.f32.mrf.mxu0
    %2725 = vdwg.mxu0
    %2726 = vmatpush.bf16.msra.mxu0 %v1743
    %2727 = vmatpush.bf16.msra.mxu0 %v1727
    %2728 = vmatpush.bf16.msra.mxu0 %v1711
    %2729 = vmatpush.bf16.msra.mxu0 %v1695
    %2730 = vmatpush.bf16.msra.mxu0 %v1679
    %2731 = vmatpush.bf16.msra.mxu0 %v1663
    %2732 = vmatpush.bf16.msra.mxu0 %v1647
    %2733 = vmatpush.bf16.msra.mxu0 %v1631
    %2734 = vmatmul.bf16.gmra.mxu0 %v335
    %v2735 = vpop.f32.mrf.mxu0
    %v2736 = vadd.f32 %v663, %v2735
    %v2737 = vpop.f32.mrf.mxu0
    %2738 = vdwg.mxu0
    %2739 = vmatpush.bf16.msra.mxu0 %v1871
    %2740 = vmatpush.bf16.msra.mxu0 %v1855
    %2741 = vmatpush.bf16.msra.mxu0 %v1839
    %2742 = vmatpush.bf16.msra.mxu0 %v1823
    %2743 = vmatpush.bf16.msra.mxu0 %v1807
    %2744 = vmatpush.bf16.msra.mxu0 %v1791
    %2745 = vmatpush.bf16.msra.mxu0 %v1775
    %2746 = vmatpush.bf16.msra.mxu0 %v1759
    %2747 = vmatmul.bf16.gmra.mxu0 %v336
    %v2748 = vpop.f32.mrf.mxu0
    %v2749 = vadd.f32 %v2736, %v2748
    %v2750 = vpop.f32.mrf.mxu0
    %2751 = vdwg.mxu0
    %2752 = vmatpush.bf16.msra.mxu0 0
    %2753 = vmatpush.bf16.msra.mxu0 0
    %2754 = vmatpush.bf16.msra.mxu0 0
    %2755 = vmatpush.bf16.msra.mxu0 0
    %2756 = vmatpush.bf16.msra.mxu0 %v2283
    %2757 = vmatpush.bf16.msra.mxu0 %v1919
    %2758 = vmatpush.bf16.msra.mxu0 %v1903
    %2759 = vmatpush.bf16.msra.mxu0 %v1887
    %2760 = vmatmul.bf16.gmra.mxu0 %v2246
    %v2761 = vpop.f32.mrf.mxu0
    %v2762 = vadd.f32 %v2749, %v2761
    %v2763 = vpop.f32.mrf.mxu0
    %2764 = vdwg.mxu0
    %2765 = vmatpush.bf16.msra.mxu0 %v1744
    %2766 = vmatpush.bf16.msra.mxu0 %v1728
    %2767 = vmatpush.bf16.msra.mxu0 %v1712
    %2768 = vmatpush.bf16.msra.mxu0 %v1696
    %2769 = vmatpush.bf16.msra.mxu0 %v1680
    %2770 = vmatpush.bf16.msra.mxu0 %v1664
    %2771 = vmatpush.bf16.msra.mxu0 %v1648
    %2772 = vmatpush.bf16.msra.mxu0 %v1632
    %2773 = vmatmul.bf16.gmra.mxu0 %v335
    %v2774 = vpop.f32.mrf.mxu0
    %v2775 = vadd.f32 %v664, %v2774
    %v2776 = vpop.f32.mrf.mxu0
    %2777 = vdwg.mxu0
    %2778 = vmatpush.bf16.msra.mxu0 %v1872
    %2779 = vmatpush.bf16.msra.mxu0 %v1856
    %2780 = vmatpush.bf16.msra.mxu0 %v1840
    %2781 = vmatpush.bf16.msra.mxu0 %v1824
    %2782 = vmatpush.bf16.msra.mxu0 %v1808
    %2783 = vmatpush.bf16.msra.mxu0 %v1792
    %2784 = vmatpush.bf16.msra.mxu0 %v1776
    %2785 = vmatpush.bf16.msra.mxu0 %v1760
    %2786 = vmatmul.bf16.gmra.mxu0 %v336
    %v2787 = vpop.f32.mrf.mxu0
    %v2788 = vadd.f32 %v2775, %v2787
    %v2789 = vpop.f32.mrf.mxu0
    %2790 = vdwg.mxu0
    %2791 = vmatpush.bf16.msra.mxu0 0
    %2792 = vmatpush.bf16.msra.mxu0 0
    %2793 = vmatpush.bf16.msra.mxu0 0
    %2794 = vmatpush.bf16.msra.mxu0 0
    %2795 = vmatpush.bf16.msra.mxu0 %v2286
    %2796 = vmatpush.bf16.msra.mxu0 %v1920
    %2797 = vmatpush.bf16.msra.mxu0 %v1904
    %2798 = vmatpush.bf16.msra.mxu0 %v1888
    %2799 = vmatmul.bf16.gmra.mxu0 %v2246
    %v2800 = vpop.f32.mrf.mxu0
    %v2801 = vadd.f32 %v2788, %v2800
    %v2802 = vpop.f32.mrf.mxu0
    %2803 = vdwg.mxu0
    %2804 = vmatpush.bf16.msra.mxu0 %v1745
    %2805 = vmatpush.bf16.msra.mxu0 %v1729
    %2806 = vmatpush.bf16.msra.mxu0 %v1713
    %2807 = vmatpush.bf16.msra.mxu0 %v1697
    %2808 = vmatpush.bf16.msra.mxu0 %v1681
    %2809 = vmatpush.bf16.msra.mxu0 %v1665
    %2810 = vmatpush.bf16.msra.mxu0 %v1649
    %2811 = vmatpush.bf16.msra.mxu0 %v1633
    %2812 = vmatmul.bf16.gmra.mxu0 %v335
    %v2813 = vpop.f32.mrf.mxu0
    %v2814 = vadd.f32 %v665, %v2813
    %v2815 = vpop.f32.mrf.mxu0
    %2816 = vdwg.mxu0
    %2817 = vmatpush.bf16.msra.mxu0 %v1873
    %2818 = vmatpush.bf16.msra.mxu0 %v1857
    %2819 = vmatpush.bf16.msra.mxu0 %v1841
    %2820 = vmatpush.bf16.msra.mxu0 %v1825
    %2821 = vmatpush.bf16.msra.mxu0 %v1809
    %2822 = vmatpush.bf16.msra.mxu0 %v1793
    %2823 = vmatpush.bf16.msra.mxu0 %v1777
    %2824 = vmatpush.bf16.msra.mxu0 %v1761
    %2825 = vmatmul.bf16.gmra.mxu0 %v336
    %v2826 = vpop.f32.mrf.mxu0
    %v2827 = vadd.f32 %v2814, %v2826
    %v2828 = vpop.f32.mrf.mxu0
    %2829 = vdwg.mxu0
    %2830 = vmatpush.bf16.msra.mxu0 0
    %2831 = vmatpush.bf16.msra.mxu0 0
    %2832 = vmatpush.bf16.msra.mxu0 0
    %2833 = vmatpush.bf16.msra.mxu0 0
    %2834 = vmatpush.bf16.msra.mxu0 %v2289
    %2835 = vmatpush.bf16.msra.mxu0 %v1921
    %2836 = vmatpush.bf16.msra.mxu0 %v1905
    %2837 = vmatpush.bf16.msra.mxu0 %v1889
    %2838 = vmatmul.bf16.gmra.mxu0 %v2246
    %v2839 = vpop.f32.mrf.mxu0
    %v2840 = vadd.f32 %v2827, %v2839
    %v2841 = vpop.f32.mrf.mxu0
    %2842 = vdwg.mxu0
    %2843 = vmatpush.bf16.msra.mxu0 %v1746
    %2844 = vmatpush.bf16.msra.mxu0 %v1730
    %2845 = vmatpush.bf16.msra.mxu0 %v1714
    %2846 = vmatpush.bf16.msra.mxu0 %v1698
    %2847 = vmatpush.bf16.msra.mxu0 %v1682
    %2848 = vmatpush.bf16.msra.mxu0 %v1666
    %2849 = vmatpush.bf16.msra.mxu0 %v1650
    %2850 = vmatpush.bf16.msra.mxu0 %v1634
    %2851 = vmatmul.bf16.gmra.mxu0 %v335
    %v2852 = vpop.f32.mrf.mxu0
    %v2853 = vadd.f32 %v666, %v2852
    %v2854 = vpop.f32.mrf.mxu0
    %2855 = vdwg.mxu0
    %2856 = vmatpush.bf16.msra.mxu0 %v1874
    %2857 = vmatpush.bf16.msra.mxu0 %v1858
    %2858 = vmatpush.bf16.msra.mxu0 %v1842
    %2859 = vmatpush.bf16.msra.mxu0 %v1826
    %2860 = vmatpush.bf16.msra.mxu0 %v1810
    %2861 = vmatpush.bf16.msra.mxu0 %v1794
    %2862 = vmatpush.bf16.msra.mxu0 %v1778
    %2863 = vmatpush.bf16.msra.mxu0 %v1762
    %2864 = vmatmul.bf16.gmra.mxu0 %v336
    %v2865 = vpop.f32.mrf.mxu0
    %v2866 = vadd.f32 %v2853, %v2865
    %v2867 = vpop.f32.mrf.mxu0
    %2868 = vdwg.mxu0
    %2869 = vmatpush.bf16.msra.mxu0 0
    %2870 = vmatpush.bf16.msra.mxu0 0
    %2871 = vmatpush.bf16.msra.mxu0 0
    %2872 = vmatpush.bf16.msra.mxu0 0
    %2873 = vmatpush.bf16.msra.mxu0 %v2292
    %2874 = vmatpush.bf16.msra.mxu0 %v1922
    %2875 = vmatpush.bf16.msra.mxu0 %v1906
    %2876 = vmatpush.bf16.msra.mxu0 %v1890
    %2877 = vmatmul.bf16.gmra.mxu0 %v2246
    %v2878 = vpop.f32.mrf.mxu0
    %v2879 = vadd.f32 %v2866, %v2878
    %v2880 = vpop.f32.mrf.mxu0
    %2881 = vdwg.mxu0
    %2882 = vmatpush.bf16.msra.mxu0 %v1747
    %2883 = vmatpush.bf16.msra.mxu0 %v1731
    %2884 = vmatpush.bf16.msra.mxu0 %v1715
    %2885 = vmatpush.bf16.msra.mxu0 %v1699
    %2886 = vmatpush.bf16.msra.mxu0 %v1683
    %2887 = vmatpush.bf16.msra.mxu0 %v1667
    %2888 = vmatpush.bf16.msra.mxu0 %v1651
    %2889 = vmatpush.bf16.msra.mxu0 %v1635
    %2890 = vmatmul.bf16.gmra.mxu0 %v335
    %v2891 = vpop.f32.mrf.mxu0
    %v2892 = vadd.f32 %v667, %v2891
    %v2893 = vpop.f32.mrf.mxu0
    %2894 = vdwg.mxu0
    %2895 = vmatpush.bf16.msra.mxu0 %v1875
    %2896 = vmatpush.bf16.msra.mxu0 %v1859
    %2897 = vmatpush.bf16.msra.mxu0 %v1843
    %2898 = vmatpush.bf16.msra.mxu0 %v1827
    %2899 = vmatpush.bf16.msra.mxu0 %v1811
    %2900 = vmatpush.bf16.msra.mxu0 %v1795
    %2901 = vmatpush.bf16.msra.mxu0 %v1779
    %2902 = vmatpush.bf16.msra.mxu0 %v1763
    %2903 = vmatmul.bf16.gmra.mxu0 %v336
    %v2904 = vpop.f32.mrf.mxu0
    %v2905 = vadd.f32 %v2892, %v2904
    %v2906 = vpop.f32.mrf.mxu0
    %2907 = vdwg.mxu0
    %2908 = vmatpush.bf16.msra.mxu0 0
    %2909 = vmatpush.bf16.msra.mxu0 0
    %2910 = vmatpush.bf16.msra.mxu0 0
    %2911 = vmatpush.bf16.msra.mxu0 0
    %2912 = vmatpush.bf16.msra.mxu0 %v2295
    %2913 = vmatpush.bf16.msra.mxu0 %v1923
    %2914 = vmatpush.bf16.msra.mxu0 %v1907
    %2915 = vmatpush.bf16.msra.mxu0 %v1891
    %2916 = vmatmul.bf16.gmra.mxu0 %v2246
    %v2917 = vpop.f32.mrf.mxu0
    %v2918 = vadd.f32 %v2905, %v2917
    %v2919 = vpop.f32.mrf.mxu0
    %2920 = vdwg.mxu0
    %v2921 = vsel %vm2248, %v2333, 0.0
    %v2922 = vsel %vm2248, %v2372, 0.0
    %v2923 = vadd.f32 %v2921, %v2922
    %v2924 = vsel %vm2248, %v2411, 0.0
    %v2925 = vadd.f32 %v2923, %v2924
    %v2926 = vsel %vm2248, %v2450, 0.0
    %v2927 = vadd.f32 %v2925, %v2926
    %v2928 = vsel %vm2248, %v2489, 0.0
    %v2929 = vadd.f32 %v2927, %v2928
    %v2930 = vsel %vm2248, %v2528, 0.0
    %v2931 = vadd.f32 %v2929, %v2930
    %v2932 = vsel %vm2248, %v2567, 0.0
    %v2933 = vadd.f32 %v2931, %v2932
    %v2934 = vsel %vm2248, %v2606, 0.0
    %v2935 = vadd.f32 %v2933, %v2934
    %v2936 = vsel %vm2248, %v2645, 0.0
    %v2937 = vadd.f32 %v2935, %v2936
    %v2938 = vsel %vm2248, %v2684, 0.0
    %v2939 = vadd.f32 %v2937, %v2938
    %v2940 = vsel %vm2248, %v2723, 0.0
    %v2941 = vadd.f32 %v2939, %v2940
    %v2942 = vsel %vm2248, %v2762, 0.0
    %v2943 = vadd.f32 %v2941, %v2942
    %v2944 = vsel %vm2248, %v2801, 0.0
    %v2945 = vadd.f32 %v2943, %v2944
    %v2946 = vsel %vm2248, %v2840, 0.0
    %v2947 = vadd.f32 %v2945, %v2946
    %v2948 = vsel %vm2248, %v2879, 0.0
    %v2949 = vadd.f32 %v2947, %v2948
    %vm2950 = vcmask 650240
    %v2951 = vsel %vm2950, %v2918, 0.0
    %v2952 = vadd.f32 %v2949, %v2951
    %2953 = vadd.xlane.f32.xlu0 %v2952
    %v2954 = vpop.xlane.xlu0 %2953
    %v2955 = vrcp.pop 2000.0
    %v2956 = vmul.f32 2000.0, %v2955
    %v2957 = vsub.f32 1.0, %v2956
    %v2958 = vmul.f32 %v2955, %v2957
    %v2959 = vadd.f32 %v2955, %v2958
    %vm2960 = vweird.f32 %v2955
    %v2961 = vsel %vm2960, %v2955, %v2959
    %v2962 = vmul.f32 %v2954, %v2961
    %v2963 = vmul.f32 %v2333, %v2333
    %v2964 = vmul.f32 %v2372, %v2372
    %v2965 = vmul.f32 %v2411, %v2411
    %v2966 = vmul.f32 %v2450, %v2450
    %v2967 = vmul.f32 %v2489, %v2489
    %v2968 = vmul.f32 %v2528, %v2528
    %v2969 = vmul.f32 %v2567, %v2567
    %v2970 = vmul.f32 %v2606, %v2606
    %v2971 = vmul.f32 %v2645, %v2645
    %v2972 = vmul.f32 %v2684, %v2684
    %v2973 = vmul.f32 %v2723, %v2723
    %v2974 = vmul.f32 %v2762, %v2762
    %v2975 = vmul.f32 %v2801, %v2801
    %v2976 = vmul.f32 %v2840, %v2840
    %v2977 = vmul.f32 %v2879, %v2879
    %v2978 = vmul.f32 %v2918, %v2918
    %v2979 = vsel %vm2248, %v2963, 0.0
    %v2980 = vsel %vm2248, %v2964, 0.0
    %v2981 = vadd.f32 %v2979, %v2980
    %v2982 = vsel %vm2248, %v2965, 0.0
    %v2983 = vadd.f32 %v2981, %v2982
    %v2984 = vsel %vm2248, %v2966, 0.0
    %v2985 = vadd.f32 %v2983, %v2984
    %v2986 = vsel %vm2248, %v2967, 0.0
    %v2987 = vadd.f32 %v2985, %v2986
    %v2988 = vsel %vm2248, %v2968, 0.0
    %v2989 = vadd.f32 %v2987, %v2988
    %v2990 = vsel %vm2248, %v2969, 0.0
    %v2991 = vadd.f32 %v2989, %v2990
    %v2992 = vsel %vm2248, %v2970, 0.0
    %v2993 = vadd.f32 %v2991, %v2992
    %v2994 = vsel %vm2248, %v2971, 0.0
    %v2995 = vadd.f32 %v2993, %v2994
    %v2996 = vsel %vm2248, %v2972, 0.0
    %v2997 = vadd.f32 %v2995, %v2996
    %v2998 = vsel %vm2248, %v2973, 0.0
    %v2999 = vadd.f32 %v2997, %v2998
    %v3000 = vsel %vm2248, %v2974, 0.0
    %v3001 = vadd.f32 %v2999, %v3000
    %v3002 = vsel %vm2248, %v2975, 0.0
    %v3003 = vadd.f32 %v3001, %v3002
    %v3004 = vsel %vm2248, %v2976, 0.0
    %v3005 = vadd.f32 %v3003, %v3004
    %v3006 = vsel %vm2248, %v2977, 0.0
    %v3007 = vadd.f32 %v3005, %v3006
    %v3008 = vsel %vm2950, %v2978, 0.0
    %v3009 = vadd.f32 %v3007, %v3008
    %3010 = vadd.xlane.f32.xlu0 %v3009
    %v3011 = vpop.xlane.xlu0 %3010
    %v3012 = vmul.f32 %v3011, %v2961
    %v3013 = vmul.f32 %v2962, %v2962
    %v3014 = vsub.f32 %v3012, %v3013
    %v3015 = vmax.f32 %v3014, 0.0
    %v3016 = vsub.f32 %v2333, %v2962
    %v3017 = vsub.f32 %v2372, %v2962
    %v3018 = vsub.f32 %v2411, %v2962
    %v3019 = vsub.f32 %v2450, %v2962
    %v3020 = vsub.f32 %v2489, %v2962
    %v3021 = vsub.f32 %v2528, %v2962
    %v3022 = vsub.f32 %v2567, %v2962
    %v3023 = vsub.f32 %v2606, %v2962
    %v3024 = vsub.f32 %v2645, %v2962
    %v3025 = vsub.f32 %v2684, %v2962
    %v3026 = vsub.f32 %v2723, %v2962
    %v3027 = vsub.f32 %v2762, %v2962
    %v3028 = vsub.f32 %v2801, %v2962
    %v3029 = vsub.f32 %v2840, %v2962
    %v3030 = vsub.f32 %v2879, %v2962
    %v3031 = vsub.f32 %v2918, %v2962
    %v3032 = vadd.f32 %v3015, 1e-05
    %v3033 = vrsqrt.pop %v3032
    %v3034 = vmul.f32 %v3033, %v3032
    %v3035 = vmul.f32 %v3034, %v3033
    %v3036 = vmul.f32 0.5, %v3035
    %v3037 = vsub.f32 1.5, %v3036
    %v3038 = vmul.f32 %v3033, %v3037
    %vm3039 = vweird.f32 %v3032
    %vm3040 = vweird.f32 %v3033
    %vm3041 = vmor %vm3039, %vm3040
    %v3042 = vsel %vm3041, %v3033, %v3038
    %v3043 = vmul.f32 %v3016, %v3042
    %v3044 = vmul.f32 %v3017, %v3042
    %v3045 = vmul.f32 %v3018, %v3042
    %v3046 = vmul.f32 %v3019, %v3042
    %v3047 = vmul.f32 %v3020, %v3042
    %v3048 = vmul.f32 %v3021, %v3042
    %v3049 = vmul.f32 %v3022, %v3042
    %v3050 = vmul.f32 %v3023, %v3042
    %v3051 = vmul.f32 %v3024, %v3042
    %v3052 = vmul.f32 %v3025, %v3042
    %v3053 = vmul.f32 %v3026, %v3042
    %v3054 = vmul.f32 %v3027, %v3042
    %v3055 = vmul.f32 %v3028, %v3042
    %v3056 = vmul.f32 %v3029, %v3042
    %v3057 = vmul.f32 %v3030, %v3042
    %v3058 = vmul.f32 %v3031, %v3042
    %v3061 = vperm.slane %v303, 0
    %v3062 = vperm.slane %v303, 1
    %v3063 = vperm.slane %v303, 2
    %v3064 = vperm.slane %v303, 3
    %v3065 = vperm.slane %v303, 4
    %v3066 = vperm.slane %v303, 5
    %v3067 = vperm.slane %v303, 6
    %v3068 = vperm.slane %v303, 7
    %v3069 = vperm.slane %v307, 0
    %v3070 = vperm.slane %v307, 1
    %v3071 = vperm.slane %v307, 2
    %v3072 = vperm.slane %v307, 3
    %v3073 = vperm.slane %v307, 4
    %v3074 = vperm.slane %v307, 5
    %v3075 = vperm.slane %v307, 6
    %v3076 = vperm.slane %v307, 7
    %v3093 = vmul.f32 %v3043, %v3061
    %v3094 = vmul.f32 %v3044, %v3062
    %v3095 = vmul.f32 %v3045, %v3063
    %v3096 = vmul.f32 %v3046, %v3064
    %v3097 = vmul.f32 %v3047, %v3065
    %v3098 = vmul.f32 %v3048, %v3066
    %v3099 = vmul.f32 %v3049, %v3067
    %v3100 = vmul.f32 %v3050, %v3068
    %v3101 = vmul.f32 %v3051, %v3069
    %v3102 = vmul.f32 %v3052, %v3070
    %v3103 = vmul.f32 %v3053, %v3071
    %v3104 = vmul.f32 %v3054, %v3072
    %v3105 = vmul.f32 %v3055, %v3073
    %v3106 = vmul.f32 %v3056, %v3074
    %v3107 = vmul.f32 %v3057, %v3075
    %v3108 = vmul.f32 %v3058, %v3076
    %v3111 = vperm.slane %v311, 0
    %v3112 = vperm.slane %v311, 1
    %v3113 = vperm.slane %v311, 2
    %v3114 = vperm.slane %v311, 3
    %v3115 = vperm.slane %v311, 4
    %v3116 = vperm.slane %v311, 5
    %v3117 = vperm.slane %v311, 6
    %v3118 = vperm.slane %v311, 7
    %v3119 = vperm.slane %v315, 0
    %v3120 = vperm.slane %v315, 1
    %v3121 = vperm.slane %v315, 2
    %v3122 = vperm.slane %v315, 3
    %v3123 = vperm.slane %v315, 4
    %v3124 = vperm.slane %v315, 5
    %v3125 = vperm.slane %v315, 6
    %v3126 = vperm.slane %v315, 7
    %v3143 = vadd.f32 %v3093, %v3111
    %v3144 = vadd.f32 %v3094, %v3112
    %v3145 = vadd.f32 %v3095, %v3113
    %v3146 = vadd.f32 %v3096, %v3114
    %v3147 = vadd.f32 %v3097, %v3115
    %v3148 = vadd.f32 %v3098, %v3116
    %v3149 = vadd.f32 %v3099, %v3117
    %v3150 = vadd.f32 %v3100, %v3118
    %v3151 = vadd.f32 %v3101, %v3119
    %v3152 = vadd.f32 %v3102, %v3120
    %v3153 = vadd.f32 %v3103, %v3121
    %v3154 = vadd.f32 %v3104, %v3122
    %v3155 = vadd.f32 %v3105, %v3123
    %v3156 = vadd.f32 %v3106, %v3124
    %v3157 = vadd.f32 %v3107, %v3125
    %v3158 = vadd.f32 %v3108, %v3126
    %v3159 = vmax.f32 %v3143, 0.0
    %v3160 = vmax.f32 %v3144, 0.0
    %v3161 = vmax.f32 %v3145, 0.0
    %v3162 = vmax.f32 %v3146, 0.0
    %v3163 = vmax.f32 %v3147, 0.0
    %v3164 = vmax.f32 %v3148, 0.0
    %v3165 = vmax.f32 %v3149, 0.0
    %v3166 = vmax.f32 %v3150, 0.0
    %v3167 = vmax.f32 %v3151, 0.0
    %v3168 = vmax.f32 %v3152, 0.0
    %v3169 = vmax.f32 %v3153, 0.0
    %v3170 = vmax.f32 %v3154, 0.0
    %v3171 = vmax.f32 %v3155, 0.0
    %v3172 = vmax.f32 %v3156, 0.0
    %v3173 = vmax.f32 %v3157, 0.0
    %v3174 = vmax.f32 %v3158, 0.0
    %s3175 = smul.u32 4, 250
    %s3176 = smul.u32 %s3175, 4
    %s3177 = sshll.u32 %s3176, 4
    %3178 = dma.done [#allocation4], %s3177
    %v3179 = vpack.c.bf16 %v3159, %v3159
    %v3180 = vpack.c.bf16 %v3160, %v3160
    %v3181 = vpack.c.bf16 %v3161, %v3161
    %v3182 = vpack.c.bf16 %v3162, %v3162
    %v3183 = vpack.c.bf16 %v3163, %v3163
    %v3184 = vpack.c.bf16 %v3164, %v3164
    %v3185 = vpack.c.bf16 %v3165, %v3165
    %v3186 = vpack.c.bf16 %v3166, %v3166
    %v3187 = vpack.c.bf16 %v3167, %v3167
    %v3188 = vpack.c.bf16 %v3168, %v3168
    %v3189 = vpack.c.bf16 %v3169, %v3169
    %v3190 = vpack.c.bf16 %v3170, %v3170
    %v3191 = vpack.c.bf16 %v3171, %v3171
    %v3192 = vpack.c.bf16 %v3172, %v3172
    %v3193 = vpack.c.bf16 %v3173, %v3173
    %v3194 = vpack.c.bf16 %v3174, %v3174
    %v3195 = vld [vmem:[#allocation2] sm:$0xff]
    %v3196 = vld [vmem:[#allocation2 + $0x8] sm:$0xff]
    %v3197 = vld [vmem:[#allocation2 + $0x10] sm:$0xff]
    %v3198 = vld [vmem:[#allocation2 + $0x18] sm:$0xff]
    %v3199 = vld [vmem:[#allocation2 + $0x20] sm:$0xff]
    %v3200 = vld [vmem:[#allocation2 + $0x28] sm:$0xff]
    %v3201 = vld [vmem:[#allocation2 + $0x30] sm:$0xff]
    %v3202 = vld [vmem:[#allocation2 + $0x38] sm:$0xff]
    %v3203 = vld [vmem:[#allocation2 + $0x40] sm:$0xff]
    %v3204 = vld [vmem:[#allocation2 + $0x48] sm:$0xff]
    %v3205 = vld [vmem:[#allocation2 + $0x50] sm:$0xff]
    %v3206 = vld [vmem:[#allocation2 + $0x58] sm:$0xff]
    %v3207 = vld [vmem:[#allocation2 + $0x60] sm:$0xff]
    %v3208 = vld [vmem:[#allocation2 + $0x68] sm:$0xff]
    %v3209 = vld [vmem:[#allocation2 + $0x70] sm:$0xff]
    %v3210 = vld [vmem:[#allocation2 + $0x78] sm:$0xff]
    %v3211 = vld [vmem:[#allocation2 + $0x80] sm:$0xff]
    %v3212 = vld [vmem:[#allocation2 + $0x88] sm:$0xff]
    %v3213 = vld [vmem:[#allocation2 + $0x90] sm:$0xff]
    %v3214 = vld [vmem:[#allocation2 + $0x98] sm:$0xff]
    %v3215 = vld [vmem:[#allocation2 + $0xa0] sm:$0xff]
    %v3216 = vld [vmem:[#allocation2 + $0xa8] sm:$0xff]
    %v3217 = vld [vmem:[#allocation2 + $0xb0] sm:$0xff]
    %v3218 = vld [vmem:[#allocation2 + $0xb8] sm:$0xff]
    %v3219 = vld [vmem:[#allocation2 + $0xc0] sm:$0xff]
    %v3220 = vld [vmem:[#allocation2 + $0xc8] sm:$0xff]
    %v3221 = vld [vmem:[#allocation2 + $0xd0] sm:$0xff]
    %v3222 = vld [vmem:[#allocation2 + $0xd8] sm:$0xff]
    %v3223 = vld [vmem:[#allocation2 + $0xe0] sm:$0xff]
    %v3224 = vld [vmem:[#allocation2 + $0xe8] sm:$0xff]
    %v3225 = vld [vmem:[#allocation2 + $0xf0] sm:$0xff]
    %v3226 = vld [vmem:[#allocation2 + $0xf8] sm:$0xff]
    %v3227 = vld [vmem:[#allocation2 + $0x100] sm:$0xff]
    %v3228 = vld [vmem:[#allocation2 + $0x108] sm:$0xff]
    %v3229 = vld [vmem:[#allocation2 + $0x110] sm:$0xff]
    %v3230 = vld [vmem:[#allocation2 + $0x118] sm:$0xff]
    %v3231 = vld [vmem:[#allocation2 + $0x120] sm:$0xff]
    %v3232 = vld [vmem:[#allocation2 + $0x128] sm:$0xff]
    %v3233 = vld [vmem:[#allocation2 + $0x130] sm:$0xff]
    %v3234 = vld [vmem:[#allocation2 + $0x138] sm:$0xff]
    %v3235 = vld [vmem:[#allocation2 + $0x140] sm:$0xff]
    %v3236 = vld [vmem:[#allocation2 + $0x148] sm:$0xff]
    %v3237 = vld [vmem:[#allocation2 + $0x150] sm:$0xff]
    %v3238 = vld [vmem:[#allocation2 + $0x158] sm:$0xff]
    %v3239 = vld [vmem:[#allocation2 + $0x160] sm:$0xff]
    %v3240 = vld [vmem:[#allocation2 + $0x168] sm:$0xff]
    %v3241 = vld [vmem:[#allocation2 + $0x170] sm:$0xff]
    %v3242 = vld [vmem:[#allocation2 + $0x178] sm:$0xff]
    %v3243 = vld [vmem:[#allocation2 + $0x180] sm:$0xff]
    %v3244 = vld [vmem:[#allocation2 + $0x188] sm:$0xff]
    %v3245 = vld [vmem:[#allocation2 + $0x190] sm:$0xff]
    %v3246 = vld [vmem:[#allocation2 + $0x198] sm:$0xff]
    %v3247 = vld [vmem:[#allocation2 + $0x1a0] sm:$0xff]
    %v3248 = vld [vmem:[#allocation2 + $0x1a8] sm:$0xff]
    %v3249 = vld [vmem:[#allocation2 + $0x1b0] sm:$0xff]
    %v3250 = vld [vmem:[#allocation2 + $0x1b8] sm:$0xff]
    %v3251 = vld [vmem:[#allocation2 + $0x1c0] sm:$0xff]
    %v3252 = vld [vmem:[#allocation2 + $0x1c8] sm:$0xff]
    %v3253 = vld [vmem:[#allocation2 + $0x1d0] sm:$0xff]
    %v3254 = vld [vmem:[#allocation2 + $0x1d8] sm:$0xff]
    %v3255 = vld [vmem:[#allocation2 + $0x1e0] sm:$0xff]
    %v3256 = vld [vmem:[#allocation2 + $0x1e8] sm:$0xff]
    %v3257 = vld [vmem:[#allocation2 + $0x1f0] sm:$0xff]
    %v3258 = vld [vmem:[#allocation2 + $0x1f8] sm:$0xff]
    %v3259 = vld [vmem:[#allocation2 + $0x200] sm:$0xff]
    %v3260 = vld [vmem:[#allocation2 + $0x208] sm:$0xff]
    %v3261 = vld [vmem:[#allocation2 + $0x210] sm:$0xff]
    %v3262 = vld [vmem:[#allocation2 + $0x218] sm:$0xff]
    %v3263 = vld [vmem:[#allocation2 + $0x220] sm:$0xff]
    %v3264 = vld [vmem:[#allocation2 + $0x228] sm:$0xff]
    %v3265 = vld [vmem:[#allocation2 + $0x230] sm:$0xff]
    %v3266 = vld [vmem:[#allocation2 + $0x238] sm:$0xff]
    %v3267 = vld [vmem:[#allocation2 + $0x240] sm:$0xff]
    %v3268 = vld [vmem:[#allocation2 + $0x248] sm:$0xff]
    %v3269 = vld [vmem:[#allocation2 + $0x250] sm:$0xff]
    %v3270 = vld [vmem:[#allocation2 + $0x258] sm:$0xff]
    %v3271 = vld [vmem:[#allocation2 + $0x260] sm:$0xff]
    %v3272 = vld [vmem:[#allocation2 + $0x268] sm:$0xff]
    %v3273 = vld [vmem:[#allocation2 + $0x270] sm:$0xff]
    %v3274 = vld [vmem:[#allocation2 + $0x278] sm:$0xff]
    %v3275 = vld [vmem:[#allocation2 + $0x280] sm:$0xff]
    %v3276 = vld [vmem:[#allocation2 + $0x288] sm:$0xff]
    %v3277 = vld [vmem:[#allocation2 + $0x290] sm:$0xff]
    %v3278 = vld [vmem:[#allocation2 + $0x298] sm:$0xff]
    %v3279 = vld [vmem:[#allocation2 + $0x2a0] sm:$0xff]
    %v3280 = vld [vmem:[#allocation2 + $0x2a8] sm:$0xff]
    %v3281 = vld [vmem:[#allocation2 + $0x2b0] sm:$0xff]
    %v3282 = vld [vmem:[#allocation2 + $0x2b8] sm:$0xff]
    %v3283 = vld [vmem:[#allocation2 + $0x2c0] sm:$0xff]
    %v3284 = vld [vmem:[#allocation2 + $0x2c8] sm:$0xff]
    %v3285 = vld [vmem:[#allocation2 + $0x2d0] sm:$0xff]
    %v3286 = vld [vmem:[#allocation2 + $0x2d8] sm:$0xff]
    %v3287 = vld [vmem:[#allocation2 + $0x2e0] sm:$0xff]
    %v3288 = vld [vmem:[#allocation2 + $0x2e8] sm:$0xff]
    %v3289 = vld [vmem:[#allocation2 + $0x2f0] sm:$0xff]
    %v3290 = vld [vmem:[#allocation2 + $0x2f8] sm:$0xff]
    %v3291 = vld [vmem:[#allocation2 + $0x300] sm:$0xff]
    %v3292 = vld [vmem:[#allocation2 + $0x308] sm:$0xff]
    %v3293 = vld [vmem:[#allocation2 + $0x310] sm:$0xff]
    %v3294 = vld [vmem:[#allocation2 + $0x318] sm:$0xff]
    %v3295 = vld [vmem:[#allocation2 + $0x320] sm:$0xff]
    %v3296 = vld [vmem:[#allocation2 + $0x328] sm:$0xff]
    %v3297 = vld [vmem:[#allocation2 + $0x330] sm:$0xff]
    %v3298 = vld [vmem:[#allocation2 + $0x338] sm:$0xff]
    %v3299 = vld [vmem:[#allocation2 + $0x340] sm:$0xff]
    %v3300 = vld [vmem:[#allocation2 + $0x348] sm:$0xff]
    %v3301 = vld [vmem:[#allocation2 + $0x350] sm:$0xff]
    %v3302 = vld [vmem:[#allocation2 + $0x358] sm:$0xff]
    %v3303 = vld [vmem:[#allocation2 + $0x360] sm:$0xff]
    %v3304 = vld [vmem:[#allocation2 + $0x368] sm:$0xff]
    %v3305 = vld [vmem:[#allocation2 + $0x370] sm:$0xff]
    %v3306 = vld [vmem:[#allocation2 + $0x378] sm:$0xff]
    %v3307 = vld [vmem:[#allocation2 + $0x380] sm:$0xff]
    %v3308 = vld [vmem:[#allocation2 + $0x388] sm:$0xff]
    %v3309 = vld [vmem:[#allocation2 + $0x390] sm:$0xff]
    %v3310 = vld [vmem:[#allocation2 + $0x398] sm:$0xff]
    %v3311 = vld [vmem:[#allocation2 + $0x3a0] sm:$0xff]
    %v3312 = vld [vmem:[#allocation2 + $0x3a8] sm:$0xff]
    %v3313 = vld [vmem:[#allocation2 + $0x3b0] sm:$0xff]
    %v3314 = vld [vmem:[#allocation2 + $0x3b8] sm:$0xff]
    %v3315 = vld [vmem:[#allocation2 + $0x3c0] sm:$0xff]
    %v3316 = vld [vmem:[#allocation2 + $0x3c8] sm:$0xff]
    %v3317 = vld [vmem:[#allocation2 + $0x3d0] sm:$0xff]
    %v3318 = vld [vmem:[#allocation2 + $0x3d8] sm:$0xff]
    %v3319 = vld [vmem:[#allocation2 + $0x3e0] sm:$0xff]
    %v3320 = vld [vmem:[#allocation2 + $0x3e8] sm:$0xff]
    %v3321 = vld [vmem:[#allocation2 + $0x3f0] sm:$0xff]
    %v3322 = vld [vmem:[#allocation2 + $0x3f8] sm:$0xff]
    %v3323 = vld [vmem:[#allocation2 + $0x400] sm:$0xff]
    %v3324 = vld [vmem:[#allocation2 + $0x408] sm:$0xff]
    %v3325 = vld [vmem:[#allocation2 + $0x410] sm:$0xff]
    %v3326 = vld [vmem:[#allocation2 + $0x418] sm:$0xff]
    %v3327 = vld [vmem:[#allocation2 + $0x420] sm:$0xff]
    %v3328 = vld [vmem:[#allocation2 + $0x428] sm:$0xff]
    %v3329 = vld [vmem:[#allocation2 + $0x430] sm:$0xff]
    %v3330 = vld [vmem:[#allocation2 + $0x438] sm:$0xff]
    %v3331 = vld [vmem:[#allocation2 + $0x440] sm:$0xff]
    %v3332 = vld [vmem:[#allocation2 + $0x448] sm:$0xff]
    %v3333 = vld [vmem:[#allocation2 + $0x450] sm:$0xff]
    %v3334 = vld [vmem:[#allocation2 + $0x458] sm:$0xff]
    %v3335 = vld [vmem:[#allocation2 + $0x460] sm:$0xff]
    %v3336 = vld [vmem:[#allocation2 + $0x468] sm:$0xff]
    %v3337 = vld [vmem:[#allocation2 + $0x470] sm:$0xff]
    %v3338 = vld [vmem:[#allocation2 + $0x478] sm:$0xff]
    %v3339 = vld [vmem:[#allocation2 + $0x480] sm:$0xff]
    %v3340 = vld [vmem:[#allocation2 + $0x488] sm:$0xff]
    %v3341 = vld [vmem:[#allocation2 + $0x490] sm:$0xff]
    %v3342 = vld [vmem:[#allocation2 + $0x498] sm:$0xff]
    %v3343 = vld [vmem:[#allocation2 + $0x4a0] sm:$0xff]
    %v3344 = vld [vmem:[#allocation2 + $0x4a8] sm:$0xff]
    %v3345 = vld [vmem:[#allocation2 + $0x4b0] sm:$0xff]
    %v3346 = vld [vmem:[#allocation2 + $0x4b8] sm:$0xff]
    %v3347 = vld [vmem:[#allocation2 + $0x4c0] sm:$0xff]
    %v3348 = vld [vmem:[#allocation2 + $0x4c8] sm:$0xff]
    %v3349 = vld [vmem:[#allocation2 + $0x4d0] sm:$0xff]
    %v3350 = vld [vmem:[#allocation2 + $0x4d8] sm:$0xff]
    %v3351 = vld [vmem:[#allocation2 + $0x4e0] sm:$0xff]
    %v3352 = vld [vmem:[#allocation2 + $0x4e8] sm:$0xff]
    %v3353 = vld [vmem:[#allocation2 + $0x4f0] sm:$0xff]
    %v3354 = vld [vmem:[#allocation2 + $0x4f8] sm:$0xff]
    %v3355 = vld [vmem:[#allocation2 + $0x500] sm:$0xff]
    %v3356 = vld [vmem:[#allocation2 + $0x508] sm:$0xff]
    %v3357 = vld [vmem:[#allocation2 + $0x510] sm:$0xff]
    %v3358 = vld [vmem:[#allocation2 + $0x518] sm:$0xff]
    %v3359 = vld [vmem:[#allocation2 + $0x520] sm:$0xff]
    %v3360 = vld [vmem:[#allocation2 + $0x528] sm:$0xff]
    %v3361 = vld [vmem:[#allocation2 + $0x530] sm:$0xff]
    %v3362 = vld [vmem:[#allocation2 + $0x538] sm:$0xff]
    %v3363 = vld [vmem:[#allocation2 + $0x540] sm:$0xff]
    %v3364 = vld [vmem:[#allocation2 + $0x548] sm:$0xff]
    %v3365 = vld [vmem:[#allocation2 + $0x550] sm:$0xff]
    %v3366 = vld [vmem:[#allocation2 + $0x558] sm:$0xff]
    %v3367 = vld [vmem:[#allocation2 + $0x560] sm:$0xff]
    %v3368 = vld [vmem:[#allocation2 + $0x568] sm:$0xff]
    %v3369 = vld [vmem:[#allocation2 + $0x570] sm:$0xff]
    %v3370 = vld [vmem:[#allocation2 + $0x578] sm:$0xff]
    %v3371 = vld [vmem:[#allocation2 + $0x580] sm:$0xff]
    %v3372 = vld [vmem:[#allocation2 + $0x588] sm:$0xff]
    %v3373 = vld [vmem:[#allocation2 + $0x590] sm:$0xff]
    %v3374 = vld [vmem:[#allocation2 + $0x598] sm:$0xff]
    %v3375 = vld [vmem:[#allocation2 + $0x5a0] sm:$0xff]
    %v3376 = vld [vmem:[#allocation2 + $0x5a8] sm:$0xff]
    %v3377 = vld [vmem:[#allocation2 + $0x5b0] sm:$0xff]
    %v3378 = vld [vmem:[#allocation2 + $0x5b8] sm:$0xff]
    %v3379 = vld [vmem:[#allocation2 + $0x5c0] sm:$0xff]
    %v3380 = vld [vmem:[#allocation2 + $0x5c8] sm:$0xff]
    %v3381 = vld [vmem:[#allocation2 + $0x5d0] sm:$0xff]
    %v3382 = vld [vmem:[#allocation2 + $0x5d8] sm:$0xff]
    %v3383 = vld [vmem:[#allocation2 + $0x5e0] sm:$0xff]
    %v3384 = vld [vmem:[#allocation2 + $0x5e8] sm:$0xff]
    %v3385 = vld [vmem:[#allocation2 + $0x5f0] sm:$0xff]
    %v3386 = vld [vmem:[#allocation2 + $0x5f8] sm:$0xff]
    %v3387 = vld [vmem:[#allocation2 + $0x600] sm:$0xff]
    %v3388 = vld [vmem:[#allocation2 + $0x608] sm:$0xff]
    %v3389 = vld [vmem:[#allocation2 + $0x610] sm:$0xff]
    %v3390 = vld [vmem:[#allocation2 + $0x618] sm:$0xff]
    %v3391 = vld [vmem:[#allocation2 + $0x620] sm:$0xff]
    %v3392 = vld [vmem:[#allocation2 + $0x628] sm:$0xff]
    %v3393 = vld [vmem:[#allocation2 + $0x630] sm:$0xff]
    %v3394 = vld [vmem:[#allocation2 + $0x638] sm:$0xff]
    %v3395 = vld [vmem:[#allocation2 + $0x640] sm:$0xff]
    %v3396 = vld [vmem:[#allocation2 + $0x648] sm:$0xff]
    %v3397 = vld [vmem:[#allocation2 + $0x650] sm:$0xff]
    %v3398 = vld [vmem:[#allocation2 + $0x658] sm:$0xff]
    %v3399 = vld [vmem:[#allocation2 + $0x660] sm:$0xff]
    %v3400 = vld [vmem:[#allocation2 + $0x668] sm:$0xff]
    %v3401 = vld [vmem:[#allocation2 + $0x670] sm:$0xff]
    %v3402 = vld [vmem:[#allocation2 + $0x678] sm:$0xff]
    %v3403 = vld [vmem:[#allocation2 + $0x680] sm:$0xff]
    %v3404 = vld [vmem:[#allocation2 + $0x688] sm:$0xff]
    %v3405 = vld [vmem:[#allocation2 + $0x690] sm:$0xff]
    %v3406 = vld [vmem:[#allocation2 + $0x698] sm:$0xff]
    %v3407 = vld [vmem:[#allocation2 + $0x6a0] sm:$0xff]
    %v3408 = vld [vmem:[#allocation2 + $0x6a8] sm:$0xff]
    %v3409 = vld [vmem:[#allocation2 + $0x6b0] sm:$0xff]
    %v3410 = vld [vmem:[#allocation2 + $0x6b8] sm:$0xff]
    %v3411 = vld [vmem:[#allocation2 + $0x6c0] sm:$0xff]
    %v3412 = vld [vmem:[#allocation2 + $0x6c8] sm:$0xff]
    %v3413 = vld [vmem:[#allocation2 + $0x6d0] sm:$0xff]
    %v3414 = vld [vmem:[#allocation2 + $0x6d8] sm:$0xff]
    %v3415 = vld [vmem:[#allocation2 + $0x6e0] sm:$0xff]
    %v3416 = vld [vmem:[#allocation2 + $0x6e8] sm:$0xff]
    %v3417 = vld [vmem:[#allocation2 + $0x6f0] sm:$0xff]
    %v3418 = vld [vmem:[#allocation2 + $0x6f8] sm:$0xff]
    %v3419 = vld [vmem:[#allocation2 + $0x700] sm:$0xff]
    %v3420 = vld [vmem:[#allocation2 + $0x708] sm:$0xff]
    %v3421 = vld [vmem:[#allocation2 + $0x710] sm:$0xff]
    %v3422 = vld [vmem:[#allocation2 + $0x718] sm:$0xff]
    %v3423 = vld [vmem:[#allocation2 + $0x720] sm:$0xff]
    %v3424 = vld [vmem:[#allocation2 + $0x728] sm:$0xff]
    %v3425 = vld [vmem:[#allocation2 + $0x730] sm:$0xff]
    %v3426 = vld [vmem:[#allocation2 + $0x738] sm:$0xff]
    %v3427 = vld [vmem:[#allocation2 + $0x740] sm:$0xff]
    %v3428 = vld [vmem:[#allocation2 + $0x748] sm:$0xff]
    %v3429 = vld [vmem:[#allocation2 + $0x750] sm:$0xff]
    %v3430 = vld [vmem:[#allocation2 + $0x758] sm:$0xff]
    %v3431 = vld [vmem:[#allocation2 + $0x760] sm:$0xff]
    %v3432 = vld [vmem:[#allocation2 + $0x768] sm:$0xff]
    %v3433 = vld [vmem:[#allocation2 + $0x770] sm:$0xff]
    %v3434 = vld [vmem:[#allocation2 + $0x778] sm:$0xff]
    %v3435 = vld [vmem:[#allocation2 + $0x780] sm:$0xff]
    %v3436 = vld [vmem:[#allocation2 + $0x788] sm:$0xff]
    %v3437 = vld [vmem:[#allocation2 + $0x790] sm:$0xff]
    %v3438 = vld [vmem:[#allocation2 + $0x798] sm:$0xff]
    %v3439 = vld [vmem:[#allocation2 + $0x7a0] sm:$0xff]
    %v3440 = vld [vmem:[#allocation2 + $0x7a8] sm:$0xff]
    %v3441 = vld [vmem:[#allocation2 + $0x7b0] sm:$0xff]
    %v3442 = vld [vmem:[#allocation2 + $0x7b8] sm:$0xff]
    %v3443 = vld [vmem:[#allocation2 + $0x7c0] sm:$0xff]
    %v3444 = vld [vmem:[#allocation2 + $0x7c8] sm:$0xff]
    %v3445 = vld [vmem:[#allocation2 + $0x7d0] sm:$0xff]
    %v3446 = vld [vmem:[#allocation2 + $0x7d8] sm:$0xff]
    %v3447 = vld [vmem:[#allocation2 + $0x7e0] sm:$0xff]
    %v3448 = vld [vmem:[#allocation2 + $0x7e8] sm:$0xff]
    %v3449 = vld [vmem:[#allocation2 + $0x7f0] sm:$0xff]
    %v3450 = vld [vmem:[#allocation2 + $0x7f8] sm:$0xff]
    %v3451 = vld [vmem:[#allocation2 + $0x800] sm:$0xff]
    %v3452 = vld [vmem:[#allocation2 + $0x808] sm:$0xff]
    %v3453 = vld [vmem:[#allocation2 + $0x810] sm:$0xff]
    %v3454 = vld [vmem:[#allocation2 + $0x818] sm:$0xff]
    %v3455 = vld [vmem:[#allocation2 + $0x820] sm:$0xff]
    %v3456 = vld [vmem:[#allocation2 + $0x828] sm:$0xff]
    %v3457 = vld [vmem:[#allocation2 + $0x830] sm:$0xff]
    %v3458 = vld [vmem:[#allocation2 + $0x838] sm:$0xff]
    %v3459 = vld [vmem:[#allocation2 + $0x840] sm:$0xff]
    %v3460 = vld [vmem:[#allocation2 + $0x848] sm:$0xff]
    %v3461 = vld [vmem:[#allocation2 + $0x850] sm:$0xff]
    %v3462 = vld [vmem:[#allocation2 + $0x858] sm:$0xff]
    %v3463 = vld [vmem:[#allocation2 + $0x860] sm:$0xff]
    %v3464 = vld [vmem:[#allocation2 + $0x868] sm:$0xff]
    %v3465 = vld [vmem:[#allocation2 + $0x870] sm:$0xff]
    %v3466 = vld [vmem:[#allocation2 + $0x878] sm:$0xff]
    %v3467 = vld [vmem:[#allocation2 + $0x880] sm:$0xff]
    %v3468 = vld [vmem:[#allocation2 + $0x888] sm:$0xff]
    %v3469 = vld [vmem:[#allocation2 + $0x890] sm:$0xff]
    %v3470 = vld [vmem:[#allocation2 + $0x898] sm:$0xff]
    %v3471 = vld [vmem:[#allocation2 + $0x8a0] sm:$0xff]
    %v3472 = vld [vmem:[#allocation2 + $0x8a8] sm:$0xff]
    %v3473 = vld [vmem:[#allocation2 + $0x8b0] sm:$0xff]
    %v3474 = vld [vmem:[#allocation2 + $0x8b8] sm:$0xff]
    %v3475 = vld [vmem:[#allocation2 + $0x8c0] sm:$0xff]
    %v3476 = vld [vmem:[#allocation2 + $0x8c8] sm:$0xff]
    %v3477 = vld [vmem:[#allocation2 + $0x8d0] sm:$0xff]
    %v3478 = vld [vmem:[#allocation2 + $0x8d8] sm:$0xff]
    %v3479 = vld [vmem:[#allocation2 + $0x8e0] sm:$0xff]
    %v3480 = vld [vmem:[#allocation2 + $0x8e8] sm:$0xff]
    %v3481 = vld [vmem:[#allocation2 + $0x8f0] sm:$0xff]
    %v3482 = vld [vmem:[#allocation2 + $0x8f8] sm:$0xff]
    %v3483 = vld [vmem:[#allocation2 + $0x900] sm:$0xff]
    %v3484 = vld [vmem:[#allocation2 + $0x908] sm:$0xff]
    %v3485 = vld [vmem:[#allocation2 + $0x910] sm:$0xff]
    %v3486 = vld [vmem:[#allocation2 + $0x918] sm:$0xff]
    %v3487 = vld [vmem:[#allocation2 + $0x920] sm:$0xff]
    %v3488 = vld [vmem:[#allocation2 + $0x928] sm:$0xff]
    %v3489 = vld [vmem:[#allocation2 + $0x930] sm:$0xff]
    %v3490 = vld [vmem:[#allocation2 + $0x938] sm:$0xff]
    %v3491 = vld [vmem:[#allocation2 + $0x940] sm:$0xff]
    %v3492 = vld [vmem:[#allocation2 + $0x948] sm:$0xff]
    %v3493 = vld [vmem:[#allocation2 + $0x950] sm:$0xff]
    %v3494 = vld [vmem:[#allocation2 + $0x958] sm:$0xff]
    %v3495 = vld [vmem:[#allocation2 + $0x960] sm:$0xff]
    %v3496 = vld [vmem:[#allocation2 + $0x968] sm:$0xff]
    %v3497 = vld [vmem:[#allocation2 + $0x970] sm:$0xff]
    %v3498 = vld [vmem:[#allocation2 + $0x978] sm:$0xff]
    %v3499 = vld [vmem:[#allocation2 + $0x980] sm:$0xff]
    %v3500 = vld [vmem:[#allocation2 + $0x988] sm:$0xff]
    %v3501 = vld [vmem:[#allocation2 + $0x990] sm:$0xff]
    %v3502 = vld [vmem:[#allocation2 + $0x998] sm:$0xff]
    %v3503 = vld [vmem:[#allocation2 + $0x9a0] sm:$0xff]
    %v3504 = vld [vmem:[#allocation2 + $0x9a8] sm:$0xff]
    %v3505 = vld [vmem:[#allocation2 + $0x9b0] sm:$0xff]
    %v3506 = vld [vmem:[#allocation2 + $0x9b8] sm:$0xff]
    %v3507 = vld [vmem:[#allocation2 + $0x9c0] sm:$0xff]
    %v3508 = vld [vmem:[#allocation2 + $0x9c8] sm:$0xff]
    %v3509 = vld [vmem:[#allocation2 + $0x9d0] sm:$0xff]
    %v3510 = vld [vmem:[#allocation2 + $0x9d8] sm:$0xff]
    %v3511 = vld [vmem:[#allocation2 + $0x9e0] sm:$0xff]
    %v3512 = vld [vmem:[#allocation2 + $0x9e8] sm:$0xff]
    %v3513 = vld [vmem:[#allocation2 + $0x9f0] sm:$0xff]
    %v3514 = vld [vmem:[#allocation2 + $0x9f8] sm:$0xff]
    %v3515 = vld [vmem:[#allocation2 + $0xa00] sm:$0xff]
    %v3516 = vld [vmem:[#allocation2 + $0xa08] sm:$0xff]
    %v3517 = vld [vmem:[#allocation2 + $0xa10] sm:$0xff]
    %v3518 = vld [vmem:[#allocation2 + $0xa18] sm:$0xff]
    %v3519 = vld [vmem:[#allocation2 + $0xa20] sm:$0xff]
    %v3520 = vld [vmem:[#allocation2 + $0xa28] sm:$0xff]
    %v3521 = vld [vmem:[#allocation2 + $0xa30] sm:$0xff]
    %v3522 = vld [vmem:[#allocation2 + $0xa38] sm:$0xff]
    %v3523 = vld [vmem:[#allocation2 + $0xa40] sm:$0xff]
    %v3524 = vld [vmem:[#allocation2 + $0xa48] sm:$0xff]
    %v3525 = vld [vmem:[#allocation2 + $0xa50] sm:$0xff]
    %v3526 = vld [vmem:[#allocation2 + $0xa58] sm:$0xff]
    %v3527 = vld [vmem:[#allocation2 + $0xa60] sm:$0xff]
    %v3528 = vld [vmem:[#allocation2 + $0xa68] sm:$0xff]
    %v3529 = vld [vmem:[#allocation2 + $0xa70] sm:$0xff]
    %v3530 = vld [vmem:[#allocation2 + $0xa78] sm:$0xff]
    %v3531 = vld [vmem:[#allocation2 + $0xa80] sm:$0xff]
    %v3532 = vld [vmem:[#allocation2 + $0xa88] sm:$0xff]
    %v3533 = vld [vmem:[#allocation2 + $0xa90] sm:$0xff]
    %v3534 = vld [vmem:[#allocation2 + $0xa98] sm:$0xff]
    %v3535 = vld [vmem:[#allocation2 + $0xaa0] sm:$0xff]
    %v3536 = vld [vmem:[#allocation2 + $0xaa8] sm:$0xff]
    %v3537 = vld [vmem:[#allocation2 + $0xab0] sm:$0xff]
    %v3538 = vld [vmem:[#allocation2 + $0xab8] sm:$0xff]
    %v3539 = vld [vmem:[#allocation2 + $0xac0] sm:$0xff]
    %v3540 = vld [vmem:[#allocation2 + $0xac8] sm:$0xff]
    %v3541 = vld [vmem:[#allocation2 + $0xad0] sm:$0xff]
    %v3542 = vld [vmem:[#allocation2 + $0xad8] sm:$0xff]
    %v3543 = vld [vmem:[#allocation2 + $0xae0] sm:$0xff]
    %v3544 = vld [vmem:[#allocation2 + $0xae8] sm:$0xff]
    %v3545 = vld [vmem:[#allocation2 + $0xaf0] sm:$0xff]
    %v3546 = vld [vmem:[#allocation2 + $0xaf8] sm:$0xff]
    %v3547 = vld [vmem:[#allocation2 + $0xb00] sm:$0xff]
    %v3548 = vld [vmem:[#allocation2 + $0xb08] sm:$0xff]
    %v3549 = vld [vmem:[#allocation2 + $0xb10] sm:$0xff]
    %v3550 = vld [vmem:[#allocation2 + $0xb18] sm:$0xff]
    %v3551 = vld [vmem:[#allocation2 + $0xb20] sm:$0xff]
    %v3552 = vld [vmem:[#allocation2 + $0xb28] sm:$0xff]
    %v3553 = vld [vmem:[#allocation2 + $0xb30] sm:$0xff]
    %v3554 = vld [vmem:[#allocation2 + $0xb38] sm:$0xff]
    %v3555 = vld [vmem:[#allocation2 + $0xb40] sm:$0xff]
    %v3556 = vld [vmem:[#allocation2 + $0xb48] sm:$0xff]
    %v3557 = vld [vmem:[#allocation2 + $0xb50] sm:$0xff]
    %v3558 = vld [vmem:[#allocation2 + $0xb58] sm:$0xff]
    %v3559 = vld [vmem:[#allocation2 + $0xb60] sm:$0xff]
    %v3560 = vld [vmem:[#allocation2 + $0xb68] sm:$0xff]
    %v3561 = vld [vmem:[#allocation2 + $0xb70] sm:$0xff]
    %v3562 = vld [vmem:[#allocation2 + $0xb78] sm:$0xff]
    %v3563 = vld [vmem:[#allocation2 + $0xb80] sm:$0xff]
    %v3564 = vld [vmem:[#allocation2 + $0xb88] sm:$0xff]
    %v3565 = vld [vmem:[#allocation2 + $0xb90] sm:$0xff]
    %v3566 = vld [vmem:[#allocation2 + $0xb98] sm:$0xff]
    %v3567 = vld [vmem:[#allocation2 + $0xba0] sm:$0xff]
    %v3568 = vld [vmem:[#allocation2 + $0xba8] sm:$0xff]
    %v3569 = vld [vmem:[#allocation2 + $0xbb0] sm:$0xff]
    %v3570 = vld [vmem:[#allocation2 + $0xbb8] sm:$0xff]
    %v3571 = vld [vmem:[#allocation2 + $0xbc0] sm:$0xff]
    %v3572 = vld [vmem:[#allocation2 + $0xbc8] sm:$0xff]
    %v3573 = vld [vmem:[#allocation2 + $0xbd0] sm:$0xff]
    %v3574 = vld [vmem:[#allocation2 + $0xbd8] sm:$0xff]
    %v3575 = vld [vmem:[#allocation2 + $0xbe0] sm:$0xff]
    %v3576 = vld [vmem:[#allocation2 + $0xbe8] sm:$0xff]
    %v3577 = vld [vmem:[#allocation2 + $0xbf0] sm:$0xff]
    %v3578 = vld [vmem:[#allocation2 + $0xbf8] sm:$0xff]
    %v3579 = vld [vmem:[#allocation2 + $0xc00] sm:$0xff]
    %v3580 = vld [vmem:[#allocation2 + $0xc08] sm:$0xff]
    %v3581 = vld [vmem:[#allocation2 + $0xc10] sm:$0xff]
    %v3582 = vld [vmem:[#allocation2 + $0xc18] sm:$0xff]
    %v3583 = vld [vmem:[#allocation2 + $0xc20] sm:$0xff]
    %v3584 = vld [vmem:[#allocation2 + $0xc28] sm:$0xff]
    %v3585 = vld [vmem:[#allocation2 + $0xc30] sm:$0xff]
    %v3586 = vld [vmem:[#allocation2 + $0xc38] sm:$0xff]
    %v3587 = vld [vmem:[#allocation2 + $0xc40] sm:$0xff]
    %v3588 = vld [vmem:[#allocation2 + $0xc48] sm:$0xff]
    %v3589 = vld [vmem:[#allocation2 + $0xc50] sm:$0xff]
    %v3590 = vld [vmem:[#allocation2 + $0xc58] sm:$0xff]
    %v3591 = vld [vmem:[#allocation2 + $0xc60] sm:$0xff]
    %v3592 = vld [vmem:[#allocation2 + $0xc68] sm:$0xff]
    %v3593 = vld [vmem:[#allocation2 + $0xc70] sm:$0xff]
    %v3594 = vld [vmem:[#allocation2 + $0xc78] sm:$0xff]
    %v3595 = vld [vmem:[#allocation2 + $0xc80] sm:$0xff]
    %v3596 = vld [vmem:[#allocation2 + $0xc88] sm:$0xff]
    %v3597 = vld [vmem:[#allocation2 + $0xc90] sm:$0xff]
    %v3598 = vld [vmem:[#allocation2 + $0xc98] sm:$0xff]
    %v3599 = vld [vmem:[#allocation2 + $0xca0] sm:$0xff]
    %v3600 = vld [vmem:[#allocation2 + $0xca8] sm:$0xff]
    %v3601 = vld [vmem:[#allocation2 + $0xcb0] sm:$0xff]
    %v3602 = vld [vmem:[#allocation2 + $0xcb8] sm:$0xff]
    %v3603 = vld [vmem:[#allocation2 + $0xcc0] sm:$0xff]
    %v3604 = vld [vmem:[#allocation2 + $0xcc8] sm:$0xff]
    %v3605 = vld [vmem:[#allocation2 + $0xcd0] sm:$0xff]
    %v3606 = vld [vmem:[#allocation2 + $0xcd8] sm:$0xff]
    %v3607 = vld [vmem:[#allocation2 + $0xce0] sm:$0xff]
    %v3608 = vld [vmem:[#allocation2 + $0xce8] sm:$0xff]
    %v3609 = vld [vmem:[#allocation2 + $0xcf0] sm:$0xff]
    %v3610 = vld [vmem:[#allocation2 + $0xcf8] sm:$0xff]
    %v3611 = vld [vmem:[#allocation2 + $0xd00] sm:$0xff]
    %v3612 = vld [vmem:[#allocation2 + $0xd08] sm:$0xff]
    %v3613 = vld [vmem:[#allocation2 + $0xd10] sm:$0xff]
    %v3614 = vld [vmem:[#allocation2 + $0xd18] sm:$0xff]
    %v3615 = vld [vmem:[#allocation2 + $0xd20] sm:$0xff]
    %v3616 = vld [vmem:[#allocation2 + $0xd28] sm:$0xff]
    %v3617 = vld [vmem:[#allocation2 + $0xd30] sm:$0xff]
    %v3618 = vld [vmem:[#allocation2 + $0xd38] sm:$0xff]
    %v3619 = vld [vmem:[#allocation2 + $0xd40] sm:$0xff]
    %v3620 = vld [vmem:[#allocation2 + $0xd48] sm:$0xff]
    %v3621 = vld [vmem:[#allocation2 + $0xd50] sm:$0xff]
    %v3622 = vld [vmem:[#allocation2 + $0xd58] sm:$0xff]
    %v3623 = vld [vmem:[#allocation2 + $0xd60] sm:$0xff]
    %v3624 = vld [vmem:[#allocation2 + $0xd68] sm:$0xff]
    %v3625 = vld [vmem:[#allocation2 + $0xd70] sm:$0xff]
    %v3626 = vld [vmem:[#allocation2 + $0xd78] sm:$0xff]
    %v3627 = vld [vmem:[#allocation2 + $0xd80] sm:$0xff]
    %v3628 = vld [vmem:[#allocation2 + $0xd88] sm:$0xff]
    %v3629 = vld [vmem:[#allocation2 + $0xd90] sm:$0xff]
    %v3630 = vld [vmem:[#allocation2 + $0xd98] sm:$0xff]
    %v3631 = vld [vmem:[#allocation2 + $0xda0] sm:$0xff]
    %v3632 = vld [vmem:[#allocation2 + $0xda8] sm:$0xff]
    %v3633 = vld [vmem:[#allocation2 + $0xdb0] sm:$0xff]
    %v3634 = vld [vmem:[#allocation2 + $0xdb8] sm:$0xff]
    %v3635 = vld [vmem:[#allocation2 + $0xdc0] sm:$0xff]
    %v3636 = vld [vmem:[#allocation2 + $0xdc8] sm:$0xff]
    %v3637 = vld [vmem:[#allocation2 + $0xdd0] sm:$0xff]
    %v3638 = vld [vmem:[#allocation2 + $0xdd8] sm:$0xff]
    %v3639 = vld [vmem:[#allocation2 + $0xde0] sm:$0xff]
    %v3640 = vld [vmem:[#allocation2 + $0xde8] sm:$0xff]
    %v3641 = vld [vmem:[#allocation2 + $0xdf0] sm:$0xff]
    %v3642 = vld [vmem:[#allocation2 + $0xdf8] sm:$0xff]
    %v3643 = vld [vmem:[#allocation2 + $0xe00] sm:$0xff]
    %v3644 = vld [vmem:[#allocation2 + $0xe08] sm:$0xff]
    %v3645 = vld [vmem:[#allocation2 + $0xe10] sm:$0xff]
    %v3646 = vld [vmem:[#allocation2 + $0xe18] sm:$0xff]
    %v3647 = vld [vmem:[#allocation2 + $0xe20] sm:$0xff]
    %v3648 = vld [vmem:[#allocation2 + $0xe28] sm:$0xff]
    %v3649 = vld [vmem:[#allocation2 + $0xe30] sm:$0xff]
    %v3650 = vld [vmem:[#allocation2 + $0xe38] sm:$0xff]
    %v3651 = vld [vmem:[#allocation2 + $0xe40] sm:$0xff]
    %v3652 = vld [vmem:[#allocation2 + $0xe48] sm:$0xff]
    %v3653 = vld [vmem:[#allocation2 + $0xe50] sm:$0xff]
    %v3654 = vld [vmem:[#allocation2 + $0xe58] sm:$0xff]
    %v3655 = vld [vmem:[#allocation2 + $0xe60] sm:$0xff]
    %v3656 = vld [vmem:[#allocation2 + $0xe68] sm:$0xff]
    %v3657 = vld [vmem:[#allocation2 + $0xe70] sm:$0xff]
    %v3658 = vld [vmem:[#allocation2 + $0xe78] sm:$0xff]
    %v3659 = vld [vmem:[#allocation2 + $0xe80] sm:$0xff]
    %v3660 = vld [vmem:[#allocation2 + $0xe88] sm:$0xff]
    %v3661 = vld [vmem:[#allocation2 + $0xe90] sm:$0xff]
    %v3662 = vld [vmem:[#allocation2 + $0xe98] sm:$0xff]
    %v3663 = vld [vmem:[#allocation2 + $0xea0] sm:$0xff]
    %v3664 = vld [vmem:[#allocation2 + $0xea8] sm:$0xff]
    %v3665 = vld [vmem:[#allocation2 + $0xeb0] sm:$0xff]
    %v3666 = vld [vmem:[#allocation2 + $0xeb8] sm:$0xff]
    %v3667 = vld [vmem:[#allocation2 + $0xec0] sm:$0xff]
    %v3668 = vld [vmem:[#allocation2 + $0xec8] sm:$0xff]
    %v3669 = vld [vmem:[#allocation2 + $0xed0] sm:$0xff]
    %v3670 = vld [vmem:[#allocation2 + $0xed8] sm:$0xff]
    %v3671 = vld [vmem:[#allocation2 + $0xee0] sm:$0xff]
    %v3672 = vld [vmem:[#allocation2 + $0xee8] sm:$0xff]
    %v3673 = vld [vmem:[#allocation2 + $0xef0] sm:$0xff]
    %v3674 = vld [vmem:[#allocation2 + $0xef8] sm:$0xff]
    %v3675 = vld [vmem:[#allocation2 + $0xf00] sm:$0xff]
    %v3676 = vld [vmem:[#allocation2 + $0xf08] sm:$0xff]
    %v3677 = vld [vmem:[#allocation2 + $0xf10] sm:$0xff]
    %v3678 = vld [vmem:[#allocation2 + $0xf18] sm:$0xff]
    %v3679 = vld [vmem:[#allocation2 + $0xf20] sm:$0xff]
    %v3680 = vld [vmem:[#allocation2 + $0xf28] sm:$0xff]
    %v3681 = vld [vmem:[#allocation2 + $0xf30] sm:$0xff]
    %v3682 = vld [vmem:[#allocation2 + $0xf38] sm:$0xff]
    %v3683 = vld [vmem:[#allocation2 + $0xf40] sm:$0xff]
    %v3684 = vld [vmem:[#allocation2 + $0xf48] sm:$0xff]
    %v3685 = vld [vmem:[#allocation2 + $0xf50] sm:$0xff]
    %v3686 = vld [vmem:[#allocation2 + $0xf58] sm:$0xff]
    %v3687 = vld [vmem:[#allocation2 + $0xf60] sm:$0xff]
    %v3688 = vld [vmem:[#allocation2 + $0xf68] sm:$0xff]
    %v3689 = vld [vmem:[#allocation2 + $0xf70] sm:$0xff]
    %v3690 = vld [vmem:[#allocation2 + $0xf78] sm:$0xff]
    %v3691 = vld [vmem:[#allocation2 + $0xf80] sm:$0xff]
    %v3692 = vld [vmem:[#allocation2 + $0xf88] sm:$0xff]
    %v3693 = vld [vmem:[#allocation2 + $0xf90] sm:$0xff]
    %v3694 = vld [vmem:[#allocation2 + $0xf98] sm:$0xff]
    %v3696 = vperm.slane %v317, 0
    %v3697 = vperm.slane %v317, 1
    %v3698 = vperm.slane %v317, 2
    %v3699 = vperm.slane %v317, 3
    %v4204 = vunpack.c.l.b16 %v3195
    %v4205 = vunpack.c.h.b16 %v3195
    %v4206 = vunpack.c.l.b16 %v3196
    %v4207 = vunpack.c.h.b16 %v3196
    %v4208 = vunpack.c.l.b16 %v3197
    %v4209 = vunpack.c.h.b16 %v3197
    %v4210 = vunpack.c.l.b16 %v3198
    %v4211 = vunpack.c.h.b16 %v3198
    %v4212 = vunpack.c.l.b16 %v3199
    %v4213 = vunpack.c.h.b16 %v3199
    %v4214 = vunpack.c.l.b16 %v3200
    %v4215 = vunpack.c.h.b16 %v3200
    %v4216 = vunpack.c.l.b16 %v3201
    %v4217 = vunpack.c.h.b16 %v3201
    %v4218 = vunpack.c.l.b16 %v3202
    %v4219 = vunpack.c.h.b16 %v3202
    %v4220 = vunpack.c.l.b16 %v3203
    %v4221 = vunpack.c.h.b16 %v3203
    %v4222 = vunpack.c.l.b16 %v3204
    %v4223 = vunpack.c.h.b16 %v3204
    %v4224 = vunpack.c.l.b16 %v3205
    %v4225 = vunpack.c.h.b16 %v3205
    %v4226 = vunpack.c.l.b16 %v3206
    %v4227 = vunpack.c.h.b16 %v3206
    %v4228 = vunpack.c.l.b16 %v3207
    %v4229 = vunpack.c.h.b16 %v3207
    %v4230 = vunpack.c.l.b16 %v3208
    %v4231 = vunpack.c.h.b16 %v3208
    %v4232 = vunpack.c.l.b16 %v3209
    %v4233 = vunpack.c.h.b16 %v3209
    %v4234 = vunpack.c.l.b16 %v3210
    %v4235 = vunpack.c.h.b16 %v3210
    %v4236 = vunpack.c.l.b16 %v3211
    %v4237 = vunpack.c.h.b16 %v3211
    %v4238 = vunpack.c.l.b16 %v3212
    %v4239 = vunpack.c.h.b16 %v3212
    %v4240 = vunpack.c.l.b16 %v3213
    %v4241 = vunpack.c.h.b16 %v3213
    %v4242 = vunpack.c.l.b16 %v3214
    %v4243 = vunpack.c.h.b16 %v3214
    %v4244 = vunpack.c.l.b16 %v3215
    %v4245 = vunpack.c.h.b16 %v3215
    %v4246 = vunpack.c.l.b16 %v3216
    %v4247 = vunpack.c.h.b16 %v3216
    %v4248 = vunpack.c.l.b16 %v3217
    %v4249 = vunpack.c.h.b16 %v3217
    %v4250 = vunpack.c.l.b16 %v3218
    %v4251 = vunpack.c.h.b16 %v3218
    %v4252 = vunpack.c.l.b16 %v3219
    %v4253 = vunpack.c.h.b16 %v3219
    %v4254 = vunpack.c.l.b16 %v3220
    %v4255 = vunpack.c.h.b16 %v3220
    %v4256 = vunpack.c.l.b16 %v3221
    %v4257 = vunpack.c.h.b16 %v3221
    %v4258 = vunpack.c.l.b16 %v3222
    %v4259 = vunpack.c.h.b16 %v3222
    %v4260 = vunpack.c.l.b16 %v3223
    %v4261 = vunpack.c.h.b16 %v3223
    %v4262 = vunpack.c.l.b16 %v3224
    %v4263 = vunpack.c.h.b16 %v3224
    %v4264 = vunpack.c.l.b16 %v3225
    %v4265 = vunpack.c.h.b16 %v3225
    %v4266 = vunpack.c.l.b16 %v3226
    %v4267 = vunpack.c.h.b16 %v3226
    %v4268 = vunpack.c.l.b16 %v3227
    %v4269 = vunpack.c.h.b16 %v3227
    %v4270 = vunpack.c.l.b16 %v3228
    %v4271 = vunpack.c.h.b16 %v3228
    %v4272 = vunpack.c.l.b16 %v3229
    %v4273 = vunpack.c.h.b16 %v3229
    %v4274 = vunpack.c.l.b16 %v3230
    %v4275 = vunpack.c.h.b16 %v3230
    %v4276 = vunpack.c.l.b16 %v3231
    %v4277 = vunpack.c.h.b16 %v3231
    %v4278 = vunpack.c.l.b16 %v3232
    %v4279 = vunpack.c.h.b16 %v3232
    %v4280 = vunpack.c.l.b16 %v3233
    %v4281 = vunpack.c.h.b16 %v3233
    %v4282 = vunpack.c.l.b16 %v3234
    %v4283 = vunpack.c.h.b16 %v3234
    %v4284 = vunpack.c.l.b16 %v3235
    %v4285 = vunpack.c.h.b16 %v3235
    %v4286 = vunpack.c.l.b16 %v3236
    %v4287 = vunpack.c.h.b16 %v3236
    %v4288 = vunpack.c.l.b16 %v3237
    %v4289 = vunpack.c.h.b16 %v3237
    %v4290 = vunpack.c.l.b16 %v3238
    %v4291 = vunpack.c.h.b16 %v3238
    %v4292 = vunpack.c.l.b16 %v3239
    %v4293 = vunpack.c.h.b16 %v3239
    %v4294 = vunpack.c.l.b16 %v3240
    %v4295 = vunpack.c.h.b16 %v3240
    %v4296 = vunpack.c.l.b16 %v3241
    %v4297 = vunpack.c.h.b16 %v3241
    %v4298 = vunpack.c.l.b16 %v3242
    %v4299 = vunpack.c.h.b16 %v3242
    %v4300 = vunpack.c.l.b16 %v3243
    %v4301 = vunpack.c.h.b16 %v3243
    %v4302 = vunpack.c.l.b16 %v3244
    %v4303 = vunpack.c.h.b16 %v3244
    %v4304 = vunpack.c.l.b16 %v3245
    %v4305 = vunpack.c.h.b16 %v3245
    %v4306 = vunpack.c.l.b16 %v3246
    %v4307 = vunpack.c.h.b16 %v3246
    %v4308 = vunpack.c.l.b16 %v3247
    %v4309 = vunpack.c.h.b16 %v3247
    %v4310 = vunpack.c.l.b16 %v3248
    %v4311 = vunpack.c.h.b16 %v3248
    %v4312 = vunpack.c.l.b16 %v3249
    %v4313 = vunpack.c.h.b16 %v3249
    %v4314 = vunpack.c.l.b16 %v3250
    %v4315 = vunpack.c.h.b16 %v3250
    %v4316 = vunpack.c.l.b16 %v3251
    %v4317 = vunpack.c.h.b16 %v3251
    %v4318 = vunpack.c.l.b16 %v3252
    %v4319 = vunpack.c.h.b16 %v3252
    %v4320 = vunpack.c.l.b16 %v3253
    %v4321 = vunpack.c.h.b16 %v3253
    %v4322 = vunpack.c.l.b16 %v3254
    %v4323 = vunpack.c.h.b16 %v3254
    %v4324 = vunpack.c.l.b16 %v3255
    %v4325 = vunpack.c.h.b16 %v3255
    %v4326 = vunpack.c.l.b16 %v3256
    %v4327 = vunpack.c.h.b16 %v3256
    %v4328 = vunpack.c.l.b16 %v3257
    %v4329 = vunpack.c.h.b16 %v3257
    %v4330 = vunpack.c.l.b16 %v3258
    %v4331 = vunpack.c.h.b16 %v3258
    %v4332 = vunpack.c.l.b16 %v3259
    %v4333 = vunpack.c.h.b16 %v3259
    %v4334 = vunpack.c.l.b16 %v3260
    %v4335 = vunpack.c.h.b16 %v3260
    %v4336 = vunpack.c.l.b16 %v3261
    %v4337 = vunpack.c.h.b16 %v3261
    %v4338 = vunpack.c.l.b16 %v3262
    %v4339 = vunpack.c.h.b16 %v3262
    %v4340 = vunpack.c.l.b16 %v3263
    %v4341 = vunpack.c.h.b16 %v3263
    %v4342 = vunpack.c.l.b16 %v3264
    %v4343 = vunpack.c.h.b16 %v3264
    %v4344 = vunpack.c.l.b16 %v3265
    %v4345 = vunpack.c.h.b16 %v3265
    %v4346 = vunpack.c.l.b16 %v3266
    %v4347 = vunpack.c.h.b16 %v3266
    %v4348 = vunpack.c.l.b16 %v3267
    %v4349 = vunpack.c.h.b16 %v3267
    %v4350 = vunpack.c.l.b16 %v3268
    %v4351 = vunpack.c.h.b16 %v3268
    %v4352 = vunpack.c.l.b16 %v3269
    %v4353 = vunpack.c.h.b16 %v3269
    %v4354 = vunpack.c.l.b16 %v3270
    %v4355 = vunpack.c.h.b16 %v3270
    %v4356 = vunpack.c.l.b16 %v3271
    %v4357 = vunpack.c.h.b16 %v3271
    %v4358 = vunpack.c.l.b16 %v3272
    %v4359 = vunpack.c.h.b16 %v3272
    %v4360 = vunpack.c.l.b16 %v3273
    %v4361 = vunpack.c.h.b16 %v3273
    %v4362 = vunpack.c.l.b16 %v3274
    %v4363 = vunpack.c.h.b16 %v3274
    %v4364 = vunpack.c.l.b16 %v3275
    %v4365 = vunpack.c.h.b16 %v3275
    %v4366 = vunpack.c.l.b16 %v3276
    %v4367 = vunpack.c.h.b16 %v3276
    %v4368 = vunpack.c.l.b16 %v3277
    %v4369 = vunpack.c.h.b16 %v3277
    %v4370 = vunpack.c.l.b16 %v3278
    %v4371 = vunpack.c.h.b16 %v3278
    %v4372 = vunpack.c.l.b16 %v3279
    %v4373 = vunpack.c.h.b16 %v3279
    %v4374 = vunpack.c.l.b16 %v3280
    %v4375 = vunpack.c.h.b16 %v3280
    %v4376 = vunpack.c.l.b16 %v3281
    %v4377 = vunpack.c.h.b16 %v3281
    %v4378 = vunpack.c.l.b16 %v3282
    %v4379 = vunpack.c.h.b16 %v3282
    %v4380 = vunpack.c.l.b16 %v3283
    %v4381 = vunpack.c.h.b16 %v3283
    %v4382 = vunpack.c.l.b16 %v3284
    %v4383 = vunpack.c.h.b16 %v3284
    %v4384 = vunpack.c.l.b16 %v3285
    %v4385 = vunpack.c.h.b16 %v3285
    %v4386 = vunpack.c.l.b16 %v3286
    %v4387 = vunpack.c.h.b16 %v3286
    %v4388 = vunpack.c.l.b16 %v3287
    %v4389 = vunpack.c.h.b16 %v3287
    %v4390 = vunpack.c.l.b16 %v3288
    %v4391 = vunpack.c.h.b16 %v3288
    %v4392 = vunpack.c.l.b16 %v3289
    %v4393 = vunpack.c.h.b16 %v3289
    %v4394 = vunpack.c.l.b16 %v3290
    %v4395 = vunpack.c.h.b16 %v3290
    %v4396 = vunpack.c.l.b16 %v3291
    %v4397 = vunpack.c.h.b16 %v3291
    %v4398 = vunpack.c.l.b16 %v3292
    %v4399 = vunpack.c.h.b16 %v3292
    %v4400 = vunpack.c.l.b16 %v3293
    %v4401 = vunpack.c.h.b16 %v3293
    %v4402 = vunpack.c.l.b16 %v3294
    %v4403 = vunpack.c.h.b16 %v3294
    %v4404 = vunpack.c.l.b16 %v3295
    %v4405 = vunpack.c.h.b16 %v3295
    %v4406 = vunpack.c.l.b16 %v3296
    %v4407 = vunpack.c.h.b16 %v3296
    %v4408 = vunpack.c.l.b16 %v3297
    %v4409 = vunpack.c.h.b16 %v3297
    %v4410 = vunpack.c.l.b16 %v3298
    %v4411 = vunpack.c.h.b16 %v3298
    %v4412 = vunpack.c.l.b16 %v3299
    %v4413 = vunpack.c.h.b16 %v3299
    %v4414 = vunpack.c.l.b16 %v3300
    %v4415 = vunpack.c.h.b16 %v3300
    %v4416 = vunpack.c.l.b16 %v3301
    %v4417 = vunpack.c.h.b16 %v3301
    %v4418 = vunpack.c.l.b16 %v3302
    %v4419 = vunpack.c.h.b16 %v3302
    %v4420 = vunpack.c.l.b16 %v3303
    %v4421 = vunpack.c.h.b16 %v3303
    %v4422 = vunpack.c.l.b16 %v3304
    %v4423 = vunpack.c.h.b16 %v3304
    %v4424 = vunpack.c.l.b16 %v3305
    %v4425 = vunpack.c.h.b16 %v3305
    %v4426 = vunpack.c.l.b16 %v3306
    %v4427 = vunpack.c.h.b16 %v3306
    %v4428 = vunpack.c.l.b16 %v3307
    %v4429 = vunpack.c.h.b16 %v3307
    %v4430 = vunpack.c.l.b16 %v3308
    %v4431 = vunpack.c.h.b16 %v3308
    %v4432 = vunpack.c.l.b16 %v3309
    %v4433 = vunpack.c.h.b16 %v3309
    %v4434 = vunpack.c.l.b16 %v3310
    %v4435 = vunpack.c.h.b16 %v3310
    %v4436 = vunpack.c.l.b16 %v3311
    %v4437 = vunpack.c.h.b16 %v3311
    %v4438 = vunpack.c.l.b16 %v3312
    %v4439 = vunpack.c.h.b16 %v3312
    %v4440 = vunpack.c.l.b16 %v3313
    %v4441 = vunpack.c.h.b16 %v3313
    %v4442 = vunpack.c.l.b16 %v3314
    %v4443 = vunpack.c.h.b16 %v3314
    %v4444 = vunpack.c.l.b16 %v3315
    %v4445 = vunpack.c.h.b16 %v3315
    %v4446 = vunpack.c.l.b16 %v3316
    %v4447 = vunpack.c.h.b16 %v3316
    %v4448 = vunpack.c.l.b16 %v3317
    %v4449 = vunpack.c.h.b16 %v3317
    %v4450 = vunpack.c.l.b16 %v3318
    %v4451 = vunpack.c.h.b16 %v3318
    %v4452 = vunpack.c.l.b16 %v3319
    %v4453 = vunpack.c.h.b16 %v3319
    %v4454 = vunpack.c.l.b16 %v3320
    %v4455 = vunpack.c.h.b16 %v3320
    %v4456 = vunpack.c.l.b16 %v3321
    %v4457 = vunpack.c.h.b16 %v3321
    %v4458 = vunpack.c.l.b16 %v3322
    %v4459 = vunpack.c.h.b16 %v3322
    %v4460 = vunpack.c.l.b16 %v3323
    %v4461 = vunpack.c.h.b16 %v3323
    %v4462 = vunpack.c.l.b16 %v3324
    %v4463 = vunpack.c.h.b16 %v3324
    %v4464 = vunpack.c.l.b16 %v3325
    %v4465 = vunpack.c.h.b16 %v3325
    %v4466 = vunpack.c.l.b16 %v3326
    %v4467 = vunpack.c.h.b16 %v3326
    %v4468 = vunpack.c.l.b16 %v3327
    %v4469 = vunpack.c.h.b16 %v3327
    %v4470 = vunpack.c.l.b16 %v3328
    %v4471 = vunpack.c.h.b16 %v3328
    %v4472 = vunpack.c.l.b16 %v3329
    %v4473 = vunpack.c.h.b16 %v3329
    %v4474 = vunpack.c.l.b16 %v3330
    %v4475 = vunpack.c.h.b16 %v3330
    %v4476 = vunpack.c.l.b16 %v3331
    %v4477 = vunpack.c.h.b16 %v3331
    %v4478 = vunpack.c.l.b16 %v3332
    %v4479 = vunpack.c.h.b16 %v3332
    %v4480 = vunpack.c.l.b16 %v3333
    %v4481 = vunpack.c.h.b16 %v3333
    %v4482 = vunpack.c.l.b16 %v3334
    %v4483 = vunpack.c.h.b16 %v3334
    %v4484 = vunpack.c.l.b16 %v3335
    %v4485 = vunpack.c.h.b16 %v3335
    %v4486 = vunpack.c.l.b16 %v3336
    %v4487 = vunpack.c.h.b16 %v3336
    %v4488 = vunpack.c.l.b16 %v3337
    %v4489 = vunpack.c.h.b16 %v3337
    %v4490 = vunpack.c.l.b16 %v3338
    %v4491 = vunpack.c.h.b16 %v3338
    %v4492 = vunpack.c.l.b16 %v3339
    %v4493 = vunpack.c.h.b16 %v3339
    %v4494 = vunpack.c.l.b16 %v3340
    %v4495 = vunpack.c.h.b16 %v3340
    %v4496 = vunpack.c.l.b16 %v3341
    %v4497 = vunpack.c.h.b16 %v3341
    %v4498 = vunpack.c.l.b16 %v3342
    %v4499 = vunpack.c.h.b16 %v3342
    %v4500 = vunpack.c.l.b16 %v3343
    %v4501 = vunpack.c.h.b16 %v3343
    %v4502 = vunpack.c.l.b16 %v3344
    %v4503 = vunpack.c.h.b16 %v3344
    %v4504 = vunpack.c.l.b16 %v3345
    %v4505 = vunpack.c.h.b16 %v3345
    %v4506 = vunpack.c.l.b16 %v3346
    %v4507 = vunpack.c.h.b16 %v3346
    %v4508 = vunpack.c.l.b16 %v3347
    %v4509 = vunpack.c.h.b16 %v3347
    %v4510 = vunpack.c.l.b16 %v3348
    %v4511 = vunpack.c.h.b16 %v3348
    %v4512 = vunpack.c.l.b16 %v3349
    %v4513 = vunpack.c.h.b16 %v3349
    %v4514 = vunpack.c.l.b16 %v3350
    %v4515 = vunpack.c.h.b16 %v3350
    %v4516 = vunpack.c.l.b16 %v3351
    %v4517 = vunpack.c.h.b16 %v3351
    %v4518 = vunpack.c.l.b16 %v3352
    %v4519 = vunpack.c.h.b16 %v3352
    %v4520 = vunpack.c.l.b16 %v3353
    %v4521 = vunpack.c.h.b16 %v3353
    %v4522 = vunpack.c.l.b16 %v3354
    %v4523 = vunpack.c.h.b16 %v3354
    %v4524 = vunpack.c.l.b16 %v3355
    %v4525 = vunpack.c.h.b16 %v3355
    %v4526 = vunpack.c.l.b16 %v3356
    %v4527 = vunpack.c.h.b16 %v3356
    %v4528 = vunpack.c.l.b16 %v3357
    %v4529 = vunpack.c.h.b16 %v3357
    %v4530 = vunpack.c.l.b16 %v3358
    %v4531 = vunpack.c.h.b16 %v3358
    %v4532 = vunpack.c.l.b16 %v3359
    %v4533 = vunpack.c.h.b16 %v3359
    %v4534 = vunpack.c.l.b16 %v3360
    %v4535 = vunpack.c.h.b16 %v3360
    %v4536 = vunpack.c.l.b16 %v3361
    %v4537 = vunpack.c.h.b16 %v3361
    %v4538 = vunpack.c.l.b16 %v3362
    %v4539 = vunpack.c.h.b16 %v3362
    %v4540 = vunpack.c.l.b16 %v3363
    %v4541 = vunpack.c.h.b16 %v3363
    %v4542 = vunpack.c.l.b16 %v3364
    %v4543 = vunpack.c.h.b16 %v3364
    %v4544 = vunpack.c.l.b16 %v3365
    %v4545 = vunpack.c.h.b16 %v3365
    %v4546 = vunpack.c.l.b16 %v3366
    %v4547 = vunpack.c.h.b16 %v3366
    %v4548 = vunpack.c.l.b16 %v3367
    %v4549 = vunpack.c.h.b16 %v3367
    %v4550 = vunpack.c.l.b16 %v3368
    %v4551 = vunpack.c.h.b16 %v3368
    %v4552 = vunpack.c.l.b16 %v3369
    %v4553 = vunpack.c.h.b16 %v3369
    %v4554 = vunpack.c.l.b16 %v3370
    %v4555 = vunpack.c.h.b16 %v3370
    %v4556 = vunpack.c.l.b16 %v3371
    %v4557 = vunpack.c.h.b16 %v3371
    %v4558 = vunpack.c.l.b16 %v3372
    %v4559 = vunpack.c.h.b16 %v3372
    %v4560 = vunpack.c.l.b16 %v3373
    %v4561 = vunpack.c.h.b16 %v3373
    %v4562 = vunpack.c.l.b16 %v3374
    %v4563 = vunpack.c.h.b16 %v3374
    %v4564 = vunpack.c.l.b16 %v3375
    %v4565 = vunpack.c.h.b16 %v3375
    %v4566 = vunpack.c.l.b16 %v3376
    %v4567 = vunpack.c.h.b16 %v3376
    %v4568 = vunpack.c.l.b16 %v3377
    %v4569 = vunpack.c.h.b16 %v3377
    %v4570 = vunpack.c.l.b16 %v3378
    %v4571 = vunpack.c.h.b16 %v3378
    %v4572 = vunpack.c.l.b16 %v3379
    %v4573 = vunpack.c.h.b16 %v3379
    %v4574 = vunpack.c.l.b16 %v3380
    %v4575 = vunpack.c.h.b16 %v3380
    %v4576 = vunpack.c.l.b16 %v3381
    %v4577 = vunpack.c.h.b16 %v3381
    %v4578 = vunpack.c.l.b16 %v3382
    %v4579 = vunpack.c.h.b16 %v3382
    %v4580 = vunpack.c.l.b16 %v3383
    %v4581 = vunpack.c.h.b16 %v3383
    %v4582 = vunpack.c.l.b16 %v3384
    %v4583 = vunpack.c.h.b16 %v3384
    %v4584 = vunpack.c.l.b16 %v3385
    %v4585 = vunpack.c.h.b16 %v3385
    %v4586 = vunpack.c.l.b16 %v3386
    %v4587 = vunpack.c.h.b16 %v3386
    %v4588 = vunpack.c.l.b16 %v3387
    %v4589 = vunpack.c.h.b16 %v3387
    %v4590 = vunpack.c.l.b16 %v3388
    %v4591 = vunpack.c.h.b16 %v3388
    %v4592 = vunpack.c.l.b16 %v3389
    %v4593 = vunpack.c.h.b16 %v3389
    %v4594 = vunpack.c.l.b16 %v3390
    %v4595 = vunpack.c.h.b16 %v3390
    %v4596 = vunpack.c.l.b16 %v3391
    %v4597 = vunpack.c.h.b16 %v3391
    %v4598 = vunpack.c.l.b16 %v3392
    %v4599 = vunpack.c.h.b16 %v3392
    %v4600 = vunpack.c.l.b16 %v3393
    %v4601 = vunpack.c.h.b16 %v3393
    %v4602 = vunpack.c.l.b16 %v3394
    %v4603 = vunpack.c.h.b16 %v3394
    %v4604 = vunpack.c.l.b16 %v3395
    %v4605 = vunpack.c.h.b16 %v3395
    %v4606 = vunpack.c.l.b16 %v3396
    %v4607 = vunpack.c.h.b16 %v3396
    %v4608 = vunpack.c.l.b16 %v3397
    %v4609 = vunpack.c.h.b16 %v3397
    %v4610 = vunpack.c.l.b16 %v3398
    %v4611 = vunpack.c.h.b16 %v3398
    %v4612 = vunpack.c.l.b16 %v3399
    %v4613 = vunpack.c.h.b16 %v3399
    %v4614 = vunpack.c.l.b16 %v3400
    %v4615 = vunpack.c.h.b16 %v3400
    %v4616 = vunpack.c.l.b16 %v3401
    %v4617 = vunpack.c.h.b16 %v3401
    %v4618 = vunpack.c.l.b16 %v3402
    %v4619 = vunpack.c.h.b16 %v3402
    %v4620 = vunpack.c.l.b16 %v3403
    %v4621 = vunpack.c.h.b16 %v3403
    %v4622 = vunpack.c.l.b16 %v3404
    %v4623 = vunpack.c.h.b16 %v3404
    %v4624 = vunpack.c.l.b16 %v3405
    %v4625 = vunpack.c.h.b16 %v3405
    %v4626 = vunpack.c.l.b16 %v3406
    %v4627 = vunpack.c.h.b16 %v3406
    %v4628 = vunpack.c.l.b16 %v3407
    %v4629 = vunpack.c.h.b16 %v3407
    %v4630 = vunpack.c.l.b16 %v3408
    %v4631 = vunpack.c.h.b16 %v3408
    %v4632 = vunpack.c.l.b16 %v3409
    %v4633 = vunpack.c.h.b16 %v3409
    %v4634 = vunpack.c.l.b16 %v3410
    %v4635 = vunpack.c.h.b16 %v3410
    %v4636 = vunpack.c.l.b16 %v3411
    %v4637 = vunpack.c.h.b16 %v3411
    %v4638 = vunpack.c.l.b16 %v3412
    %v4639 = vunpack.c.h.b16 %v3412
    %v4640 = vunpack.c.l.b16 %v3413
    %v4641 = vunpack.c.h.b16 %v3413
    %v4642 = vunpack.c.l.b16 %v3414
    %v4643 = vunpack.c.h.b16 %v3414
    %v4644 = vunpack.c.l.b16 %v3415
    %v4645 = vunpack.c.h.b16 %v3415
    %v4646 = vunpack.c.l.b16 %v3416
    %v4647 = vunpack.c.h.b16 %v3416
    %v4648 = vunpack.c.l.b16 %v3417
    %v4649 = vunpack.c.h.b16 %v3417
    %v4650 = vunpack.c.l.b16 %v3418
    %v4651 = vunpack.c.h.b16 %v3418
    %v4652 = vunpack.c.l.b16 %v3419
    %v4653 = vunpack.c.h.b16 %v3419
    %v4654 = vunpack.c.l.b16 %v3420
    %v4655 = vunpack.c.h.b16 %v3420
    %v4656 = vunpack.c.l.b16 %v3421
    %v4657 = vunpack.c.h.b16 %v3421
    %v4658 = vunpack.c.l.b16 %v3422
    %v4659 = vunpack.c.h.b16 %v3422
    %v4660 = vunpack.c.l.b16 %v3423
    %v4661 = vunpack.c.h.b16 %v3423
    %v4662 = vunpack.c.l.b16 %v3424
    %v4663 = vunpack.c.h.b16 %v3424
    %v4664 = vunpack.c.l.b16 %v3425
    %v4665 = vunpack.c.h.b16 %v3425
    %v4666 = vunpack.c.l.b16 %v3426
    %v4667 = vunpack.c.h.b16 %v3426
    %v4668 = vunpack.c.l.b16 %v3427
    %v4669 = vunpack.c.h.b16 %v3427
    %v4670 = vunpack.c.l.b16 %v3428
    %v4671 = vunpack.c.h.b16 %v3428
    %v4672 = vunpack.c.l.b16 %v3429
    %v4673 = vunpack.c.h.b16 %v3429
    %v4674 = vunpack.c.l.b16 %v3430
    %v4675 = vunpack.c.h.b16 %v3430
    %v4676 = vunpack.c.l.b16 %v3431
    %v4677 = vunpack.c.h.b16 %v3431
    %v4678 = vunpack.c.l.b16 %v3432
    %v4679 = vunpack.c.h.b16 %v3432
    %v4680 = vunpack.c.l.b16 %v3433
    %v4681 = vunpack.c.h.b16 %v3433
    %v4682 = vunpack.c.l.b16 %v3434
    %v4683 = vunpack.c.h.b16 %v3434
    %v4684 = vunpack.c.l.b16 %v3435
    %v4685 = vunpack.c.h.b16 %v3435
    %v4686 = vunpack.c.l.b16 %v3436
    %v4687 = vunpack.c.h.b16 %v3436
    %v4688 = vunpack.c.l.b16 %v3437
    %v4689 = vunpack.c.h.b16 %v3437
    %v4690 = vunpack.c.l.b16 %v3438
    %v4691 = vunpack.c.h.b16 %v3438
    %v4692 = vunpack.c.l.b16 %v3439
    %v4693 = vunpack.c.h.b16 %v3439
    %v4694 = vunpack.c.l.b16 %v3440
    %v4695 = vunpack.c.h.b16 %v3440
    %v4696 = vunpack.c.l.b16 %v3441
    %v4697 = vunpack.c.h.b16 %v3441
    %v4698 = vunpack.c.l.b16 %v3442
    %v4699 = vunpack.c.h.b16 %v3442
    %v4700 = vunpack.c.l.b16 %v3443
    %v4701 = vunpack.c.h.b16 %v3443
    %v4702 = vunpack.c.l.b16 %v3444
    %v4703 = vunpack.c.h.b16 %v3444
    %v4704 = vunpack.c.l.b16 %v3445
    %v4705 = vunpack.c.h.b16 %v3445
    %v4706 = vunpack.c.l.b16 %v3446
    %v4707 = vunpack.c.h.b16 %v3446
    %v4708 = vunpack.c.l.b16 %v3447
    %v4709 = vunpack.c.h.b16 %v3447
    %v4710 = vunpack.c.l.b16 %v3448
    %v4711 = vunpack.c.h.b16 %v3448
    %v4712 = vunpack.c.l.b16 %v3449
    %v4713 = vunpack.c.h.b16 %v3449
    %v4714 = vunpack.c.l.b16 %v3450
    %v4715 = vunpack.c.h.b16 %v3450
    %v4716 = vunpack.c.l.b16 %v3451
    %v4717 = vunpack.c.h.b16 %v3451
    %v4718 = vunpack.c.l.b16 %v3452
    %v4719 = vunpack.c.h.b16 %v3452
    %v4720 = vunpack.c.l.b16 %v3453
    %v4721 = vunpack.c.h.b16 %v3453
    %v4722 = vunpack.c.l.b16 %v3454
    %v4723 = vunpack.c.h.b16 %v3454
    %v4724 = vunpack.c.l.b16 %v3455
    %v4725 = vunpack.c.h.b16 %v3455
    %v4726 = vunpack.c.l.b16 %v3456
    %v4727 = vunpack.c.h.b16 %v3456
    %v4728 = vunpack.c.l.b16 %v3457
    %v4729 = vunpack.c.h.b16 %v3457
    %v4730 = vunpack.c.l.b16 %v3458
    %v4731 = vunpack.c.h.b16 %v3458
    %v4732 = vunpack.c.l.b16 %v3459
    %v4733 = vunpack.c.h.b16 %v3459
    %v4734 = vunpack.c.l.b16 %v3460
    %v4735 = vunpack.c.h.b16 %v3460
    %v4736 = vunpack.c.l.b16 %v3461
    %v4737 = vunpack.c.h.b16 %v3461
    %v4738 = vunpack.c.l.b16 %v3462
    %v4739 = vunpack.c.h.b16 %v3462
    %v4740 = vunpack.c.l.b16 %v3463
    %v4741 = vunpack.c.h.b16 %v3463
    %v4742 = vunpack.c.l.b16 %v3464
    %v4743 = vunpack.c.h.b16 %v3464
    %v4744 = vunpack.c.l.b16 %v3465
    %v4745 = vunpack.c.h.b16 %v3465
    %v4746 = vunpack.c.l.b16 %v3466
    %v4747 = vunpack.c.h.b16 %v3466
    %v4748 = vunpack.c.l.b16 %v3467
    %v4749 = vunpack.c.h.b16 %v3467
    %v4750 = vunpack.c.l.b16 %v3468
    %v4751 = vunpack.c.h.b16 %v3468
    %v4752 = vunpack.c.l.b16 %v3469
    %v4753 = vunpack.c.h.b16 %v3469
    %v4754 = vunpack.c.l.b16 %v3470
    %v4755 = vunpack.c.h.b16 %v3470
    %v4756 = vunpack.c.l.b16 %v3471
    %v4757 = vunpack.c.h.b16 %v3471
    %v4758 = vunpack.c.l.b16 %v3472
    %v4759 = vunpack.c.h.b16 %v3472
    %v4760 = vunpack.c.l.b16 %v3473
    %v4761 = vunpack.c.h.b16 %v3473
    %v4762 = vunpack.c.l.b16 %v3474
    %v4763 = vunpack.c.h.b16 %v3474
    %v4764 = vunpack.c.l.b16 %v3475
    %v4765 = vunpack.c.h.b16 %v3475
    %v4766 = vunpack.c.l.b16 %v3476
    %v4767 = vunpack.c.h.b16 %v3476
    %v4768 = vunpack.c.l.b16 %v3477
    %v4769 = vunpack.c.h.b16 %v3477
    %v4770 = vunpack.c.l.b16 %v3478
    %v4771 = vunpack.c.h.b16 %v3478
    %v4772 = vunpack.c.l.b16 %v3479
    %v4773 = vunpack.c.h.b16 %v3479
    %v4774 = vunpack.c.l.b16 %v3480
    %v4775 = vunpack.c.h.b16 %v3480
    %v4776 = vunpack.c.l.b16 %v3481
    %v4777 = vunpack.c.h.b16 %v3481
    %v4778 = vunpack.c.l.b16 %v3482
    %v4779 = vunpack.c.h.b16 %v3482
    %v4780 = vunpack.c.l.b16 %v3483
    %v4781 = vunpack.c.h.b16 %v3483
    %v4782 = vunpack.c.l.b16 %v3484
    %v4783 = vunpack.c.h.b16 %v3484
    %v4784 = vunpack.c.l.b16 %v3485
    %v4785 = vunpack.c.h.b16 %v3485
    %v4786 = vunpack.c.l.b16 %v3486
    %v4787 = vunpack.c.h.b16 %v3486
    %v4788 = vunpack.c.l.b16 %v3487
    %v4789 = vunpack.c.h.b16 %v3487
    %v4790 = vunpack.c.l.b16 %v3488
    %v4791 = vunpack.c.h.b16 %v3488
    %v4792 = vunpack.c.l.b16 %v3489
    %v4793 = vunpack.c.h.b16 %v3489
    %v4794 = vunpack.c.l.b16 %v3490
    %v4795 = vunpack.c.h.b16 %v3490
    %v4796 = vunpack.c.l.b16 %v3491
    %v4797 = vunpack.c.h.b16 %v3491
    %v4798 = vunpack.c.l.b16 %v3492
    %v4799 = vunpack.c.h.b16 %v3492
    %v4800 = vunpack.c.l.b16 %v3493
    %v4801 = vunpack.c.h.b16 %v3493
    %v4802 = vunpack.c.l.b16 %v3494
    %v4803 = vunpack.c.h.b16 %v3494
    %v4804 = vunpack.c.l.b16 %v3495
    %v4805 = vunpack.c.h.b16 %v3495
    %v4806 = vunpack.c.l.b16 %v3496
    %v4807 = vunpack.c.h.b16 %v3496
    %v4808 = vunpack.c.l.b16 %v3497
    %v4809 = vunpack.c.h.b16 %v3497
    %v4810 = vunpack.c.l.b16 %v3498
    %v4811 = vunpack.c.h.b16 %v3498
    %v4812 = vunpack.c.l.b16 %v3499
    %v4813 = vunpack.c.h.b16 %v3499
    %v4814 = vunpack.c.l.b16 %v3500
    %v4815 = vunpack.c.h.b16 %v3500
    %v4816 = vunpack.c.l.b16 %v3501
    %v4817 = vunpack.c.h.b16 %v3501
    %v4818 = vunpack.c.l.b16 %v3502
    %v4819 = vunpack.c.h.b16 %v3502
    %v4820 = vunpack.c.l.b16 %v3503
    %v4821 = vunpack.c.h.b16 %v3503
    %v4822 = vunpack.c.l.b16 %v3504
    %v4823 = vunpack.c.h.b16 %v3504
    %v4824 = vunpack.c.l.b16 %v3505
    %v4825 = vunpack.c.h.b16 %v3505
    %v4826 = vunpack.c.l.b16 %v3506
    %v4827 = vunpack.c.h.b16 %v3506
    %v4828 = vunpack.c.l.b16 %v3507
    %v4829 = vunpack.c.h.b16 %v3507
    %v4830 = vunpack.c.l.b16 %v3508
    %v4831 = vunpack.c.h.b16 %v3508
    %v4832 = vunpack.c.l.b16 %v3509
    %v4833 = vunpack.c.h.b16 %v3509
    %v4834 = vunpack.c.l.b16 %v3510
    %v4835 = vunpack.c.h.b16 %v3510
    %v4836 = vunpack.c.l.b16 %v3511
    %v4837 = vunpack.c.h.b16 %v3511
    %v4838 = vunpack.c.l.b16 %v3512
    %v4839 = vunpack.c.h.b16 %v3512
    %v4840 = vunpack.c.l.b16 %v3513
    %v4841 = vunpack.c.h.b16 %v3513
    %v4842 = vunpack.c.l.b16 %v3514
    %v4843 = vunpack.c.h.b16 %v3514
    %v4844 = vunpack.c.l.b16 %v3515
    %v4845 = vunpack.c.h.b16 %v3515
    %v4846 = vunpack.c.l.b16 %v3516
    %v4847 = vunpack.c.h.b16 %v3516
    %v4848 = vunpack.c.l.b16 %v3517
    %v4849 = vunpack.c.h.b16 %v3517
    %v4850 = vunpack.c.l.b16 %v3518
    %v4851 = vunpack.c.h.b16 %v3518
    %v4852 = vunpack.c.l.b16 %v3519
    %v4853 = vunpack.c.h.b16 %v3519
    %v4854 = vunpack.c.l.b16 %v3520
    %v4855 = vunpack.c.h.b16 %v3520
    %v4856 = vunpack.c.l.b16 %v3521
    %v4857 = vunpack.c.h.b16 %v3521
    %v4858 = vunpack.c.l.b16 %v3522
    %v4859 = vunpack.c.h.b16 %v3522
    %v4860 = vunpack.c.l.b16 %v3523
    %v4861 = vunpack.c.h.b16 %v3523
    %v4862 = vunpack.c.l.b16 %v3524
    %v4863 = vunpack.c.h.b16 %v3524
    %v4864 = vunpack.c.l.b16 %v3525
    %v4865 = vunpack.c.h.b16 %v3525
    %v4866 = vunpack.c.l.b16 %v3526
    %v4867 = vunpack.c.h.b16 %v3526
    %v4868 = vunpack.c.l.b16 %v3527
    %v4869 = vunpack.c.h.b16 %v3527
    %v4870 = vunpack.c.l.b16 %v3528
    %v4871 = vunpack.c.h.b16 %v3528
    %v4872 = vunpack.c.l.b16 %v3529
    %v4873 = vunpack.c.h.b16 %v3529
    %v4874 = vunpack.c.l.b16 %v3530
    %v4875 = vunpack.c.h.b16 %v3530
    %v4876 = vunpack.c.l.b16 %v3531
    %v4877 = vunpack.c.h.b16 %v3531
    %v4878 = vunpack.c.l.b16 %v3532
    %v4879 = vunpack.c.h.b16 %v3532
    %v4880 = vunpack.c.l.b16 %v3533
    %v4881 = vunpack.c.h.b16 %v3533
    %v4882 = vunpack.c.l.b16 %v3534
    %v4883 = vunpack.c.h.b16 %v3534
    %v4884 = vunpack.c.l.b16 %v3535
    %v4885 = vunpack.c.h.b16 %v3535
    %v4886 = vunpack.c.l.b16 %v3536
    %v4887 = vunpack.c.h.b16 %v3536
    %v4888 = vunpack.c.l.b16 %v3537
    %v4889 = vunpack.c.h.b16 %v3537
    %v4890 = vunpack.c.l.b16 %v3538
    %v4891 = vunpack.c.h.b16 %v3538
    %v4892 = vunpack.c.l.b16 %v3539
    %v4893 = vunpack.c.h.b16 %v3539
    %v4894 = vunpack.c.l.b16 %v3540
    %v4895 = vunpack.c.h.b16 %v3540
    %v4896 = vunpack.c.l.b16 %v3541
    %v4897 = vunpack.c.h.b16 %v3541
    %v4898 = vunpack.c.l.b16 %v3542
    %v4899 = vunpack.c.h.b16 %v3542
    %v4900 = vunpack.c.l.b16 %v3543
    %v4901 = vunpack.c.h.b16 %v3543
    %v4902 = vunpack.c.l.b16 %v3544
    %v4903 = vunpack.c.h.b16 %v3544
    %v4904 = vunpack.c.l.b16 %v3545
    %v4905 = vunpack.c.h.b16 %v3545
    %v4906 = vunpack.c.l.b16 %v3546
    %v4907 = vunpack.c.h.b16 %v3546
    %v4908 = vunpack.c.l.b16 %v3547
    %v4909 = vunpack.c.h.b16 %v3547
    %v4910 = vunpack.c.l.b16 %v3548
    %v4911 = vunpack.c.h.b16 %v3548
    %v4912 = vunpack.c.l.b16 %v3549
    %v4913 = vunpack.c.h.b16 %v3549
    %v4914 = vunpack.c.l.b16 %v3550
    %v4915 = vunpack.c.h.b16 %v3550
    %v4916 = vunpack.c.l.b16 %v3551
    %v4917 = vunpack.c.h.b16 %v3551
    %v4918 = vunpack.c.l.b16 %v3552
    %v4919 = vunpack.c.h.b16 %v3552
    %v4920 = vunpack.c.l.b16 %v3553
    %v4921 = vunpack.c.h.b16 %v3553
    %v4922 = vunpack.c.l.b16 %v3554
    %v4923 = vunpack.c.h.b16 %v3554
    %v4924 = vunpack.c.l.b16 %v3555
    %v4925 = vunpack.c.h.b16 %v3555
    %v4926 = vunpack.c.l.b16 %v3556
    %v4927 = vunpack.c.h.b16 %v3556
    %v4928 = vunpack.c.l.b16 %v3557
    %v4929 = vunpack.c.h.b16 %v3557
    %v4930 = vunpack.c.l.b16 %v3558
    %v4931 = vunpack.c.h.b16 %v3558
    %v4932 = vunpack.c.l.b16 %v3559
    %v4933 = vunpack.c.h.b16 %v3559
    %v4934 = vunpack.c.l.b16 %v3560
    %v4935 = vunpack.c.h.b16 %v3560
    %v4936 = vunpack.c.l.b16 %v3561
    %v4937 = vunpack.c.h.b16 %v3561
    %v4938 = vunpack.c.l.b16 %v3562
    %v4939 = vunpack.c.h.b16 %v3562
    %v4940 = vunpack.c.l.b16 %v3563
    %v4941 = vunpack.c.h.b16 %v3563
    %v4942 = vunpack.c.l.b16 %v3564
    %v4943 = vunpack.c.h.b16 %v3564
    %v4944 = vunpack.c.l.b16 %v3565
    %v4945 = vunpack.c.h.b16 %v3565
    %v4946 = vunpack.c.l.b16 %v3566
    %v4947 = vunpack.c.h.b16 %v3566
    %v4948 = vunpack.c.l.b16 %v3567
    %v4949 = vunpack.c.h.b16 %v3567
    %v4950 = vunpack.c.l.b16 %v3568
    %v4951 = vunpack.c.h.b16 %v3568
    %v4952 = vunpack.c.l.b16 %v3569
    %v4953 = vunpack.c.h.b16 %v3569
    %v4954 = vunpack.c.l.b16 %v3570
    %v4955 = vunpack.c.h.b16 %v3570
    %v4956 = vunpack.c.l.b16 %v3571
    %v4957 = vunpack.c.h.b16 %v3571
    %v4958 = vunpack.c.l.b16 %v3572
    %v4959 = vunpack.c.h.b16 %v3572
    %v4960 = vunpack.c.l.b16 %v3573
    %v4961 = vunpack.c.h.b16 %v3573
    %v4962 = vunpack.c.l.b16 %v3574
    %v4963 = vunpack.c.h.b16 %v3574
    %v4964 = vunpack.c.l.b16 %v3575
    %v4965 = vunpack.c.h.b16 %v3575
    %v4966 = vunpack.c.l.b16 %v3576
    %v4967 = vunpack.c.h.b16 %v3576
    %v4968 = vunpack.c.l.b16 %v3577
    %v4969 = vunpack.c.h.b16 %v3577
    %v4970 = vunpack.c.l.b16 %v3578
    %v4971 = vunpack.c.h.b16 %v3578
    %v4972 = vunpack.c.l.b16 %v3579
    %v4973 = vunpack.c.h.b16 %v3579
    %v4974 = vunpack.c.l.b16 %v3580
    %v4975 = vunpack.c.h.b16 %v3580
    %v4976 = vunpack.c.l.b16 %v3581
    %v4977 = vunpack.c.h.b16 %v3581
    %v4978 = vunpack.c.l.b16 %v3582
    %v4979 = vunpack.c.h.b16 %v3582
    %v4980 = vunpack.c.l.b16 %v3583
    %v4981 = vunpack.c.h.b16 %v3583
    %v4982 = vunpack.c.l.b16 %v3584
    %v4983 = vunpack.c.h.b16 %v3584
    %v4984 = vunpack.c.l.b16 %v3585
    %v4985 = vunpack.c.h.b16 %v3585
    %v4986 = vunpack.c.l.b16 %v3586
    %v4987 = vunpack.c.h.b16 %v3586
    %v4988 = vunpack.c.l.b16 %v3587
    %v4989 = vunpack.c.h.b16 %v3587
    %v4990 = vunpack.c.l.b16 %v3588
    %v4991 = vunpack.c.h.b16 %v3588
    %v4992 = vunpack.c.l.b16 %v3589
    %v4993 = vunpack.c.h.b16 %v3589
    %v4994 = vunpack.c.l.b16 %v3590
    %v4995 = vunpack.c.h.b16 %v3590
    %v4996 = vunpack.c.l.b16 %v3591
    %v4997 = vunpack.c.h.b16 %v3591
    %v4998 = vunpack.c.l.b16 %v3592
    %v4999 = vunpack.c.h.b16 %v3592
    %v5000 = vunpack.c.l.b16 %v3593
    %v5001 = vunpack.c.h.b16 %v3593
    %v5002 = vunpack.c.l.b16 %v3594
    %v5003 = vunpack.c.h.b16 %v3594
    %v5004 = vunpack.c.l.b16 %v3595
    %v5005 = vunpack.c.h.b16 %v3595
    %v5006 = vunpack.c.l.b16 %v3596
    %v5007 = vunpack.c.h.b16 %v3596
    %v5008 = vunpack.c.l.b16 %v3597
    %v5009 = vunpack.c.h.b16 %v3597
    %v5010 = vunpack.c.l.b16 %v3598
    %v5011 = vunpack.c.h.b16 %v3598
    %v5012 = vunpack.c.l.b16 %v3599
    %v5013 = vunpack.c.h.b16 %v3599
    %v5014 = vunpack.c.l.b16 %v3600
    %v5015 = vunpack.c.h.b16 %v3600
    %v5016 = vunpack.c.l.b16 %v3601
    %v5017 = vunpack.c.h.b16 %v3601
    %v5018 = vunpack.c.l.b16 %v3602
    %v5019 = vunpack.c.h.b16 %v3602
    %v5020 = vunpack.c.l.b16 %v3603
    %v5021 = vunpack.c.h.b16 %v3603
    %v5022 = vunpack.c.l.b16 %v3604
    %v5023 = vunpack.c.h.b16 %v3604
    %v5024 = vunpack.c.l.b16 %v3605
    %v5025 = vunpack.c.h.b16 %v3605
    %v5026 = vunpack.c.l.b16 %v3606
    %v5027 = vunpack.c.h.b16 %v3606
    %v5028 = vunpack.c.l.b16 %v3607
    %v5029 = vunpack.c.h.b16 %v3607
    %v5030 = vunpack.c.l.b16 %v3608
    %v5031 = vunpack.c.h.b16 %v3608
    %v5032 = vunpack.c.l.b16 %v3609
    %v5033 = vunpack.c.h.b16 %v3609
    %v5034 = vunpack.c.l.b16 %v3610
    %v5035 = vunpack.c.h.b16 %v3610
    %v5036 = vunpack.c.l.b16 %v3611
    %v5037 = vunpack.c.h.b16 %v3611
    %v5038 = vunpack.c.l.b16 %v3612
    %v5039 = vunpack.c.h.b16 %v3612
    %v5040 = vunpack.c.l.b16 %v3613
    %v5041 = vunpack.c.h.b16 %v3613
    %v5042 = vunpack.c.l.b16 %v3614
    %v5043 = vunpack.c.h.b16 %v3614
    %v5044 = vunpack.c.l.b16 %v3615
    %v5045 = vunpack.c.h.b16 %v3615
    %v5046 = vunpack.c.l.b16 %v3616
    %v5047 = vunpack.c.h.b16 %v3616
    %v5048 = vunpack.c.l.b16 %v3617
    %v5049 = vunpack.c.h.b16 %v3617
    %v5050 = vunpack.c.l.b16 %v3618
    %v5051 = vunpack.c.h.b16 %v3618
    %v5052 = vunpack.c.l.b16 %v3619
    %v5053 = vunpack.c.h.b16 %v3619
    %v5054 = vunpack.c.l.b16 %v3620
    %v5055 = vunpack.c.h.b16 %v3620
    %v5056 = vunpack.c.l.b16 %v3621
    %v5057 = vunpack.c.h.b16 %v3621
    %v5058 = vunpack.c.l.b16 %v3622
    %v5059 = vunpack.c.h.b16 %v3622
    %v5060 = vunpack.c.l.b16 %v3623
    %v5061 = vunpack.c.h.b16 %v3623
    %v5062 = vunpack.c.l.b16 %v3624
    %v5063 = vunpack.c.h.b16 %v3624
    %v5064 = vunpack.c.l.b16 %v3625
    %v5065 = vunpack.c.h.b16 %v3625
    %v5066 = vunpack.c.l.b16 %v3626
    %v5067 = vunpack.c.h.b16 %v3626
    %v5068 = vunpack.c.l.b16 %v3627
    %v5069 = vunpack.c.h.b16 %v3627
    %v5070 = vunpack.c.l.b16 %v3628
    %v5071 = vunpack.c.h.b16 %v3628
    %v5072 = vunpack.c.l.b16 %v3629
    %v5073 = vunpack.c.h.b16 %v3629
    %v5074 = vunpack.c.l.b16 %v3630
    %v5075 = vunpack.c.h.b16 %v3630
    %v5076 = vunpack.c.l.b16 %v3631
    %v5077 = vunpack.c.h.b16 %v3631
    %v5078 = vunpack.c.l.b16 %v3632
    %v5079 = vunpack.c.h.b16 %v3632
    %v5080 = vunpack.c.l.b16 %v3633
    %v5081 = vunpack.c.h.b16 %v3633
    %v5082 = vunpack.c.l.b16 %v3634
    %v5083 = vunpack.c.h.b16 %v3634
    %v5084 = vunpack.c.l.b16 %v3635
    %v5085 = vunpack.c.h.b16 %v3635
    %v5086 = vunpack.c.l.b16 %v3636
    %v5087 = vunpack.c.h.b16 %v3636
    %v5088 = vunpack.c.l.b16 %v3637
    %v5089 = vunpack.c.h.b16 %v3637
    %v5090 = vunpack.c.l.b16 %v3638
    %v5091 = vunpack.c.h.b16 %v3638
    %v5092 = vunpack.c.l.b16 %v3639
    %v5093 = vunpack.c.h.b16 %v3639
    %v5094 = vunpack.c.l.b16 %v3640
    %v5095 = vunpack.c.h.b16 %v3640
    %v5096 = vunpack.c.l.b16 %v3641
    %v5097 = vunpack.c.h.b16 %v3641
    %v5098 = vunpack.c.l.b16 %v3642
    %v5099 = vunpack.c.h.b16 %v3642
    %v5100 = vunpack.c.l.b16 %v3643
    %v5101 = vunpack.c.h.b16 %v3643
    %v5102 = vunpack.c.l.b16 %v3644
    %v5103 = vunpack.c.h.b16 %v3644
    %v5104 = vunpack.c.l.b16 %v3645
    %v5105 = vunpack.c.h.b16 %v3645
    %v5106 = vunpack.c.l.b16 %v3646
    %v5107 = vunpack.c.h.b16 %v3646
    %v5108 = vunpack.c.l.b16 %v3647
    %v5109 = vunpack.c.h.b16 %v3647
    %v5110 = vunpack.c.l.b16 %v3648
    %v5111 = vunpack.c.h.b16 %v3648
    %v5112 = vunpack.c.l.b16 %v3649
    %v5113 = vunpack.c.h.b16 %v3649
    %v5114 = vunpack.c.l.b16 %v3650
    %v5115 = vunpack.c.h.b16 %v3650
    %v5116 = vunpack.c.l.b16 %v3651
    %v5117 = vunpack.c.h.b16 %v3651
    %v5118 = vunpack.c.l.b16 %v3652
    %v5119 = vunpack.c.h.b16 %v3652
    %v5120 = vunpack.c.l.b16 %v3653
    %v5121 = vunpack.c.h.b16 %v3653
    %v5122 = vunpack.c.l.b16 %v3654
    %v5123 = vunpack.c.h.b16 %v3654
    %v5124 = vunpack.c.l.b16 %v3655
    %v5125 = vunpack.c.h.b16 %v3655
    %v5126 = vunpack.c.l.b16 %v3656
    %v5127 = vunpack.c.h.b16 %v3656
    %v5128 = vunpack.c.l.b16 %v3657
    %v5129 = vunpack.c.h.b16 %v3657
    %v5130 = vunpack.c.l.b16 %v3658
    %v5131 = vunpack.c.h.b16 %v3658
    %v5132 = vunpack.c.l.b16 %v3659
    %v5133 = vunpack.c.h.b16 %v3659
    %v5134 = vunpack.c.l.b16 %v3660
    %v5135 = vunpack.c.h.b16 %v3660
    %v5136 = vunpack.c.l.b16 %v3661
    %v5137 = vunpack.c.h.b16 %v3661
    %v5138 = vunpack.c.l.b16 %v3662
    %v5139 = vunpack.c.h.b16 %v3662
    %v5140 = vunpack.c.l.b16 %v3663
    %v5141 = vunpack.c.h.b16 %v3663
    %v5142 = vunpack.c.l.b16 %v3664
    %v5143 = vunpack.c.h.b16 %v3664
    %v5144 = vunpack.c.l.b16 %v3665
    %v5145 = vunpack.c.h.b16 %v3665
    %v5146 = vunpack.c.l.b16 %v3666
    %v5147 = vunpack.c.h.b16 %v3666
    %v5148 = vunpack.c.l.b16 %v3667
    %v5149 = vunpack.c.h.b16 %v3667
    %v5150 = vunpack.c.l.b16 %v3668
    %v5151 = vunpack.c.h.b16 %v3668
    %v5152 = vunpack.c.l.b16 %v3669
    %v5153 = vunpack.c.h.b16 %v3669
    %v5154 = vunpack.c.l.b16 %v3670
    %v5155 = vunpack.c.h.b16 %v3670
    %v5156 = vunpack.c.l.b16 %v3671
    %v5157 = vunpack.c.h.b16 %v3671
    %v5158 = vunpack.c.l.b16 %v3672
    %v5159 = vunpack.c.h.b16 %v3672
    %v5160 = vunpack.c.l.b16 %v3673
    %v5161 = vunpack.c.h.b16 %v3673
    %v5162 = vunpack.c.l.b16 %v3674
    %v5163 = vunpack.c.h.b16 %v3674
    %v5164 = vunpack.c.l.b16 %v3675
    %v5165 = vunpack.c.h.b16 %v3675
    %v5166 = vunpack.c.l.b16 %v3676
    %v5167 = vunpack.c.h.b16 %v3676
    %v5168 = vunpack.c.l.b16 %v3677
    %v5169 = vunpack.c.h.b16 %v3677
    %v5170 = vunpack.c.l.b16 %v3678
    %v5171 = vunpack.c.h.b16 %v3678
    %v5172 = vunpack.c.l.b16 %v3679
    %v5173 = vunpack.c.h.b16 %v3679
    %v5174 = vunpack.c.l.b16 %v3680
    %v5175 = vunpack.c.h.b16 %v3680
    %v5176 = vunpack.c.l.b16 %v3681
    %v5177 = vunpack.c.h.b16 %v3681
    %v5178 = vunpack.c.l.b16 %v3682
    %v5179 = vunpack.c.h.b16 %v3682
    %v5180 = vunpack.c.l.b16 %v3683
    %v5181 = vunpack.c.h.b16 %v3683
    %v5182 = vunpack.c.l.b16 %v3684
    %v5183 = vunpack.c.h.b16 %v3684
    %v5184 = vunpack.c.l.b16 %v3685
    %v5185 = vunpack.c.h.b16 %v3685
    %v5186 = vunpack.c.l.b16 %v3686
    %v5187 = vunpack.c.h.b16 %v3686
    %v5188 = vunpack.c.l.b16 %v3687
    %v5189 = vunpack.c.h.b16 %v3687
    %v5190 = vunpack.c.l.b16 %v3688
    %v5191 = vunpack.c.h.b16 %v3688
    %v5192 = vunpack.c.l.b16 %v3689
    %v5193 = vunpack.c.h.b16 %v3689
    %v5194 = vunpack.c.l.b16 %v3690
    %v5195 = vunpack.c.h.b16 %v3690
    %v5196 = vunpack.c.l.b16 %v3691
    %v5197 = vunpack.c.h.b16 %v3691
    %v5198 = vunpack.c.l.b16 %v3692
    %v5199 = vunpack.c.h.b16 %v3692
    %v5200 = vunpack.c.l.b16 %v3693
    %v5201 = vunpack.c.h.b16 %v3693
    %v5202 = vunpack.c.l.b16 %v3694
    %v5203 = vunpack.c.h.b16 %v3694
    %v5204 = vpack.c.b16 %v4208, %v4204
    %v5205 = vpack.c.b16 %v4209, %v4205
    %v5206 = vpack.c.b16 %v4210, %v4206
    %v5207 = vpack.c.b16 %v4211, %v4207
    %v5208 = vpack.c.b16 %v4216, %v4212
    %v5209 = vpack.c.b16 %v4217, %v4213
    %v5210 = vpack.c.b16 %v4218, %v4214
    %v5211 = vpack.c.b16 %v4219, %v4215
    %v5212 = vpack.c.b16 %v4224, %v4220
    %v5213 = vpack.c.b16 %v4225, %v4221
    %v5214 = vpack.c.b16 %v4226, %v4222
    %v5215 = vpack.c.b16 %v4227, %v4223
    %v5216 = vpack.c.b16 %v4232, %v4228
    %v5217 = vpack.c.b16 %v4233, %v4229
    %v5218 = vpack.c.b16 %v4234, %v4230
    %v5219 = vpack.c.b16 %v4235, %v4231
    %v5220 = vpack.c.b16 %v4240, %v4236
    %v5221 = vpack.c.b16 %v4241, %v4237
    %v5222 = vpack.c.b16 %v4242, %v4238
    %v5223 = vpack.c.b16 %v4243, %v4239
    %v5224 = vpack.c.b16 %v4248, %v4244
    %v5225 = vpack.c.b16 %v4249, %v4245
    %v5226 = vpack.c.b16 %v4250, %v4246
    %v5227 = vpack.c.b16 %v4251, %v4247
    %v5228 = vpack.c.b16 %v4256, %v4252
    %v5229 = vpack.c.b16 %v4257, %v4253
    %v5230 = vpack.c.b16 %v4258, %v4254
    %v5231 = vpack.c.b16 %v4259, %v4255
    %v5232 = vpack.c.b16 %v4264, %v4260
    %v5233 = vpack.c.b16 %v4265, %v4261
    %v5234 = vpack.c.b16 %v4266, %v4262
    %v5235 = vpack.c.b16 %v4267, %v4263
    %v5236 = vpack.c.b16 %v4272, %v4268
    %v5237 = vpack.c.b16 %v4273, %v4269
    %v5238 = vpack.c.b16 %v4274, %v4270
    %v5239 = vpack.c.b16 %v4275, %v4271
    %v5240 = vpack.c.b16 %v4280, %v4276
    %v5241 = vpack.c.b16 %v4281, %v4277
    %v5242 = vpack.c.b16 %v4282, %v4278
    %v5243 = vpack.c.b16 %v4283, %v4279
    %v5244 = vpack.c.b16 %v4288, %v4284
    %v5245 = vpack.c.b16 %v4289, %v4285
    %v5246 = vpack.c.b16 %v4290, %v4286
    %v5247 = vpack.c.b16 %v4291, %v4287
    %v5248 = vpack.c.b16 %v4296, %v4292
    %v5249 = vpack.c.b16 %v4297, %v4293
    %v5250 = vpack.c.b16 %v4298, %v4294
    %v5251 = vpack.c.b16 %v4299, %v4295
    %v5252 = vpack.c.b16 %v4304, %v4300
    %v5253 = vpack.c.b16 %v4305, %v4301
    %v5254 = vpack.c.b16 %v4306, %v4302
    %v5255 = vpack.c.b16 %v4307, %v4303
    %v5256 = vpack.c.b16 %v4312, %v4308
    %v5257 = vpack.c.b16 %v4313, %v4309
    %v5258 = vpack.c.b16 %v4314, %v4310
    %v5259 = vpack.c.b16 %v4315, %v4311
    %v5260 = vpack.c.b16 %v4320, %v4316
    %v5261 = vpack.c.b16 %v4321, %v4317
    %v5262 = vpack.c.b16 %v4322, %v4318
    %v5263 = vpack.c.b16 %v4323, %v4319
    %v5264 = vpack.c.b16 %v4328, %v4324
    %v5265 = vpack.c.b16 %v4329, %v4325
    %v5266 = vpack.c.b16 %v4330, %v4326
    %v5267 = vpack.c.b16 %v4331, %v4327
    %v5268 = vpack.c.b16 %v4336, %v4332
    %v5269 = vpack.c.b16 %v4337, %v4333
    %v5270 = vpack.c.b16 %v4338, %v4334
    %v5271 = vpack.c.b16 %v4339, %v4335
    %v5272 = vpack.c.b16 %v4344, %v4340
    %v5273 = vpack.c.b16 %v4345, %v4341
    %v5274 = vpack.c.b16 %v4346, %v4342
    %v5275 = vpack.c.b16 %v4347, %v4343
    %v5276 = vpack.c.b16 %v4352, %v4348
    %v5277 = vpack.c.b16 %v4353, %v4349
    %v5278 = vpack.c.b16 %v4354, %v4350
    %v5279 = vpack.c.b16 %v4355, %v4351
    %v5280 = vpack.c.b16 %v4360, %v4356
    %v5281 = vpack.c.b16 %v4361, %v4357
    %v5282 = vpack.c.b16 %v4362, %v4358
    %v5283 = vpack.c.b16 %v4363, %v4359
    %v5284 = vpack.c.b16 %v4368, %v4364
    %v5285 = vpack.c.b16 %v4369, %v4365
    %v5286 = vpack.c.b16 %v4370, %v4366
    %v5287 = vpack.c.b16 %v4371, %v4367
    %v5288 = vpack.c.b16 %v4376, %v4372
    %v5289 = vpack.c.b16 %v4377, %v4373
    %v5290 = vpack.c.b16 %v4378, %v4374
    %v5291 = vpack.c.b16 %v4379, %v4375
    %v5292 = vpack.c.b16 %v4384, %v4380
    %v5293 = vpack.c.b16 %v4385, %v4381
    %v5294 = vpack.c.b16 %v4386, %v4382
    %v5295 = vpack.c.b16 %v4387, %v4383
    %v5296 = vpack.c.b16 %v4392, %v4388
    %v5297 = vpack.c.b16 %v4393, %v4389
    %v5298 = vpack.c.b16 %v4394, %v4390
    %v5299 = vpack.c.b16 %v4395, %v4391
    %v5300 = vpack.c.b16 %v4400, %v4396
    %v5301 = vpack.c.b16 %v4401, %v4397
    %v5302 = vpack.c.b16 %v4402, %v4398
    %v5303 = vpack.c.b16 %v4403, %v4399
    %v5304 = vpack.c.b16 %v4408, %v4404
    %v5305 = vpack.c.b16 %v4409, %v4405
    %v5306 = vpack.c.b16 %v4410, %v4406
    %v5307 = vpack.c.b16 %v4411, %v4407
    %v5308 = vpack.c.b16 %v4416, %v4412
    %v5309 = vpack.c.b16 %v4417, %v4413
    %v5310 = vpack.c.b16 %v4418, %v4414
    %v5311 = vpack.c.b16 %v4419, %v4415
    %v5312 = vpack.c.b16 %v4424, %v4420
    %v5313 = vpack.c.b16 %v4425, %v4421
    %v5314 = vpack.c.b16 %v4426, %v4422
    %v5315 = vpack.c.b16 %v4427, %v4423
    %v5316 = vpack.c.b16 %v4432, %v4428
    %v5317 = vpack.c.b16 %v4433, %v4429
    %v5318 = vpack.c.b16 %v4434, %v4430
    %v5319 = vpack.c.b16 %v4435, %v4431
    %v5320 = vpack.c.b16 %v4440, %v4436
    %v5321 = vpack.c.b16 %v4441, %v4437
    %v5322 = vpack.c.b16 %v4442, %v4438
    %v5323 = vpack.c.b16 %v4443, %v4439
    %v5324 = vpack.c.b16 %v4448, %v4444
    %v5325 = vpack.c.b16 %v4449, %v4445
    %v5326 = vpack.c.b16 %v4450, %v4446
    %v5327 = vpack.c.b16 %v4451, %v4447
    %v5328 = vpack.c.b16 %v4456, %v4452
    %v5329 = vpack.c.b16 %v4457, %v4453
    %v5330 = vpack.c.b16 %v4458, %v4454
    %v5331 = vpack.c.b16 %v4459, %v4455
    %v5332 = vpack.c.b16 %v4464, %v4460
    %v5333 = vpack.c.b16 %v4465, %v4461
    %v5334 = vpack.c.b16 %v4466, %v4462
    %v5335 = vpack.c.b16 %v4467, %v4463
    %v5336 = vpack.c.b16 %v4472, %v4468
    %v5337 = vpack.c.b16 %v4473, %v4469
    %v5338 = vpack.c.b16 %v4474, %v4470
    %v5339 = vpack.c.b16 %v4475, %v4471
    %v5340 = vpack.c.b16 %v4480, %v4476
    %v5341 = vpack.c.b16 %v4481, %v4477
    %v5342 = vpack.c.b16 %v4482, %v4478
    %v5343 = vpack.c.b16 %v4483, %v4479
    %v5344 = vpack.c.b16 %v4488, %v4484
    %v5345 = vpack.c.b16 %v4489, %v4485
    %v5346 = vpack.c.b16 %v4490, %v4486
    %v5347 = vpack.c.b16 %v4491, %v4487
    %v5348 = vpack.c.b16 %v4496, %v4492
    %v5349 = vpack.c.b16 %v4497, %v4493
    %v5350 = vpack.c.b16 %v4498, %v4494
    %v5351 = vpack.c.b16 %v4499, %v4495
    %v5352 = vpack.c.b16 %v4504, %v4500
    %v5353 = vpack.c.b16 %v4505, %v4501
    %v5354 = vpack.c.b16 %v4506, %v4502
    %v5355 = vpack.c.b16 %v4507, %v4503
    %v5356 = vpack.c.b16 %v4512, %v4508
    %v5357 = vpack.c.b16 %v4513, %v4509
    %v5358 = vpack.c.b16 %v4514, %v4510
    %v5359 = vpack.c.b16 %v4515, %v4511
    %v5360 = vpack.c.b16 %v4520, %v4516
    %v5361 = vpack.c.b16 %v4521, %v4517
    %v5362 = vpack.c.b16 %v4522, %v4518
    %v5363 = vpack.c.b16 %v4523, %v4519
    %v5364 = vpack.c.b16 %v4528, %v4524
    %v5365 = vpack.c.b16 %v4529, %v4525
    %v5366 = vpack.c.b16 %v4530, %v4526
    %v5367 = vpack.c.b16 %v4531, %v4527
    %v5368 = vpack.c.b16 %v4536, %v4532
    %v5369 = vpack.c.b16 %v4537, %v4533
    %v5370 = vpack.c.b16 %v4538, %v4534
    %v5371 = vpack.c.b16 %v4539, %v4535
    %v5372 = vpack.c.b16 %v4544, %v4540
    %v5373 = vpack.c.b16 %v4545, %v4541
    %v5374 = vpack.c.b16 %v4546, %v4542
    %v5375 = vpack.c.b16 %v4547, %v4543
    %v5376 = vpack.c.b16 %v4552, %v4548
    %v5377 = vpack.c.b16 %v4553, %v4549
    %v5378 = vpack.c.b16 %v4554, %v4550
    %v5379 = vpack.c.b16 %v4555, %v4551
    %v5380 = vpack.c.b16 %v4560, %v4556
    %v5381 = vpack.c.b16 %v4561, %v4557
    %v5382 = vpack.c.b16 %v4562, %v4558
    %v5383 = vpack.c.b16 %v4563, %v4559
    %v5384 = vpack.c.b16 %v4568, %v4564
    %v5385 = vpack.c.b16 %v4569, %v4565
    %v5386 = vpack.c.b16 %v4570, %v4566
    %v5387 = vpack.c.b16 %v4571, %v4567
    %v5388 = vpack.c.b16 %v4576, %v4572
    %v5389 = vpack.c.b16 %v4577, %v4573
    %v5390 = vpack.c.b16 %v4578, %v4574
    %v5391 = vpack.c.b16 %v4579, %v4575
    %v5392 = vpack.c.b16 %v4584, %v4580
    %v5393 = vpack.c.b16 %v4585, %v4581
    %v5394 = vpack.c.b16 %v4586, %v4582
    %v5395 = vpack.c.b16 %v4587, %v4583
    %v5396 = vpack.c.b16 %v4592, %v4588
    %v5397 = vpack.c.b16 %v4593, %v4589
    %v5398 = vpack.c.b16 %v4594, %v4590
    %v5399 = vpack.c.b16 %v4595, %v4591
    %v5400 = vpack.c.b16 %v4600, %v4596
    %v5401 = vpack.c.b16 %v4601, %v4597
    %v5402 = vpack.c.b16 %v4602, %v4598
    %v5403 = vpack.c.b16 %v4603, %v4599
    %v5404 = vpack.c.b16 %v4608, %v4604
    %v5405 = vpack.c.b16 %v4609, %v4605
    %v5406 = vpack.c.b16 %v4610, %v4606
    %v5407 = vpack.c.b16 %v4611, %v4607
    %v5408 = vpack.c.b16 %v4616, %v4612
    %v5409 = vpack.c.b16 %v4617, %v4613
    %v5410 = vpack.c.b16 %v4618, %v4614
    %v5411 = vpack.c.b16 %v4619, %v4615
    %v5412 = vpack.c.b16 %v4624, %v4620
    %v5413 = vpack.c.b16 %v4625, %v4621
    %v5414 = vpack.c.b16 %v4626, %v4622
    %v5415 = vpack.c.b16 %v4627, %v4623
    %v5416 = vpack.c.b16 %v4632, %v4628
    %v5417 = vpack.c.b16 %v4633, %v4629
    %v5418 = vpack.c.b16 %v4634, %v4630
    %v5419 = vpack.c.b16 %v4635, %v4631
    %v5420 = vpack.c.b16 %v4640, %v4636
    %v5421 = vpack.c.b16 %v4641, %v4637
    %v5422 = vpack.c.b16 %v4642, %v4638
    %v5423 = vpack.c.b16 %v4643, %v4639
    %v5424 = vpack.c.b16 %v4648, %v4644
    %v5425 = vpack.c.b16 %v4649, %v4645
    %v5426 = vpack.c.b16 %v4650, %v4646
    %v5427 = vpack.c.b16 %v4651, %v4647
    %v5428 = vpack.c.b16 %v4656, %v4652
    %v5429 = vpack.c.b16 %v4657, %v4653
    %v5430 = vpack.c.b16 %v4658, %v4654
    %v5431 = vpack.c.b16 %v4659, %v4655
    %v5432 = vpack.c.b16 %v4664, %v4660
    %v5433 = vpack.c.b16 %v4665, %v4661
    %v5434 = vpack.c.b16 %v4666, %v4662
    %v5435 = vpack.c.b16 %v4667, %v4663
    %v5436 = vpack.c.b16 %v4672, %v4668
    %v5437 = vpack.c.b16 %v4673, %v4669
    %v5438 = vpack.c.b16 %v4674, %v4670
    %v5439 = vpack.c.b16 %v4675, %v4671
    %v5440 = vpack.c.b16 %v4680, %v4676
    %v5441 = vpack.c.b16 %v4681, %v4677
    %v5442 = vpack.c.b16 %v4682, %v4678
    %v5443 = vpack.c.b16 %v4683, %v4679
    %v5444 = vpack.c.b16 %v4688, %v4684
    %v5445 = vpack.c.b16 %v4689, %v4685
    %v5446 = vpack.c.b16 %v4690, %v4686
    %v5447 = vpack.c.b16 %v4691, %v4687
    %v5448 = vpack.c.b16 %v4696, %v4692
    %v5449 = vpack.c.b16 %v4697, %v4693
    %v5450 = vpack.c.b16 %v4698, %v4694
    %v5451 = vpack.c.b16 %v4699, %v4695
    %v5452 = vpack.c.b16 %v4704, %v4700
    %v5453 = vpack.c.b16 %v4705, %v4701
    %v5454 = vpack.c.b16 %v4706, %v4702
    %v5455 = vpack.c.b16 %v4707, %v4703
    %v5456 = vpack.c.b16 %v4712, %v4708
    %v5457 = vpack.c.b16 %v4713, %v4709
    %v5458 = vpack.c.b16 %v4714, %v4710
    %v5459 = vpack.c.b16 %v4715, %v4711
    %v5460 = vpack.c.b16 %v4720, %v4716
    %v5461 = vpack.c.b16 %v4721, %v4717
    %v5462 = vpack.c.b16 %v4722, %v4718
    %v5463 = vpack.c.b16 %v4723, %v4719
    %v5464 = vpack.c.b16 %v4728, %v4724
    %v5465 = vpack.c.b16 %v4729, %v4725
    %v5466 = vpack.c.b16 %v4730, %v4726
    %v5467 = vpack.c.b16 %v4731, %v4727
    %v5468 = vpack.c.b16 %v4736, %v4732
    %v5469 = vpack.c.b16 %v4737, %v4733
    %v5470 = vpack.c.b16 %v4738, %v4734
    %v5471 = vpack.c.b16 %v4739, %v4735
    %v5472 = vpack.c.b16 %v4744, %v4740
    %v5473 = vpack.c.b16 %v4745, %v4741
    %v5474 = vpack.c.b16 %v4746, %v4742
    %v5475 = vpack.c.b16 %v4747, %v4743
    %v5476 = vpack.c.b16 %v4752, %v4748
    %v5477 = vpack.c.b16 %v4753, %v4749
    %v5478 = vpack.c.b16 %v4754, %v4750
    %v5479 = vpack.c.b16 %v4755, %v4751
    %v5480 = vpack.c.b16 %v4760, %v4756
    %v5481 = vpack.c.b16 %v4761, %v4757
    %v5482 = vpack.c.b16 %v4762, %v4758
    %v5483 = vpack.c.b16 %v4763, %v4759
    %v5484 = vpack.c.b16 %v4768, %v4764
    %v5485 = vpack.c.b16 %v4769, %v4765
    %v5486 = vpack.c.b16 %v4770, %v4766
    %v5487 = vpack.c.b16 %v4771, %v4767
    %v5488 = vpack.c.b16 %v4776, %v4772
    %v5489 = vpack.c.b16 %v4777, %v4773
    %v5490 = vpack.c.b16 %v4778, %v4774
    %v5491 = vpack.c.b16 %v4779, %v4775
    %v5492 = vpack.c.b16 %v4784, %v4780
    %v5493 = vpack.c.b16 %v4785, %v4781
    %v5494 = vpack.c.b16 %v4786, %v4782
    %v5495 = vpack.c.b16 %v4787, %v4783
    %v5496 = vpack.c.b16 %v4792, %v4788
    %v5497 = vpack.c.b16 %v4793, %v4789
    %v5498 = vpack.c.b16 %v4794, %v4790
    %v5499 = vpack.c.b16 %v4795, %v4791
    %v5500 = vpack.c.b16 %v4800, %v4796
    %v5501 = vpack.c.b16 %v4801, %v4797
    %v5502 = vpack.c.b16 %v4802, %v4798
    %v5503 = vpack.c.b16 %v4803, %v4799
    %v5504 = vpack.c.b16 %v4808, %v4804
    %v5505 = vpack.c.b16 %v4809, %v4805
    %v5506 = vpack.c.b16 %v4810, %v4806
    %v5507 = vpack.c.b16 %v4811, %v4807
    %v5508 = vpack.c.b16 %v4816, %v4812
    %v5509 = vpack.c.b16 %v4817, %v4813
    %v5510 = vpack.c.b16 %v4818, %v4814
    %v5511 = vpack.c.b16 %v4819, %v4815
    %v5512 = vpack.c.b16 %v4824, %v4820
    %v5513 = vpack.c.b16 %v4825, %v4821
    %v5514 = vpack.c.b16 %v4826, %v4822
    %v5515 = vpack.c.b16 %v4827, %v4823
    %v5516 = vpack.c.b16 %v4832, %v4828
    %v5517 = vpack.c.b16 %v4833, %v4829
    %v5518 = vpack.c.b16 %v4834, %v4830
    %v5519 = vpack.c.b16 %v4835, %v4831
    %v5520 = vpack.c.b16 %v4840, %v4836
    %v5521 = vpack.c.b16 %v4841, %v4837
    %v5522 = vpack.c.b16 %v4842, %v4838
    %v5523 = vpack.c.b16 %v4843, %v4839
    %v5524 = vpack.c.b16 %v4848, %v4844
    %v5525 = vpack.c.b16 %v4849, %v4845
    %v5526 = vpack.c.b16 %v4850, %v4846
    %v5527 = vpack.c.b16 %v4851, %v4847
    %v5528 = vpack.c.b16 %v4856, %v4852
    %v5529 = vpack.c.b16 %v4857, %v4853
    %v5530 = vpack.c.b16 %v4858, %v4854
    %v5531 = vpack.c.b16 %v4859, %v4855
    %v5532 = vpack.c.b16 %v4864, %v4860
    %v5533 = vpack.c.b16 %v4865, %v4861
    %v5534 = vpack.c.b16 %v4866, %v4862
    %v5535 = vpack.c.b16 %v4867, %v4863
    %v5536 = vpack.c.b16 %v4872, %v4868
    %v5537 = vpack.c.b16 %v4873, %v4869
    %v5538 = vpack.c.b16 %v4874, %v4870
    %v5539 = vpack.c.b16 %v4875, %v4871
    %v5540 = vpack.c.b16 %v4880, %v4876
    %v5541 = vpack.c.b16 %v4881, %v4877
    %v5542 = vpack.c.b16 %v4882, %v4878
    %v5543 = vpack.c.b16 %v4883, %v4879
    %v5544 = vpack.c.b16 %v4888, %v4884
    %v5545 = vpack.c.b16 %v4889, %v4885
    %v5546 = vpack.c.b16 %v4890, %v4886
    %v5547 = vpack.c.b16 %v4891, %v4887
    %v5548 = vpack.c.b16 %v4896, %v4892
    %v5549 = vpack.c.b16 %v4897, %v4893
    %v5550 = vpack.c.b16 %v4898, %v4894
    %v5551 = vpack.c.b16 %v4899, %v4895
    %v5552 = vpack.c.b16 %v4904, %v4900
    %v5553 = vpack.c.b16 %v4905, %v4901
    %v5554 = vpack.c.b16 %v4906, %v4902
    %v5555 = vpack.c.b16 %v4907, %v4903
    %v5556 = vpack.c.b16 %v4912, %v4908
    %v5557 = vpack.c.b16 %v4913, %v4909
    %v5558 = vpack.c.b16 %v4914, %v4910
    %v5559 = vpack.c.b16 %v4915, %v4911
    %v5560 = vpack.c.b16 %v4920, %v4916
    %v5561 = vpack.c.b16 %v4921, %v4917
    %v5562 = vpack.c.b16 %v4922, %v4918
    %v5563 = vpack.c.b16 %v4923, %v4919
    %v5564 = vpack.c.b16 %v4928, %v4924
    %v5565 = vpack.c.b16 %v4929, %v4925
    %v5566 = vpack.c.b16 %v4930, %v4926
    %v5567 = vpack.c.b16 %v4931, %v4927
    %v5568 = vpack.c.b16 %v4936, %v4932
    %v5569 = vpack.c.b16 %v4937, %v4933
    %v5570 = vpack.c.b16 %v4938, %v4934
    %v5571 = vpack.c.b16 %v4939, %v4935
    %v5572 = vpack.c.b16 %v4944, %v4940
    %v5573 = vpack.c.b16 %v4945, %v4941
    %v5574 = vpack.c.b16 %v4946, %v4942
    %v5575 = vpack.c.b16 %v4947, %v4943
    %v5576 = vpack.c.b16 %v4952, %v4948
    %v5577 = vpack.c.b16 %v4953, %v4949
    %v5578 = vpack.c.b16 %v4954, %v4950
    %v5579 = vpack.c.b16 %v4955, %v4951
    %v5580 = vpack.c.b16 %v4960, %v4956
    %v5581 = vpack.c.b16 %v4961, %v4957
    %v5582 = vpack.c.b16 %v4962, %v4958
    %v5583 = vpack.c.b16 %v4963, %v4959
    %v5584 = vpack.c.b16 %v4968, %v4964
    %v5585 = vpack.c.b16 %v4969, %v4965
    %v5586 = vpack.c.b16 %v4970, %v4966
    %v5587 = vpack.c.b16 %v4971, %v4967
    %v5588 = vpack.c.b16 %v4976, %v4972
    %v5589 = vpack.c.b16 %v4977, %v4973
    %v5590 = vpack.c.b16 %v4978, %v4974
    %v5591 = vpack.c.b16 %v4979, %v4975
    %v5592 = vpack.c.b16 %v4984, %v4980
    %v5593 = vpack.c.b16 %v4985, %v4981
    %v5594 = vpack.c.b16 %v4986, %v4982
    %v5595 = vpack.c.b16 %v4987, %v4983
    %v5596 = vpack.c.b16 %v4992, %v4988
    %v5597 = vpack.c.b16 %v4993, %v4989
    %v5598 = vpack.c.b16 %v4994, %v4990
    %v5599 = vpack.c.b16 %v4995, %v4991
    %v5600 = vpack.c.b16 %v5000, %v4996
    %v5601 = vpack.c.b16 %v5001, %v4997
    %v5602 = vpack.c.b16 %v5002, %v4998
    %v5603 = vpack.c.b16 %v5003, %v4999
    %v5604 = vpack.c.b16 %v5008, %v5004
    %v5605 = vpack.c.b16 %v5009, %v5005
    %v5606 = vpack.c.b16 %v5010, %v5006
    %v5607 = vpack.c.b16 %v5011, %v5007
    %v5608 = vpack.c.b16 %v5016, %v5012
    %v5609 = vpack.c.b16 %v5017, %v5013
    %v5610 = vpack.c.b16 %v5018, %v5014
    %v5611 = vpack.c.b16 %v5019, %v5015
    %v5612 = vpack.c.b16 %v5024, %v5020
    %v5613 = vpack.c.b16 %v5025, %v5021
    %v5614 = vpack.c.b16 %v5026, %v5022
    %v5615 = vpack.c.b16 %v5027, %v5023
    %v5616 = vpack.c.b16 %v5032, %v5028
    %v5617 = vpack.c.b16 %v5033, %v5029
    %v5618 = vpack.c.b16 %v5034, %v5030
    %v5619 = vpack.c.b16 %v5035, %v5031
    %v5620 = vpack.c.b16 %v5040, %v5036
    %v5621 = vpack.c.b16 %v5041, %v5037
    %v5622 = vpack.c.b16 %v5042, %v5038
    %v5623 = vpack.c.b16 %v5043, %v5039
    %v5624 = vpack.c.b16 %v5048, %v5044
    %v5625 = vpack.c.b16 %v5049, %v5045
    %v5626 = vpack.c.b16 %v5050, %v5046
    %v5627 = vpack.c.b16 %v5051, %v5047
    %v5628 = vpack.c.b16 %v5056, %v5052
    %v5629 = vpack.c.b16 %v5057, %v5053
    %v5630 = vpack.c.b16 %v5058, %v5054
    %v5631 = vpack.c.b16 %v5059, %v5055
    %v5632 = vpack.c.b16 %v5064, %v5060
    %v5633 = vpack.c.b16 %v5065, %v5061
    %v5634 = vpack.c.b16 %v5066, %v5062
    %v5635 = vpack.c.b16 %v5067, %v5063
    %v5636 = vpack.c.b16 %v5072, %v5068
    %v5637 = vpack.c.b16 %v5073, %v5069
    %v5638 = vpack.c.b16 %v5074, %v5070
    %v5639 = vpack.c.b16 %v5075, %v5071
    %v5640 = vpack.c.b16 %v5080, %v5076
    %v5641 = vpack.c.b16 %v5081, %v5077
    %v5642 = vpack.c.b16 %v5082, %v5078
    %v5643 = vpack.c.b16 %v5083, %v5079
    %v5644 = vpack.c.b16 %v5088, %v5084
    %v5645 = vpack.c.b16 %v5089, %v5085
    %v5646 = vpack.c.b16 %v5090, %v5086
    %v5647 = vpack.c.b16 %v5091, %v5087
    %v5648 = vpack.c.b16 %v5096, %v5092
    %v5649 = vpack.c.b16 %v5097, %v5093
    %v5650 = vpack.c.b16 %v5098, %v5094
    %v5651 = vpack.c.b16 %v5099, %v5095
    %v5652 = vpack.c.b16 %v5104, %v5100
    %v5653 = vpack.c.b16 %v5105, %v5101
    %v5654 = vpack.c.b16 %v5106, %v5102
    %v5655 = vpack.c.b16 %v5107, %v5103
    %v5656 = vpack.c.b16 %v5112, %v5108
    %v5657 = vpack.c.b16 %v5113, %v5109
    %v5658 = vpack.c.b16 %v5114, %v5110
    %v5659 = vpack.c.b16 %v5115, %v5111
    %v5660 = vpack.c.b16 %v5120, %v5116
    %v5661 = vpack.c.b16 %v5121, %v5117
    %v5662 = vpack.c.b16 %v5122, %v5118
    %v5663 = vpack.c.b16 %v5123, %v5119
    %v5664 = vpack.c.b16 %v5128, %v5124
    %v5665 = vpack.c.b16 %v5129, %v5125
    %v5666 = vpack.c.b16 %v5130, %v5126
    %v5667 = vpack.c.b16 %v5131, %v5127
    %v5668 = vpack.c.b16 %v5136, %v5132
    %v5669 = vpack.c.b16 %v5137, %v5133
    %v5670 = vpack.c.b16 %v5138, %v5134
    %v5671 = vpack.c.b16 %v5139, %v5135
    %v5672 = vpack.c.b16 %v5144, %v5140
    %v5673 = vpack.c.b16 %v5145, %v5141
    %v5674 = vpack.c.b16 %v5146, %v5142
    %v5675 = vpack.c.b16 %v5147, %v5143
    %v5676 = vpack.c.b16 %v5152, %v5148
    %v5677 = vpack.c.b16 %v5153, %v5149
    %v5678 = vpack.c.b16 %v5154, %v5150
    %v5679 = vpack.c.b16 %v5155, %v5151
    %v5680 = vpack.c.b16 %v5160, %v5156
    %v5681 = vpack.c.b16 %v5161, %v5157
    %v5682 = vpack.c.b16 %v5162, %v5158
    %v5683 = vpack.c.b16 %v5163, %v5159
    %v5684 = vpack.c.b16 %v5168, %v5164
    %v5685 = vpack.c.b16 %v5169, %v5165
    %v5686 = vpack.c.b16 %v5170, %v5166
    %v5687 = vpack.c.b16 %v5171, %v5167
    %v5688 = vpack.c.b16 %v5176, %v5172
    %v5689 = vpack.c.b16 %v5177, %v5173
    %v5690 = vpack.c.b16 %v5178, %v5174
    %v5691 = vpack.c.b16 %v5179, %v5175
    %v5692 = vpack.c.b16 %v5184, %v5180
    %v5693 = vpack.c.b16 %v5185, %v5181
    %v5694 = vpack.c.b16 %v5186, %v5182
    %v5695 = vpack.c.b16 %v5187, %v5183
    %v5696 = vpack.c.b16 %v5192, %v5188
    %v5697 = vpack.c.b16 %v5193, %v5189
    %v5698 = vpack.c.b16 %v5194, %v5190
    %v5699 = vpack.c.b16 %v5195, %v5191
    %v5700 = vpack.c.b16 %v5200, %v5196
    %v5701 = vpack.c.b16 %v5201, %v5197
    %v5702 = vpack.c.b16 %v5202, %v5198
    %v5703 = vpack.c.b16 %v5203, %v5199
    %vm6204 = vcmask 654336
    %v6206 = vsel %vm6204, %v3194, 0
    %6208 = vmatpush.bf16.msra.mxu0 %v5232
    %6209 = vmatpush.bf16.msra.mxu0 %v5228
    %6210 = vmatpush.bf16.msra.mxu0 %v5224
    %6211 = vmatpush.bf16.msra.mxu0 %v5220
    %6212 = vmatpush.bf16.msra.mxu0 %v5216
    %6213 = vmatpush.bf16.msra.mxu0 %v5212
    %6214 = vmatpush.bf16.msra.mxu0 %v5208
    %6215 = vmatpush.bf16.msra.mxu0 %v5204
    %6216 = vmatmul.bf16.gmra.mxu0 %v3179
    %v6217 = vpop.f32.mrf.mxu0
    %v6218 = vadd.f32 %v3696, %v6217
    %v6219 = vpop.f32.mrf.mxu0
    %6220 = vdwg.mxu0
    %6221 = vmatpush.bf16.msra.mxu0 %v5264
    %6222 = vmatpush.bf16.msra.mxu0 %v5260
    %6223 = vmatpush.bf16.msra.mxu0 %v5256
    %6224 = vmatpush.bf16.msra.mxu0 %v5252
    %6225 = vmatpush.bf16.msra.mxu0 %v5248
    %6226 = vmatpush.bf16.msra.mxu0 %v5244
    %6227 = vmatpush.bf16.msra.mxu0 %v5240
    %6228 = vmatpush.bf16.msra.mxu0 %v5236
    %6229 = vmatmul.bf16.gmra.mxu0 %v3180
    %v6230 = vpop.f32.mrf.mxu0
    %v6231 = vadd.f32 %v6218, %v6230
    %v6232 = vpop.f32.mrf.mxu0
    %6233 = vdwg.mxu0
    %6234 = vmatpush.bf16.msra.mxu0 %v5296
    %6235 = vmatpush.bf16.msra.mxu0 %v5292
    %6236 = vmatpush.bf16.msra.mxu0 %v5288
    %6237 = vmatpush.bf16.msra.mxu0 %v5284
    %6238 = vmatpush.bf16.msra.mxu0 %v5280
    %6239 = vmatpush.bf16.msra.mxu0 %v5276
    %6240 = vmatpush.bf16.msra.mxu0 %v5272
    %6241 = vmatpush.bf16.msra.mxu0 %v5268
    %6242 = vmatmul.bf16.gmra.mxu0 %v3181
    %v6243 = vpop.f32.mrf.mxu0
    %v6244 = vadd.f32 %v6231, %v6243
    %v6245 = vpop.f32.mrf.mxu0
    %6246 = vdwg.mxu0
    %6247 = vmatpush.bf16.msra.mxu0 %v5328
    %6248 = vmatpush.bf16.msra.mxu0 %v5324
    %6249 = vmatpush.bf16.msra.mxu0 %v5320
    %6250 = vmatpush.bf16.msra.mxu0 %v5316
    %6251 = vmatpush.bf16.msra.mxu0 %v5312
    %6252 = vmatpush.bf16.msra.mxu0 %v5308
    %6253 = vmatpush.bf16.msra.mxu0 %v5304
    %6254 = vmatpush.bf16.msra.mxu0 %v5300
    %6255 = vmatmul.bf16.gmra.mxu0 %v3182
    %v6256 = vpop.f32.mrf.mxu0
    %v6257 = vadd.f32 %v6244, %v6256
    %v6258 = vpop.f32.mrf.mxu0
    %6259 = vdwg.mxu0
    %6260 = vmatpush.bf16.msra.mxu0 %v5360
    %6261 = vmatpush.bf16.msra.mxu0 %v5356
    %6262 = vmatpush.bf16.msra.mxu0 %v5352
    %6263 = vmatpush.bf16.msra.mxu0 %v5348
    %6264 = vmatpush.bf16.msra.mxu0 %v5344
    %6265 = vmatpush.bf16.msra.mxu0 %v5340
    %6266 = vmatpush.bf16.msra.mxu0 %v5336
    %6267 = vmatpush.bf16.msra.mxu0 %v5332
    %6268 = vmatmul.bf16.gmra.mxu0 %v3183
    %v6269 = vpop.f32.mrf.mxu0
    %v6270 = vadd.f32 %v6257, %v6269
    %v6271 = vpop.f32.mrf.mxu0
    %6272 = vdwg.mxu0
    %6273 = vmatpush.bf16.msra.mxu0 %v5392
    %6274 = vmatpush.bf16.msra.mxu0 %v5388
    %6275 = vmatpush.bf16.msra.mxu0 %v5384
    %6276 = vmatpush.bf16.msra.mxu0 %v5380
    %6277 = vmatpush.bf16.msra.mxu0 %v5376
    %6278 = vmatpush.bf16.msra.mxu0 %v5372
    %6279 = vmatpush.bf16.msra.mxu0 %v5368
    %6280 = vmatpush.bf16.msra.mxu0 %v5364
    %6281 = vmatmul.bf16.gmra.mxu0 %v3184
    %v6282 = vpop.f32.mrf.mxu0
    %v6283 = vadd.f32 %v6270, %v6282
    %v6284 = vpop.f32.mrf.mxu0
    %6285 = vdwg.mxu0
    %6286 = vmatpush.bf16.msra.mxu0 %v5424
    %6287 = vmatpush.bf16.msra.mxu0 %v5420
    %6288 = vmatpush.bf16.msra.mxu0 %v5416
    %6289 = vmatpush.bf16.msra.mxu0 %v5412
    %6290 = vmatpush.bf16.msra.mxu0 %v5408
    %6291 = vmatpush.bf16.msra.mxu0 %v5404
    %6292 = vmatpush.bf16.msra.mxu0 %v5400
    %6293 = vmatpush.bf16.msra.mxu0 %v5396
    %6294 = vmatmul.bf16.gmra.mxu0 %v3185
    %v6295 = vpop.f32.mrf.mxu0
    %v6296 = vadd.f32 %v6283, %v6295
    %v6297 = vpop.f32.mrf.mxu0
    %6298 = vdwg.mxu0
    %6299 = vmatpush.bf16.msra.mxu0 %v5456
    %6300 = vmatpush.bf16.msra.mxu0 %v5452
    %6301 = vmatpush.bf16.msra.mxu0 %v5448
    %6302 = vmatpush.bf16.msra.mxu0 %v5444
    %6303 = vmatpush.bf16.msra.mxu0 %v5440
    %6304 = vmatpush.bf16.msra.mxu0 %v5436
    %6305 = vmatpush.bf16.msra.mxu0 %v5432
    %6306 = vmatpush.bf16.msra.mxu0 %v5428
    %6307 = vmatmul.bf16.gmra.mxu0 %v3186
    %v6308 = vpop.f32.mrf.mxu0
    %v6309 = vadd.f32 %v6296, %v6308
    %v6310 = vpop.f32.mrf.mxu0
    %6311 = vdwg.mxu0
    %6312 = vmatpush.bf16.msra.mxu0 %v5488
    %6313 = vmatpush.bf16.msra.mxu0 %v5484
    %6314 = vmatpush.bf16.msra.mxu0 %v5480
    %6315 = vmatpush.bf16.msra.mxu0 %v5476
    %6316 = vmatpush.bf16.msra.mxu0 %v5472
    %6317 = vmatpush.bf16.msra.mxu0 %v5468
    %6318 = vmatpush.bf16.msra.mxu0 %v5464
    %6319 = vmatpush.bf16.msra.mxu0 %v5460
    %6320 = vmatmul.bf16.gmra.mxu0 %v3187
    %v6321 = vpop.f32.mrf.mxu0
    %v6322 = vadd.f32 %v6309, %v6321
    %v6323 = vpop.f32.mrf.mxu0
    %6324 = vdwg.mxu0
    %6325 = vmatpush.bf16.msra.mxu0 %v5520
    %6326 = vmatpush.bf16.msra.mxu0 %v5516
    %6327 = vmatpush.bf16.msra.mxu0 %v5512
    %6328 = vmatpush.bf16.msra.mxu0 %v5508
    %6329 = vmatpush.bf16.msra.mxu0 %v5504
    %6330 = vmatpush.bf16.msra.mxu0 %v5500
    %6331 = vmatpush.bf16.msra.mxu0 %v5496
    %6332 = vmatpush.bf16.msra.mxu0 %v5492
    %6333 = vmatmul.bf16.gmra.mxu0 %v3188
    %v6334 = vpop.f32.mrf.mxu0
    %v6335 = vadd.f32 %v6322, %v6334
    %v6336 = vpop.f32.mrf.mxu0
    %6337 = vdwg.mxu0
    %6338 = vmatpush.bf16.msra.mxu0 %v5552
    %6339 = vmatpush.bf16.msra.mxu0 %v5548
    %6340 = vmatpush.bf16.msra.mxu0 %v5544
    %6341 = vmatpush.bf16.msra.mxu0 %v5540
    %6342 = vmatpush.bf16.msra.mxu0 %v5536
    %6343 = vmatpush.bf16.msra.mxu0 %v5532
    %6344 = vmatpush.bf16.msra.mxu0 %v5528
    %6345 = vmatpush.bf16.msra.mxu0 %v5524
    %6346 = vmatmul.bf16.gmra.mxu0 %v3189
    %v6347 = vpop.f32.mrf.mxu0
    %v6348 = vadd.f32 %v6335, %v6347
    %v6349 = vpop.f32.mrf.mxu0
    %6350 = vdwg.mxu0
    %6351 = vmatpush.bf16.msra.mxu0 %v5584
    %6352 = vmatpush.bf16.msra.mxu0 %v5580
    %6353 = vmatpush.bf16.msra.mxu0 %v5576
    %6354 = vmatpush.bf16.msra.mxu0 %v5572
    %6355 = vmatpush.bf16.msra.mxu0 %v5568
    %6356 = vmatpush.bf16.msra.mxu0 %v5564
    %6357 = vmatpush.bf16.msra.mxu0 %v5560
    %6358 = vmatpush.bf16.msra.mxu0 %v5556
    %6359 = vmatmul.bf16.gmra.mxu0 %v3190
    %v6360 = vpop.f32.mrf.mxu0
    %v6361 = vadd.f32 %v6348, %v6360
    %v6362 = vpop.f32.mrf.mxu0
    %6363 = vdwg.mxu0
    %6364 = vmatpush.bf16.msra.mxu0 %v5616
    %6365 = vmatpush.bf16.msra.mxu0 %v5612
    %6366 = vmatpush.bf16.msra.mxu0 %v5608
    %6367 = vmatpush.bf16.msra.mxu0 %v5604
    %6368 = vmatpush.bf16.msra.mxu0 %v5600
    %6369 = vmatpush.bf16.msra.mxu0 %v5596
    %6370 = vmatpush.bf16.msra.mxu0 %v5592
    %6371 = vmatpush.bf16.msra.mxu0 %v5588
    %6372 = vmatmul.bf16.gmra.mxu0 %v3191
    %v6373 = vpop.f32.mrf.mxu0
    %v6374 = vadd.f32 %v6361, %v6373
    %v6375 = vpop.f32.mrf.mxu0
    %6376 = vdwg.mxu0
    %6377 = vmatpush.bf16.msra.mxu0 %v5648
    %6378 = vmatpush.bf16.msra.mxu0 %v5644
    %6379 = vmatpush.bf16.msra.mxu0 %v5640
    %6380 = vmatpush.bf16.msra.mxu0 %v5636
    %6381 = vmatpush.bf16.msra.mxu0 %v5632
    %6382 = vmatpush.bf16.msra.mxu0 %v5628
    %6383 = vmatpush.bf16.msra.mxu0 %v5624
    %6384 = vmatpush.bf16.msra.mxu0 %v5620
    %6385 = vmatmul.bf16.gmra.mxu0 %v3192
    %v6386 = vpop.f32.mrf.mxu0
    %v6387 = vadd.f32 %v6374, %v6386
    %v6388 = vpop.f32.mrf.mxu0
    %6389 = vdwg.mxu0
    %6390 = vmatpush.bf16.msra.mxu0 %v5680
    %6391 = vmatpush.bf16.msra.mxu0 %v5676
    %6392 = vmatpush.bf16.msra.mxu0 %v5672
    %6393 = vmatpush.bf16.msra.mxu0 %v5668
    %6394 = vmatpush.bf16.msra.mxu0 %v5664
    %6395 = vmatpush.bf16.msra.mxu0 %v5660
    %6396 = vmatpush.bf16.msra.mxu0 %v5656
    %6397 = vmatpush.bf16.msra.mxu0 %v5652
    %6398 = vmatmul.bf16.gmra.mxu0 %v3193
    %v6399 = vpop.f32.mrf.mxu0
    %v6400 = vadd.f32 %v6387, %v6399
    %v6401 = vpop.f32.mrf.mxu0
    %6402 = vdwg.mxu0
    %6403 = vmatpush.bf16.msra.mxu0 0
    %6404 = vmatpush.bf16.msra.mxu0 0
    %6405 = vmatpush.bf16.msra.mxu0 0
    %6406 = vmatpush.bf16.msra.mxu0 %v5700
    %6407 = vmatpush.bf16.msra.mxu0 %v5696
    %6408 = vmatpush.bf16.msra.mxu0 %v5692
    %6409 = vmatpush.bf16.msra.mxu0 %v5688
    %6410 = vmatpush.bf16.msra.mxu0 %v5684
    %6411 = vmatmul.bf16.gmra.mxu0 %v6206
    %v6412 = vpop.f32.mrf.mxu0
    %v6413 = vadd.f32 %v6400, %v6412
    %v6414 = vpop.f32.mrf.mxu0
    %6415 = vdwg.mxu0
    %6416 = vmatpush.bf16.msra.mxu0 %v5233
    %6417 = vmatpush.bf16.msra.mxu0 %v5229
    %6418 = vmatpush.bf16.msra.mxu0 %v5225
    %6419 = vmatpush.bf16.msra.mxu0 %v5221
    %6420 = vmatpush.bf16.msra.mxu0 %v5217
    %6421 = vmatpush.bf16.msra.mxu0 %v5213
    %6422 = vmatpush.bf16.msra.mxu0 %v5209
    %6423 = vmatpush.bf16.msra.mxu0 %v5205
    %6424 = vmatmul.bf16.gmra.mxu0 %v3179
    %v6425 = vpop.f32.mrf.mxu0
    %v6426 = vadd.f32 %v3697, %v6425
    %v6427 = vpop.f32.mrf.mxu0
    %6428 = vdwg.mxu0
    %6429 = vmatpush.bf16.msra.mxu0 %v5265
    %6430 = vmatpush.bf16.msra.mxu0 %v5261
    %6431 = vmatpush.bf16.msra.mxu0 %v5257
    %6432 = vmatpush.bf16.msra.mxu0 %v5253
    %6433 = vmatpush.bf16.msra.mxu0 %v5249
    %6434 = vmatpush.bf16.msra.mxu0 %v5245
    %6435 = vmatpush.bf16.msra.mxu0 %v5241
    %6436 = vmatpush.bf16.msra.mxu0 %v5237
    %6437 = vmatmul.bf16.gmra.mxu0 %v3180
    %v6438 = vpop.f32.mrf.mxu0
    %v6439 = vadd.f32 %v6426, %v6438
    %v6440 = vpop.f32.mrf.mxu0
    %6441 = vdwg.mxu0
    %6442 = vmatpush.bf16.msra.mxu0 %v5297
    %6443 = vmatpush.bf16.msra.mxu0 %v5293
    %6444 = vmatpush.bf16.msra.mxu0 %v5289
    %6445 = vmatpush.bf16.msra.mxu0 %v5285
    %6446 = vmatpush.bf16.msra.mxu0 %v5281
    %6447 = vmatpush.bf16.msra.mxu0 %v5277
    %6448 = vmatpush.bf16.msra.mxu0 %v5273
    %6449 = vmatpush.bf16.msra.mxu0 %v5269
    %6450 = vmatmul.bf16.gmra.mxu0 %v3181
    %v6451 = vpop.f32.mrf.mxu0
    %v6452 = vadd.f32 %v6439, %v6451
    %v6453 = vpop.f32.mrf.mxu0
    %6454 = vdwg.mxu0
    %6455 = vmatpush.bf16.msra.mxu0 %v5329
    %6456 = vmatpush.bf16.msra.mxu0 %v5325
    %6457 = vmatpush.bf16.msra.mxu0 %v5321
    %6458 = vmatpush.bf16.msra.mxu0 %v5317
    %6459 = vmatpush.bf16.msra.mxu0 %v5313
    %6460 = vmatpush.bf16.msra.mxu0 %v5309
    %6461 = vmatpush.bf16.msra.mxu0 %v5305
    %6462 = vmatpush.bf16.msra.mxu0 %v5301
    %6463 = vmatmul.bf16.gmra.mxu0 %v3182
    %v6464 = vpop.f32.mrf.mxu0
    %v6465 = vadd.f32 %v6452, %v6464
    %v6466 = vpop.f32.mrf.mxu0
    %6467 = vdwg.mxu0
    %6468 = vmatpush.bf16.msra.mxu0 %v5361
    %6469 = vmatpush.bf16.msra.mxu0 %v5357
    %6470 = vmatpush.bf16.msra.mxu0 %v5353
    %6471 = vmatpush.bf16.msra.mxu0 %v5349
    %6472 = vmatpush.bf16.msra.mxu0 %v5345
    %6473 = vmatpush.bf16.msra.mxu0 %v5341
    %6474 = vmatpush.bf16.msra.mxu0 %v5337
    %6475 = vmatpush.bf16.msra.mxu0 %v5333
    %6476 = vmatmul.bf16.gmra.mxu0 %v3183
    %v6477 = vpop.f32.mrf.mxu0
    %v6478 = vadd.f32 %v6465, %v6477
    %v6479 = vpop.f32.mrf.mxu0
    %6480 = vdwg.mxu0
    %6481 = vmatpush.bf16.msra.mxu0 %v5393
    %6482 = vmatpush.bf16.msra.mxu0 %v5389
    %6483 = vmatpush.bf16.msra.mxu0 %v5385
    %6484 = vmatpush.bf16.msra.mxu0 %v5381
    %6485 = vmatpush.bf16.msra.mxu0 %v5377
    %6486 = vmatpush.bf16.msra.mxu0 %v5373
    %6487 = vmatpush.bf16.msra.mxu0 %v5369
    %6488 = vmatpush.bf16.msra.mxu0 %v5365
    %6489 = vmatmul.bf16.gmra.mxu0 %v3184
    %v6490 = vpop.f32.mrf.mxu0
    %v6491 = vadd.f32 %v6478, %v6490
    %v6492 = vpop.f32.mrf.mxu0
    %6493 = vdwg.mxu0
    %6494 = vmatpush.bf16.msra.mxu0 %v5425
    %6495 = vmatpush.bf16.msra.mxu0 %v5421
    %6496 = vmatpush.bf16.msra.mxu0 %v5417
    %6497 = vmatpush.bf16.msra.mxu0 %v5413
    %6498 = vmatpush.bf16.msra.mxu0 %v5409
    %6499 = vmatpush.bf16.msra.mxu0 %v5405
    %6500 = vmatpush.bf16.msra.mxu0 %v5401
    %6501 = vmatpush.bf16.msra.mxu0 %v5397
    %6502 = vmatmul.bf16.gmra.mxu0 %v3185
    %v6503 = vpop.f32.mrf.mxu0
    %v6504 = vadd.f32 %v6491, %v6503
    %v6505 = vpop.f32.mrf.mxu0
    %6506 = vdwg.mxu0
    %6507 = vmatpush.bf16.msra.mxu0 %v5457
    %6508 = vmatpush.bf16.msra.mxu0 %v5453
    %6509 = vmatpush.bf16.msra.mxu0 %v5449
    %6510 = vmatpush.bf16.msra.mxu0 %v5445
    %6511 = vmatpush.bf16.msra.mxu0 %v5441
    %6512 = vmatpush.bf16.msra.mxu0 %v5437
    %6513 = vmatpush.bf16.msra.mxu0 %v5433
    %6514 = vmatpush.bf16.msra.mxu0 %v5429
    %6515 = vmatmul.bf16.gmra.mxu0 %v3186
    %v6516 = vpop.f32.mrf.mxu0
    %v6517 = vadd.f32 %v6504, %v6516
    %v6518 = vpop.f32.mrf.mxu0
    %6519 = vdwg.mxu0
    %6520 = vmatpush.bf16.msra.mxu0 %v5489
    %6521 = vmatpush.bf16.msra.mxu0 %v5485
    %6522 = vmatpush.bf16.msra.mxu0 %v5481
    %6523 = vmatpush.bf16.msra.mxu0 %v5477
    %6524 = vmatpush.bf16.msra.mxu0 %v5473
    %6525 = vmatpush.bf16.msra.mxu0 %v5469
    %6526 = vmatpush.bf16.msra.mxu0 %v5465
    %6527 = vmatpush.bf16.msra.mxu0 %v5461
    %6528 = vmatmul.bf16.gmra.mxu0 %v3187
    %v6529 = vpop.f32.mrf.mxu0
    %v6530 = vadd.f32 %v6517, %v6529
    %v6531 = vpop.f32.mrf.mxu0
    %6532 = vdwg.mxu0
    %6533 = vmatpush.bf16.msra.mxu0 %v5521
    %6534 = vmatpush.bf16.msra.mxu0 %v5517
    %6535 = vmatpush.bf16.msra.mxu0 %v5513
    %6536 = vmatpush.bf16.msra.mxu0 %v5509
    %6537 = vmatpush.bf16.msra.mxu0 %v5505
    %6538 = vmatpush.bf16.msra.mxu0 %v5501
    %6539 = vmatpush.bf16.msra.mxu0 %v5497
    %6540 = vmatpush.bf16.msra.mxu0 %v5493
    %6541 = vmatmul.bf16.gmra.mxu0 %v3188
    %v6542 = vpop.f32.mrf.mxu0
    %v6543 = vadd.f32 %v6530, %v6542
    %v6544 = vpop.f32.mrf.mxu0
    %6545 = vdwg.mxu0
    %6546 = vmatpush.bf16.msra.mxu0 %v5553
    %6547 = vmatpush.bf16.msra.mxu0 %v5549
    %6548 = vmatpush.bf16.msra.mxu0 %v5545
    %6549 = vmatpush.bf16.msra.mxu0 %v5541
    %6550 = vmatpush.bf16.msra.mxu0 %v5537
    %6551 = vmatpush.bf16.msra.mxu0 %v5533
    %6552 = vmatpush.bf16.msra.mxu0 %v5529
    %6553 = vmatpush.bf16.msra.mxu0 %v5525
    %6554 = vmatmul.bf16.gmra.mxu0 %v3189
    %v6555 = vpop.f32.mrf.mxu0
    %v6556 = vadd.f32 %v6543, %v6555
    %v6557 = vpop.f32.mrf.mxu0
    %6558 = vdwg.mxu0
    %6559 = vmatpush.bf16.msra.mxu0 %v5585
    %6560 = vmatpush.bf16.msra.mxu0 %v5581
    %6561 = vmatpush.bf16.msra.mxu0 %v5577
    %6562 = vmatpush.bf16.msra.mxu0 %v5573
    %6563 = vmatpush.bf16.msra.mxu0 %v5569
    %6564 = vmatpush.bf16.msra.mxu0 %v5565
    %6565 = vmatpush.bf16.msra.mxu0 %v5561
    %6566 = vmatpush.bf16.msra.mxu0 %v5557
    %6567 = vmatmul.bf16.gmra.mxu0 %v3190
    %v6568 = vpop.f32.mrf.mxu0
    %v6569 = vadd.f32 %v6556, %v6568
    %v6570 = vpop.f32.mrf.mxu0
    %6571 = vdwg.mxu0
    %6572 = vmatpush.bf16.msra.mxu0 %v5617
    %6573 = vmatpush.bf16.msra.mxu0 %v5613
    %6574 = vmatpush.bf16.msra.mxu0 %v5609
    %6575 = vmatpush.bf16.msra.mxu0 %v5605
    %6576 = vmatpush.bf16.msra.mxu0 %v5601
    %6577 = vmatpush.bf16.msra.mxu0 %v5597
    %6578 = vmatpush.bf16.msra.mxu0 %v5593
    %6579 = vmatpush.bf16.msra.mxu0 %v5589
    %6580 = vmatmul.bf16.gmra.mxu0 %v3191
    %v6581 = vpop.f32.mrf.mxu0
    %v6582 = vadd.f32 %v6569, %v6581
    %v6583 = vpop.f32.mrf.mxu0
    %6584 = vdwg.mxu0
    %6585 = vmatpush.bf16.msra.mxu0 %v5649
    %6586 = vmatpush.bf16.msra.mxu0 %v5645
    %6587 = vmatpush.bf16.msra.mxu0 %v5641
    %6588 = vmatpush.bf16.msra.mxu0 %v5637
    %6589 = vmatpush.bf16.msra.mxu0 %v5633
    %6590 = vmatpush.bf16.msra.mxu0 %v5629
    %6591 = vmatpush.bf16.msra.mxu0 %v5625
    %6592 = vmatpush.bf16.msra.mxu0 %v5621
    %6593 = vmatmul.bf16.gmra.mxu0 %v3192
    %v6594 = vpop.f32.mrf.mxu0
    %v6595 = vadd.f32 %v6582, %v6594
    %v6596 = vpop.f32.mrf.mxu0
    %6597 = vdwg.mxu0
    %6598 = vmatpush.bf16.msra.mxu0 %v5681
    %6599 = vmatpush.bf16.msra.mxu0 %v5677
    %6600 = vmatpush.bf16.msra.mxu0 %v5673
    %6601 = vmatpush.bf16.msra.mxu0 %v5669
    %6602 = vmatpush.bf16.msra.mxu0 %v5665
    %6603 = vmatpush.bf16.msra.mxu0 %v5661
    %6604 = vmatpush.bf16.msra.mxu0 %v5657
    %6605 = vmatpush.bf16.msra.mxu0 %v5653
    %6606 = vmatmul.bf16.gmra.mxu0 %v3193
    %v6607 = vpop.f32.mrf.mxu0
    %v6608 = vadd.f32 %v6595, %v6607
    %v6609 = vpop.f32.mrf.mxu0
    %6610 = vdwg.mxu0
    %6611 = vmatpush.bf16.msra.mxu0 0
    %6612 = vmatpush.bf16.msra.mxu0 0
    %6613 = vmatpush.bf16.msra.mxu0 0
    %6614 = vmatpush.bf16.msra.mxu0 %v5701
    %6615 = vmatpush.bf16.msra.mxu0 %v5697
    %6616 = vmatpush.bf16.msra.mxu0 %v5693
    %6617 = vmatpush.bf16.msra.mxu0 %v5689
    %6618 = vmatpush.bf16.msra.mxu0 %v5685
    %6619 = vmatmul.bf16.gmra.mxu0 %v6206
    %v6620 = vpop.f32.mrf.mxu0
    %v6621 = vadd.f32 %v6608, %v6620
    %v6622 = vpop.f32.mrf.mxu0
    %6623 = vdwg.mxu0
    %6624 = vmatpush.bf16.msra.mxu0 %v5234
    %6625 = vmatpush.bf16.msra.mxu0 %v5230
    %6626 = vmatpush.bf16.msra.mxu0 %v5226
    %6627 = vmatpush.bf16.msra.mxu0 %v5222
    %6628 = vmatpush.bf16.msra.mxu0 %v5218
    %6629 = vmatpush.bf16.msra.mxu0 %v5214
    %6630 = vmatpush.bf16.msra.mxu0 %v5210
    %6631 = vmatpush.bf16.msra.mxu0 %v5206
    %6632 = vmatmul.bf16.gmra.mxu0 %v3179
    %v6633 = vpop.f32.mrf.mxu0
    %v6634 = vadd.f32 %v3698, %v6633
    %v6635 = vpop.f32.mrf.mxu0
    %6636 = vdwg.mxu0
    %6637 = vmatpush.bf16.msra.mxu0 %v5266
    %6638 = vmatpush.bf16.msra.mxu0 %v5262
    %6639 = vmatpush.bf16.msra.mxu0 %v5258
    %6640 = vmatpush.bf16.msra.mxu0 %v5254
    %6641 = vmatpush.bf16.msra.mxu0 %v5250
    %6642 = vmatpush.bf16.msra.mxu0 %v5246
    %6643 = vmatpush.bf16.msra.mxu0 %v5242
    %6644 = vmatpush.bf16.msra.mxu0 %v5238
    %6645 = vmatmul.bf16.gmra.mxu0 %v3180
    %v6646 = vpop.f32.mrf.mxu0
    %v6647 = vadd.f32 %v6634, %v6646
    %v6648 = vpop.f32.mrf.mxu0
    %6649 = vdwg.mxu0
    %6650 = vmatpush.bf16.msra.mxu0 %v5298
    %6651 = vmatpush.bf16.msra.mxu0 %v5294
    %6652 = vmatpush.bf16.msra.mxu0 %v5290
    %6653 = vmatpush.bf16.msra.mxu0 %v5286
    %6654 = vmatpush.bf16.msra.mxu0 %v5282
    %6655 = vmatpush.bf16.msra.mxu0 %v5278
    %6656 = vmatpush.bf16.msra.mxu0 %v5274
    %6657 = vmatpush.bf16.msra.mxu0 %v5270
    %6658 = vmatmul.bf16.gmra.mxu0 %v3181
    %v6659 = vpop.f32.mrf.mxu0
    %v6660 = vadd.f32 %v6647, %v6659
    %v6661 = vpop.f32.mrf.mxu0
    %6662 = vdwg.mxu0
    %6663 = vmatpush.bf16.msra.mxu0 %v5330
    %6664 = vmatpush.bf16.msra.mxu0 %v5326
    %6665 = vmatpush.bf16.msra.mxu0 %v5322
    %6666 = vmatpush.bf16.msra.mxu0 %v5318
    %6667 = vmatpush.bf16.msra.mxu0 %v5314
    %6668 = vmatpush.bf16.msra.mxu0 %v5310
    %6669 = vmatpush.bf16.msra.mxu0 %v5306
    %6670 = vmatpush.bf16.msra.mxu0 %v5302
    %6671 = vmatmul.bf16.gmra.mxu0 %v3182
    %v6672 = vpop.f32.mrf.mxu0
    %v6673 = vadd.f32 %v6660, %v6672
    %v6674 = vpop.f32.mrf.mxu0
    %6675 = vdwg.mxu0
    %6676 = vmatpush.bf16.msra.mxu0 %v5362
    %6677 = vmatpush.bf16.msra.mxu0 %v5358
    %6678 = vmatpush.bf16.msra.mxu0 %v5354
    %6679 = vmatpush.bf16.msra.mxu0 %v5350
    %6680 = vmatpush.bf16.msra.mxu0 %v5346
    %6681 = vmatpush.bf16.msra.mxu0 %v5342
    %6682 = vmatpush.bf16.msra.mxu0 %v5338
    %6683 = vmatpush.bf16.msra.mxu0 %v5334
    %6684 = vmatmul.bf16.gmra.mxu0 %v3183
    %v6685 = vpop.f32.mrf.mxu0
    %v6686 = vadd.f32 %v6673, %v6685
    %v6687 = vpop.f32.mrf.mxu0
    %6688 = vdwg.mxu0
    %6689 = vmatpush.bf16.msra.mxu0 %v5394
    %6690 = vmatpush.bf16.msra.mxu0 %v5390
    %6691 = vmatpush.bf16.msra.mxu0 %v5386
    %6692 = vmatpush.bf16.msra.mxu0 %v5382
    %6693 = vmatpush.bf16.msra.mxu0 %v5378
    %6694 = vmatpush.bf16.msra.mxu0 %v5374
    %6695 = vmatpush.bf16.msra.mxu0 %v5370
    %6696 = vmatpush.bf16.msra.mxu0 %v5366
    %6697 = vmatmul.bf16.gmra.mxu0 %v3184
    %v6698 = vpop.f32.mrf.mxu0
    %v6699 = vadd.f32 %v6686, %v6698
    %v6700 = vpop.f32.mrf.mxu0
    %6701 = vdwg.mxu0
    %6702 = vmatpush.bf16.msra.mxu0 %v5426
    %6703 = vmatpush.bf16.msra.mxu0 %v5422
    %6704 = vmatpush.bf16.msra.mxu0 %v5418
    %6705 = vmatpush.bf16.msra.mxu0 %v5414
    %6706 = vmatpush.bf16.msra.mxu0 %v5410
    %6707 = vmatpush.bf16.msra.mxu0 %v5406
    %6708 = vmatpush.bf16.msra.mxu0 %v5402
    %6709 = vmatpush.bf16.msra.mxu0 %v5398
    %6710 = vmatmul.bf16.gmra.mxu0 %v3185
    %v6711 = vpop.f32.mrf.mxu0
    %v6712 = vadd.f32 %v6699, %v6711
    %v6713 = vpop.f32.mrf.mxu0
    %6714 = vdwg.mxu0
    %6715 = vmatpush.bf16.msra.mxu0 %v5458
    %6716 = vmatpush.bf16.msra.mxu0 %v5454
    %6717 = vmatpush.bf16.msra.mxu0 %v5450
    %6718 = vmatpush.bf16.msra.mxu0 %v5446
    %6719 = vmatpush.bf16.msra.mxu0 %v5442
    %6720 = vmatpush.bf16.msra.mxu0 %v5438
    %6721 = vmatpush.bf16.msra.mxu0 %v5434
    %6722 = vmatpush.bf16.msra.mxu0 %v5430
    %6723 = vmatmul.bf16.gmra.mxu0 %v3186
    %v6724 = vpop.f32.mrf.mxu0
    %v6725 = vadd.f32 %v6712, %v6724
    %v6726 = vpop.f32.mrf.mxu0
    %6727 = vdwg.mxu0
    %6728 = vmatpush.bf16.msra.mxu0 %v5490
    %6729 = vmatpush.bf16.msra.mxu0 %v5486
    %6730 = vmatpush.bf16.msra.mxu0 %v5482
    %6731 = vmatpush.bf16.msra.mxu0 %v5478
    %6732 = vmatpush.bf16.msra.mxu0 %v5474
    %6733 = vmatpush.bf16.msra.mxu0 %v5470
    %6734 = vmatpush.bf16.msra.mxu0 %v5466
    %6735 = vmatpush.bf16.msra.mxu0 %v5462
    %6736 = vmatmul.bf16.gmra.mxu0 %v3187
    %v6737 = vpop.f32.mrf.mxu0
    %v6738 = vadd.f32 %v6725, %v6737
    %v6739 = vpop.f32.mrf.mxu0
    %6740 = vdwg.mxu0
    %6741 = vmatpush.bf16.msra.mxu0 %v5522
    %6742 = vmatpush.bf16.msra.mxu0 %v5518
    %6743 = vmatpush.bf16.msra.mxu0 %v5514
    %6744 = vmatpush.bf16.msra.mxu0 %v5510
    %6745 = vmatpush.bf16.msra.mxu0 %v5506
    %6746 = vmatpush.bf16.msra.mxu0 %v5502
    %6747 = vmatpush.bf16.msra.mxu0 %v5498
    %6748 = vmatpush.bf16.msra.mxu0 %v5494
    %6749 = vmatmul.bf16.gmra.mxu0 %v3188
    %v6750 = vpop.f32.mrf.mxu0
    %v6751 = vadd.f32 %v6738, %v6750
    %v6752 = vpop.f32.mrf.mxu0
    %6753 = vdwg.mxu0
    %6754 = vmatpush.bf16.msra.mxu0 %v5554
    %6755 = vmatpush.bf16.msra.mxu0 %v5550
    %6756 = vmatpush.bf16.msra.mxu0 %v5546
    %6757 = vmatpush.bf16.msra.mxu0 %v5542
    %6758 = vmatpush.bf16.msra.mxu0 %v5538
    %6759 = vmatpush.bf16.msra.mxu0 %v5534
    %6760 = vmatpush.bf16.msra.mxu0 %v5530
    %6761 = vmatpush.bf16.msra.mxu0 %v5526
    %6762 = vmatmul.bf16.gmra.mxu0 %v3189
    %v6763 = vpop.f32.mrf.mxu0
    %v6764 = vadd.f32 %v6751, %v6763
    %v6765 = vpop.f32.mrf.mxu0
    %6766 = vdwg.mxu0
    %6767 = vmatpush.bf16.msra.mxu0 %v5586
    %6768 = vmatpush.bf16.msra.mxu0 %v5582
    %6769 = vmatpush.bf16.msra.mxu0 %v5578
    %6770 = vmatpush.bf16.msra.mxu0 %v5574
    %6771 = vmatpush.bf16.msra.mxu0 %v5570
    %6772 = vmatpush.bf16.msra.mxu0 %v5566
    %6773 = vmatpush.bf16.msra.mxu0 %v5562
    %6774 = vmatpush.bf16.msra.mxu0 %v5558
    %6775 = vmatmul.bf16.gmra.mxu0 %v3190
    %v6776 = vpop.f32.mrf.mxu0
    %v6777 = vadd.f32 %v6764, %v6776
    %v6778 = vpop.f32.mrf.mxu0
    %6779 = vdwg.mxu0
    %6780 = vmatpush.bf16.msra.mxu0 %v5618
    %6781 = vmatpush.bf16.msra.mxu0 %v5614
    %6782 = vmatpush.bf16.msra.mxu0 %v5610
    %6783 = vmatpush.bf16.msra.mxu0 %v5606
    %6784 = vmatpush.bf16.msra.mxu0 %v5602
    %6785 = vmatpush.bf16.msra.mxu0 %v5598
    %6786 = vmatpush.bf16.msra.mxu0 %v5594
    %6787 = vmatpush.bf16.msra.mxu0 %v5590
    %6788 = vmatmul.bf16.gmra.mxu0 %v3191
    %v6789 = vpop.f32.mrf.mxu0
    %v6790 = vadd.f32 %v6777, %v6789
    %v6791 = vpop.f32.mrf.mxu0
    %6792 = vdwg.mxu0
    %6793 = vmatpush.bf16.msra.mxu0 %v5650
    %6794 = vmatpush.bf16.msra.mxu0 %v5646
    %6795 = vmatpush.bf16.msra.mxu0 %v5642
    %6796 = vmatpush.bf16.msra.mxu0 %v5638
    %6797 = vmatpush.bf16.msra.mxu0 %v5634
    %6798 = vmatpush.bf16.msra.mxu0 %v5630
    %6799 = vmatpush.bf16.msra.mxu0 %v5626
    %6800 = vmatpush.bf16.msra.mxu0 %v5622
    %6801 = vmatmul.bf16.gmra.mxu0 %v3192
    %v6802 = vpop.f32.mrf.mxu0
    %v6803 = vadd.f32 %v6790, %v6802
    %v6804 = vpop.f32.mrf.mxu0
    %6805 = vdwg.mxu0
    %6806 = vmatpush.bf16.msra.mxu0 %v5682
    %6807 = vmatpush.bf16.msra.mxu0 %v5678
    %6808 = vmatpush.bf16.msra.mxu0 %v5674
    %6809 = vmatpush.bf16.msra.mxu0 %v5670
    %6810 = vmatpush.bf16.msra.mxu0 %v5666
    %6811 = vmatpush.bf16.msra.mxu0 %v5662
    %6812 = vmatpush.bf16.msra.mxu0 %v5658
    %6813 = vmatpush.bf16.msra.mxu0 %v5654
    %6814 = vmatmul.bf16.gmra.mxu0 %v3193
    %v6815 = vpop.f32.mrf.mxu0
    %v6816 = vadd.f32 %v6803, %v6815
    %v6817 = vpop.f32.mrf.mxu0
    %6818 = vdwg.mxu0
    %6819 = vmatpush.bf16.msra.mxu0 0
    %6820 = vmatpush.bf16.msra.mxu0 0
    %6821 = vmatpush.bf16.msra.mxu0 0
    %6822 = vmatpush.bf16.msra.mxu0 %v5702
    %6823 = vmatpush.bf16.msra.mxu0 %v5698
    %6824 = vmatpush.bf16.msra.mxu0 %v5694
    %6825 = vmatpush.bf16.msra.mxu0 %v5690
    %6826 = vmatpush.bf16.msra.mxu0 %v5686
    %6827 = vmatmul.bf16.gmra.mxu0 %v6206
    %v6828 = vpop.f32.mrf.mxu0
    %v6829 = vadd.f32 %v6816, %v6828
    %v6830 = vpop.f32.mrf.mxu0
    %6831 = vdwg.mxu0
    %6832 = vmatpush.bf16.msra.mxu0 %v5235
    %6833 = vmatpush.bf16.msra.mxu0 %v5231
    %6834 = vmatpush.bf16.msra.mxu0 %v5227
    %6835 = vmatpush.bf16.msra.mxu0 %v5223
    %6836 = vmatpush.bf16.msra.mxu0 %v5219
    %6837 = vmatpush.bf16.msra.mxu0 %v5215
    %6838 = vmatpush.bf16.msra.mxu0 %v5211
    %6839 = vmatpush.bf16.msra.mxu0 %v5207
    %6840 = vmatmul.bf16.gmra.mxu0 %v3179
    %v6841 = vpop.f32.mrf.mxu0
    %v6842 = vadd.f32 %v3699, %v6841
    %v6843 = vpop.f32.mrf.mxu0
    %6844 = vdwg.mxu0
    %6845 = vmatpush.bf16.msra.mxu0 %v5267
    %6846 = vmatpush.bf16.msra.mxu0 %v5263
    %6847 = vmatpush.bf16.msra.mxu0 %v5259
    %6848 = vmatpush.bf16.msra.mxu0 %v5255
    %6849 = vmatpush.bf16.msra.mxu0 %v5251
    %6850 = vmatpush.bf16.msra.mxu0 %v5247
    %6851 = vmatpush.bf16.msra.mxu0 %v5243
    %6852 = vmatpush.bf16.msra.mxu0 %v5239
    %6853 = vmatmul.bf16.gmra.mxu0 %v3180
    %v6854 = vpop.f32.mrf.mxu0
    %v6855 = vadd.f32 %v6842, %v6854
    %v6856 = vpop.f32.mrf.mxu0
    %6857 = vdwg.mxu0
    %6858 = vmatpush.bf16.msra.mxu0 %v5299
    %6859 = vmatpush.bf16.msra.mxu0 %v5295
    %6860 = vmatpush.bf16.msra.mxu0 %v5291
    %6861 = vmatpush.bf16.msra.mxu0 %v5287
    %6862 = vmatpush.bf16.msra.mxu0 %v5283
    %6863 = vmatpush.bf16.msra.mxu0 %v5279
    %6864 = vmatpush.bf16.msra.mxu0 %v5275
    %6865 = vmatpush.bf16.msra.mxu0 %v5271
    %6866 = vmatmul.bf16.gmra.mxu0 %v3181
    %v6867 = vpop.f32.mrf.mxu0
    %v6868 = vadd.f32 %v6855, %v6867
    %v6869 = vpop.f32.mrf.mxu0
    %6870 = vdwg.mxu0
    %6871 = vmatpush.bf16.msra.mxu0 %v5331
    %6872 = vmatpush.bf16.msra.mxu0 %v5327
    %6873 = vmatpush.bf16.msra.mxu0 %v5323
    %6874 = vmatpush.bf16.msra.mxu0 %v5319
    %6875 = vmatpush.bf16.msra.mxu0 %v5315
    %6876 = vmatpush.bf16.msra.mxu0 %v5311
    %6877 = vmatpush.bf16.msra.mxu0 %v5307
    %6878 = vmatpush.bf16.msra.mxu0 %v5303
    %6879 = vmatmul.bf16.gmra.mxu0 %v3182
    %v6880 = vpop.f32.mrf.mxu0
    %v6881 = vadd.f32 %v6868, %v6880
    %v6882 = vpop.f32.mrf.mxu0
    %6883 = vdwg.mxu0
    %6884 = vmatpush.bf16.msra.mxu0 %v5363
    %6885 = vmatpush.bf16.msra.mxu0 %v5359
    %6886 = vmatpush.bf16.msra.mxu0 %v5355
    %6887 = vmatpush.bf16.msra.mxu0 %v5351
    %6888 = vmatpush.bf16.msra.mxu0 %v5347
    %6889 = vmatpush.bf16.msra.mxu0 %v5343
    %6890 = vmatpush.bf16.msra.mxu0 %v5339
    %6891 = vmatpush.bf16.msra.mxu0 %v5335
    %6892 = vmatmul.bf16.gmra.mxu0 %v3183
    %v6893 = vpop.f32.mrf.mxu0
    %v6894 = vadd.f32 %v6881, %v6893
    %v6895 = vpop.f32.mrf.mxu0
    %6896 = vdwg.mxu0
    %6897 = vmatpush.bf16.msra.mxu0 %v5395
    %6898 = vmatpush.bf16.msra.mxu0 %v5391
    %6899 = vmatpush.bf16.msra.mxu0 %v5387
    %6900 = vmatpush.bf16.msra.mxu0 %v5383
    %6901 = vmatpush.bf16.msra.mxu0 %v5379
    %6902 = vmatpush.bf16.msra.mxu0 %v5375
    %6903 = vmatpush.bf16.msra.mxu0 %v5371
    %6904 = vmatpush.bf16.msra.mxu0 %v5367
    %6905 = vmatmul.bf16.gmra.mxu0 %v3184
    %v6906 = vpop.f32.mrf.mxu0
    %v6907 = vadd.f32 %v6894, %v6906
    %v6908 = vpop.f32.mrf.mxu0
    %6909 = vdwg.mxu0
    %6910 = vmatpush.bf16.msra.mxu0 %v5427
    %6911 = vmatpush.bf16.msra.mxu0 %v5423
    %6912 = vmatpush.bf16.msra.mxu0 %v5419
    %6913 = vmatpush.bf16.msra.mxu0 %v5415
    %6914 = vmatpush.bf16.msra.mxu0 %v5411
    %6915 = vmatpush.bf16.msra.mxu0 %v5407
    %6916 = vmatpush.bf16.msra.mxu0 %v5403
    %6917 = vmatpush.bf16.msra.mxu0 %v5399
    %6918 = vmatmul.bf16.gmra.mxu0 %v3185
    %v6919 = vpop.f32.mrf.mxu0
    %v6920 = vadd.f32 %v6907, %v6919
    %v6921 = vpop.f32.mrf.mxu0
    %6922 = vdwg.mxu0
    %6923 = vmatpush.bf16.msra.mxu0 %v5459
    %6924 = vmatpush.bf16.msra.mxu0 %v5455
    %6925 = vmatpush.bf16.msra.mxu0 %v5451
    %6926 = vmatpush.bf16.msra.mxu0 %v5447
    %6927 = vmatpush.bf16.msra.mxu0 %v5443
    %6928 = vmatpush.bf16.msra.mxu0 %v5439
    %6929 = vmatpush.bf16.msra.mxu0 %v5435
    %6930 = vmatpush.bf16.msra.mxu0 %v5431
    %6931 = vmatmul.bf16.gmra.mxu0 %v3186
    %v6932 = vpop.f32.mrf.mxu0
    %v6933 = vadd.f32 %v6920, %v6932
    %v6934 = vpop.f32.mrf.mxu0
    %6935 = vdwg.mxu0
    %6936 = vmatpush.bf16.msra.mxu0 %v5491
    %6937 = vmatpush.bf16.msra.mxu0 %v5487
    %6938 = vmatpush.bf16.msra.mxu0 %v5483
    %6939 = vmatpush.bf16.msra.mxu0 %v5479
    %6940 = vmatpush.bf16.msra.mxu0 %v5475
    %6941 = vmatpush.bf16.msra.mxu0 %v5471
    %6942 = vmatpush.bf16.msra.mxu0 %v5467
    %6943 = vmatpush.bf16.msra.mxu0 %v5463
    %6944 = vmatmul.bf16.gmra.mxu0 %v3187
    %v6945 = vpop.f32.mrf.mxu0
    %v6946 = vadd.f32 %v6933, %v6945
    %v6947 = vpop.f32.mrf.mxu0
    %6948 = vdwg.mxu0
    %6949 = vmatpush.bf16.msra.mxu0 %v5523
    %6950 = vmatpush.bf16.msra.mxu0 %v5519
    %6951 = vmatpush.bf16.msra.mxu0 %v5515
    %6952 = vmatpush.bf16.msra.mxu0 %v5511
    %6953 = vmatpush.bf16.msra.mxu0 %v5507
    %6954 = vmatpush.bf16.msra.mxu0 %v5503
    %6955 = vmatpush.bf16.msra.mxu0 %v5499
    %6956 = vmatpush.bf16.msra.mxu0 %v5495
    %6957 = vmatmul.bf16.gmra.mxu0 %v3188
    %v6958 = vpop.f32.mrf.mxu0
    %v6959 = vadd.f32 %v6946, %v6958
    %v6960 = vpop.f32.mrf.mxu0
    %6961 = vdwg.mxu0
    %6962 = vmatpush.bf16.msra.mxu0 %v5555
    %6963 = vmatpush.bf16.msra.mxu0 %v5551
    %6964 = vmatpush.bf16.msra.mxu0 %v5547
    %6965 = vmatpush.bf16.msra.mxu0 %v5543
    %6966 = vmatpush.bf16.msra.mxu0 %v5539
    %6967 = vmatpush.bf16.msra.mxu0 %v5535
    %6968 = vmatpush.bf16.msra.mxu0 %v5531
    %6969 = vmatpush.bf16.msra.mxu0 %v5527
    %6970 = vmatmul.bf16.gmra.mxu0 %v3189
    %v6971 = vpop.f32.mrf.mxu0
    %v6972 = vadd.f32 %v6959, %v6971
    %v6973 = vpop.f32.mrf.mxu0
    %6974 = vdwg.mxu0
    %6975 = vmatpush.bf16.msra.mxu0 %v5587
    %6976 = vmatpush.bf16.msra.mxu0 %v5583
    %6977 = vmatpush.bf16.msra.mxu0 %v5579
    %6978 = vmatpush.bf16.msra.mxu0 %v5575
    %6979 = vmatpush.bf16.msra.mxu0 %v5571
    %6980 = vmatpush.bf16.msra.mxu0 %v5567
    %6981 = vmatpush.bf16.msra.mxu0 %v5563
    %6982 = vmatpush.bf16.msra.mxu0 %v5559
    %6983 = vmatmul.bf16.gmra.mxu0 %v3190
    %v6984 = vpop.f32.mrf.mxu0
    %v6985 = vadd.f32 %v6972, %v6984
    %v6986 = vpop.f32.mrf.mxu0
    %6987 = vdwg.mxu0
    %6988 = vmatpush.bf16.msra.mxu0 %v5619
    %6989 = vmatpush.bf16.msra.mxu0 %v5615
    %6990 = vmatpush.bf16.msra.mxu0 %v5611
    %6991 = vmatpush.bf16.msra.mxu0 %v5607
    %6992 = vmatpush.bf16.msra.mxu0 %v5603
    %6993 = vmatpush.bf16.msra.mxu0 %v5599
    %6994 = vmatpush.bf16.msra.mxu0 %v5595
    %6995 = vmatpush.bf16.msra.mxu0 %v5591
    %6996 = vmatmul.bf16.gmra.mxu0 %v3191
    %v6997 = vpop.f32.mrf.mxu0
    %v6998 = vadd.f32 %v6985, %v6997
    %v6999 = vpop.f32.mrf.mxu0
    %7000 = vdwg.mxu0
    %7001 = vmatpush.bf16.msra.mxu0 %v5651
    %7002 = vmatpush.bf16.msra.mxu0 %v5647
    %7003 = vmatpush.bf16.msra.mxu0 %v5643
    %7004 = vmatpush.bf16.msra.mxu0 %v5639
    %7005 = vmatpush.bf16.msra.mxu0 %v5635
    %7006 = vmatpush.bf16.msra.mxu0 %v5631
    %7007 = vmatpush.bf16.msra.mxu0 %v5627
    %7008 = vmatpush.bf16.msra.mxu0 %v5623
    %7009 = vmatmul.bf16.gmra.mxu0 %v3192
    %v7010 = vpop.f32.mrf.mxu0
    %v7011 = vadd.f32 %v6998, %v7010
    %v7012 = vpop.f32.mrf.mxu0
    %7013 = vdwg.mxu0
    %7014 = vmatpush.bf16.msra.mxu0 %v5683
    %7015 = vmatpush.bf16.msra.mxu0 %v5679
    %7016 = vmatpush.bf16.msra.mxu0 %v5675
    %7017 = vmatpush.bf16.msra.mxu0 %v5671
    %7018 = vmatpush.bf16.msra.mxu0 %v5667
    %7019 = vmatpush.bf16.msra.mxu0 %v5663
    %7020 = vmatpush.bf16.msra.mxu0 %v5659
    %7021 = vmatpush.bf16.msra.mxu0 %v5655
    %7022 = vmatmul.bf16.gmra.mxu0 %v3193
    %v7023 = vpop.f32.mrf.mxu0
    %v7024 = vadd.f32 %v7011, %v7023
    %v7025 = vpop.f32.mrf.mxu0
    %7026 = vdwg.mxu0
    %7027 = vmatpush.bf16.msra.mxu0 0
    %7028 = vmatpush.bf16.msra.mxu0 0
    %7029 = vmatpush.bf16.msra.mxu0 0
    %7030 = vmatpush.bf16.msra.mxu0 %v5703
    %7031 = vmatpush.bf16.msra.mxu0 %v5699
    %7032 = vmatpush.bf16.msra.mxu0 %v5695
    %7033 = vmatpush.bf16.msra.mxu0 %v5691
    %7034 = vmatpush.bf16.msra.mxu0 %v5687
    %7035 = vmatmul.bf16.gmra.mxu0 %v6206
    %v7036 = vpop.f32.mrf.mxu0
    %v7037 = vadd.f32 %v7024, %v7036
    %v7038 = vpop.f32.mrf.mxu0
    %7039 = vdwg.mxu0
    %v7040 = vsel %vm2248, %v6413, 0.0
    %v7041 = vsel %vm2248, %v6621, 0.0
    %v7042 = vadd.f32 %v7040, %v7041
    %v7043 = vsel %vm2248, %v6829, 0.0
    %v7044 = vadd.f32 %v7042, %v7043
    %vm7045 = vcmask 945152
    %v7046 = vsel %vm7045, %v7037, 0.0
    %v7047 = vadd.f32 %v7044, %v7046
    %7048 = vadd.xlane.f32.xlu0 %v7047
    %v7049 = vpop.xlane.xlu0 %7048
    %v7050 = vrcp.pop 500.0
    %v7051 = vmul.f32 500.0, %v7050
    %v7052 = vsub.f32 1.0, %v7051
    %v7053 = vmul.f32 %v7050, %v7052
    %v7054 = vadd.f32 %v7050, %v7053
    %vm7055 = vweird.f32 %v7050
    %v7056 = vsel %vm7055, %v7050, %v7054
    %v7057 = vmul.f32 %v7049, %v7056
    %v7058 = vmul.f32 %v6413, %v6413
    %v7059 = vmul.f32 %v6621, %v6621
    %v7060 = vmul.f32 %v6829, %v6829
    %v7061 = vmul.f32 %v7037, %v7037
    %v7062 = vsel %vm2248, %v7058, 0.0
    %v7063 = vsel %vm2248, %v7059, 0.0
    %v7064 = vadd.f32 %v7062, %v7063
    %v7065 = vsel %vm2248, %v7060, 0.0
    %v7066 = vadd.f32 %v7064, %v7065
    %v7067 = vsel %vm7045, %v7061, 0.0
    %v7068 = vadd.f32 %v7066, %v7067
    %7069 = vadd.xlane.f32.xlu0 %v7068
    %v7070 = vpop.xlane.xlu0 %7069
    %v7071 = vmul.f32 %v7070, %v7056
    %v7072 = vmul.f32 %v7057, %v7057
    %v7073 = vsub.f32 %v7071, %v7072
    %v7074 = vmax.f32 %v7073, 0.0
    %v7075 = vsub.f32 %v6413, %v7057
    %v7076 = vsub.f32 %v6621, %v7057
    %v7077 = vsub.f32 %v6829, %v7057
    %v7078 = vsub.f32 %v7037, %v7057
    %v7079 = vadd.f32 %v7074, 1e-05
    %v7080 = vrsqrt.pop %v7079
    %v7081 = vmul.f32 %v7080, %v7079
    %v7082 = vmul.f32 %v7081, %v7080
    %v7083 = vmul.f32 0.5, %v7082
    %v7084 = vsub.f32 1.5, %v7083
    %v7085 = vmul.f32 %v7080, %v7084
    %vm7086 = vweird.f32 %v7079
    %vm7087 = vweird.f32 %v7080
    %vm7088 = vmor %vm7086, %vm7087
    %v7089 = vsel %vm7088, %v7080, %v7085
    %v7090 = vmul.f32 %v7075, %v7089
    %v7091 = vmul.f32 %v7076, %v7089
    %v7092 = vmul.f32 %v7077, %v7089
    %v7093 = vmul.f32 %v7078, %v7089
    %v7095 = vperm.slane %v319, 0
    %v7096 = vperm.slane %v319, 1
    %v7097 = vperm.slane %v319, 2
    %v7098 = vperm.slane %v319, 3
    %v7103 = vmul.f32 %v7090, %v7095
    %v7104 = vmul.f32 %v7091, %v7096
    %v7105 = vmul.f32 %v7092, %v7097
    %v7106 = vmul.f32 %v7093, %v7098
    %v7108 = vperm.slane %v321, 0
    %v7109 = vperm.slane %v321, 1
    %v7110 = vperm.slane %v321, 2
    %v7111 = vperm.slane %v321, 3
    %v7116 = vadd.f32 %v7103, %v7108
    %v7117 = vadd.f32 %v7104, %v7109
    %v7118 = vadd.f32 %v7105, %v7110
    %v7119 = vadd.f32 %v7106, %v7111
    %v7120 = vmax.f32 %v7116, 0.0
    %v7121 = vmax.f32 %v7117, 0.0
    %v7122 = vmax.f32 %v7118, 0.0
    %v7123 = vmax.f32 %v7119, 0.0
    %s7124 = smul.u32 4, 63
    %s7125 = smul.u32 %s7124, 3
    %s7126 = sshll.u32 %s7125, 4
    %7127 = dma.done %s74, %s7126
    %v7128 = vpack.c.bf16 %v7120, %v7120
    %v7129 = vpack.c.bf16 %v7121, %v7121
    %v7130 = vpack.c.bf16 %v7122, %v7122
    %v7131 = vpack.c.bf16 %v7123, %v7123
    %v7132 = vld [vmem:[#allocation3] sm:$0xff]
    %v7133 = vld [vmem:[#allocation3 + $0x8] sm:$0xf]
    %v7134 = vld [vmem:[#allocation3 + $0xc] sm:$0xff]
    %v7135 = vld [vmem:[#allocation3 + $0x14] sm:$0xf]
    %v7136 = vld [vmem:[#allocation3 + $0x18] sm:$0xff]
    %v7137 = vld [vmem:[#allocation3 + $0x20] sm:$0xf]
    %v7138 = vld [vmem:[#allocation3 + $0x24] sm:$0xff]
    %v7139 = vld [vmem:[#allocation3 + $0x2c] sm:$0xf]
    %v7140 = vld [vmem:[#allocation3 + $0x30] sm:$0xff]
    %v7141 = vld [vmem:[#allocation3 + $0x38] sm:$0xf]
    %v7142 = vld [vmem:[#allocation3 + $0x3c] sm:$0xff]
    %v7143 = vld [vmem:[#allocation3 + $0x44] sm:$0xf]
    %v7144 = vld [vmem:[#allocation3 + $0x48] sm:$0xff]
    %v7145 = vld [vmem:[#allocation3 + $0x50] sm:$0xf]
    %v7146 = vld [vmem:[#allocation3 + $0x54] sm:$0xff]
    %v7147 = vld [vmem:[#allocation3 + $0x5c] sm:$0xf]
    %v7148 = vld [vmem:[#allocation3 + $0x60] sm:$0xff]
    %v7149 = vld [vmem:[#allocation3 + $0x68] sm:$0xf]
    %v7150 = vld [vmem:[#allocation3 + $0x6c] sm:$0xff]
    %v7151 = vld [vmem:[#allocation3 + $0x74] sm:$0xf]
    %v7152 = vld [vmem:[#allocation3 + $0x78] sm:$0xff]
    %v7153 = vld [vmem:[#allocation3 + $0x80] sm:$0xf]
    %v7154 = vld [vmem:[#allocation3 + $0x84] sm:$0xff]
    %v7155 = vld [vmem:[#allocation3 + $0x8c] sm:$0xf]
    %v7156 = vld [vmem:[#allocation3 + $0x90] sm:$0xff]
    %v7157 = vld [vmem:[#allocation3 + $0x98] sm:$0xf]
    %v7158 = vld [vmem:[#allocation3 + $0x9c] sm:$0xff]
    %v7159 = vld [vmem:[#allocation3 + $0xa4] sm:$0xf]
    %v7160 = vld [vmem:[#allocation3 + $0xa8] sm:$0xff]
    %v7161 = vld [vmem:[#allocation3 + $0xb0] sm:$0xf]
    %v7162 = vld [vmem:[#allocation3 + $0xb4] sm:$0xff]
    %v7163 = vld [vmem:[#allocation3 + $0xbc] sm:$0xf]
    %v7164 = vld [vmem:[#allocation3 + $0xc0] sm:$0xff]
    %v7165 = vld [vmem:[#allocation3 + $0xc8] sm:$0xf]
    %v7166 = vld [vmem:[#allocation3 + $0xcc] sm:$0xff]
    %v7167 = vld [vmem:[#allocation3 + $0xd4] sm:$0xf]
    %v7168 = vld [vmem:[#allocation3 + $0xd8] sm:$0xff]
    %v7169 = vld [vmem:[#allocation3 + $0xe0] sm:$0xf]
    %v7170 = vld [vmem:[#allocation3 + $0xe4] sm:$0xff]
    %v7171 = vld [vmem:[#allocation3 + $0xec] sm:$0xf]
    %v7172 = vld [vmem:[#allocation3 + $0xf0] sm:$0xff]
    %v7173 = vld [vmem:[#allocation3 + $0xf8] sm:$0xf]
    %v7174 = vld [vmem:[#allocation3 + $0xfc] sm:$0xff]
    %v7175 = vld [vmem:[#allocation3 + $0x104] sm:$0xf]
    %v7176 = vld [vmem:[#allocation3 + $0x108] sm:$0xff]
    %v7177 = vld [vmem:[#allocation3 + $0x110] sm:$0xf]
    %v7178 = vld [vmem:[#allocation3 + $0x114] sm:$0xff]
    %v7179 = vld [vmem:[#allocation3 + $0x11c] sm:$0xf]
    %v7180 = vld [vmem:[#allocation3 + $0x120] sm:$0xff]
    %v7181 = vld [vmem:[#allocation3 + $0x128] sm:$0xf]
    %v7182 = vld [vmem:[#allocation3 + $0x12c] sm:$0xff]
    %v7183 = vld [vmem:[#allocation3 + $0x134] sm:$0xf]
    %v7184 = vld [vmem:[#allocation3 + $0x138] sm:$0xff]
    %v7185 = vld [vmem:[#allocation3 + $0x140] sm:$0xf]
    %v7186 = vld [vmem:[#allocation3 + $0x144] sm:$0xff]
    %v7187 = vld [vmem:[#allocation3 + $0x14c] sm:$0xf]
    %v7188 = vld [vmem:[#allocation3 + $0x150] sm:$0xff]
    %v7189 = vld [vmem:[#allocation3 + $0x158] sm:$0xf]
    %v7190 = vld [vmem:[#allocation3 + $0x15c] sm:$0xff]
    %v7191 = vld [vmem:[#allocation3 + $0x164] sm:$0xf]
    %v7192 = vld [vmem:[#allocation3 + $0x168] sm:$0xff]
    %v7193 = vld [vmem:[#allocation3 + $0x170] sm:$0xf]
    %v7194 = vld [vmem:[#allocation3 + $0x174] sm:$0xff]
    %v7195 = vld [vmem:[#allocation3 + $0x17c] sm:$0xf]
    %v7196 = vld [vmem:[#allocation3 + $0x180] sm:$0xff]
    %v7197 = vld [vmem:[#allocation3 + $0x188] sm:$0xf]
    %v7198 = vld [vmem:[#allocation3 + $0x18c] sm:$0xff]
    %v7199 = vld [vmem:[#allocation3 + $0x194] sm:$0xf]
    %v7200 = vld [vmem:[#allocation3 + $0x198] sm:$0xff]
    %v7201 = vld [vmem:[#allocation3 + $0x1a0] sm:$0xf]
    %v7202 = vld [vmem:[#allocation3 + $0x1a4] sm:$0xff]
    %v7203 = vld [vmem:[#allocation3 + $0x1ac] sm:$0xf]
    %v7204 = vld [vmem:[#allocation3 + $0x1b0] sm:$0xff]
    %v7205 = vld [vmem:[#allocation3 + $0x1b8] sm:$0xf]
    %v7206 = vld [vmem:[#allocation3 + $0x1bc] sm:$0xff]
    %v7207 = vld [vmem:[#allocation3 + $0x1c4] sm:$0xf]
    %v7208 = vld [vmem:[#allocation3 + $0x1c8] sm:$0xff]
    %v7209 = vld [vmem:[#allocation3 + $0x1d0] sm:$0xf]
    %v7210 = vld [vmem:[#allocation3 + $0x1d4] sm:$0xff]
    %v7211 = vld [vmem:[#allocation3 + $0x1dc] sm:$0xf]
    %v7212 = vld [vmem:[#allocation3 + $0x1e0] sm:$0xff]
    %v7213 = vld [vmem:[#allocation3 + $0x1e8] sm:$0xf]
    %v7214 = vld [vmem:[#allocation3 + $0x1ec] sm:$0xff]
    %v7215 = vld [vmem:[#allocation3 + $0x1f4] sm:$0xf]
    %v7216 = vld [vmem:[#allocation3 + $0x1f8] sm:$0xff]
    %v7217 = vld [vmem:[#allocation3 + $0x200] sm:$0xf]
    %v7218 = vld [vmem:[#allocation3 + $0x204] sm:$0xff]
    %v7219 = vld [vmem:[#allocation3 + $0x20c] sm:$0xf]
    %v7220 = vld [vmem:[#allocation3 + $0x210] sm:$0xff]
    %v7221 = vld [vmem:[#allocation3 + $0x218] sm:$0xf]
    %v7222 = vld [vmem:[#allocation3 + $0x21c] sm:$0xff]
    %v7223 = vld [vmem:[#allocation3 + $0x224] sm:$0xf]
    %v7224 = vld [vmem:[#allocation3 + $0x228] sm:$0xff]
    %v7225 = vld [vmem:[#allocation3 + $0x230] sm:$0xf]
    %v7226 = vld [vmem:[#allocation3 + $0x234] sm:$0xff]
    %v7227 = vld [vmem:[#allocation3 + $0x23c] sm:$0xf]
    %v7228 = vld [vmem:[#allocation3 + $0x240] sm:$0xff]
    %v7229 = vld [vmem:[#allocation3 + $0x248] sm:$0xf]
    %v7230 = vld [vmem:[#allocation3 + $0x24c] sm:$0xff]
    %v7231 = vld [vmem:[#allocation3 + $0x254] sm:$0xf]
    %v7232 = vld [vmem:[#allocation3 + $0x258] sm:$0xff]
    %v7233 = vld [vmem:[#allocation3 + $0x260] sm:$0xf]
    %v7234 = vld [vmem:[#allocation3 + $0x264] sm:$0xff]
    %v7235 = vld [vmem:[#allocation3 + $0x26c] sm:$0xf]
    %v7236 = vld [vmem:[#allocation3 + $0x270] sm:$0xff]
    %v7237 = vld [vmem:[#allocation3 + $0x278] sm:$0xf]
    %v7238 = vld [vmem:[#allocation3 + $0x27c] sm:$0xff]
    %v7239 = vld [vmem:[#allocation3 + $0x284] sm:$0xf]
    %v7240 = vld [vmem:[#allocation3 + $0x288] sm:$0xff]
    %v7241 = vld [vmem:[#allocation3 + $0x290] sm:$0xf]
    %v7242 = vld [vmem:[#allocation3 + $0x294] sm:$0xff]
    %v7243 = vld [vmem:[#allocation3 + $0x29c] sm:$0xf]
    %v7244 = vld [vmem:[#allocation3 + $0x2a0] sm:$0xff]
    %v7245 = vld [vmem:[#allocation3 + $0x2a8] sm:$0xf]
    %v7246 = vld [vmem:[#allocation3 + $0x2ac] sm:$0xff]
    %v7247 = vld [vmem:[#allocation3 + $0x2b4] sm:$0xf]
    %v7248 = vld [vmem:[#allocation3 + $0x2b8] sm:$0xff]
    %v7249 = vld [vmem:[#allocation3 + $0x2c0] sm:$0xf]
    %v7250 = vld [vmem:[#allocation3 + $0x2c4] sm:$0xff]
    %v7251 = vld [vmem:[#allocation3 + $0x2cc] sm:$0xf]
    %v7252 = vld [vmem:[#allocation3 + $0x2d0] sm:$0xff]
    %v7253 = vld [vmem:[#allocation3 + $0x2d8] sm:$0xf]
    %v7254 = vld [vmem:[#allocation3 + $0x2dc] sm:$0xff]
    %v7255 = vld [vmem:[#allocation3 + $0x2e4] sm:$0xf]
    %v7256 = vld [vmem:[#allocation3 + $0x2e8] sm:$0x33]
    %v7257 = vld [vmem:[#allocation3 + $0x2f0] sm:$0x3]
    %v7259 = vperm.slane %v323, 0
    %v7260 = vperm.slane %v323, 1
    %v7261 = vperm.slane %v323, 2
    %v7391 = vunpack.c.l.b16 %v7132
    %v7392 = vunpack.c.h.b16 %v7132
    %v7393 = vunpack.c.l.b16 %v7133
    %v7394 = vunpack.c.l.b16 %v7134
    %v7395 = vunpack.c.h.b16 %v7134
    %v7396 = vunpack.c.l.b16 %v7135
    %v7397 = vunpack.c.l.b16 %v7136
    %v7398 = vunpack.c.h.b16 %v7136
    %v7399 = vunpack.c.l.b16 %v7137
    %v7400 = vunpack.c.l.b16 %v7138
    %v7401 = vunpack.c.h.b16 %v7138
    %v7402 = vunpack.c.l.b16 %v7139
    %v7403 = vunpack.c.l.b16 %v7140
    %v7404 = vunpack.c.h.b16 %v7140
    %v7405 = vunpack.c.l.b16 %v7141
    %v7406 = vunpack.c.l.b16 %v7142
    %v7407 = vunpack.c.h.b16 %v7142
    %v7408 = vunpack.c.l.b16 %v7143
    %v7409 = vunpack.c.l.b16 %v7144
    %v7410 = vunpack.c.h.b16 %v7144
    %v7411 = vunpack.c.l.b16 %v7145
    %v7412 = vunpack.c.l.b16 %v7146
    %v7413 = vunpack.c.h.b16 %v7146
    %v7414 = vunpack.c.l.b16 %v7147
    %v7415 = vunpack.c.l.b16 %v7148
    %v7416 = vunpack.c.h.b16 %v7148
    %v7417 = vunpack.c.l.b16 %v7149
    %v7418 = vunpack.c.l.b16 %v7150
    %v7419 = vunpack.c.h.b16 %v7150
    %v7420 = vunpack.c.l.b16 %v7151
    %v7421 = vunpack.c.l.b16 %v7152
    %v7422 = vunpack.c.h.b16 %v7152
    %v7423 = vunpack.c.l.b16 %v7153
    %v7424 = vunpack.c.l.b16 %v7154
    %v7425 = vunpack.c.h.b16 %v7154
    %v7426 = vunpack.c.l.b16 %v7155
    %v7427 = vunpack.c.l.b16 %v7156
    %v7428 = vunpack.c.h.b16 %v7156
    %v7429 = vunpack.c.l.b16 %v7157
    %v7430 = vunpack.c.l.b16 %v7158
    %v7431 = vunpack.c.h.b16 %v7158
    %v7432 = vunpack.c.l.b16 %v7159
    %v7433 = vunpack.c.l.b16 %v7160
    %v7434 = vunpack.c.h.b16 %v7160
    %v7435 = vunpack.c.l.b16 %v7161
    %v7436 = vunpack.c.l.b16 %v7162
    %v7437 = vunpack.c.h.b16 %v7162
    %v7438 = vunpack.c.l.b16 %v7163
    %v7439 = vunpack.c.l.b16 %v7164
    %v7440 = vunpack.c.h.b16 %v7164
    %v7441 = vunpack.c.l.b16 %v7165
    %v7442 = vunpack.c.l.b16 %v7166
    %v7443 = vunpack.c.h.b16 %v7166
    %v7444 = vunpack.c.l.b16 %v7167
    %v7445 = vunpack.c.l.b16 %v7168
    %v7446 = vunpack.c.h.b16 %v7168
    %v7447 = vunpack.c.l.b16 %v7169
    %v7448 = vunpack.c.l.b16 %v7170
    %v7449 = vunpack.c.h.b16 %v7170
    %v7450 = vunpack.c.l.b16 %v7171
    %v7451 = vunpack.c.l.b16 %v7172
    %v7452 = vunpack.c.h.b16 %v7172
    %v7453 = vunpack.c.l.b16 %v7173
    %v7454 = vunpack.c.l.b16 %v7174
    %v7455 = vunpack.c.h.b16 %v7174
    %v7456 = vunpack.c.l.b16 %v7175
    %v7457 = vunpack.c.l.b16 %v7176
    %v7458 = vunpack.c.h.b16 %v7176
    %v7459 = vunpack.c.l.b16 %v7177
    %v7460 = vunpack.c.l.b16 %v7178
    %v7461 = vunpack.c.h.b16 %v7178
    %v7462 = vunpack.c.l.b16 %v7179
    %v7463 = vunpack.c.l.b16 %v7180
    %v7464 = vunpack.c.h.b16 %v7180
    %v7465 = vunpack.c.l.b16 %v7181
    %v7466 = vunpack.c.l.b16 %v7182
    %v7467 = vunpack.c.h.b16 %v7182
    %v7468 = vunpack.c.l.b16 %v7183
    %v7469 = vunpack.c.l.b16 %v7184
    %v7470 = vunpack.c.h.b16 %v7184
    %v7471 = vunpack.c.l.b16 %v7185
    %v7472 = vunpack.c.l.b16 %v7186
    %v7473 = vunpack.c.h.b16 %v7186
    %v7474 = vunpack.c.l.b16 %v7187
    %v7475 = vunpack.c.l.b16 %v7188
    %v7476 = vunpack.c.h.b16 %v7188
    %v7477 = vunpack.c.l.b16 %v7189
    %v7478 = vunpack.c.l.b16 %v7190
    %v7479 = vunpack.c.h.b16 %v7190
    %v7480 = vunpack.c.l.b16 %v7191
    %v7481 = vunpack.c.l.b16 %v7192
    %v7482 = vunpack.c.h.b16 %v7192
    %v7483 = vunpack.c.l.b16 %v7193
    %v7484 = vunpack.c.l.b16 %v7194
    %v7485 = vunpack.c.h.b16 %v7194
    %v7486 = vunpack.c.l.b16 %v7195
    %v7487 = vunpack.c.l.b16 %v7196
    %v7488 = vunpack.c.h.b16 %v7196
    %v7489 = vunpack.c.l.b16 %v7197
    %v7490 = vunpack.c.l.b16 %v7198
    %v7491 = vunpack.c.h.b16 %v7198
    %v7492 = vunpack.c.l.b16 %v7199
    %v7493 = vunpack.c.l.b16 %v7200
    %v7494 = vunpack.c.h.b16 %v7200
    %v7495 = vunpack.c.l.b16 %v7201
    %v7496 = vunpack.c.l.b16 %v7202
    %v7497 = vunpack.c.h.b16 %v7202
    %v7498 = vunpack.c.l.b16 %v7203
    %v7499 = vunpack.c.l.b16 %v7204
    %v7500 = vunpack.c.h.b16 %v7204
    %v7501 = vunpack.c.l.b16 %v7205
    %v7502 = vunpack.c.l.b16 %v7206
    %v7503 = vunpack.c.h.b16 %v7206
    %v7504 = vunpack.c.l.b16 %v7207
    %v7505 = vunpack.c.l.b16 %v7208
    %v7506 = vunpack.c.h.b16 %v7208
    %v7507 = vunpack.c.l.b16 %v7209
    %v7508 = vunpack.c.l.b16 %v7210
    %v7509 = vunpack.c.h.b16 %v7210
    %v7510 = vunpack.c.l.b16 %v7211
    %v7511 = vunpack.c.l.b16 %v7212
    %v7512 = vunpack.c.h.b16 %v7212
    %v7513 = vunpack.c.l.b16 %v7213
    %v7514 = vunpack.c.l.b16 %v7214
    %v7515 = vunpack.c.h.b16 %v7214
    %v7516 = vunpack.c.l.b16 %v7215
    %v7517 = vunpack.c.l.b16 %v7216
    %v7518 = vunpack.c.h.b16 %v7216
    %v7519 = vunpack.c.l.b16 %v7217
    %v7520 = vunpack.c.l.b16 %v7218
    %v7521 = vunpack.c.h.b16 %v7218
    %v7522 = vunpack.c.l.b16 %v7219
    %v7523 = vunpack.c.l.b16 %v7220
    %v7524 = vunpack.c.h.b16 %v7220
    %v7525 = vunpack.c.l.b16 %v7221
    %v7526 = vunpack.c.l.b16 %v7222
    %v7527 = vunpack.c.h.b16 %v7222
    %v7528 = vunpack.c.l.b16 %v7223
    %v7529 = vunpack.c.l.b16 %v7224
    %v7530 = vunpack.c.h.b16 %v7224
    %v7531 = vunpack.c.l.b16 %v7225
    %v7532 = vunpack.c.l.b16 %v7226
    %v7533 = vunpack.c.h.b16 %v7226
    %v7534 = vunpack.c.l.b16 %v7227
    %v7535 = vunpack.c.l.b16 %v7228
    %v7536 = vunpack.c.h.b16 %v7228
    %v7537 = vunpack.c.l.b16 %v7229
    %v7538 = vunpack.c.l.b16 %v7230
    %v7539 = vunpack.c.h.b16 %v7230
    %v7540 = vunpack.c.l.b16 %v7231
    %v7541 = vunpack.c.l.b16 %v7232
    %v7542 = vunpack.c.h.b16 %v7232
    %v7543 = vunpack.c.l.b16 %v7233
    %v7544 = vunpack.c.l.b16 %v7234
    %v7545 = vunpack.c.h.b16 %v7234
    %v7546 = vunpack.c.l.b16 %v7235
    %v7547 = vunpack.c.l.b16 %v7236
    %v7548 = vunpack.c.h.b16 %v7236
    %v7549 = vunpack.c.l.b16 %v7237
    %v7550 = vunpack.c.l.b16 %v7238
    %v7551 = vunpack.c.h.b16 %v7238
    %v7552 = vunpack.c.l.b16 %v7239
    %v7553 = vunpack.c.l.b16 %v7240
    %v7554 = vunpack.c.h.b16 %v7240
    %v7555 = vunpack.c.l.b16 %v7241
    %v7556 = vunpack.c.l.b16 %v7242
    %v7557 = vunpack.c.h.b16 %v7242
    %v7558 = vunpack.c.l.b16 %v7243
    %v7559 = vunpack.c.l.b16 %v7244
    %v7560 = vunpack.c.h.b16 %v7244
    %v7561 = vunpack.c.l.b16 %v7245
    %v7562 = vunpack.c.l.b16 %v7246
    %v7563 = vunpack.c.h.b16 %v7246
    %v7564 = vunpack.c.l.b16 %v7247
    %v7565 = vunpack.c.l.b16 %v7248
    %v7566 = vunpack.c.h.b16 %v7248
    %v7567 = vunpack.c.l.b16 %v7249
    %v7568 = vunpack.c.l.b16 %v7250
    %v7569 = vunpack.c.h.b16 %v7250
    %v7570 = vunpack.c.l.b16 %v7251
    %v7571 = vunpack.c.l.b16 %v7252
    %v7572 = vunpack.c.h.b16 %v7252
    %v7573 = vunpack.c.l.b16 %v7253
    %v7574 = vunpack.c.l.b16 %v7254
    %v7575 = vunpack.c.h.b16 %v7254
    %v7576 = vunpack.c.l.b16 %v7255
    %v7577 = vunpack.c.l.b16 %v7256
    %v7578 = vunpack.c.h.b16 %v7256
    %v7579 = vunpack.c.l.b16 %v7257
    %v7580 = vpack.c.b16 %v7394, %v7391
    %v7581 = vpack.c.b16 %v7395, %v7392
    %v7582 = vpack.c.b16 %v7396, %v7393
    %v7583 = vpack.c.b16 %v7400, %v7397
    %v7584 = vpack.c.b16 %v7401, %v7398
    %v7585 = vpack.c.b16 %v7402, %v7399
    %v7586 = vpack.c.b16 %v7406, %v7403
    %v7587 = vpack.c.b16 %v7407, %v7404
    %v7588 = vpack.c.b16 %v7408, %v7405
    %v7589 = vpack.c.b16 %v7412, %v7409
    %v7590 = vpack.c.b16 %v7413, %v7410
    %v7591 = vpack.c.b16 %v7414, %v7411
    %v7592 = vpack.c.b16 %v7418, %v7415
    %v7593 = vpack.c.b16 %v7419, %v7416
    %v7594 = vpack.c.b16 %v7420, %v7417
    %v7595 = vpack.c.b16 %v7424, %v7421
    %v7596 = vpack.c.b16 %v7425, %v7422
    %v7597 = vpack.c.b16 %v7426, %v7423
    %v7598 = vpack.c.b16 %v7430, %v7427
    %v7599 = vpack.c.b16 %v7431, %v7428
    %v7600 = vpack.c.b16 %v7432, %v7429
    %v7601 = vpack.c.b16 %v7436, %v7433
    %v7602 = vpack.c.b16 %v7437, %v7434
    %v7603 = vpack.c.b16 %v7438, %v7435
    %v7604 = vpack.c.b16 %v7442, %v7439
    %v7605 = vpack.c.b16 %v7443, %v7440
    %v7606 = vpack.c.b16 %v7444, %v7441
    %v7607 = vpack.c.b16 %v7448, %v7445
    %v7608 = vpack.c.b16 %v7449, %v7446
    %v7609 = vpack.c.b16 %v7450, %v7447
    %v7610 = vpack.c.b16 %v7454, %v7451
    %v7611 = vpack.c.b16 %v7455, %v7452
    %v7612 = vpack.c.b16 %v7456, %v7453
    %v7613 = vpack.c.b16 %v7460, %v7457
    %v7614 = vpack.c.b16 %v7461, %v7458
    %v7615 = vpack.c.b16 %v7462, %v7459
    %v7616 = vpack.c.b16 %v7466, %v7463
    %v7617 = vpack.c.b16 %v7467, %v7464
    %v7618 = vpack.c.b16 %v7468, %v7465
    %v7619 = vpack.c.b16 %v7472, %v7469
    %v7620 = vpack.c.b16 %v7473, %v7470
    %v7621 = vpack.c.b16 %v7474, %v7471
    %v7622 = vpack.c.b16 %v7478, %v7475
    %v7623 = vpack.c.b16 %v7479, %v7476
    %v7624 = vpack.c.b16 %v7480, %v7477
    %v7625 = vpack.c.b16 %v7484, %v7481
    %v7626 = vpack.c.b16 %v7485, %v7482
    %v7627 = vpack.c.b16 %v7486, %v7483
    %v7628 = vpack.c.b16 %v7490, %v7487
    %v7629 = vpack.c.b16 %v7491, %v7488
    %v7630 = vpack.c.b16 %v7492, %v7489
    %v7631 = vpack.c.b16 %v7496, %v7493
    %v7632 = vpack.c.b16 %v7497, %v7494
    %v7633 = vpack.c.b16 %v7498, %v7495
    %v7634 = vpack.c.b16 %v7502, %v7499
    %v7635 = vpack.c.b16 %v7503, %v7500
    %v7636 = vpack.c.b16 %v7504, %v7501
    %v7637 = vpack.c.b16 %v7508, %v7505
    %v7638 = vpack.c.b16 %v7509, %v7506
    %v7639 = vpack.c.b16 %v7510, %v7507
    %v7640 = vpack.c.b16 %v7514, %v7511
    %v7641 = vpack.c.b16 %v7515, %v7512
    %v7642 = vpack.c.b16 %v7516, %v7513
    %v7643 = vpack.c.b16 %v7520, %v7517
    %v7644 = vpack.c.b16 %v7521, %v7518
    %v7645 = vpack.c.b16 %v7522, %v7519
    %v7646 = vpack.c.b16 %v7526, %v7523
    %v7647 = vpack.c.b16 %v7527, %v7524
    %v7648 = vpack.c.b16 %v7528, %v7525
    %v7649 = vpack.c.b16 %v7532, %v7529
    %v7650 = vpack.c.b16 %v7533, %v7530
    %v7651 = vpack.c.b16 %v7534, %v7531
    %v7652 = vpack.c.b16 %v7538, %v7535
    %v7653 = vpack.c.b16 %v7539, %v7536
    %v7654 = vpack.c.b16 %v7540, %v7537
    %v7655 = vpack.c.b16 %v7544, %v7541
    %v7656 = vpack.c.b16 %v7545, %v7542
    %v7657 = vpack.c.b16 %v7546, %v7543
    %v7658 = vpack.c.b16 %v7550, %v7547
    %v7659 = vpack.c.b16 %v7551, %v7548
    %v7660 = vpack.c.b16 %v7552, %v7549
    %v7661 = vpack.c.b16 %v7556, %v7553
    %v7662 = vpack.c.b16 %v7557, %v7554
    %v7663 = vpack.c.b16 %v7558, %v7555
    %v7664 = vpack.c.b16 %v7562, %v7559
    %v7665 = vpack.c.b16 %v7563, %v7560
    %v7666 = vpack.c.b16 %v7564, %v7561
    %v7667 = vpack.c.b16 %v7568, %v7565
    %v7668 = vpack.c.b16 %v7569, %v7566
    %v7669 = vpack.c.b16 %v7570, %v7567
    %v7670 = vpack.c.b16 %v7574, %v7571
    %v7671 = vpack.c.b16 %v7575, %v7572
    %v7672 = vpack.c.b16 %v7576, %v7573
    %v7673 = vpack.c.b16 %v7577, %v7577
    %v7674 = vpack.c.b16 %v7578, %v7578
    %v7675 = vpack.c.b16 %v7579, %v7579
    %vm7769 = vcmask 949248
    %v7771 = vsel %vm7769, %v7131, 0
    %vm7773 = vcmask 1041408
    %v7775 = vsel %vm7773, %v7673, 0
    %v7778 = vsel %vm7773, %v7674, 0
    %v7781 = vsel %vm7773, %v7675, 0
    %7783 = vmatpush.bf16.msra.mxu0 %v7601
    %7784 = vmatpush.bf16.msra.mxu0 %v7598
    %7785 = vmatpush.bf16.msra.mxu0 %v7595
    %7786 = vmatpush.bf16.msra.mxu0 %v7592
    %7787 = vmatpush.bf16.msra.mxu0 %v7589
    %7788 = vmatpush.bf16.msra.mxu0 %v7586
    %7789 = vmatpush.bf16.msra.mxu0 %v7583
    %7790 = vmatpush.bf16.msra.mxu0 %v7580
    %7791 = vmatmul.bf16.gmra.mxu0 %v7128
    %v7792 = vpop.f32.mrf.mxu0
    %v7793 = vadd.f32 %v7259, %v7792
    %v7794 = vpop.f32.mrf.mxu0
    %7795 = vdwg.mxu0
    %7796 = vmatpush.bf16.msra.mxu0 %v7625
    %7797 = vmatpush.bf16.msra.mxu0 %v7622
    %7798 = vmatpush.bf16.msra.mxu0 %v7619
    %7799 = vmatpush.bf16.msra.mxu0 %v7616
    %7800 = vmatpush.bf16.msra.mxu0 %v7613
    %7801 = vmatpush.bf16.msra.mxu0 %v7610
    %7802 = vmatpush.bf16.msra.mxu0 %v7607
    %7803 = vmatpush.bf16.msra.mxu0 %v7604
    %7804 = vmatmul.bf16.gmra.mxu0 %v7129
    %v7805 = vpop.f32.mrf.mxu0
    %v7806 = vadd.f32 %v7793, %v7805
    %v7807 = vpop.f32.mrf.mxu0
    %7808 = vdwg.mxu0
    %7809 = vmatpush.bf16.msra.mxu0 %v7649
    %7810 = vmatpush.bf16.msra.mxu0 %v7646
    %7811 = vmatpush.bf16.msra.mxu0 %v7643
    %7812 = vmatpush.bf16.msra.mxu0 %v7640
    %7813 = vmatpush.bf16.msra.mxu0 %v7637
    %7814 = vmatpush.bf16.msra.mxu0 %v7634
    %7815 = vmatpush.bf16.msra.mxu0 %v7631
    %7816 = vmatpush.bf16.msra.mxu0 %v7628
    %7817 = vmatmul.bf16.gmra.mxu0 %v7130
    %v7818 = vpop.f32.mrf.mxu0
    %v7819 = vadd.f32 %v7806, %v7818
    %v7820 = vpop.f32.mrf.mxu0
    %7821 = vdwg.mxu0
    %7822 = vmatpush.bf16.msra.mxu0 %v7775
    %7823 = vmatpush.bf16.msra.mxu0 %v7670
    %7824 = vmatpush.bf16.msra.mxu0 %v7667
    %7825 = vmatpush.bf16.msra.mxu0 %v7664
    %7826 = vmatpush.bf16.msra.mxu0 %v7661
    %7827 = vmatpush.bf16.msra.mxu0 %v7658
    %7828 = vmatpush.bf16.msra.mxu0 %v7655
    %7829 = vmatpush.bf16.msra.mxu0 %v7652
    %7830 = vmatmul.bf16.gmra.mxu0 %v7771
    %v7831 = vpop.f32.mrf.mxu0
    %v7832 = vadd.f32 %v7819, %v7831
    %v7833 = vpop.f32.mrf.mxu0
    %7834 = vdwg.mxu0
    %7835 = vmatpush.bf16.msra.mxu0 %v7602
    %7836 = vmatpush.bf16.msra.mxu0 %v7599
    %7837 = vmatpush.bf16.msra.mxu0 %v7596
    %7838 = vmatpush.bf16.msra.mxu0 %v7593
    %7839 = vmatpush.bf16.msra.mxu0 %v7590
    %7840 = vmatpush.bf16.msra.mxu0 %v7587
    %7841 = vmatpush.bf16.msra.mxu0 %v7584
    %7842 = vmatpush.bf16.msra.mxu0 %v7581
    %7843 = vmatmul.bf16.gmra.mxu0 %v7128
    %v7844 = vpop.f32.mrf.mxu0
    %v7845 = vadd.f32 %v7260, %v7844
    %v7846 = vpop.f32.mrf.mxu0
    %7847 = vdwg.mxu0
    %7848 = vmatpush.bf16.msra.mxu0 %v7626
    %7849 = vmatpush.bf16.msra.mxu0 %v7623
    %7850 = vmatpush.bf16.msra.mxu0 %v7620
    %7851 = vmatpush.bf16.msra.mxu0 %v7617
    %7852 = vmatpush.bf16.msra.mxu0 %v7614
    %7853 = vmatpush.bf16.msra.mxu0 %v7611
    %7854 = vmatpush.bf16.msra.mxu0 %v7608
    %7855 = vmatpush.bf16.msra.mxu0 %v7605
    %7856 = vmatmul.bf16.gmra.mxu0 %v7129
    %v7857 = vpop.f32.mrf.mxu0
    %v7858 = vadd.f32 %v7845, %v7857
    %v7859 = vpop.f32.mrf.mxu0
    %7860 = vdwg.mxu0
    %7861 = vmatpush.bf16.msra.mxu0 %v7650
    %7862 = vmatpush.bf16.msra.mxu0 %v7647
    %7863 = vmatpush.bf16.msra.mxu0 %v7644
    %7864 = vmatpush.bf16.msra.mxu0 %v7641
    %7865 = vmatpush.bf16.msra.mxu0 %v7638
    %7866 = vmatpush.bf16.msra.mxu0 %v7635
    %7867 = vmatpush.bf16.msra.mxu0 %v7632
    %7868 = vmatpush.bf16.msra.mxu0 %v7629
    %7869 = vmatmul.bf16.gmra.mxu0 %v7130
    %v7870 = vpop.f32.mrf.mxu0
    %v7871 = vadd.f32 %v7858, %v7870
    %v7872 = vpop.f32.mrf.mxu0
    %7873 = vdwg.mxu0
    %7874 = vmatpush.bf16.msra.mxu0 %v7778
    %7875 = vmatpush.bf16.msra.mxu0 %v7671
    %7876 = vmatpush.bf16.msra.mxu0 %v7668
    %7877 = vmatpush.bf16.msra.mxu0 %v7665
    %7878 = vmatpush.bf16.msra.mxu0 %v7662
    %7879 = vmatpush.bf16.msra.mxu0 %v7659
    %7880 = vmatpush.bf16.msra.mxu0 %v7656
    %7881 = vmatpush.bf16.msra.mxu0 %v7653
    %7882 = vmatmul.bf16.gmra.mxu0 %v7771
    %v7883 = vpop.f32.mrf.mxu0
    %v7884 = vadd.f32 %v7871, %v7883
    %v7885 = vpop.f32.mrf.mxu0
    %7886 = vdwg.mxu0
    %7887 = vmatpush.bf16.msra.mxu0 %v7603
    %7888 = vmatpush.bf16.msra.mxu0 %v7600
    %7889 = vmatpush.bf16.msra.mxu0 %v7597
    %7890 = vmatpush.bf16.msra.mxu0 %v7594
    %7891 = vmatpush.bf16.msra.mxu0 %v7591
    %7892 = vmatpush.bf16.msra.mxu0 %v7588
    %7893 = vmatpush.bf16.msra.mxu0 %v7585
    %7894 = vmatpush.bf16.msra.mxu0 %v7582
    %7895 = vmatmul.bf16.gmra.mxu0 %v7128
    %v7896 = vpop.f32.mrf.mxu0
    %v7897 = vadd.f32 %v7261, %v7896
    %v7898 = vpop.f32.mrf.mxu0
    %7899 = vdwg.mxu0
    %7900 = vmatpush.bf16.msra.mxu0 %v7627
    %7901 = vmatpush.bf16.msra.mxu0 %v7624
    %7902 = vmatpush.bf16.msra.mxu0 %v7621
    %7903 = vmatpush.bf16.msra.mxu0 %v7618
    %7904 = vmatpush.bf16.msra.mxu0 %v7615
    %7905 = vmatpush.bf16.msra.mxu0 %v7612
    %7906 = vmatpush.bf16.msra.mxu0 %v7609
    %7907 = vmatpush.bf16.msra.mxu0 %v7606
    %7908 = vmatmul.bf16.gmra.mxu0 %v7129
    %v7909 = vpop.f32.mrf.mxu0
    %v7910 = vadd.f32 %v7897, %v7909
    %v7911 = vpop.f32.mrf.mxu0
    %7912 = vdwg.mxu0
    %7913 = vmatpush.bf16.msra.mxu0 %v7651
    %7914 = vmatpush.bf16.msra.mxu0 %v7648
    %7915 = vmatpush.bf16.msra.mxu0 %v7645
    %7916 = vmatpush.bf16.msra.mxu0 %v7642
    %7917 = vmatpush.bf16.msra.mxu0 %v7639
    %7918 = vmatpush.bf16.msra.mxu0 %v7636
    %7919 = vmatpush.bf16.msra.mxu0 %v7633
    %7920 = vmatpush.bf16.msra.mxu0 %v7630
    %7921 = vmatmul.bf16.gmra.mxu0 %v7130
    %v7922 = vpop.f32.mrf.mxu0
    %v7923 = vadd.f32 %v7910, %v7922
    %v7924 = vpop.f32.mrf.mxu0
    %7925 = vdwg.mxu0
    %7926 = vmatpush.bf16.msra.mxu0 %v7781
    %7927 = vmatpush.bf16.msra.mxu0 %v7672
    %7928 = vmatpush.bf16.msra.mxu0 %v7669
    %7929 = vmatpush.bf16.msra.mxu0 %v7666
    %7930 = vmatpush.bf16.msra.mxu0 %v7663
    %7931 = vmatpush.bf16.msra.mxu0 %v7660
    %7932 = vmatpush.bf16.msra.mxu0 %v7657
    %7933 = vmatpush.bf16.msra.mxu0 %v7654
    %7934 = vmatmul.bf16.gmra.mxu0 %v7771
    %v7935 = vpop.f32.mrf.mxu0
    %v7936 = vadd.f32 %v7923, %v7935
    %v7937 = vpop.f32.mrf.mxu0
    %7938 = vdwg.mxu0
    %v7941 = vrot.slane %v7884, 4
    %v7942 = vsel %vm2248, %v7832, %v7941
    %7944 = vst [vmem:[#allocation11] sm:$0xff] %v7942
    %vm7945 = vcmask 453632
    %7946 = vst.msk [vmem:[#allocation11 + $0x8] sm:$0xf] %vm7945, %v7936
    // Predicated region
    $region52: #{tpu_custom_call.1} parent=1 // pred_check
      _
    $region53: #{tpu_custom_call.1} parent=1 // pred_check_branch
      %7948 = sbr.rel (0) target = $region55
    $region54: #{tpu_custom_call.1} parent=1 // pred_region
      %7950 = vsyncadd [#allocation7], 0
      %s7952 = sshll.u32 [#allocation11], 4
      %s7953 = int_to_ptr.vmem [resolvable:$true] %s7952
      %s7954 = sshll.u32 %s5, 4
      %s7955 = int_to_ptr.hbm [resolvable:$true] %s7954
      %7957 = dma.vmem_to_hbm [thread:$0]  %s7953, 192, %s7955, [#allocation7]
    $region55: #{tpu_custom_call.1} parent=1 // pred_fallthru
      _
    // Predicated region
    $region56: #{tpu_custom_call.1} parent=1 // pred_check
      _
    $region57: #{tpu_custom_call.1} parent=1 // pred_check_branch
      %7959 = sbr.rel (0) target = $region59
    $region58: #{tpu_custom_call.1} parent=1 // pred_region
      %7961 = dma.done [#allocation7], 192
    $region59: #{tpu_custom_call.1} parent=1 // pred_fallthru
      _
    %7962 = vsyncpa [#allocation6], 1
    %7963 = vsyncpa [#allocation9], 1
    %7964 = vsyncpa [#allocation7], 1
  %7965 = vsyncmov [#allocation4]
  %s7966 = vpop.sfrf %7965
  %p7967 = scmp.eq.s32.totalorder %s7966, 0
  %p7968 = pneg %p7967
  %7970 = shalt.err (%p7968)
  %s7971 = scalar_lea.sflag [#allocation4], 1
  %7972 = vsyncmov %s7971
  %s7973 = vpop.sfrf %7972
  %p7974 = scmp.eq.s32.totalorder %s7973, 0
  %p7975 = pneg %p7974
  %7977 = shalt.err (%p7975)

</llo_original>
